<compile_context>
chip_gen: v7x
topology: tpu7x:2x2x1
jax: 0.10.0
libtpu: 0.0.40
codegen_flags: <defaults>
</compile_context>

<pallas_src>
import functools

import jax
import jax.numpy as jnp
from jax import lax
from jax.experimental import pallas as pl
from jax.experimental.pallas import tpu as pltpu


def _make_dense_block_kernel(c_in, growth_rate, num_layers, H, W):
    """Build the fused DenseBlock kernel for static (c_in, G, L, H, W)."""
    L = num_layers
    c_total = c_in + growth_rate * L

    def kernel(*refs):
        x_ref = refs[0]
        param_refs = refs[1:1 + 4 * L]      # per layer: scale, shift, w, bias
        o_ref = refs[1 + 4 * L]             # (1, H, W, c_total) output block
        norm_ref = refs[2 + 4 * L]          # (H+2, W+2, c_total) halo scratch

        f32 = jnp.float32

        # Zero only the 1-pixel halo border.  Interior channels that get read
        # are fully rewritten below before they are read; zeroing per step
        # keeps this correct under megacore sharding of the batch axis.
        norm_ref[0:1, :, :] = jnp.zeros((1, W + 2, c_total), f32)
        norm_ref[H + 1:H + 2, :, :] = jnp.zeros((1, W + 2, c_total), f32)
        norm_ref[:, 0:1, :] = jnp.zeros((H + 2, 1, c_total), f32)
        norm_ref[:, W + 1:W + 2, :] = jnp.zeros((H + 2, 1, c_total), f32)

        # Dense concat part 0: input occupies the first c_in channels of the
        # output block, which doubles as the VMEM feature buffer.
        o_ref[0, :, :, 0:c_in] = x_ref[0].astype(o_ref.dtype)

        cin = c_in
        for l in range(L):
            scale_ref, shift_ref, w_ref, b_ref = param_refs[4 * l:4 * l + 4]

            # Folded BatchNorm + ReLU on the current concatenation (VPU).
            cur = o_ref[0, :, :, 0:cin].astype(f32)               # (H, W, cin)
            xn = jnp.maximum(cur * scale_ref[...] + shift_ref[...], 0.0)
            norm_ref[1:H + 1, 1:W + 1, 0:cin] = xn

            # im2col: 9 shifted taps concatenated along channels -> one MXU
            # matmul with K = 9*cin instead of nine K=cin micro-matmuls.
            taps = [norm_ref[ky:ky + H, kx:kx + W, 0:cin]
                    for ky in range(3) for kx in range(3)]
            patches = jnp.concatenate(taps, axis=-1).reshape(H * W, 9 * cin)
            out = jnp.dot(patches, w_ref[...],
                          preferred_element_type=f32)             # (H*W, G)
            out = (out + b_ref[...]).reshape(H, W, growth_rate)

            # Dropout(0.5) is identity in eval mode.
            o_ref[0, :, :, cin:cin + growth_rate] = out.astype(o_ref.dtype)
            cin += growth_rate

    return kernel


def dense_block_pallas(x_nhwc, params_list):
    """Fused DenseBlock forward. x_nhwc: (N, H, W, C_in) -> (N, H, W, C_total)."""
    N, H, W, c_in = x_nhwc.shape
    L = len(params_list)
    growth = params_list[0]["bias"].shape[0]
    c_total = c_in + growth * L

    flat_params = []
    in_specs = [pl.BlockSpec((1, H, W, c_in), lambda n: (n, 0, 0, 0))]
    for p in params_list:
        cin_l = p["scale"].shape[0]
        flat_params += [
            p["scale"].reshape(1, cin_l).astype(jnp.float32),
            p["shift"].reshape(1, cin_l).astype(jnp.float32),
            # HWIO (3,3,cin,G) -> tap-major im2col weight (9*cin, G).
            p["w_hwio"].reshape(9 * cin_l, growth).astype(jnp.float32),
            p["bias"].reshape(1, growth).astype(jnp.float32),
        ]
        in_specs += [
            pl.BlockSpec((1, cin_l), lambda n: (0, 0)),
            pl.BlockSpec((1, cin_l), lambda n: (0, 0)),
            pl.BlockSpec((9 * cin_l, growth), lambda n: (0, 0)),
            pl.BlockSpec((1, growth), lambda n: (0, 0)),
        ]

    kernel = _make_dense_block_kernel(c_in, growth, L, H, W)

    return pl.pallas_call(
        kernel,
        out_shape=jax.ShapeDtypeStruct((N, H, W, c_total), x_nhwc.dtype),
        grid_spec=pltpu.PrefetchScalarGridSpec(
            num_scalar_prefetch=0,
            grid=(N,),
            in_specs=in_specs,
            out_specs=pl.BlockSpec((1, H, W, c_total),
                                   lambda n: (n, 0, 0, 0)),
            scratch_shapes=[pltpu.VMEM((H + 2, W + 2, c_total), jnp.float32)],
        ),
        compiler_params=pltpu.CompilerParams(
            dimension_semantics=("parallel",)),
    )(x_nhwc, *flat_params)


def init_dense_block_params(key, channels_in, growth_rate, num_layers):
    """Deterministic parameter init mirroring DenseBlock.__init__ shapes."""
    params = []
    cur = channels_in
    for _ in range(num_layers):
        key, k_g, k_b, k_m, k_v, k_w, k_cb = jax.random.split(key, 7)
        gamma = 1.0 + 0.1 * jax.random.normal(k_g, (cur,), jnp.float32)
        beta = 0.1 * jax.random.normal(k_b, (cur,), jnp.float32)
        run_mean = 0.1 * jax.random.normal(k_m, (cur,), jnp.float32)
        run_var = 1.0 + 0.1 * jax.random.uniform(k_v, (cur,), jnp.float32)
        eps = 1e-5
        scale = gamma / jnp.sqrt(run_var + eps)
        shift = beta - run_mean * scale
        # PyTorch Conv2d weight is (G, Cin, 3, 3) = OIHW; convert to HWIO.
        w_oihw = 0.1 * jax.random.normal(k_w, (growth_rate, cur, 3, 3),
                                         jnp.float32)
        w_hwio = jnp.transpose(w_oihw, (2, 3, 1, 0))  # (3, 3, Cin, G)
        bias = 0.1 * jax.random.normal(k_cb, (growth_rate,), jnp.float32)
        params.append(dict(scale=scale, shift=shift, w_hwio=w_hwio, bias=bias))
        cur += growth_rate
    return params


@jax.jit
def dense_block_forward(x_nchw, params_list):
    """DenseBlock forward. Input/output NCHW (PyTorch convention)."""
    x = jnp.transpose(x_nchw, (0, 2, 3, 1))        # NCHW -> NHWC
    out_nhwc = dense_block_pallas(x, params_list)  # fused block, full concat
    return jnp.transpose(out_nhwc, (0, 3, 1, 2))   # NHWC -> NCHW


def _reference_forward(x_nchw, params_list):
    """Pure-JAX reference (same eval semantics) for a correctness check."""
    x = jnp.transpose(x_nchw, (0, 2, 3, 1))
    features = [x]
    for p in params_list:
        inp = jnp.concatenate(features, axis=-1)
        xn = jnp.maximum(inp * p["scale"] + p["shift"], 0.0)
        out = lax.conv_general_dilated(
            xn, p["w_hwio"], window_strides=(1, 1), padding="SAME",
            dimension_numbers=("NHWC", "HWIO", "NHWC"))
        out = out + p["bias"]
        features.append(out)
    out_nhwc = jnp.concatenate(features, axis=-1)
    return jnp.transpose(out_nhwc, (0, 3, 1, 2))


if __name__ == "__main__":
    key = jax.random.PRNGKey(0)
    key_x, key_p = jax.random.split(key)

    N, C_in, H, W = 2, 4, 16, 16
    growth_rate, num_layers = 4, 3

    x = jax.random.normal(key_x, (N, C_in, H, W), jnp.float32)
    params = init_dense_block_params(key_p, C_in, growth_rate, num_layers)

    out = dense_block_forward(x, params)
    out = jax.block_until_ready(out)

    expected_channels = C_in + growth_rate * num_layers
    assert out.shape == (N, expected_channels, H, W), out.shape

    ref = _reference_forward(x, params)
    assert jnp.allclose(out, ref, atol=1e-4, rtol=1e-4), (
        float(jnp.max(jnp.abs(out - ref))))

    print("KERNEL_OK")
</pallas_src>

<mosaic_0001>
module attributes {stable_mosaic.version = 11 : i64} {
  func.func @kernel(%arg0: i32, %arg1: memref<1x16x16x4xf32, #tpu.memory_space<vmem>>, %arg2: memref<1x4xf32, #tpu.memory_space<vmem>>, %arg3: memref<1x4xf32, #tpu.memory_space<vmem>>, %arg4: memref<36x4xf32, #tpu.memory_space<vmem>>, %arg5: memref<1x4xf32, #tpu.memory_space<vmem>>, %arg6: memref<1x8xf32, #tpu.memory_space<vmem>>, %arg7: memref<1x8xf32, #tpu.memory_space<vmem>>, %arg8: memref<72x4xf32, #tpu.memory_space<vmem>>, %arg9: memref<1x4xf32, #tpu.memory_space<vmem>>, %arg10: memref<1x12xf32, #tpu.memory_space<vmem>>, %arg11: memref<1x12xf32, #tpu.memory_space<vmem>>, %arg12: memref<108x4xf32, #tpu.memory_space<vmem>>, %arg13: memref<1x4xf32, #tpu.memory_space<vmem>>, %arg14: memref<1x16x16x16xf32, #tpu.memory_space<vmem>>, %arg15: memref<18x18x16xf32, #tpu.memory_space<vmem>>) attributes {dimension_semantics = [#tpu.dimension_semantics<parallel>], iteration_bounds = array<i64: 2>, scalar_prefetch = 0 : i64, scratch_operands = 1 : i64, tpu.core_type = #tpu.core_type<tc>, window_params = [{transform_indices = @transform_0, window_bounds = array<i64: 1, 16, 16, 4>}, {pipeline_mode = #tpu.pipeline_mode<synchronous>, transform_indices = @transform_1, window_bounds = array<i64: 1, 4>}, {pipeline_mode = #tpu.pipeline_mode<synchronous>, transform_indices = @transform_2, window_bounds = array<i64: 1, 4>}, {pipeline_mode = #tpu.pipeline_mode<synchronous>, transform_indices = @transform_3, window_bounds = array<i64: 36, 4>}, {pipeline_mode = #tpu.pipeline_mode<synchronous>, transform_indices = @transform_4, window_bounds = array<i64: 1, 4>}, {pipeline_mode = #tpu.pipeline_mode<synchronous>, transform_indices = @transform_5, window_bounds = array<i64: 1, 8>}, {pipeline_mode = #tpu.pipeline_mode<synchronous>, transform_indices = @transform_6, window_bounds = array<i64: 1, 8>}, {pipeline_mode = #tpu.pipeline_mode<synchronous>, transform_indices = @transform_7, window_bounds = array<i64: 72, 4>}, {pipeline_mode = #tpu.pipeline_mode<synchronous>, transform_indices = @transform_8, window_bounds = array<i64: 1, 4>}, {pipeline_mode = #tpu.pipeline_mode<synchronous>, transform_indices = @transform_9, window_bounds = array<i64: 1, 12>}, {pipeline_mode = #tpu.pipeline_mode<synchronous>, transform_indices = @transform_10, window_bounds = array<i64: 1, 12>}, {pipeline_mode = #tpu.pipeline_mode<synchronous>, transform_indices = @transform_11, window_bounds = array<i64: 108, 4>}, {pipeline_mode = #tpu.pipeline_mode<synchronous>, transform_indices = @transform_12, window_bounds = array<i64: 1, 4>}, {transform_indices = @transform_13, window_bounds = array<i64: 1, 16, 16, 16>}]} {
    %cst = arith.constant 0.000000e+00 : f32
    %0 = vector.broadcast %cst : f32 to vector<1x18x16xf32>
    %c0 = arith.constant 0 : index
    %c0_0 = arith.constant 0 : index
    %c0_1 = arith.constant 0 : index
    %1 = vector.load %arg15[%c0, %c0_0, %c0_1] : memref<18x18x16xf32, #tpu.memory_space<vmem>>, vector<1x18x16xf32>
    tpu.vector_store %arg15[%c0, %c0_0, %c0_1], %0 {strides = array<i32>} : memref<18x18x16xf32, #tpu.memory_space<vmem>>, vector<1x18x16xf32>,
    %cst_2 = arith.constant 0.000000e+00 : f32
    %2 = vector.broadcast %cst_2 : f32 to vector<1x18x16xf32>
    %c17 = arith.constant 17 : index
    %c0_3 = arith.constant 0 : index
    %c0_4 = arith.constant 0 : index
    %3 = vector.load %arg15[%c17, %c0_3, %c0_4] : memref<18x18x16xf32, #tpu.memory_space<vmem>>, vector<1x18x16xf32>
    tpu.vector_store %arg15[%c17, %c0_3, %c0_4], %2 {strides = array<i32>} : memref<18x18x16xf32, #tpu.memory_space<vmem>>, vector<1x18x16xf32>,
    %cst_5 = arith.constant 0.000000e+00 : f32
    %4 = vector.broadcast %cst_5 : f32 to vector<18x1x16xf32>
    %c0_6 = arith.constant 0 : index
    %c0_7 = arith.constant 0 : index
    %c0_8 = arith.constant 0 : index
    %5 = vector.load %arg15[%c0_6, %c0_7, %c0_8] : memref<18x18x16xf32, #tpu.memory_space<vmem>>, vector<18x1x16xf32>
    tpu.vector_store %arg15[%c0_6, %c0_7, %c0_8], %4 {strides = array<i32>} : memref<18x18x16xf32, #tpu.memory_space<vmem>>, vector<18x1x16xf32>,
    %cst_9 = arith.constant 0.000000e+00 : f32
    %6 = vector.broadcast %cst_9 : f32 to vector<18x1x16xf32>
    %c0_10 = arith.constant 0 : index
    %c17_11 = arith.constant 17 : index
    %c0_12 = arith.constant 0 : index
    %7 = vector.load %arg15[%c0_10, %c17_11, %c0_12] : memref<18x18x16xf32, #tpu.memory_space<vmem>>, vector<18x1x16xf32>
    tpu.vector_store %arg15[%c0_10, %c17_11, %c0_12], %6 {strides = array<i32>} : memref<18x18x16xf32, #tpu.memory_space<vmem>>, vector<18x1x16xf32>,
    %c0_13 = arith.constant 0 : index
    %c0_14 = arith.constant 0 : index
    %c0_15 = arith.constant 0 : index
    %c0_16 = arith.constant 0 : index
    %8 = vector.load %arg1[%c0_13, %c0_14, %c0_15, %c0_16] : memref<1x16x16x4xf32, #tpu.memory_space<vmem>>, vector<1x16x16x4xf32>
    %9 = vector.shape_cast %8 : vector<1x16x16x4xf32> to vector<16x16x4xf32>
    %c0_17 = arith.constant 0 : index
    %c0_18 = arith.constant 0 : index
    %c0_19 = arith.constant 0 : index
    %c0_20 = arith.constant 0 : index
    %10 = vector.load %arg14[%c0_17, %c0_18, %c0_19, %c0_20] : memref<1x16x16x16xf32, #tpu.memory_space<vmem>>, vector<1x16x16x4xf32>
    %11 = vector.shape_cast %10 : vector<1x16x16x4xf32> to vector<16x16x4xf32>
    %12 = vector.shape_cast %9 : vector<16x16x4xf32> to vector<1x16x16x4xf32>
    tpu.vector_store %arg14[%c0_17, %c0_18, %c0_19, %c0_20], %12 {strides = array<i32>} : memref<1x16x16x16xf32, #tpu.memory_space<vmem>>, vector<1x16x16x4xf32>,
    %c0_21 = arith.constant 0 : index
    %c0_22 = arith.constant 0 : index
    %c0_23 = arith.constant 0 : index
    %c0_24 = arith.constant 0 : index
    %13 = vector.load %arg14[%c0_21, %c0_22, %c0_23, %c0_24] : memref<1x16x16x16xf32, #tpu.memory_space<vmem>>, vector<1x16x16x4xf32>
    %14 = vector.shape_cast %13 : vector<1x16x16x4xf32> to vector<16x16x4xf32>
    %c0_25 = arith.constant 0 : index
    %c0_26 = arith.constant 0 : index
    %15 = vector.load %arg2[%c0_25, %c0_26] : memref<1x4xf32, #tpu.memory_space<vmem>>, vector<1x4xf32>
    %16 = vector.shape_cast %15 : vector<1x4xf32> to vector<1x1x4xf32>
    %17 = vector.broadcast %16 : vector<1x1x4xf32> to vector<16x16x4xf32>
    %18 = arith.mulf %14, %17 : vector<16x16x4xf32>
    %c0_27 = arith.constant 0 : index
    %c0_28 = arith.constant 0 : index
    %19 = vector.load %arg3[%c0_27, %c0_28] : memref<1x4xf32, #tpu.memory_space<vmem>>, vector<1x4xf32>
    %20 = vector.shape_cast %19 : vector<1x4xf32> to vector<1x1x4xf32>
    %21 = vector.broadcast %20 : vector<1x1x4xf32> to vector<16x16x4xf32>
    %22 = arith.addf %18, %21 : vector<16x16x4xf32>
    %cst_29 = arith.constant 0.000000e+00 : f32
    %23 = vector.broadcast %cst_29 : f32 to vector<16x16x4xf32>
    %24 = arith.maximumf %22, %23 : vector<16x16x4xf32>
    %c1 = arith.constant 1 : index
    %c1_30 = arith.constant 1 : index
    %c0_31 = arith.constant 0 : index
    %25 = vector.load %arg15[%c1, %c1_30, %c0_31] : memref<18x18x16xf32, #tpu.memory_space<vmem>>, vector<16x16x4xf32>
    tpu.vector_store %arg15[%c1, %c1_30, %c0_31], %24 {strides = array<i32>} : memref<18x18x16xf32, #tpu.memory_space<vmem>>, vector<16x16x4xf32>,
    %c0_32 = arith.constant 0 : index
    %c0_33 = arith.constant 0 : index
    %c0_34 = arith.constant 0 : index
    %26 = vector.load %arg15[%c0_32, %c0_33, %c0_34] : memref<18x18x16xf32, #tpu.memory_space<vmem>>, vector<16x16x4xf32>
    %c0_35 = arith.constant 0 : index
    %c1_36 = arith.constant 1 : index
    %c0_37 = arith.constant 0 : index
    %27 = vector.load %arg15[%c0_35, %c1_36, %c0_37] : memref<18x18x16xf32, #tpu.memory_space<vmem>>, vector<16x16x4xf32>
    %c0_38 = arith.constant 0 : index
    %c2 = arith.constant 2 : index
    %c0_39 = arith.constant 0 : index
    %28 = vector.load %arg15[%c0_38, %c2, %c0_39] : memref<18x18x16xf32, #tpu.memory_space<vmem>>, vector<16x16x4xf32>
    %c1_40 = arith.constant 1 : index
    %c0_41 = arith.constant 0 : index
    %c0_42 = arith.constant 0 : index
    %29 = vector.load %arg15[%c1_40, %c0_41, %c0_42] : memref<18x18x16xf32, #tpu.memory_space<vmem>>, vector<16x16x4xf32>
    %c1_43 = arith.constant 1 : index
    %c1_44 = arith.constant 1 : index
    %c0_45 = arith.constant 0 : index
    %30 = vector.load %arg15[%c1_43, %c1_44, %c0_45] : memref<18x18x16xf32, #tpu.memory_space<vmem>>, vector<16x16x4xf32>
    %c1_46 = arith.constant 1 : index
    %c2_47 = arith.constant 2 : index
    %c0_48 = arith.constant 0 : index
    %31 = vector.load %arg15[%c1_46, %c2_47, %c0_48] : memref<18x18x16xf32, #tpu.memory_space<vmem>>, vector<16x16x4xf32>
    %c2_49 = arith.constant 2 : index
    %c0_50 = arith.constant 0 : index
    %c0_51 = arith.constant 0 : index
    %32 = vector.load %arg15[%c2_49, %c0_50, %c0_51] : memref<18x18x16xf32, #tpu.memory_space<vmem>>, vector<16x16x4xf32>
    %c2_52 = arith.constant 2 : index
    %c1_53 = arith.constant 1 : index
    %c0_54 = arith.constant 0 : index
    %33 = vector.load %arg15[%c2_52, %c1_53, %c0_54] : memref<18x18x16xf32, #tpu.memory_space<vmem>>, vector<16x16x4xf32>
    %c2_55 = arith.constant 2 : index
    %c2_56 = arith.constant 2 : index
    %c0_57 = arith.constant 0 : index
    %34 = vector.load %arg15[%c2_55, %c2_56, %c0_57] : memref<18x18x16xf32, #tpu.memory_space<vmem>>, vector<16x16x4xf32>
    %35 = tpu.concatenate %26, %27, %28, %29, %30, %31, %32, %33, %34 in 2 : vector<16x16x4xf32>, vector<16x16x4xf32>, vector<16x16x4xf32>, vector<16x16x4xf32>, vector<16x16x4xf32>, vector<16x16x4xf32>, vector<16x16x4xf32>, vector<16x16x4xf32>, vector<16x16x4xf32> -> vector<16x16x36xf32>
    %36 = vector.shape_cast %35 : vector<16x16x36xf32> to vector<256x36xf32>
    %c0_58 = arith.constant 0 : index
    %c0_59 = arith.constant 0 : index
    %37 = vector.load %arg4[%c0_58, %c0_59] : memref<36x4xf32, #tpu.memory_space<vmem>>, vector<36x4xf32>
    %cst_60 = arith.constant dense<0.000000e+00> : vector<256x4xf32>
    %38 = tpu.matmul %36, %37, %cst_60 {dimension_numbers = #tpu.dot_dimension_numbers<[1], [0], [0], [1], [0, 0, 1, 1], [], []>} : vector<256x36xf32>, vector<36x4xf32>, vector<256x4xf32> -> vector<256x4xf32>
    %c0_61 = arith.constant 0 : index
    %c0_62 = arith.constant 0 : index
    %39 = vector.load %arg5[%c0_61, %c0_62] : memref<1x4xf32, #tpu.memory_space<vmem>>, vector<1x4xf32>
    %40 = vector.broadcast %39 : vector<1x4xf32> to vector<256x4xf32>
    %41 = arith.addf %38, %40 : vector<256x4xf32>
    %42 = vector.shape_cast %41 : vector<256x4xf32> to vector<16x16x4xf32>
    %c0_63 = arith.constant 0 : index
    %c0_64 = arith.constant 0 : index
    %c0_65 = arith.constant 0 : index
    %c4 = arith.constant 4 : index
    %43 = vector.load %arg14[%c0_63, %c0_64, %c0_65, %c4] : memref<1x16x16x16xf32, #tpu.memory_space<vmem>>, vector<1x16x16x4xf32>
    %44 = vector.shape_cast %43 : vector<1x16x16x4xf32> to vector<16x16x4xf32>
    %45 = vector.shape_cast %42 : vector<16x16x4xf32> to vector<1x16x16x4xf32>
    tpu.vector_store %arg14[%c0_63, %c0_64, %c0_65, %c4], %45 {strides = array<i32>} : memref<1x16x16x16xf32, #tpu.memory_space<vmem>>, vector<1x16x16x4xf32>,
    %c0_66 = arith.constant 0 : index
    %c0_67 = arith.constant 0 : index
    %c0_68 = arith.constant 0 : index
    %c0_69 = arith.constant 0 : index
    %46 = vector.load %arg14[%c0_66, %c0_67, %c0_68, %c0_69] : memref<1x16x16x16xf32, #tpu.memory_space<vmem>>, vector<1x16x16x8xf32>
    %47 = vector.shape_cast %46 : vector<1x16x16x8xf32> to vector<16x16x8xf32>
    %c0_70 = arith.constant 0 : index
    %c0_71 = arith.constant 0 : index
    %48 = vector.load %arg6[%c0_70, %c0_71] : memref<1x8xf32, #tpu.memory_space<vmem>>, vector<1x8xf32>
    %49 = vector.shape_cast %48 : vector<1x8xf32> to vector<1x1x8xf32>
    %50 = vector.broadcast %49 : vector<1x1x8xf32> to vector<16x16x8xf32>
    %51 = arith.mulf %47, %50 : vector<16x16x8xf32>
    %c0_72 = arith.constant 0 : index
    %c0_73 = arith.constant 0 : index
    %52 = vector.load %arg7[%c0_72, %c0_73] : memref<1x8xf32, #tpu.memory_space<vmem>>, vector<1x8xf32>
    %53 = vector.shape_cast %52 : vector<1x8xf32> to vector<1x1x8xf32>
    %54 = vector.broadcast %53 : vector<1x1x8xf32> to vector<16x16x8xf32>
    %55 = arith.addf %51, %54 : vector<16x16x8xf32>
    %cst_74 = arith.constant 0.000000e+00 : f32
    %56 = vector.broadcast %cst_74 : f32 to vector<16x16x8xf32>
    %57 = arith.maximumf %55, %56 : vector<16x16x8xf32>
    %c1_75 = arith.constant 1 : index
    %c1_76 = arith.constant 1 : index
    %c0_77 = arith.constant 0 : index
    %58 = vector.load %arg15[%c1_75, %c1_76, %c0_77] : memref<18x18x16xf32, #tpu.memory_space<vmem>>, vector<16x16x8xf32>
    tpu.vector_store %arg15[%c1_75, %c1_76, %c0_77], %57 {strides = array<i32>} : memref<18x18x16xf32, #tpu.memory_space<vmem>>, vector<16x16x8xf32>,
    %c0_78 = arith.constant 0 : index
    %c0_79 = arith.constant 0 : index
    %c0_80 = arith.constant 0 : index
    %59 = vector.load %arg15[%c0_78, %c0_79, %c0_80] : memref<18x18x16xf32, #tpu.memory_space<vmem>>, vector<16x16x8xf32>
    %c0_81 = arith.constant 0 : index
    %c1_82 = arith.constant 1 : index
    %c0_83 = arith.constant 0 : index
    %60 = vector.load %arg15[%c0_81, %c1_82, %c0_83] : memref<18x18x16xf32, #tpu.memory_space<vmem>>, vector<16x16x8xf32>
    %c0_84 = arith.constant 0 : index
    %c2_85 = arith.constant 2 : index
    %c0_86 = arith.constant 0 : index
    %61 = vector.load %arg15[%c0_84, %c2_85, %c0_86] : memref<18x18x16xf32, #tpu.memory_space<vmem>>, vector<16x16x8xf32>
    %c1_87 = arith.constant 1 : index
    %c0_88 = arith.constant 0 : index
    %c0_89 = arith.constant 0 : index
    %62 = vector.load %arg15[%c1_87, %c0_88, %c0_89] : memref<18x18x16xf32, #tpu.memory_space<vmem>>, vector<16x16x8xf32>
    %c1_90 = arith.constant 1 : index
    %c1_91 = arith.constant 1 : index
    %c0_92 = arith.constant 0 : index
    %63 = vector.load %arg15[%c1_90, %c1_91, %c0_92] : memref<18x18x16xf32, #tpu.memory_space<vmem>>, vector<16x16x8xf32>
    %c1_93 = arith.constant 1 : index
    %c2_94 = arith.constant 2 : index
    %c0_95 = arith.constant 0 : index
    %64 = vector.load %arg15[%c1_93, %c2_94, %c0_95] : memref<18x18x16xf32, #tpu.memory_space<vmem>>, vector<16x16x8xf32>
    %c2_96 = arith.constant 2 : index
    %c0_97 = arith.constant 0 : index
    %c0_98 = arith.constant 0 : index
    %65 = vector.load %arg15[%c2_96, %c0_97, %c0_98] : memref<18x18x16xf32, #tpu.memory_space<vmem>>, vector<16x16x8xf32>
    %c2_99 = arith.constant 2 : index
    %c1_100 = arith.constant 1 : index
    %c0_101 = arith.constant 0 : index
    %66 = vector.load %arg15[%c2_99, %c1_100, %c0_101] : memref<18x18x16xf32, #tpu.memory_space<vmem>>, vector<16x16x8xf32>
    %c2_102 = arith.constant 2 : index
    %c2_103 = arith.constant 2 : index
    %c0_104 = arith.constant 0 : index
    %67 = vector.load %arg15[%c2_102, %c2_103, %c0_104] : memref<18x18x16xf32, #tpu.memory_space<vmem>>, vector<16x16x8xf32>
    %68 = tpu.concatenate %59, %60, %61, %62, %63, %64, %65, %66, %67 in 2 : vector<16x16x8xf32>, vector<16x16x8xf32>, vector<16x16x8xf32>, vector<16x16x8xf32>, vector<16x16x8xf32>, vector<16x16x8xf32>, vector<16x16x8xf32>, vector<16x16x8xf32>, vector<16x16x8xf32> -> vector<16x16x72xf32>
    %69 = vector.shape_cast %68 : vector<16x16x72xf32> to vector<256x72xf32>
    %c0_105 = arith.constant 0 : index
    %c0_106 = arith.constant 0 : index
    %70 = vector.load %arg8[%c0_105, %c0_106] : memref<72x4xf32, #tpu.memory_space<vmem>>, vector<72x4xf32>
    %cst_107 = arith.constant dense<0.000000e+00> : vector<256x4xf32>
    %71 = tpu.matmul %69, %70, %cst_107 {dimension_numbers = #tpu.dot_dimension_numbers<[1], [0], [0], [1], [0, 0, 1, 1], [], []>} : vector<256x72xf32>, vector<72x4xf32>, vector<256x4xf32> -> vector<256x4xf32>
    %c0_108 = arith.constant 0 : index
    %c0_109 = arith.constant 0 : index
    %72 = vector.load %arg9[%c0_108, %c0_109] : memref<1x4xf32, #tpu.memory_space<vmem>>, vector<1x4xf32>
    %73 = vector.broadcast %72 : vector<1x4xf32> to vector<256x4xf32>
    %74 = arith.addf %71, %73 : vector<256x4xf32>
    %75 = vector.shape_cast %74 : vector<256x4xf32> to vector<16x16x4xf32>
    %c0_110 = arith.constant 0 : index
    %c0_111 = arith.constant 0 : index
    %c0_112 = arith.constant 0 : index
    %c8 = arith.constant 8 : index
    %76 = vector.load %arg14[%c0_110, %c0_111, %c0_112, %c8] : memref<1x16x16x16xf32, #tpu.memory_space<vmem>>, vector<1x16x16x4xf32>
    %77 = vector.shape_cast %76 : vector<1x16x16x4xf32> to vector<16x16x4xf32>
    %78 = vector.shape_cast %75 : vector<16x16x4xf32> to vector<1x16x16x4xf32>
    tpu.vector_store %arg14[%c0_110, %c0_111, %c0_112, %c8], %78 {strides = array<i32>} : memref<1x16x16x16xf32, #tpu.memory_space<vmem>>, vector<1x16x16x4xf32>,
    %c0_113 = arith.constant 0 : index
    %c0_114 = arith.constant 0 : index
    %c0_115 = arith.constant 0 : index
    %c0_116 = arith.constant 0 : index
    %79 = vector.load %arg14[%c0_113, %c0_114, %c0_115, %c0_116] : memref<1x16x16x16xf32, #tpu.memory_space<vmem>>, vector<1x16x16x12xf32>
    %80 = vector.shape_cast %79 : vector<1x16x16x12xf32> to vector<16x16x12xf32>
    %c0_117 = arith.constant 0 : index
    %c0_118 = arith.constant 0 : index
    %81 = vector.load %arg10[%c0_117, %c0_118] : memref<1x12xf32, #tpu.memory_space<vmem>>, vector<1x12xf32>
    %82 = vector.shape_cast %81 : vector<1x12xf32> to vector<1x1x12xf32>
    %83 = vector.broadcast %82 : vector<1x1x12xf32> to vector<16x16x12xf32>
    %84 = arith.mulf %80, %83 : vector<16x16x12xf32>
    %c0_119 = arith.constant 0 : index
    %c0_120 = arith.constant 0 : index
    %85 = vector.load %arg11[%c0_119, %c0_120] : memref<1x12xf32, #tpu.memory_space<vmem>>, vector<1x12xf32>
    %86 = vector.shape_cast %85 : vector<1x12xf32> to vector<1x1x12xf32>
    %87 = vector.broadcast %86 : vector<1x1x12xf32> to vector<16x16x12xf32>
    %88 = arith.addf %84, %87 : vector<16x16x12xf32>
    %cst_121 = arith.constant 0.000000e+00 : f32
    %89 = vector.broadcast %cst_121 : f32 to vector<16x16x12xf32>
    %90 = arith.maximumf %88, %89 : vector<16x16x12xf32>
    %c1_122 = arith.constant 1 : index
    %c1_123 = arith.constant 1 : index
    %c0_124 = arith.constant 0 : index
    %91 = vector.load %arg15[%c1_122, %c1_123, %c0_124] : memref<18x18x16xf32, #tpu.memory_space<vmem>>, vector<16x16x12xf32>
    tpu.vector_store %arg15[%c1_122, %c1_123, %c0_124], %90 {strides = array<i32>} : memref<18x18x16xf32, #tpu.memory_space<vmem>>, vector<16x16x12xf32>,
    %c0_125 = arith.constant 0 : index
    %c0_126 = arith.constant 0 : index
    %c0_127 = arith.constant 0 : index
    %92 = vector.load %arg15[%c0_125, %c0_126, %c0_127] : memref<18x18x16xf32, #tpu.memory_space<vmem>>, vector<16x16x12xf32>
    %c0_128 = arith.constant 0 : index
    %c1_129 = arith.constant 1 : index
    %c0_130 = arith.constant 0 : index
    %93 = vector.load %arg15[%c0_128, %c1_129, %c0_130] : memref<18x18x16xf32, #tpu.memory_space<vmem>>, vector<16x16x12xf32>
    %c0_131 = arith.constant 0 : index
    %c2_132 = arith.constant 2 : index
    %c0_133 = arith.constant 0 : index
    %94 = vector.load %arg15[%c0_131, %c2_132, %c0_133] : memref<18x18x16xf32, #tpu.memory_space<vmem>>, vector<16x16x12xf32>
    %c1_134 = arith.constant 1 : index
    %c0_135 = arith.constant 0 : index
    %c0_136 = arith.constant 0 : index
    %95 = vector.load %arg15[%c1_134, %c0_135, %c0_136] : memref<18x18x16xf32, #tpu.memory_space<vmem>>, vector<16x16x12xf32>
    %c1_137 = arith.constant 1 : index
    %c1_138 = arith.constant 1 : index
    %c0_139 = arith.constant 0 : index
    %96 = vector.load %arg15[%c1_137, %c1_138, %c0_139] : memref<18x18x16xf32, #tpu.memory_space<vmem>>, vector<16x16x12xf32>
    %c1_140 = arith.constant 1 : index
    %c2_141 = arith.constant 2 : index
    %c0_142 = arith.constant 0 : index
    %97 = vector.load %arg15[%c1_140, %c2_141, %c0_142] : memref<18x18x16xf32, #tpu.memory_space<vmem>>, vector<16x16x12xf32>
    %c2_143 = arith.constant 2 : index
    %c0_144 = arith.constant 0 : index
    %c0_145 = arith.constant 0 : index
    %98 = vector.load %arg15[%c2_143, %c0_144, %c0_145] : memref<18x18x16xf32, #tpu.memory_space<vmem>>, vector<16x16x12xf32>
    %c2_146 = arith.constant 2 : index
    %c1_147 = arith.constant 1 : index
    %c0_148 = arith.constant 0 : index
    %99 = vector.load %arg15[%c2_146, %c1_147, %c0_148] : memref<18x18x16xf32, #tpu.memory_space<vmem>>, vector<16x16x12xf32>
    %c2_149 = arith.constant 2 : index
    %c2_150 = arith.constant 2 : index
    %c0_151 = arith.constant 0 : index
    %100 = vector.load %arg15[%c2_149, %c2_150, %c0_151] : memref<18x18x16xf32, #tpu.memory_space<vmem>>, vector<16x16x12xf32>
    %101 = tpu.concatenate %92, %93, %94, %95, %96, %97, %98, %99, %100 in 2 : vector<16x16x12xf32>, vector<16x16x12xf32>, vector<16x16x12xf32>, vector<16x16x12xf32>, vector<16x16x12xf32>, vector<16x16x12xf32>, vector<16x16x12xf32>, vector<16x16x12xf32>, vector<16x16x12xf32> -> vector<16x16x108xf32>
    %102 = vector.shape_cast %101 : vector<16x16x108xf32> to vector<256x108xf32>
    %c0_152 = arith.constant 0 : index
    %c0_153 = arith.constant 0 : index
    %103 = vector.load %arg12[%c0_152, %c0_153] : memref<108x4xf32, #tpu.memory_space<vmem>>, vector<108x4xf32>
    %cst_154 = arith.constant dense<0.000000e+00> : vector<256x4xf32>
    %104 = tpu.matmul %102, %103, %cst_154 {dimension_numbers = #tpu.dot_dimension_numbers<[1], [0], [0], [1], [0, 0, 1, 1], [], []>} : vector<256x108xf32>, vector<108x4xf32>, vector<256x4xf32> -> vector<256x4xf32>
    %c0_155 = arith.constant 0 : index
    %c0_156 = arith.constant 0 : index
    %105 = vector.load %arg13[%c0_155, %c0_156] : memref<1x4xf32, #tpu.memory_space<vmem>>, vector<1x4xf32>
    %106 = vector.broadcast %105 : vector<1x4xf32> to vector<256x4xf32>
    %107 = arith.addf %104, %106 : vector<256x4xf32>
    %108 = vector.shape_cast %107 : vector<256x4xf32> to vector<16x16x4xf32>
    %c0_157 = arith.constant 0 : index
    %c0_158 = arith.constant 0 : index
    %c0_159 = arith.constant 0 : index
    %c12 = arith.constant 12 : index
    %109 = vector.load %arg14[%c0_157, %c0_158, %c0_159, %c12] : memref<1x16x16x16xf32, #tpu.memory_space<vmem>>, vector<1x16x16x4xf32>
    %110 = vector.shape_cast %109 : vector<1x16x16x4xf32> to vector<16x16x4xf32>
    %111 = vector.shape_cast %108 : vector<16x16x4xf32> to vector<1x16x16x4xf32>
    tpu.vector_store %arg14[%c0_157, %c0_158, %c0_159, %c12], %111 {strides = array<i32>} : memref<1x16x16x16xf32, #tpu.memory_space<vmem>>, vector<1x16x16x4xf32>,
    return
  }
  func.func @transform_0(%arg0: i32) -> (i32, i32, i32, i32) {
    %c0_i32 = arith.constant 0 : i32
    %c0_i32_0 = arith.constant 0 : i32
    %c0_i32_1 = arith.constant 0 : i32
    %c0_i32_2 = arith.constant 0 : i32
    return %arg0, %c0_i32, %c0_i32_0, %c0_i32_1 : i32, i32, i32, i32
  }
  func.func @transform_1(%arg0: i32) -> (i32, i32) {
    %c0_i32 = arith.constant 0 : i32
    %c0_i32_0 = arith.constant 0 : i32
    %c0_i32_1 = arith.constant 0 : i32
    return %c0_i32, %c0_i32_0 : i32, i32
  }
  func.func @transform_2(%arg0: i32) -> (i32, i32) {
    %c0_i32 = arith.constant 0 : i32
    %c0_i32_0 = arith.constant 0 : i32
    %c0_i32_1 = arith.constant 0 : i32
    return %c0_i32, %c0_i32_0 : i32, i32
  }
  func.func @transform_3(%arg0: i32) -> (i32, i32) {
    %c0_i32 = arith.constant 0 : i32
    %c0_i32_0 = arith.constant 0 : i32
    %c0_i32_1 = arith.constant 0 : i32
    return %c0_i32, %c0_i32_0 : i32, i32
  }
  func.func @transform_4(%arg0: i32) -> (i32, i32) {
    %c0_i32 = arith.constant 0 : i32
    %c0_i32_0 = arith.constant 0 : i32
    %c0_i32_1 = arith.constant 0 : i32
    return %c0_i32, %c0_i32_0 : i32, i32
  }
  func.func @transform_5(%arg0: i32) -> (i32, i32) {
    %c0_i32 = arith.constant 0 : i32
    %c0_i32_0 = arith.constant 0 : i32
    %c0_i32_1 = arith.constant 0 : i32
    return %c0_i32, %c0_i32_0 : i32, i32
  }
  func.func @transform_6(%arg0: i32) -> (i32, i32) {
    %c0_i32 = arith.constant 0 : i32
    %c0_i32_0 = arith.constant 0 : i32
    %c0_i32_1 = arith.constant 0 : i32
    return %c0_i32, %c0_i32_0 : i32, i32
  }
  func.func @transform_7(%arg0: i32) -> (i32, i32) {
    %c0_i32 = arith.constant 0 : i32
    %c0_i32_0 = arith.constant 0 : i32
    %c0_i32_1 = arith.constant 0 : i32
    return %c0_i32, %c0_i32_0 : i32, i32
  }
  func.func @transform_8(%arg0: i32) -> (i32, i32) {
    %c0_i32 = arith.constant 0 : i32
    %c0_i32_0 = arith.constant 0 : i32
    %c0_i32_1 = arith.constant 0 : i32
    return %c0_i32, %c0_i32_0 : i32, i32
  }
  func.func @transform_9(%arg0: i32) -> (i32, i32) {
    %c0_i32 = arith.constant 0 : i32
    %c0_i32_0 = arith.constant 0 : i32
    %c0_i32_1 = arith.constant 0 : i32
    return %c0_i32, %c0_i32_0 : i32, i32
  }
  func.func @transform_10(%arg0: i32) -> (i32, i32) {
    %c0_i32 = arith.constant 0 : i32
    %c0_i32_0 = arith.constant 0 : i32
    %c0_i32_1 = arith.constant 0 : i32
    return %c0_i32, %c0_i32_0 : i32, i32
  }
  func.func @transform_11(%arg0: i32) -> (i32, i32) {
    %c0_i32 = arith.constant 0 : i32
    %c0_i32_0 = arith.constant 0 : i32
    %c0_i32_1 = arith.constant 0 : i32
    return %c0_i32, %c0_i32_0 : i32, i32
  }
  func.func @transform_12(%arg0: i32) -> (i32, i32) {
    %c0_i32 = arith.constant 0 : i32
    %c0_i32_0 = arith.constant 0 : i32
    %c0_i32_1 = arith.constant 0 : i32
    return %c0_i32, %c0_i32_0 : i32, i32
  }
  func.func @transform_13(%arg0: i32) -> (i32, i32, i32, i32) {
    %c0_i32 = arith.constant 0 : i32
    %c0_i32_0 = arith.constant 0 : i32
    %c0_i32_1 = arith.constant 0 : i32
    %c0_i32_2 = arith.constant 0 : i32
    return %arg0, %c0_i32, %c0_i32_0, %c0_i32_1 : i32, i32, i32, i32
  }
}

</mosaic_0001>

<llo_original>
// kernel: dense_block_forward.1
$region0: #{dense_block_forward.1}
  #allocation0 [shape = 'u32[]', space=smem, size = 0x4, offset = 0x4, fixed_abs, tag = 'smem constant byte address 0x4 - core index']
  #allocation1 [shape = 'u32[144,128]{1,0:T(1,128)}', space=vmem, size = 0x12000, scoped, tag = 'internal scratch']
  #allocation2 [shape = 'f32[18,18,16]{2,1,0:T(8,128)}', space=vmem, size = 0x36000, scoped, tag = 'scratch operand']
  %s0 = inlined_call_operand.vmem [shape: f32[2,16,16,4], index: 0, kind: input, shape index: {}]
  %s1 = inlined_call_operand.vmem [shape: f32[1,4], index: 1, kind: input, shape index: {}]
  %s2 = inlined_call_operand.vmem [shape: f32[1,4], index: 2, kind: input, shape index: {}]
  %s3 = inlined_call_operand.vmem [shape: f32[36,4], index: 3, kind: input, shape index: {}]
  %s4 = inlined_call_operand.vmem [shape: f32[1,4], index: 4, kind: input, shape index: {}]
  %s5 = inlined_call_operand.vmem [shape: f32[1,8], index: 5, kind: input, shape index: {}]
  %s6 = inlined_call_operand.vmem [shape: f32[1,8], index: 6, kind: input, shape index: {}]
  %s7 = inlined_call_operand.vmem [shape: f32[72,4], index: 7, kind: input, shape index: {}]
  %s8 = inlined_call_operand.vmem [shape: f32[1,4], index: 8, kind: input, shape index: {}]
  %s9 = inlined_call_operand.vmem [shape: f32[1,12], index: 9, kind: input, shape index: {}]
  %s10 = inlined_call_operand.vmem [shape: f32[1,12], index: 10, kind: input, shape index: {}]
  %s11 = inlined_call_operand.vmem [shape: f32[108,4], index: 11, kind: input, shape index: {}]
  %s12 = inlined_call_operand.vmem [shape: f32[1,4], index: 12, kind: input, shape index: {}]
  %s13 = inlined_call_operand.vmem [shape: f32[2,16,16,16], index: 13, kind: output, shape index: {}]
  %s14 = sld [smem:[#allocation0]]
  $region85: #{dense_block_forward.1} parent=0
    _
  %s16 = ssub.s32 1, %s14
  %s17 = scalar_select 0, %s16, %s14
  loop: start=0, step=1, limit=4
  $region2: #{dense_block_forward.1} parent=0 // loop_pre_header
    _
  $region3: #{dense_block_forward.1} parent=0 // loop_header
    %s19 = sphi 0, %s23
    %p20 = scmp.ge.s32.totalorder %s19, 4
    %s29 = sphi 0, %s31
    %s32 = sphi 0, %s29
    %s33 = sphi 0, %s32
    %s49 = sphi 0, %s33
    %s53 = sphi 0, %s53
    %s55 = sphi 0, %s53
    %s56 = sphi 0, %s55
    %s70 = sphi 0, %s56
    %s74 = sphi 0, %s74
    %s76 = sphi 0, %s74
    %s77 = sphi 0, %s76
    %s91 = sphi 0, %s77
    %s95 = sphi 0, %s95
    %s97 = sphi 0, %s95
    %s98 = sphi 0, %s97
    %s112 = sphi 0, %s98
    %s116 = sphi 0, %s116
    %s118 = sphi 0, %s116
    %s119 = sphi 0, %s118
    %s133 = sphi 0, %s119
    %s137 = sphi 0, %s137
    %s139 = sphi 0, %s137
    %s140 = sphi 0, %s139
    %s154 = sphi 0, %s140
    %s158 = sphi 0, %s158
    %s160 = sphi 0, %s158
    %s161 = sphi 0, %s160
    %s175 = sphi 0, %s161
    %s179 = sphi 0, %s179
    %s181 = sphi 0, %s179
    %s182 = sphi 0, %s181
    %s196 = sphi 0, %s182
    %s200 = sphi 0, %s200
    %s202 = sphi 0, %s200
    %s203 = sphi 0, %s202
    %s217 = sphi 0, %s203
    %s221 = sphi 0, %s221
    %s223 = sphi 0, %s221
    %s224 = sphi 0, %s223
    %s238 = sphi 0, %s224
    %s242 = sphi 0, %s242
    %s244 = sphi 0, %s242
    %s245 = sphi 0, %s244
    %s259 = sphi 0, %s245
    %s263 = sphi 0, %s263
    %s265 = sphi 0, %s263
    %s266 = sphi 0, %s265
    %s280 = sphi 0, %s266
    %s284 = sphi 0, %s284
    %s286 = sphi 0, %s284
    %s287 = sphi 0, %s286
    %s301 = sphi 0, %s287
    %s307 = sphi 0, %s309
    %s310 = sphi 0, %s307
    %s311 = sphi 0, %s310
    %s327 = sphi 0, %s311
  $region4: #{dense_block_forward.1} parent=0 // loop_header_branch
    %22 = sbr.rel (%p20) target = $region8
  $region5: #{dense_block_forward.1} parent=0 // loop_body
    %s24 = ssub.s32 %s19, 1
    %s25 = ssub.s32 %s19, 2
    %s26 = sadd.s32 %s19, 1
    %s27 = ssub.s32 %s19, %s26
    %p28 = scmp.eq.s32.totalorder %s27, 0
    %s30 = sadd.s32 %s29, 1
    %s31 = scalar_select %p28, %s29, %s30
    %p34 = pneg %p28
    %p35 = scmp.eq.s32.totalorder %s19, 1
    %p36 = por %p34, %p35
    %p37 = scmp.ne.s32.totalorder %s29, %s32
    %p38 = scmp.eq.s32.totalorder %s19, 0
    %p39 = por %p37, %p38
    %p40 = scmp.ne.s32.totalorder %s29, %s32
    %p41 = scmp.eq.s32.totalorder %s24, 1
    %p42 = por %p40, %p41
    %p43 = scmp.ne.s32.totalorder %s32, %s33
    %p44 = scmp.eq.s32.totalorder %s24, 0
    %p45 = por %p43, %p44
    %p46 = scmp.ne.s32.totalorder %s32, %s33
    %p47 = scmp.eq.s32.totalorder %s25, 1
    %p48 = por %p46, %p47
    %p50 = scmp.ne.s32.totalorder %s33, %s49
    %p51 = scmp.eq.s32.totalorder %s25, 0
    %p52 = por %p50, %p51
    %s54 = sadd.s32 %s53, 1
    %p57 = scmp.eq.s32.totalorder %s19, 1
    %p58 = scmp.ne.s32.totalorder %s53, %s55
    %p59 = scmp.eq.s32.totalorder %s19, 0
    %p60 = por %p58, %p59
    %p61 = scmp.ne.s32.totalorder %s53, %s55
    %p62 = scmp.eq.s32.totalorder %s24, 1
    %p63 = por %p61, %p62
    %p64 = scmp.ne.s32.totalorder %s55, %s56
    %p65 = scmp.eq.s32.totalorder %s24, 0
    %p66 = por %p64, %p65
    %p67 = scmp.ne.s32.totalorder %s55, %s56
    %p68 = scmp.eq.s32.totalorder %s25, 1
    %p69 = por %p67, %p68
    %p71 = scmp.ne.s32.totalorder %s56, %s70
    %p72 = scmp.eq.s32.totalorder %s25, 0
    %p73 = por %p71, %p72
    %s75 = sadd.s32 %s74, 1
    %p78 = scmp.eq.s32.totalorder %s19, 1
    %p79 = scmp.ne.s32.totalorder %s74, %s76
    %p80 = scmp.eq.s32.totalorder %s19, 0
    %p81 = por %p79, %p80
    %p82 = scmp.ne.s32.totalorder %s74, %s76
    %p83 = scmp.eq.s32.totalorder %s24, 1
    %p84 = por %p82, %p83
    %p85 = scmp.ne.s32.totalorder %s76, %s77
    %p86 = scmp.eq.s32.totalorder %s24, 0
    %p87 = por %p85, %p86
    %p88 = scmp.ne.s32.totalorder %s76, %s77
    %p89 = scmp.eq.s32.totalorder %s25, 1
    %p90 = por %p88, %p89
    %p92 = scmp.ne.s32.totalorder %s77, %s91
    %p93 = scmp.eq.s32.totalorder %s25, 0
    %p94 = por %p92, %p93
    %s96 = sadd.s32 %s95, 1
    %p99 = scmp.eq.s32.totalorder %s19, 1
    %p100 = scmp.ne.s32.totalorder %s95, %s97
    %p101 = scmp.eq.s32.totalorder %s19, 0
    %p102 = por %p100, %p101
    %p103 = scmp.ne.s32.totalorder %s95, %s97
    %p104 = scmp.eq.s32.totalorder %s24, 1
    %p105 = por %p103, %p104
    %p106 = scmp.ne.s32.totalorder %s97, %s98
    %p107 = scmp.eq.s32.totalorder %s24, 0
    %p108 = por %p106, %p107
    %p109 = scmp.ne.s32.totalorder %s97, %s98
    %p110 = scmp.eq.s32.totalorder %s25, 1
    %p111 = por %p109, %p110
    %p113 = scmp.ne.s32.totalorder %s98, %s112
    %p114 = scmp.eq.s32.totalorder %s25, 0
    %p115 = por %p113, %p114
    %s117 = sadd.s32 %s116, 1
    %p120 = scmp.eq.s32.totalorder %s19, 1
    %p121 = scmp.ne.s32.totalorder %s116, %s118
    %p122 = scmp.eq.s32.totalorder %s19, 0
    %p123 = por %p121, %p122
    %p124 = scmp.ne.s32.totalorder %s116, %s118
    %p125 = scmp.eq.s32.totalorder %s24, 1
    %p126 = por %p124, %p125
    %p127 = scmp.ne.s32.totalorder %s118, %s119
    %p128 = scmp.eq.s32.totalorder %s24, 0
    %p129 = por %p127, %p128
    %p130 = scmp.ne.s32.totalorder %s118, %s119
    %p131 = scmp.eq.s32.totalorder %s25, 1
    %p132 = por %p130, %p131
    %p134 = scmp.ne.s32.totalorder %s119, %s133
    %p135 = scmp.eq.s32.totalorder %s25, 0
    %p136 = por %p134, %p135
    %s138 = sadd.s32 %s137, 1
    %p141 = scmp.eq.s32.totalorder %s19, 1
    %p142 = scmp.ne.s32.totalorder %s137, %s139
    %p143 = scmp.eq.s32.totalorder %s19, 0
    %p144 = por %p142, %p143
    %p145 = scmp.ne.s32.totalorder %s137, %s139
    %p146 = scmp.eq.s32.totalorder %s24, 1
    %p147 = por %p145, %p146
    %p148 = scmp.ne.s32.totalorder %s139, %s140
    %p149 = scmp.eq.s32.totalorder %s24, 0
    %p150 = por %p148, %p149
    %p151 = scmp.ne.s32.totalorder %s139, %s140
    %p152 = scmp.eq.s32.totalorder %s25, 1
    %p153 = por %p151, %p152
    %p155 = scmp.ne.s32.totalorder %s140, %s154
    %p156 = scmp.eq.s32.totalorder %s25, 0
    %p157 = por %p155, %p156
    %s159 = sadd.s32 %s158, 1
    %p162 = scmp.eq.s32.totalorder %s19, 1
    %p163 = scmp.ne.s32.totalorder %s158, %s160
    %p164 = scmp.eq.s32.totalorder %s19, 0
    %p165 = por %p163, %p164
    %p166 = scmp.ne.s32.totalorder %s158, %s160
    %p167 = scmp.eq.s32.totalorder %s24, 1
    %p168 = por %p166, %p167
    %p169 = scmp.ne.s32.totalorder %s160, %s161
    %p170 = scmp.eq.s32.totalorder %s24, 0
    %p171 = por %p169, %p170
    %p172 = scmp.ne.s32.totalorder %s160, %s161
    %p173 = scmp.eq.s32.totalorder %s25, 1
    %p174 = por %p172, %p173
    %p176 = scmp.ne.s32.totalorder %s161, %s175
    %p177 = scmp.eq.s32.totalorder %s25, 0
    %p178 = por %p176, %p177
    %s180 = sadd.s32 %s179, 1
    %p183 = scmp.eq.s32.totalorder %s19, 1
    %p184 = scmp.ne.s32.totalorder %s179, %s181
    %p185 = scmp.eq.s32.totalorder %s19, 0
    %p186 = por %p184, %p185
    %p187 = scmp.ne.s32.totalorder %s179, %s181
    %p188 = scmp.eq.s32.totalorder %s24, 1
    %p189 = por %p187, %p188
    %p190 = scmp.ne.s32.totalorder %s181, %s182
    %p191 = scmp.eq.s32.totalorder %s24, 0
    %p192 = por %p190, %p191
    %p193 = scmp.ne.s32.totalorder %s181, %s182
    %p194 = scmp.eq.s32.totalorder %s25, 1
    %p195 = por %p193, %p194
    %p197 = scmp.ne.s32.totalorder %s182, %s196
    %p198 = scmp.eq.s32.totalorder %s25, 0
    %p199 = por %p197, %p198
    %s201 = sadd.s32 %s200, 1
    %p204 = scmp.eq.s32.totalorder %s19, 1
    %p205 = scmp.ne.s32.totalorder %s200, %s202
    %p206 = scmp.eq.s32.totalorder %s19, 0
    %p207 = por %p205, %p206
    %p208 = scmp.ne.s32.totalorder %s200, %s202
    %p209 = scmp.eq.s32.totalorder %s24, 1
    %p210 = por %p208, %p209
    %p211 = scmp.ne.s32.totalorder %s202, %s203
    %p212 = scmp.eq.s32.totalorder %s24, 0
    %p213 = por %p211, %p212
    %p214 = scmp.ne.s32.totalorder %s202, %s203
    %p215 = scmp.eq.s32.totalorder %s25, 1
    %p216 = por %p214, %p215
    %p218 = scmp.ne.s32.totalorder %s203, %s217
    %p219 = scmp.eq.s32.totalorder %s25, 0
    %p220 = por %p218, %p219
    %s222 = sadd.s32 %s221, 1
    %p225 = scmp.eq.s32.totalorder %s19, 1
    %p226 = scmp.ne.s32.totalorder %s221, %s223
    %p227 = scmp.eq.s32.totalorder %s19, 0
    %p228 = por %p226, %p227
    %p229 = scmp.ne.s32.totalorder %s221, %s223
    %p230 = scmp.eq.s32.totalorder %s24, 1
    %p231 = por %p229, %p230
    %p232 = scmp.ne.s32.totalorder %s223, %s224
    %p233 = scmp.eq.s32.totalorder %s24, 0
    %p234 = por %p232, %p233
    %p235 = scmp.ne.s32.totalorder %s223, %s224
    %p236 = scmp.eq.s32.totalorder %s25, 1
    %p237 = por %p235, %p236
    %p239 = scmp.ne.s32.totalorder %s224, %s238
    %p240 = scmp.eq.s32.totalorder %s25, 0
    %p241 = por %p239, %p240
    %s243 = sadd.s32 %s242, 1
    %p246 = scmp.eq.s32.totalorder %s19, 1
    %p247 = scmp.ne.s32.totalorder %s242, %s244
    %p248 = scmp.eq.s32.totalorder %s19, 0
    %p249 = por %p247, %p248
    %p250 = scmp.ne.s32.totalorder %s242, %s244
    %p251 = scmp.eq.s32.totalorder %s24, 1
    %p252 = por %p250, %p251
    %p253 = scmp.ne.s32.totalorder %s244, %s245
    %p254 = scmp.eq.s32.totalorder %s24, 0
    %p255 = por %p253, %p254
    %p256 = scmp.ne.s32.totalorder %s244, %s245
    %p257 = scmp.eq.s32.totalorder %s25, 1
    %p258 = por %p256, %p257
    %p260 = scmp.ne.s32.totalorder %s245, %s259
    %p261 = scmp.eq.s32.totalorder %s25, 0
    %p262 = por %p260, %p261
    %s264 = sadd.s32 %s263, 1
    %p267 = scmp.eq.s32.totalorder %s19, 1
    %p268 = scmp.ne.s32.totalorder %s263, %s265
    %p269 = scmp.eq.s32.totalorder %s19, 0
    %p270 = por %p268, %p269
    %p271 = scmp.ne.s32.totalorder %s263, %s265
    %p272 = scmp.eq.s32.totalorder %s24, 1
    %p273 = por %p271, %p272
    %p274 = scmp.ne.s32.totalorder %s265, %s266
    %p275 = scmp.eq.s32.totalorder %s24, 0
    %p276 = por %p274, %p275
    %p277 = scmp.ne.s32.totalorder %s265, %s266
    %p278 = scmp.eq.s32.totalorder %s25, 1
    %p279 = por %p277, %p278
    %p281 = scmp.ne.s32.totalorder %s266, %s280
    %p282 = scmp.eq.s32.totalorder %s25, 0
    %p283 = por %p281, %p282
    %s285 = sadd.s32 %s284, 1
    %p288 = scmp.eq.s32.totalorder %s19, 1
    %p289 = scmp.ne.s32.totalorder %s284, %s286
    %p290 = scmp.eq.s32.totalorder %s19, 0
    %p291 = por %p289, %p290
    %p292 = scmp.ne.s32.totalorder %s284, %s286
    %p293 = scmp.eq.s32.totalorder %s24, 1
    %p294 = por %p292, %p293
    %p295 = scmp.ne.s32.totalorder %s286, %s287
    %p296 = scmp.eq.s32.totalorder %s24, 0
    %p297 = por %p295, %p296
    %p298 = scmp.ne.s32.totalorder %s286, %s287
    %p299 = scmp.eq.s32.totalorder %s25, 1
    %p300 = por %p298, %p299
    %p302 = scmp.ne.s32.totalorder %s287, %s301
    %p303 = scmp.eq.s32.totalorder %s25, 0
    %p304 = por %p302, %p303
    %s305 = ssub.s32 %s19, %s26
    %p306 = scmp.eq.s32.totalorder %s305, 0
    %s308 = sadd.s32 %s307, 1
    %s309 = scalar_select %p306, %s307, %s308
    %p312 = pneg %p306
    %p313 = scmp.eq.s32.totalorder %s19, 1
    %p314 = por %p312, %p313
    %p315 = scmp.ne.s32.totalorder %s307, %s310
    %p316 = scmp.eq.s32.totalorder %s19, 0
    %p317 = por %p315, %p316
    %p318 = scmp.ne.s32.totalorder %s307, %s310
    %p319 = scmp.eq.s32.totalorder %s24, 1
    %p320 = por %p318, %p319
    %p321 = scmp.ne.s32.totalorder %s310, %s311
    %p322 = scmp.eq.s32.totalorder %s24, 0
    %p323 = por %p321, %p322
    %p324 = scmp.ne.s32.totalorder %s310, %s311
    %p325 = scmp.eq.s32.totalorder %s25, 1
    %p326 = por %p324, %p325
    %p328 = scmp.ne.s32.totalorder %s311, %s327
    %p329 = scmp.eq.s32.totalorder %s25, 0
    %p330 = por %p328, %p329
    %p331 = scmp.le.s32.totalorder 1, %s19
    %p332 = scmp.lt.s32.totalorder %s19, 3
    %p333 = pnand %p331, %p332
    %p334 = pneg %p333
    // Predicated region
    $region9: #{dense_block_forward.1} parent=5 // pred_check
      _
    $region10: #{dense_block_forward.1} parent=5 // pred_check_branch
      %336 = sbr.rel (%p333) target = $region12
    $region11: #{dense_block_forward.1} parent=5 // pred_region
      %s337 = ssub.s32 %s19, 1
      // Predicated region
      $region13: #{dense_block_forward.1} parent=11 // pred_check
        %p338 = pneg %p66
      $region14: #{dense_block_forward.1} parent=11 // pred_check_branch
        %340 = sbr.rel (%p338) target = $region16
      $region15: #{dense_block_forward.1} parent=11 // pred_region
        _
      $region16: #{dense_block_forward.1} parent=11 // pred_fallthru
        _
      // Predicated region
      $region17: #{dense_block_forward.1} parent=11 // pred_check
        %p341 = pneg %p87
      $region18: #{dense_block_forward.1} parent=11 // pred_check_branch
        %343 = sbr.rel (%p341) target = $region20
      $region19: #{dense_block_forward.1} parent=11 // pred_region
        _
      $region20: #{dense_block_forward.1} parent=11 // pred_fallthru
        _
      // Predicated region
      $region21: #{dense_block_forward.1} parent=11 // pred_check
        %p344 = pneg %p108
      $region22: #{dense_block_forward.1} parent=11 // pred_check_branch
        %346 = sbr.rel (%p344) target = $region24
      $region23: #{dense_block_forward.1} parent=11 // pred_region
        _
      $region24: #{dense_block_forward.1} parent=11 // pred_fallthru
        _
      // Predicated region
      $region25: #{dense_block_forward.1} parent=11 // pred_check
        %p347 = pneg %p129
      $region26: #{dense_block_forward.1} parent=11 // pred_check_branch
        %349 = sbr.rel (%p347) target = $region28
      $region27: #{dense_block_forward.1} parent=11 // pred_region
        _
      $region28: #{dense_block_forward.1} parent=11 // pred_fallthru
        _
      // Predicated region
      $region29: #{dense_block_forward.1} parent=11 // pred_check
        %p350 = pneg %p150
      $region30: #{dense_block_forward.1} parent=11 // pred_check_branch
        %352 = sbr.rel (%p350) target = $region32
      $region31: #{dense_block_forward.1} parent=11 // pred_region
        _
      $region32: #{dense_block_forward.1} parent=11 // pred_fallthru
        _
      // Predicated region
      $region33: #{dense_block_forward.1} parent=11 // pred_check
        %p353 = pneg %p171
      $region34: #{dense_block_forward.1} parent=11 // pred_check_branch
        %355 = sbr.rel (%p353) target = $region36
      $region35: #{dense_block_forward.1} parent=11 // pred_region
        _
      $region36: #{dense_block_forward.1} parent=11 // pred_fallthru
        _
      // Predicated region
      $region37: #{dense_block_forward.1} parent=11 // pred_check
        %p356 = pneg %p192
      $region38: #{dense_block_forward.1} parent=11 // pred_check_branch
        %358 = sbr.rel (%p356) target = $region40
      $region39: #{dense_block_forward.1} parent=11 // pred_region
        _
      $region40: #{dense_block_forward.1} parent=11 // pred_fallthru
        _
      // Predicated region
      $region41: #{dense_block_forward.1} parent=11 // pred_check
        %p359 = pneg %p213
      $region42: #{dense_block_forward.1} parent=11 // pred_check_branch
        %361 = sbr.rel (%p359) target = $region44
      $region43: #{dense_block_forward.1} parent=11 // pred_region
        _
      $region44: #{dense_block_forward.1} parent=11 // pred_fallthru
        _
      // Predicated region
      $region45: #{dense_block_forward.1} parent=11 // pred_check
        %p362 = pneg %p234
      $region46: #{dense_block_forward.1} parent=11 // pred_check_branch
        %364 = sbr.rel (%p362) target = $region48
      $region47: #{dense_block_forward.1} parent=11 // pred_region
        _
      $region48: #{dense_block_forward.1} parent=11 // pred_fallthru
        _
      // Predicated region
      $region49: #{dense_block_forward.1} parent=11 // pred_check
        %p365 = pneg %p255
      $region50: #{dense_block_forward.1} parent=11 // pred_check_branch
        %367 = sbr.rel (%p365) target = $region52
      $region51: #{dense_block_forward.1} parent=11 // pred_region
        _
      $region52: #{dense_block_forward.1} parent=11 // pred_fallthru
        _
      // Predicated region
      $region53: #{dense_block_forward.1} parent=11 // pred_check
        %p368 = pneg %p276
      $region54: #{dense_block_forward.1} parent=11 // pred_check_branch
        %370 = sbr.rel (%p368) target = $region56
      $region55: #{dense_block_forward.1} parent=11 // pred_region
        _
      $region56: #{dense_block_forward.1} parent=11 // pred_fallthru
        _
      // Predicated region
      $region57: #{dense_block_forward.1} parent=11 // pred_check
        %p371 = pneg %p297
      $region58: #{dense_block_forward.1} parent=11 // pred_check_branch
        %373 = sbr.rel (%p371) target = $region60
      $region59: #{dense_block_forward.1} parent=11 // pred_region
        _
      $region60: #{dense_block_forward.1} parent=11 // pred_fallthru
        _
    $region12: #{dense_block_forward.1} parent=5 // pred_fallthru
      _
    %p374 = scmp.lt.s32.totalorder %s19, 2
    // Predicated region
    $region61: #{dense_block_forward.1} parent=5 // pred_check
      %p375 = pneg %p374
    $region62: #{dense_block_forward.1} parent=5 // pred_check_branch
      %377 = sbr.rel (%p375) target = $region64
    $region63: #{dense_block_forward.1} parent=5 // pred_region
      // Predicated region
      $region65: #{dense_block_forward.1} parent=63 // pred_check
        %p378 = pneg %p39
      $region66: #{dense_block_forward.1} parent=63 // pred_check_branch
        %380 = sbr.rel (%p378) target = $region68
      $region67: #{dense_block_forward.1} parent=63 // pred_region
        %p381 = scmp.lt.s32.totalorder %s19, 1
        %s382 = scalar_select %p381, %s19, 1
        %s383 = smul.addr %s382, 32
        %s384 = smul.addr %s383, 8
        %s385 = scalar_lea.vmem %s0, %s384
      $region68: #{dense_block_forward.1} parent=63 // pred_fallthru
        _
    $region64: #{dense_block_forward.1} parent=5 // pred_fallthru
      _
    %p386 = scmp.le.s32.totalorder 1, %s19
    %p387 = scmp.lt.s32.totalorder %s19, 3
    %p388 = pnand %p386, %p387
    %p389 = pneg %p388
    // Predicated region
    $region69: #{dense_block_forward.1} parent=5 // pred_check
      _
    $region70: #{dense_block_forward.1} parent=5 // pred_check_branch
      %391 = sbr.rel (%p388) target = $region72
    $region71: #{dense_block_forward.1} parent=5 // pred_region
      %s392 = ssub.s32 %s19, 1
      %p393 = scmp.lt.s32.totalorder %s24, 1
      %s394 = scalar_select %p393, %s24, 1
      %s395 = smul.addr %s394, 32
      %s396 = smul.addr %s395, 8
      %s397 = scalar_lea.vmem %s0, %s396
      %p398 = pneg %p45
      %p399 = pneg %p42
      %p400 = pneg %p66
      %p401 = pneg %p63
      %p402 = pneg %p87
      %p403 = pneg %p84
      %p404 = pneg %p108
      %p405 = pneg %p105
      %p406 = pneg %p129
      %p407 = pneg %p126
      %p408 = pneg %p150
      %p409 = pneg %p147
      %p410 = pneg %p171
      %p411 = pneg %p168
      %p412 = pneg %p192
      %p413 = pneg %p189
      %p414 = pneg %p213
      %p415 = pneg %p210
      %p416 = pneg %p234
      %p417 = pneg %p231
      %p418 = pneg %p255
      %p419 = pneg %p252
      %p420 = pneg %p276
      %p421 = pneg %p273
      %p422 = pneg %p297
      %p423 = pneg %p294
      %p424 = pneg %p323
      %p425 = pneg %p320
      %p426 = scmp.lt.s32.totalorder %s24, 1
      %s427 = scalar_select %p426, %s24, 1
      %s428 = smul.addr %s427, 32
      %s429 = smul.addr %s428, 8
      %s430 = scalar_lea.vmem %s13, %s429
      %p431 = scmp.lt.s32.totalorder %s24, 1
      %s432 = scalar_select %p431, %s24, 1
      %s433 = smul.addr %s432, 32
      %s434 = smul.addr %s433, 8
      %s435 = scalar_lea.vmem %s0, %s434
      %p436 = scmp.lt.s32.totalorder %s24, 1
      %s437 = scalar_select %p436, %s24, 1
      %s438 = smul.addr %s437, 32
      %s439 = smul.addr %s438, 8
      %s440 = scalar_lea.vmem %s13, %s439
      %vm441 = vcmask 130048
      %442 = vst.msk [vmem:[#allocation2] sm:$0xff] %vm441, 0.0
      %443 = vst.msk [vmem:[#allocation2 + $0x8] sm:$0xff] %vm441, 0.0
      %vm444 = vcmask 123904
      %445 = vst.msk [vmem:[#allocation2 + $0x10] sm:$0x3] %vm444, 0.0
      %s446 = scalar_lea.vmem [#allocation2], 408
      %447 = vst.msk [vmem:[%s446] sm:$0xff] %vm441, 0.0
      %448 = vst.msk [vmem:[%s446 + $0x8] sm:$0xff] %vm441, 0.0
      %449 = vst.msk [vmem:[%s446 + $0x10] sm:$0x3] %vm444, 0.0
      %vm450 = vcmask 122880
      %451 = vst.msk [vmem:[#allocation2] sm:$0x1] %vm450, 0.0
      %452 = vst.msk [vmem:[#allocation2 + $0x18] sm:$0x1] %vm450, 0.0
      %453 = vst.msk [vmem:[#allocation2 + $0x30] sm:$0x1] %vm450, 0.0
      %454 = vst.msk [vmem:[#allocation2 + $0x48] sm:$0x1] %vm450, 0.0
      %455 = vst.msk [vmem:[#allocation2 + $0x60] sm:$0x1] %vm450, 0.0
      %456 = vst.msk [vmem:[#allocation2 + $0x78] sm:$0x1] %vm450, 0.0
      %457 = vst.msk [vmem:[#allocation2 + $0x90] sm:$0x1] %vm450, 0.0
      %458 = vst.msk [vmem:[#allocation2 + $0xa8] sm:$0x1] %vm450, 0.0
      %459 = vst.msk [vmem:[#allocation2 + $0xc0] sm:$0x1] %vm450, 0.0
      %460 = vst.msk [vmem:[#allocation2 + $0xd8] sm:$0x1] %vm450, 0.0
      %461 = vst.msk [vmem:[#allocation2 + $0xf0] sm:$0x1] %vm450, 0.0
      %462 = vst.msk [vmem:[#allocation2 + $0x108] sm:$0x1] %vm450, 0.0
      %463 = vst.msk [vmem:[#allocation2 + $0x120] sm:$0x1] %vm450, 0.0
      %464 = vst.msk [vmem:[#allocation2 + $0x138] sm:$0x1] %vm450, 0.0
      %465 = vst.msk [vmem:[#allocation2 + $0x150] sm:$0x1] %vm450, 0.0
      %466 = vst.msk [vmem:[#allocation2 + $0x168] sm:$0x1] %vm450, 0.0
      %467 = vst.msk [vmem:[#allocation2 + $0x180] sm:$0x1] %vm450, 0.0
      %468 = vst.msk [vmem:[#allocation2 + $0x198] sm:$0x1] %vm450, 0.0
      %469 = vst.msk [vmem:[#allocation2 + $0x11] sm:$0x1] %vm450, 0.0
      %470 = vst.msk [vmem:[#allocation2 + $0x29] sm:$0x1] %vm450, 0.0
      %471 = vst.msk [vmem:[#allocation2 + $0x41] sm:$0x1] %vm450, 0.0
      %472 = vst.msk [vmem:[#allocation2 + $0x59] sm:$0x1] %vm450, 0.0
      %473 = vst.msk [vmem:[#allocation2 + $0x71] sm:$0x1] %vm450, 0.0
      %474 = vst.msk [vmem:[#allocation2 + $0x89] sm:$0x1] %vm450, 0.0
      %475 = vst.msk [vmem:[#allocation2 + $0xa1] sm:$0x1] %vm450, 0.0
      %476 = vst.msk [vmem:[#allocation2 + $0xb9] sm:$0x1] %vm450, 0.0
      %477 = vst.msk [vmem:[#allocation2 + $0xd1] sm:$0x1] %vm450, 0.0
      %478 = vst.msk [vmem:[#allocation2 + $0xe9] sm:$0x1] %vm450, 0.0
      %479 = vst.msk [vmem:[#allocation2 + $0x101] sm:$0x1] %vm450, 0.0
      %480 = vst.msk [vmem:[#allocation2 + $0x119] sm:$0x1] %vm450, 0.0
      %481 = vst.msk [vmem:[#allocation2 + $0x131] sm:$0x1] %vm450, 0.0
      %482 = vst.msk [vmem:[#allocation2 + $0x149] sm:$0x1] %vm450, 0.0
      %483 = vst.msk [vmem:[#allocation2 + $0x161] sm:$0x1] %vm450, 0.0
      %484 = vst.msk [vmem:[#allocation2 + $0x179] sm:$0x1] %vm450, 0.0
      %485 = vst.msk [vmem:[#allocation2 + $0x191] sm:$0x1] %vm450, 0.0
      %486 = vst.msk [vmem:[#allocation2 + $0x1a9] sm:$0x1] %vm450, 0.0
      %v487 = vld [vmem:[%s435] sm:$0xff]
      %v488 = vld [vmem:[%s435 + $0x8] sm:$0xff]
      %v489 = vld [vmem:[%s435 + $0x10] sm:$0xff]
      %v490 = vld [vmem:[%s435 + $0x18] sm:$0xff]
      %v491 = vld [vmem:[%s435 + $0x20] sm:$0xff]
      %v492 = vld [vmem:[%s435 + $0x28] sm:$0xff]
      %v493 = vld [vmem:[%s435 + $0x30] sm:$0xff]
      %v494 = vld [vmem:[%s435 + $0x38] sm:$0xff]
      %v495 = vld [vmem:[%s435 + $0x40] sm:$0xff]
      %v496 = vld [vmem:[%s435 + $0x48] sm:$0xff]
      %v497 = vld [vmem:[%s435 + $0x50] sm:$0xff]
      %v498 = vld [vmem:[%s435 + $0x58] sm:$0xff]
      %v499 = vld [vmem:[%s435 + $0x60] sm:$0xff]
      %v500 = vld [vmem:[%s435 + $0x68] sm:$0xff]
      %v501 = vld [vmem:[%s435 + $0x70] sm:$0xff]
      %v502 = vld [vmem:[%s435 + $0x78] sm:$0xff]
      %v503 = vld [vmem:[%s435 + $0x80] sm:$0xff]
      %v504 = vld [vmem:[%s435 + $0x88] sm:$0xff]
      %v505 = vld [vmem:[%s435 + $0x90] sm:$0xff]
      %v506 = vld [vmem:[%s435 + $0x98] sm:$0xff]
      %v507 = vld [vmem:[%s435 + $0xa0] sm:$0xff]
      %v508 = vld [vmem:[%s435 + $0xa8] sm:$0xff]
      %v509 = vld [vmem:[%s435 + $0xb0] sm:$0xff]
      %v510 = vld [vmem:[%s435 + $0xb8] sm:$0xff]
      %v511 = vld [vmem:[%s435 + $0xc0] sm:$0xff]
      %v512 = vld [vmem:[%s435 + $0xc8] sm:$0xff]
      %v513 = vld [vmem:[%s435 + $0xd0] sm:$0xff]
      %v514 = vld [vmem:[%s435 + $0xd8] sm:$0xff]
      %v515 = vld [vmem:[%s435 + $0xe0] sm:$0xff]
      %v516 = vld [vmem:[%s435 + $0xe8] sm:$0xff]
      %v517 = vld [vmem:[%s435 + $0xf0] sm:$0xff]
      %v518 = vld [vmem:[%s435 + $0xf8] sm:$0xff]
      %vm519 = vcmask 31744
      %520 = vst.msk [vmem:[%s440] sm:$0xff] %vm519, %v487
      %521 = vst.msk [vmem:[%s440 + $0x8] sm:$0xff] %vm519, %v488
      %522 = vst.msk [vmem:[%s440 + $0x10] sm:$0xff] %vm519, %v489
      %523 = vst.msk [vmem:[%s440 + $0x18] sm:$0xff] %vm519, %v490
      %524 = vst.msk [vmem:[%s440 + $0x20] sm:$0xff] %vm519, %v491
      %525 = vst.msk [vmem:[%s440 + $0x28] sm:$0xff] %vm519, %v492
      %526 = vst.msk [vmem:[%s440 + $0x30] sm:$0xff] %vm519, %v493
      %527 = vst.msk [vmem:[%s440 + $0x38] sm:$0xff] %vm519, %v494
      %528 = vst.msk [vmem:[%s440 + $0x40] sm:$0xff] %vm519, %v495
      %529 = vst.msk [vmem:[%s440 + $0x48] sm:$0xff] %vm519, %v496
      %530 = vst.msk [vmem:[%s440 + $0x50] sm:$0xff] %vm519, %v497
      %531 = vst.msk [vmem:[%s440 + $0x58] sm:$0xff] %vm519, %v498
      %532 = vst.msk [vmem:[%s440 + $0x60] sm:$0xff] %vm519, %v499
      %533 = vst.msk [vmem:[%s440 + $0x68] sm:$0xff] %vm519, %v500
      %534 = vst.msk [vmem:[%s440 + $0x70] sm:$0xff] %vm519, %v501
      %535 = vst.msk [vmem:[%s440 + $0x78] sm:$0xff] %vm519, %v502
      %536 = vst.msk [vmem:[%s440 + $0x80] sm:$0xff] %vm519, %v503
      %537 = vst.msk [vmem:[%s440 + $0x88] sm:$0xff] %vm519, %v504
      %538 = vst.msk [vmem:[%s440 + $0x90] sm:$0xff] %vm519, %v505
      %539 = vst.msk [vmem:[%s440 + $0x98] sm:$0xff] %vm519, %v506
      %540 = vst.msk [vmem:[%s440 + $0xa0] sm:$0xff] %vm519, %v507
      %541 = vst.msk [vmem:[%s440 + $0xa8] sm:$0xff] %vm519, %v508
      %542 = vst.msk [vmem:[%s440 + $0xb0] sm:$0xff] %vm519, %v509
      %543 = vst.msk [vmem:[%s440 + $0xb8] sm:$0xff] %vm519, %v510
      %544 = vst.msk [vmem:[%s440 + $0xc0] sm:$0xff] %vm519, %v511
      %545 = vst.msk [vmem:[%s440 + $0xc8] sm:$0xff] %vm519, %v512
      %546 = vst.msk [vmem:[%s440 + $0xd0] sm:$0xff] %vm519, %v513
      %547 = vst.msk [vmem:[%s440 + $0xd8] sm:$0xff] %vm519, %v514
      %548 = vst.msk [vmem:[%s440 + $0xe0] sm:$0xff] %vm519, %v515
      %549 = vst.msk [vmem:[%s440 + $0xe8] sm:$0xff] %vm519, %v516
      %550 = vst.msk [vmem:[%s440 + $0xf0] sm:$0xff] %vm519, %v517
      %551 = vst.msk [vmem:[%s440 + $0xf8] sm:$0xff] %vm519, %v518
      %v552 = vld [vmem:[%s440] sm:$0xff]
      %v553 = vld [vmem:[%s440 + $0x8] sm:$0xff]
      %v554 = vld [vmem:[%s440 + $0x10] sm:$0xff]
      %v555 = vld [vmem:[%s440 + $0x18] sm:$0xff]
      %v556 = vld [vmem:[%s440 + $0x20] sm:$0xff]
      %v557 = vld [vmem:[%s440 + $0x28] sm:$0xff]
      %v558 = vld [vmem:[%s440 + $0x30] sm:$0xff]
      %v559 = vld [vmem:[%s440 + $0x38] sm:$0xff]
      %v560 = vld [vmem:[%s440 + $0x40] sm:$0xff]
      %v561 = vld [vmem:[%s440 + $0x48] sm:$0xff]
      %v562 = vld [vmem:[%s440 + $0x50] sm:$0xff]
      %v563 = vld [vmem:[%s440 + $0x58] sm:$0xff]
      %v564 = vld [vmem:[%s440 + $0x60] sm:$0xff]
      %v565 = vld [vmem:[%s440 + $0x68] sm:$0xff]
      %v566 = vld [vmem:[%s440 + $0x70] sm:$0xff]
      %v567 = vld [vmem:[%s440 + $0x78] sm:$0xff]
      %v568 = vld [vmem:[%s440 + $0x80] sm:$0xff]
      %v569 = vld [vmem:[%s440 + $0x88] sm:$0xff]
      %v570 = vld [vmem:[%s440 + $0x90] sm:$0xff]
      %v571 = vld [vmem:[%s440 + $0x98] sm:$0xff]
      %v572 = vld [vmem:[%s440 + $0xa0] sm:$0xff]
      %v573 = vld [vmem:[%s440 + $0xa8] sm:$0xff]
      %v574 = vld [vmem:[%s440 + $0xb0] sm:$0xff]
      %v575 = vld [vmem:[%s440 + $0xb8] sm:$0xff]
      %v576 = vld [vmem:[%s440 + $0xc0] sm:$0xff]
      %v577 = vld [vmem:[%s440 + $0xc8] sm:$0xff]
      %v578 = vld [vmem:[%s440 + $0xd0] sm:$0xff]
      %v579 = vld [vmem:[%s440 + $0xd8] sm:$0xff]
      %v580 = vld [vmem:[%s440 + $0xe0] sm:$0xff]
      %v581 = vld [vmem:[%s440 + $0xe8] sm:$0xff]
      %v582 = vld [vmem:[%s440 + $0xf0] sm:$0xff]
      %v583 = vld [vmem:[%s440 + $0xf8] sm:$0xff]
      %v584 = vld [vmem:[%s1] sm:$0x1]
      %v586 = vlaneseq
      %v587 = vshrl.u32 %v586, 7
      %v588 = vsub.s32 0, %v587
      %v589 = vrot.slane %v584, %v588
      %v591 = vmul.f32 %v552, %v589
      %v592 = vmul.f32 %v553, %v589
      %v593 = vmul.f32 %v554, %v589
      %v594 = vmul.f32 %v555, %v589
      %v595 = vmul.f32 %v556, %v589
      %v596 = vmul.f32 %v557, %v589
      %v597 = vmul.f32 %v558, %v589
      %v598 = vmul.f32 %v559, %v589
      %v599 = vmul.f32 %v560, %v589
      %v600 = vmul.f32 %v561, %v589
      %v601 = vmul.f32 %v562, %v589
      %v602 = vmul.f32 %v563, %v589
      %v603 = vmul.f32 %v564, %v589
      %v604 = vmul.f32 %v565, %v589
      %v605 = vmul.f32 %v566, %v589
      %v606 = vmul.f32 %v567, %v589
      %v607 = vmul.f32 %v568, %v589
      %v608 = vmul.f32 %v569, %v589
      %v609 = vmul.f32 %v570, %v589
      %v610 = vmul.f32 %v571, %v589
      %v611 = vmul.f32 %v572, %v589
      %v612 = vmul.f32 %v573, %v589
      %v613 = vmul.f32 %v574, %v589
      %v614 = vmul.f32 %v575, %v589
      %v615 = vmul.f32 %v576, %v589
      %v616 = vmul.f32 %v577, %v589
      %v617 = vmul.f32 %v578, %v589
      %v618 = vmul.f32 %v579, %v589
      %v619 = vmul.f32 %v580, %v589
      %v620 = vmul.f32 %v581, %v589
      %v621 = vmul.f32 %v582, %v589
      %v622 = vmul.f32 %v583, %v589
      %v623 = vld [vmem:[%s2] sm:$0x1]
      %v625 = vlaneseq
      %v626 = vshrl.u32 %v625, 7
      %v627 = vsub.s32 0, %v626
      %v628 = vrot.slane %v623, %v627
      %v630 = vadd.f32 %v591, %v628
      %v631 = vadd.f32 %v592, %v628
      %v632 = vadd.f32 %v593, %v628
      %v633 = vadd.f32 %v594, %v628
      %v634 = vadd.f32 %v595, %v628
      %v635 = vadd.f32 %v596, %v628
      %v636 = vadd.f32 %v597, %v628
      %v637 = vadd.f32 %v598, %v628
      %v638 = vadd.f32 %v599, %v628
      %v639 = vadd.f32 %v600, %v628
      %v640 = vadd.f32 %v601, %v628
      %v641 = vadd.f32 %v602, %v628
      %v642 = vadd.f32 %v603, %v628
      %v643 = vadd.f32 %v604, %v628
      %v644 = vadd.f32 %v605, %v628
      %v645 = vadd.f32 %v606, %v628
      %v646 = vadd.f32 %v607, %v628
      %v647 = vadd.f32 %v608, %v628
      %v648 = vadd.f32 %v609, %v628
      %v649 = vadd.f32 %v610, %v628
      %v650 = vadd.f32 %v611, %v628
      %v651 = vadd.f32 %v612, %v628
      %v652 = vadd.f32 %v613, %v628
      %v653 = vadd.f32 %v614, %v628
      %v654 = vadd.f32 %v615, %v628
      %v655 = vadd.f32 %v616, %v628
      %v656 = vadd.f32 %v617, %v628
      %v657 = vadd.f32 %v618, %v628
      %v658 = vadd.f32 %v619, %v628
      %v659 = vadd.f32 %v620, %v628
      %v660 = vadd.f32 %v621, %v628
      %v661 = vadd.f32 %v622, %v628
      %v662 = vmax.f32 %v630, 0.0
      %v663 = vmax.f32 %v631, 0.0
      %v664 = vmax.f32 %v632, 0.0
      %v665 = vmax.f32 %v633, 0.0
      %v666 = vmax.f32 %v634, 0.0
      %v667 = vmax.f32 %v635, 0.0
      %v668 = vmax.f32 %v636, 0.0
      %v669 = vmax.f32 %v637, 0.0
      %v670 = vmax.f32 %v638, 0.0
      %v671 = vmax.f32 %v639, 0.0
      %v672 = vmax.f32 %v640, 0.0
      %v673 = vmax.f32 %v641, 0.0
      %v674 = vmax.f32 %v642, 0.0
      %v675 = vmax.f32 %v643, 0.0
      %v676 = vmax.f32 %v644, 0.0
      %v677 = vmax.f32 %v645, 0.0
      %v678 = vmax.f32 %v646, 0.0
      %v679 = vmax.f32 %v647, 0.0
      %v680 = vmax.f32 %v648, 0.0
      %v681 = vmax.f32 %v649, 0.0
      %v682 = vmax.f32 %v650, 0.0
      %v683 = vmax.f32 %v651, 0.0
      %v684 = vmax.f32 %v652, 0.0
      %v685 = vmax.f32 %v653, 0.0
      %v686 = vmax.f32 %v654, 0.0
      %v687 = vmax.f32 %v655, 0.0
      %v688 = vmax.f32 %v656, 0.0
      %v689 = vmax.f32 %v657, 0.0
      %v690 = vmax.f32 %v658, 0.0
      %v691 = vmax.f32 %v659, 0.0
      %v692 = vmax.f32 %v660, 0.0
      %v693 = vmax.f32 %v661, 0.0
      %s694 = scalar_lea.vmem [#allocation2], 24
      %695 = vst.msk [vmem:[%s694 + $0x1] sm:$0xff] %vm519, %v662
      %696 = vst.msk [vmem:[%s694 + $0x9] sm:$0xff] %vm519, %v663
      %697 = vst.msk [vmem:[%s694 + $0x19] sm:$0xff] %vm519, %v664
      %698 = vst.msk [vmem:[%s694 + $0x21] sm:$0xff] %vm519, %v665
      %699 = vst.msk [vmem:[%s694 + $0x31] sm:$0xff] %vm519, %v666
      %700 = vst.msk [vmem:[%s694 + $0x39] sm:$0xff] %vm519, %v667
      %701 = vst.msk [vmem:[%s694 + $0x49] sm:$0xff] %vm519, %v668
      %702 = vst.msk [vmem:[%s694 + $0x51] sm:$0xff] %vm519, %v669
      %703 = vst.msk [vmem:[%s694 + $0x61] sm:$0xff] %vm519, %v670
      %704 = vst.msk [vmem:[%s694 + $0x69] sm:$0xff] %vm519, %v671
      %705 = vst.msk [vmem:[%s694 + $0x79] sm:$0xff] %vm519, %v672
      %706 = vst.msk [vmem:[%s694 + $0x81] sm:$0xff] %vm519, %v673
      %707 = vst.msk [vmem:[%s694 + $0x91] sm:$0xff] %vm519, %v674
      %708 = vst.msk [vmem:[%s694 + $0x99] sm:$0xff] %vm519, %v675
      %709 = vst.msk [vmem:[%s694 + $0xa9] sm:$0xff] %vm519, %v676
      %710 = vst.msk [vmem:[%s694 + $0xb1] sm:$0xff] %vm519, %v677
      %711 = vst.msk [vmem:[%s694 + $0xc1] sm:$0xff] %vm519, %v678
      %712 = vst.msk [vmem:[%s694 + $0xc9] sm:$0xff] %vm519, %v679
      %713 = vst.msk [vmem:[%s694 + $0xd9] sm:$0xff] %vm519, %v680
      %714 = vst.msk [vmem:[%s694 + $0xe1] sm:$0xff] %vm519, %v681
      %715 = vst.msk [vmem:[%s694 + $0xf1] sm:$0xff] %vm519, %v682
      %716 = vst.msk [vmem:[%s694 + $0xf9] sm:$0xff] %vm519, %v683
      %717 = vst.msk [vmem:[%s694 + $0x109] sm:$0xff] %vm519, %v684
      %718 = vst.msk [vmem:[%s694 + $0x111] sm:$0xff] %vm519, %v685
      %719 = vst.msk [vmem:[%s694 + $0x121] sm:$0xff] %vm519, %v686
      %720 = vst.msk [vmem:[%s694 + $0x129] sm:$0xff] %vm519, %v687
      %721 = vst.msk [vmem:[%s694 + $0x139] sm:$0xff] %vm519, %v688
      %722 = vst.msk [vmem:[%s694 + $0x141] sm:$0xff] %vm519, %v689
      %723 = vst.msk [vmem:[%s694 + $0x151] sm:$0xff] %vm519, %v690
      %724 = vst.msk [vmem:[%s694 + $0x159] sm:$0xff] %vm519, %v691
      %725 = vst.msk [vmem:[%s694 + $0x169] sm:$0xff] %vm519, %v692
      %726 = vst.msk [vmem:[%s694 + $0x171] sm:$0xff] %vm519, %v693
      %v727 = vld [vmem:[#allocation2] sm:$0xff]
      %v728 = vld [vmem:[#allocation2 + $0x8] sm:$0xff]
      %v729 = vld [vmem:[#allocation2 + $0x18] sm:$0xff]
      %v730 = vld [vmem:[#allocation2 + $0x20] sm:$0xff]
      %v731 = vld [vmem:[#allocation2 + $0x30] sm:$0xff]
      %v732 = vld [vmem:[#allocation2 + $0x38] sm:$0xff]
      %v733 = vld [vmem:[#allocation2 + $0x48] sm:$0xff]
      %v734 = vld [vmem:[#allocation2 + $0x50] sm:$0xff]
      %v735 = vld [vmem:[#allocation2 + $0x60] sm:$0xff]
      %v736 = vld [vmem:[#allocation2 + $0x68] sm:$0xff]
      %v737 = vld [vmem:[#allocation2 + $0x78] sm:$0xff]
      %v738 = vld [vmem:[#allocation2 + $0x80] sm:$0xff]
      %v739 = vld [vmem:[#allocation2 + $0x90] sm:$0xff]
      %v740 = vld [vmem:[#allocation2 + $0x98] sm:$0xff]
      %v741 = vld [vmem:[#allocation2 + $0xa8] sm:$0xff]
      %v742 = vld [vmem:[#allocation2 + $0xb0] sm:$0xff]
      %v743 = vld [vmem:[#allocation2 + $0xc0] sm:$0xff]
      %v744 = vld [vmem:[#allocation2 + $0xc8] sm:$0xff]
      %v745 = vld [vmem:[#allocation2 + $0xd8] sm:$0xff]
      %v746 = vld [vmem:[#allocation2 + $0xe0] sm:$0xff]
      %v747 = vld [vmem:[#allocation2 + $0xf0] sm:$0xff]
      %v748 = vld [vmem:[#allocation2 + $0xf8] sm:$0xff]
      %v749 = vld [vmem:[#allocation2 + $0x108] sm:$0xff]
      %v750 = vld [vmem:[#allocation2 + $0x110] sm:$0xff]
      %v751 = vld [vmem:[#allocation2 + $0x120] sm:$0xff]
      %v752 = vld [vmem:[#allocation2 + $0x128] sm:$0xff]
      %v753 = vld [vmem:[#allocation2 + $0x138] sm:$0xff]
      %v754 = vld [vmem:[#allocation2 + $0x140] sm:$0xff]
      %v755 = vld [vmem:[#allocation2 + $0x150] sm:$0xff]
      %v756 = vld [vmem:[#allocation2 + $0x158] sm:$0xff]
      %v757 = vld [vmem:[#allocation2 + $0x168] sm:$0xff]
      %v758 = vld [vmem:[#allocation2 + $0x170] sm:$0xff]
      %v759 = vld [vmem:[#allocation2 + $0x1] sm:$0xff]
      %v760 = vld [vmem:[#allocation2 + $0x9] sm:$0xff]
      %v761 = vld [vmem:[#allocation2 + $0x19] sm:$0xff]
      %v762 = vld [vmem:[#allocation2 + $0x21] sm:$0xff]
      %v763 = vld [vmem:[#allocation2 + $0x31] sm:$0xff]
      %v764 = vld [vmem:[#allocation2 + $0x39] sm:$0xff]
      %v765 = vld [vmem:[#allocation2 + $0x49] sm:$0xff]
      %v766 = vld [vmem:[#allocation2 + $0x51] sm:$0xff]
      %v767 = vld [vmem:[#allocation2 + $0x61] sm:$0xff]
      %v768 = vld [vmem:[#allocation2 + $0x69] sm:$0xff]
      %v769 = vld [vmem:[#allocation2 + $0x79] sm:$0xff]
      %v770 = vld [vmem:[#allocation2 + $0x81] sm:$0xff]
      %v771 = vld [vmem:[#allocation2 + $0x91] sm:$0xff]
      %v772 = vld [vmem:[#allocation2 + $0x99] sm:$0xff]
      %v773 = vld [vmem:[#allocation2 + $0xa9] sm:$0xff]
      %v774 = vld [vmem:[#allocation2 + $0xb1] sm:$0xff]
      %v775 = vld [vmem:[#allocation2 + $0xc1] sm:$0xff]
      %v776 = vld [vmem:[#allocation2 + $0xc9] sm:$0xff]
      %v777 = vld [vmem:[#allocation2 + $0xd9] sm:$0xff]
      %v778 = vld [vmem:[#allocation2 + $0xe1] sm:$0xff]
      %v779 = vld [vmem:[#allocation2 + $0xf1] sm:$0xff]
      %v780 = vld [vmem:[#allocation2 + $0xf9] sm:$0xff]
      %v781 = vld [vmem:[#allocation2 + $0x109] sm:$0xff]
      %v782 = vld [vmem:[#allocation2 + $0x111] sm:$0xff]
      %v783 = vld [vmem:[#allocation2 + $0x121] sm:$0xff]
      %v784 = vld [vmem:[#allocation2 + $0x129] sm:$0xff]
      %v785 = vld [vmem:[#allocation2 + $0x139] sm:$0xff]
      %v786 = vld [vmem:[#allocation2 + $0x141] sm:$0xff]
      %v787 = vld [vmem:[#allocation2 + $0x151] sm:$0xff]
      %v788 = vld [vmem:[#allocation2 + $0x159] sm:$0xff]
      %v789 = vld [vmem:[#allocation2 + $0x169] sm:$0xff]
      %v790 = vld [vmem:[#allocation2 + $0x171] sm:$0xff]
      %v791 = vld [vmem:[#allocation2 + $0x2] sm:$0xff]
      %v792 = vld [vmem:[#allocation2 + $0xa] sm:$0xff]
      %v793 = vld [vmem:[#allocation2 + $0x1a] sm:$0xff]
      %v794 = vld [vmem:[#allocation2 + $0x22] sm:$0xff]
      %v795 = vld [vmem:[#allocation2 + $0x32] sm:$0xff]
      %v796 = vld [vmem:[#allocation2 + $0x3a] sm:$0xff]
      %v797 = vld [vmem:[#allocation2 + $0x4a] sm:$0xff]
      %v798 = vld [vmem:[#allocation2 + $0x52] sm:$0xff]
      %v799 = vld [vmem:[#allocation2 + $0x62] sm:$0xff]
      %v800 = vld [vmem:[#allocation2 + $0x6a] sm:$0xff]
      %v801 = vld [vmem:[#allocation2 + $0x7a] sm:$0xff]
      %v802 = vld [vmem:[#allocation2 + $0x82] sm:$0xff]
      %v803 = vld [vmem:[#allocation2 + $0x92] sm:$0xff]
      %v804 = vld [vmem:[#allocation2 + $0x9a] sm:$0xff]
      %v805 = vld [vmem:[#allocation2 + $0xaa] sm:$0xff]
      %v806 = vld [vmem:[#allocation2 + $0xb2] sm:$0xff]
      %v807 = vld [vmem:[#allocation2 + $0xc2] sm:$0xff]
      %v808 = vld [vmem:[#allocation2 + $0xca] sm:$0xff]
      %v809 = vld [vmem:[#allocation2 + $0xda] sm:$0xff]
      %v810 = vld [vmem:[#allocation2 + $0xe2] sm:$0xff]
      %v811 = vld [vmem:[#allocation2 + $0xf2] sm:$0xff]
      %v812 = vld [vmem:[#allocation2 + $0xfa] sm:$0xff]
      %v813 = vld [vmem:[#allocation2 + $0x10a] sm:$0xff]
      %v814 = vld [vmem:[#allocation2 + $0x112] sm:$0xff]
      %v815 = vld [vmem:[#allocation2 + $0x122] sm:$0xff]
      %v816 = vld [vmem:[#allocation2 + $0x12a] sm:$0xff]
      %v817 = vld [vmem:[#allocation2 + $0x13a] sm:$0xff]
      %v818 = vld [vmem:[#allocation2 + $0x142] sm:$0xff]
      %v819 = vld [vmem:[#allocation2 + $0x152] sm:$0xff]
      %v820 = vld [vmem:[#allocation2 + $0x15a] sm:$0xff]
      %v821 = vld [vmem:[#allocation2 + $0x16a] sm:$0xff]
      %v822 = vld [vmem:[#allocation2 + $0x172] sm:$0xff]
      %v823 = vld [vmem:[%s694] sm:$0xff]
      %v824 = vld [vmem:[%s694 + $0x8] sm:$0xff]
      %v825 = vld [vmem:[%s694 + $0x18] sm:$0xff]
      %v826 = vld [vmem:[%s694 + $0x20] sm:$0xff]
      %v827 = vld [vmem:[%s694 + $0x30] sm:$0xff]
      %v828 = vld [vmem:[%s694 + $0x38] sm:$0xff]
      %v829 = vld [vmem:[%s694 + $0x48] sm:$0xff]
      %v830 = vld [vmem:[%s694 + $0x50] sm:$0xff]
      %v831 = vld [vmem:[%s694 + $0x60] sm:$0xff]
      %v832 = vld [vmem:[%s694 + $0x68] sm:$0xff]
      %v833 = vld [vmem:[%s694 + $0x78] sm:$0xff]
      %v834 = vld [vmem:[%s694 + $0x80] sm:$0xff]
      %v835 = vld [vmem:[%s694 + $0x90] sm:$0xff]
      %v836 = vld [vmem:[%s694 + $0x98] sm:$0xff]
      %v837 = vld [vmem:[%s694 + $0xa8] sm:$0xff]
      %v838 = vld [vmem:[%s694 + $0xb0] sm:$0xff]
      %v839 = vld [vmem:[%s694 + $0xc0] sm:$0xff]
      %v840 = vld [vmem:[%s694 + $0xc8] sm:$0xff]
      %v841 = vld [vmem:[%s694 + $0xd8] sm:$0xff]
      %v842 = vld [vmem:[%s694 + $0xe0] sm:$0xff]
      %v843 = vld [vmem:[%s694 + $0xf0] sm:$0xff]
      %v844 = vld [vmem:[%s694 + $0xf8] sm:$0xff]
      %v845 = vld [vmem:[%s694 + $0x108] sm:$0xff]
      %v846 = vld [vmem:[%s694 + $0x110] sm:$0xff]
      %v847 = vld [vmem:[%s694 + $0x120] sm:$0xff]
      %v848 = vld [vmem:[%s694 + $0x128] sm:$0xff]
      %v849 = vld [vmem:[%s694 + $0x138] sm:$0xff]
      %v850 = vld [vmem:[%s694 + $0x140] sm:$0xff]
      %v851 = vld [vmem:[%s694 + $0x150] sm:$0xff]
      %v852 = vld [vmem:[%s694 + $0x158] sm:$0xff]
      %v853 = vld [vmem:[%s694 + $0x168] sm:$0xff]
      %v854 = vld [vmem:[%s694 + $0x170] sm:$0xff]
      %v855 = vld [vmem:[%s694 + $0x1] sm:$0xff]
      %v856 = vld [vmem:[%s694 + $0x9] sm:$0xff]
      %v857 = vld [vmem:[%s694 + $0x19] sm:$0xff]
      %v858 = vld [vmem:[%s694 + $0x21] sm:$0xff]
      %v859 = vld [vmem:[%s694 + $0x31] sm:$0xff]
      %v860 = vld [vmem:[%s694 + $0x39] sm:$0xff]
      %v861 = vld [vmem:[%s694 + $0x49] sm:$0xff]
      %v862 = vld [vmem:[%s694 + $0x51] sm:$0xff]
      %v863 = vld [vmem:[%s694 + $0x61] sm:$0xff]
      %v864 = vld [vmem:[%s694 + $0x69] sm:$0xff]
      %v865 = vld [vmem:[%s694 + $0x79] sm:$0xff]
      %v866 = vld [vmem:[%s694 + $0x81] sm:$0xff]
      %v867 = vld [vmem:[%s694 + $0x91] sm:$0xff]
      %v868 = vld [vmem:[%s694 + $0x99] sm:$0xff]
      %v869 = vld [vmem:[%s694 + $0xa9] sm:$0xff]
      %v870 = vld [vmem:[%s694 + $0xb1] sm:$0xff]
      %v871 = vld [vmem:[%s694 + $0xc1] sm:$0xff]
      %v872 = vld [vmem:[%s694 + $0xc9] sm:$0xff]
      %v873 = vld [vmem:[%s694 + $0xd9] sm:$0xff]
      %v874 = vld [vmem:[%s694 + $0xe1] sm:$0xff]
      %v875 = vld [vmem:[%s694 + $0xf1] sm:$0xff]
      %v876 = vld [vmem:[%s694 + $0xf9] sm:$0xff]
      %v877 = vld [vmem:[%s694 + $0x109] sm:$0xff]
      %v878 = vld [vmem:[%s694 + $0x111] sm:$0xff]
      %v879 = vld [vmem:[%s694 + $0x121] sm:$0xff]
      %v880 = vld [vmem:[%s694 + $0x129] sm:$0xff]
      %v881 = vld [vmem:[%s694 + $0x139] sm:$0xff]
      %v882 = vld [vmem:[%s694 + $0x141] sm:$0xff]
      %v883 = vld [vmem:[%s694 + $0x151] sm:$0xff]
      %v884 = vld [vmem:[%s694 + $0x159] sm:$0xff]
      %v885 = vld [vmem:[%s694 + $0x169] sm:$0xff]
      %v886 = vld [vmem:[%s694 + $0x171] sm:$0xff]
      %v887 = vld [vmem:[%s694 + $0x2] sm:$0xff]
      %v888 = vld [vmem:[%s694 + $0xa] sm:$0xff]
      %v889 = vld [vmem:[%s694 + $0x1a] sm:$0xff]
      %v890 = vld [vmem:[%s694 + $0x22] sm:$0xff]
      %v891 = vld [vmem:[%s694 + $0x32] sm:$0xff]
      %v892 = vld [vmem:[%s694 + $0x3a] sm:$0xff]
      %v893 = vld [vmem:[%s694 + $0x4a] sm:$0xff]
      %v894 = vld [vmem:[%s694 + $0x52] sm:$0xff]
      %v895 = vld [vmem:[%s694 + $0x62] sm:$0xff]
      %v896 = vld [vmem:[%s694 + $0x6a] sm:$0xff]
      %v897 = vld [vmem:[%s694 + $0x7a] sm:$0xff]
      %v898 = vld [vmem:[%s694 + $0x82] sm:$0xff]
      %v899 = vld [vmem:[%s694 + $0x92] sm:$0xff]
      %v900 = vld [vmem:[%s694 + $0x9a] sm:$0xff]
      %v901 = vld [vmem:[%s694 + $0xaa] sm:$0xff]
      %v902 = vld [vmem:[%s694 + $0xb2] sm:$0xff]
      %v903 = vld [vmem:[%s694 + $0xc2] sm:$0xff]
      %v904 = vld [vmem:[%s694 + $0xca] sm:$0xff]
      %v905 = vld [vmem:[%s694 + $0xda] sm:$0xff]
      %v906 = vld [vmem:[%s694 + $0xe2] sm:$0xff]
      %v907 = vld [vmem:[%s694 + $0xf2] sm:$0xff]
      %v908 = vld [vmem:[%s694 + $0xfa] sm:$0xff]
      %v909 = vld [vmem:[%s694 + $0x10a] sm:$0xff]
      %v910 = vld [vmem:[%s694 + $0x112] sm:$0xff]
      %v911 = vld [vmem:[%s694 + $0x122] sm:$0xff]
      %v912 = vld [vmem:[%s694 + $0x12a] sm:$0xff]
      %v913 = vld [vmem:[%s694 + $0x13a] sm:$0xff]
      %v914 = vld [vmem:[%s694 + $0x142] sm:$0xff]
      %v915 = vld [vmem:[%s694 + $0x152] sm:$0xff]
      %v916 = vld [vmem:[%s694 + $0x15a] sm:$0xff]
      %v917 = vld [vmem:[%s694 + $0x16a] sm:$0xff]
      %v918 = vld [vmem:[%s694 + $0x172] sm:$0xff]
      %s919 = scalar_lea.vmem [#allocation2], 48
      %v920 = vld [vmem:[%s919] sm:$0xff]
      %v921 = vld [vmem:[%s919 + $0x8] sm:$0xff]
      %v922 = vld [vmem:[%s919 + $0x18] sm:$0xff]
      %v923 = vld [vmem:[%s919 + $0x20] sm:$0xff]
      %v924 = vld [vmem:[%s919 + $0x30] sm:$0xff]
      %v925 = vld [vmem:[%s919 + $0x38] sm:$0xff]
      %v926 = vld [vmem:[%s919 + $0x48] sm:$0xff]
      %v927 = vld [vmem:[%s919 + $0x50] sm:$0xff]
      %v928 = vld [vmem:[%s919 + $0x60] sm:$0xff]
      %v929 = vld [vmem:[%s919 + $0x68] sm:$0xff]
      %v930 = vld [vmem:[%s919 + $0x78] sm:$0xff]
      %v931 = vld [vmem:[%s919 + $0x80] sm:$0xff]
      %v932 = vld [vmem:[%s919 + $0x90] sm:$0xff]
      %v933 = vld [vmem:[%s919 + $0x98] sm:$0xff]
      %v934 = vld [vmem:[%s919 + $0xa8] sm:$0xff]
      %v935 = vld [vmem:[%s919 + $0xb0] sm:$0xff]
      %v936 = vld [vmem:[%s919 + $0xc0] sm:$0xff]
      %v937 = vld [vmem:[%s919 + $0xc8] sm:$0xff]
      %v938 = vld [vmem:[%s919 + $0xd8] sm:$0xff]
      %v939 = vld [vmem:[%s919 + $0xe0] sm:$0xff]
      %v940 = vld [vmem:[%s919 + $0xf0] sm:$0xff]
      %v941 = vld [vmem:[%s919 + $0xf8] sm:$0xff]
      %v942 = vld [vmem:[%s919 + $0x108] sm:$0xff]
      %v943 = vld [vmem:[%s919 + $0x110] sm:$0xff]
      %v944 = vld [vmem:[%s919 + $0x120] sm:$0xff]
      %v945 = vld [vmem:[%s919 + $0x128] sm:$0xff]
      %v946 = vld [vmem:[%s919 + $0x138] sm:$0xff]
      %v947 = vld [vmem:[%s919 + $0x140] sm:$0xff]
      %v948 = vld [vmem:[%s919 + $0x150] sm:$0xff]
      %v949 = vld [vmem:[%s919 + $0x158] sm:$0xff]
      %v950 = vld [vmem:[%s919 + $0x168] sm:$0xff]
      %v951 = vld [vmem:[%s919 + $0x170] sm:$0xff]
      %v952 = vld [vmem:[%s919 + $0x1] sm:$0xff]
      %v953 = vld [vmem:[%s919 + $0x9] sm:$0xff]
      %v954 = vld [vmem:[%s919 + $0x19] sm:$0xff]
      %v955 = vld [vmem:[%s919 + $0x21] sm:$0xff]
      %v956 = vld [vmem:[%s919 + $0x31] sm:$0xff]
      %v957 = vld [vmem:[%s919 + $0x39] sm:$0xff]
      %v958 = vld [vmem:[%s919 + $0x49] sm:$0xff]
      %v959 = vld [vmem:[%s919 + $0x51] sm:$0xff]
      %v960 = vld [vmem:[%s919 + $0x61] sm:$0xff]
      %v961 = vld [vmem:[%s919 + $0x69] sm:$0xff]
      %v962 = vld [vmem:[%s919 + $0x79] sm:$0xff]
      %v963 = vld [vmem:[%s919 + $0x81] sm:$0xff]
      %v964 = vld [vmem:[%s919 + $0x91] sm:$0xff]
      %v965 = vld [vmem:[%s919 + $0x99] sm:$0xff]
      %v966 = vld [vmem:[%s919 + $0xa9] sm:$0xff]
      %v967 = vld [vmem:[%s919 + $0xb1] sm:$0xff]
      %v968 = vld [vmem:[%s919 + $0xc1] sm:$0xff]
      %v969 = vld [vmem:[%s919 + $0xc9] sm:$0xff]
      %v970 = vld [vmem:[%s919 + $0xd9] sm:$0xff]
      %v971 = vld [vmem:[%s919 + $0xe1] sm:$0xff]
      %v972 = vld [vmem:[%s919 + $0xf1] sm:$0xff]
      %v973 = vld [vmem:[%s919 + $0xf9] sm:$0xff]
      %v974 = vld [vmem:[%s919 + $0x109] sm:$0xff]
      %v975 = vld [vmem:[%s919 + $0x111] sm:$0xff]
      %v976 = vld [vmem:[%s919 + $0x121] sm:$0xff]
      %v977 = vld [vmem:[%s919 + $0x129] sm:$0xff]
      %v978 = vld [vmem:[%s919 + $0x139] sm:$0xff]
      %v979 = vld [vmem:[%s919 + $0x141] sm:$0xff]
      %v980 = vld [vmem:[%s919 + $0x151] sm:$0xff]
      %v981 = vld [vmem:[%s919 + $0x159] sm:$0xff]
      %v982 = vld [vmem:[%s919 + $0x169] sm:$0xff]
      %v983 = vld [vmem:[%s919 + $0x171] sm:$0xff]
      %v984 = vld [vmem:[%s919 + $0x2] sm:$0xff]
      %v985 = vld [vmem:[%s919 + $0xa] sm:$0xff]
      %v986 = vld [vmem:[%s919 + $0x1a] sm:$0xff]
      %v987 = vld [vmem:[%s919 + $0x22] sm:$0xff]
      %v988 = vld [vmem:[%s919 + $0x32] sm:$0xff]
      %v989 = vld [vmem:[%s919 + $0x3a] sm:$0xff]
      %v990 = vld [vmem:[%s919 + $0x4a] sm:$0xff]
      %v991 = vld [vmem:[%s919 + $0x52] sm:$0xff]
      %v992 = vld [vmem:[%s919 + $0x62] sm:$0xff]
      %v993 = vld [vmem:[%s919 + $0x6a] sm:$0xff]
      %v994 = vld [vmem:[%s919 + $0x7a] sm:$0xff]
      %v995 = vld [vmem:[%s919 + $0x82] sm:$0xff]
      %v996 = vld [vmem:[%s919 + $0x92] sm:$0xff]
      %v997 = vld [vmem:[%s919 + $0x9a] sm:$0xff]
      %v998 = vld [vmem:[%s919 + $0xaa] sm:$0xff]
      %v999 = vld [vmem:[%s919 + $0xb2] sm:$0xff]
      %v1000 = vld [vmem:[%s919 + $0xc2] sm:$0xff]
      %v1001 = vld [vmem:[%s919 + $0xca] sm:$0xff]
      %v1002 = vld [vmem:[%s919 + $0xda] sm:$0xff]
      %v1003 = vld [vmem:[%s919 + $0xe2] sm:$0xff]
      %v1004 = vld [vmem:[%s919 + $0xf2] sm:$0xff]
      %v1005 = vld [vmem:[%s919 + $0xfa] sm:$0xff]
      %v1006 = vld [vmem:[%s919 + $0x10a] sm:$0xff]
      %v1007 = vld [vmem:[%s919 + $0x112] sm:$0xff]
      %v1008 = vld [vmem:[%s919 + $0x122] sm:$0xff]
      %v1009 = vld [vmem:[%s919 + $0x12a] sm:$0xff]
      %v1010 = vld [vmem:[%s919 + $0x13a] sm:$0xff]
      %v1011 = vld [vmem:[%s919 + $0x142] sm:$0xff]
      %v1012 = vld [vmem:[%s919 + $0x152] sm:$0xff]
      %v1013 = vld [vmem:[%s919 + $0x15a] sm:$0xff]
      %v1014 = vld [vmem:[%s919 + $0x16a] sm:$0xff]
      %v1015 = vld [vmem:[%s919 + $0x172] sm:$0xff]
      %1048 = vrot.lane.b32.xlu0 %v759, 4
      %v1049 = vpop.permute.xlu0 %1048
      %1050 = vrot.lane.b32.xlu0 %v760, 4
      %v1051 = vpop.permute.xlu0 %1050
      %1052 = vrot.lane.b32.xlu0 %v761, 4
      %v1053 = vpop.permute.xlu0 %1052
      %1054 = vrot.lane.b32.xlu0 %v762, 4
      %v1055 = vpop.permute.xlu0 %1054
      %1056 = vrot.lane.b32.xlu0 %v763, 4
      %v1057 = vpop.permute.xlu0 %1056
      %1058 = vrot.lane.b32.xlu0 %v764, 4
      %v1059 = vpop.permute.xlu0 %1058
      %1060 = vrot.lane.b32.xlu0 %v765, 4
      %v1061 = vpop.permute.xlu0 %1060
      %1062 = vrot.lane.b32.xlu0 %v766, 4
      %v1063 = vpop.permute.xlu0 %1062
      %1064 = vrot.lane.b32.xlu0 %v767, 4
      %v1065 = vpop.permute.xlu0 %1064
      %1066 = vrot.lane.b32.xlu0 %v768, 4
      %v1067 = vpop.permute.xlu0 %1066
      %1068 = vrot.lane.b32.xlu0 %v769, 4
      %v1069 = vpop.permute.xlu0 %1068
      %1070 = vrot.lane.b32.xlu0 %v770, 4
      %v1071 = vpop.permute.xlu0 %1070
      %1072 = vrot.lane.b32.xlu0 %v771, 4
      %v1073 = vpop.permute.xlu0 %1072
      %1074 = vrot.lane.b32.xlu0 %v772, 4
      %v1075 = vpop.permute.xlu0 %1074
      %1076 = vrot.lane.b32.xlu0 %v773, 4
      %v1077 = vpop.permute.xlu0 %1076
      %1078 = vrot.lane.b32.xlu0 %v774, 4
      %v1079 = vpop.permute.xlu0 %1078
      %1080 = vrot.lane.b32.xlu0 %v775, 4
      %v1081 = vpop.permute.xlu0 %1080
      %1082 = vrot.lane.b32.xlu0 %v776, 4
      %v1083 = vpop.permute.xlu0 %1082
      %1084 = vrot.lane.b32.xlu0 %v777, 4
      %v1085 = vpop.permute.xlu0 %1084
      %1086 = vrot.lane.b32.xlu0 %v778, 4
      %v1087 = vpop.permute.xlu0 %1086
      %1088 = vrot.lane.b32.xlu0 %v779, 4
      %v1089 = vpop.permute.xlu0 %1088
      %1090 = vrot.lane.b32.xlu0 %v780, 4
      %v1091 = vpop.permute.xlu0 %1090
      %1092 = vrot.lane.b32.xlu0 %v781, 4
      %v1093 = vpop.permute.xlu0 %1092
      %1094 = vrot.lane.b32.xlu0 %v782, 4
      %v1095 = vpop.permute.xlu0 %1094
      %1096 = vrot.lane.b32.xlu0 %v783, 4
      %v1097 = vpop.permute.xlu0 %1096
      %1098 = vrot.lane.b32.xlu0 %v784, 4
      %v1099 = vpop.permute.xlu0 %1098
      %1100 = vrot.lane.b32.xlu0 %v785, 4
      %v1101 = vpop.permute.xlu0 %1100
      %1102 = vrot.lane.b32.xlu0 %v786, 4
      %v1103 = vpop.permute.xlu0 %1102
      %1104 = vrot.lane.b32.xlu0 %v787, 4
      %v1105 = vpop.permute.xlu0 %1104
      %1106 = vrot.lane.b32.xlu0 %v788, 4
      %v1107 = vpop.permute.xlu0 %1106
      %1108 = vrot.lane.b32.xlu0 %v789, 4
      %v1109 = vpop.permute.xlu0 %1108
      %1110 = vrot.lane.b32.xlu0 %v790, 4
      %v1111 = vpop.permute.xlu0 %1110
      %1176 = vrot.lane.b32.xlu0 %v791, 8
      %v1177 = vpop.permute.xlu0 %1176
      %1178 = vrot.lane.b32.xlu0 %v792, 8
      %v1179 = vpop.permute.xlu0 %1178
      %1180 = vrot.lane.b32.xlu0 %v793, 8
      %v1181 = vpop.permute.xlu0 %1180
      %1182 = vrot.lane.b32.xlu0 %v794, 8
      %v1183 = vpop.permute.xlu0 %1182
      %1184 = vrot.lane.b32.xlu0 %v795, 8
      %v1185 = vpop.permute.xlu0 %1184
      %1186 = vrot.lane.b32.xlu0 %v796, 8
      %v1187 = vpop.permute.xlu0 %1186
      %1188 = vrot.lane.b32.xlu0 %v797, 8
      %v1189 = vpop.permute.xlu0 %1188
      %1190 = vrot.lane.b32.xlu0 %v798, 8
      %v1191 = vpop.permute.xlu0 %1190
      %1192 = vrot.lane.b32.xlu0 %v799, 8
      %v1193 = vpop.permute.xlu0 %1192
      %1194 = vrot.lane.b32.xlu0 %v800, 8
      %v1195 = vpop.permute.xlu0 %1194
      %1196 = vrot.lane.b32.xlu0 %v801, 8
      %v1197 = vpop.permute.xlu0 %1196
      %1198 = vrot.lane.b32.xlu0 %v802, 8
      %v1199 = vpop.permute.xlu0 %1198
      %1200 = vrot.lane.b32.xlu0 %v803, 8
      %v1201 = vpop.permute.xlu0 %1200
      %1202 = vrot.lane.b32.xlu0 %v804, 8
      %v1203 = vpop.permute.xlu0 %1202
      %1204 = vrot.lane.b32.xlu0 %v805, 8
      %v1205 = vpop.permute.xlu0 %1204
      %1206 = vrot.lane.b32.xlu0 %v806, 8
      %v1207 = vpop.permute.xlu0 %1206
      %1208 = vrot.lane.b32.xlu0 %v807, 8
      %v1209 = vpop.permute.xlu0 %1208
      %1210 = vrot.lane.b32.xlu0 %v808, 8
      %v1211 = vpop.permute.xlu0 %1210
      %1212 = vrot.lane.b32.xlu0 %v809, 8
      %v1213 = vpop.permute.xlu0 %1212
      %1214 = vrot.lane.b32.xlu0 %v810, 8
      %v1215 = vpop.permute.xlu0 %1214
      %1216 = vrot.lane.b32.xlu0 %v811, 8
      %v1217 = vpop.permute.xlu0 %1216
      %1218 = vrot.lane.b32.xlu0 %v812, 8
      %v1219 = vpop.permute.xlu0 %1218
      %1220 = vrot.lane.b32.xlu0 %v813, 8
      %v1221 = vpop.permute.xlu0 %1220
      %1222 = vrot.lane.b32.xlu0 %v814, 8
      %v1223 = vpop.permute.xlu0 %1222
      %1224 = vrot.lane.b32.xlu0 %v815, 8
      %v1225 = vpop.permute.xlu0 %1224
      %1226 = vrot.lane.b32.xlu0 %v816, 8
      %v1227 = vpop.permute.xlu0 %1226
      %1228 = vrot.lane.b32.xlu0 %v817, 8
      %v1229 = vpop.permute.xlu0 %1228
      %1230 = vrot.lane.b32.xlu0 %v818, 8
      %v1231 = vpop.permute.xlu0 %1230
      %1232 = vrot.lane.b32.xlu0 %v819, 8
      %v1233 = vpop.permute.xlu0 %1232
      %1234 = vrot.lane.b32.xlu0 %v820, 8
      %v1235 = vpop.permute.xlu0 %1234
      %1236 = vrot.lane.b32.xlu0 %v821, 8
      %v1237 = vpop.permute.xlu0 %1236
      %1238 = vrot.lane.b32.xlu0 %v822, 8
      %v1239 = vpop.permute.xlu0 %1238
      %1304 = vrot.lane.b32.xlu0 %v823, 12
      %v1305 = vpop.permute.xlu0 %1304
      %1306 = vrot.lane.b32.xlu0 %v824, 12
      %v1307 = vpop.permute.xlu0 %1306
      %1308 = vrot.lane.b32.xlu0 %v825, 12
      %v1309 = vpop.permute.xlu0 %1308
      %1310 = vrot.lane.b32.xlu0 %v826, 12
      %v1311 = vpop.permute.xlu0 %1310
      %1312 = vrot.lane.b32.xlu0 %v827, 12
      %v1313 = vpop.permute.xlu0 %1312
      %1314 = vrot.lane.b32.xlu0 %v828, 12
      %v1315 = vpop.permute.xlu0 %1314
      %1316 = vrot.lane.b32.xlu0 %v829, 12
      %v1317 = vpop.permute.xlu0 %1316
      %1318 = vrot.lane.b32.xlu0 %v830, 12
      %v1319 = vpop.permute.xlu0 %1318
      %1320 = vrot.lane.b32.xlu0 %v831, 12
      %v1321 = vpop.permute.xlu0 %1320
      %1322 = vrot.lane.b32.xlu0 %v832, 12
      %v1323 = vpop.permute.xlu0 %1322
      %1324 = vrot.lane.b32.xlu0 %v833, 12
      %v1325 = vpop.permute.xlu0 %1324
      %1326 = vrot.lane.b32.xlu0 %v834, 12
      %v1327 = vpop.permute.xlu0 %1326
      %1328 = vrot.lane.b32.xlu0 %v835, 12
      %v1329 = vpop.permute.xlu0 %1328
      %1330 = vrot.lane.b32.xlu0 %v836, 12
      %v1331 = vpop.permute.xlu0 %1330
      %1332 = vrot.lane.b32.xlu0 %v837, 12
      %v1333 = vpop.permute.xlu0 %1332
      %1334 = vrot.lane.b32.xlu0 %v838, 12
      %v1335 = vpop.permute.xlu0 %1334
      %1336 = vrot.lane.b32.xlu0 %v839, 12
      %v1337 = vpop.permute.xlu0 %1336
      %1338 = vrot.lane.b32.xlu0 %v840, 12
      %v1339 = vpop.permute.xlu0 %1338
      %1340 = vrot.lane.b32.xlu0 %v841, 12
      %v1341 = vpop.permute.xlu0 %1340
      %1342 = vrot.lane.b32.xlu0 %v842, 12
      %v1343 = vpop.permute.xlu0 %1342
      %1344 = vrot.lane.b32.xlu0 %v843, 12
      %v1345 = vpop.permute.xlu0 %1344
      %1346 = vrot.lane.b32.xlu0 %v844, 12
      %v1347 = vpop.permute.xlu0 %1346
      %1348 = vrot.lane.b32.xlu0 %v845, 12
      %v1349 = vpop.permute.xlu0 %1348
      %1350 = vrot.lane.b32.xlu0 %v846, 12
      %v1351 = vpop.permute.xlu0 %1350
      %1352 = vrot.lane.b32.xlu0 %v847, 12
      %v1353 = vpop.permute.xlu0 %1352
      %1354 = vrot.lane.b32.xlu0 %v848, 12
      %v1355 = vpop.permute.xlu0 %1354
      %1356 = vrot.lane.b32.xlu0 %v849, 12
      %v1357 = vpop.permute.xlu0 %1356
      %1358 = vrot.lane.b32.xlu0 %v850, 12
      %v1359 = vpop.permute.xlu0 %1358
      %1360 = vrot.lane.b32.xlu0 %v851, 12
      %v1361 = vpop.permute.xlu0 %1360
      %1362 = vrot.lane.b32.xlu0 %v852, 12
      %v1363 = vpop.permute.xlu0 %1362
      %1364 = vrot.lane.b32.xlu0 %v853, 12
      %v1365 = vpop.permute.xlu0 %1364
      %1366 = vrot.lane.b32.xlu0 %v854, 12
      %v1367 = vpop.permute.xlu0 %1366
      %1432 = vrot.lane.b32.xlu0 %v855, 16
      %v1433 = vpop.permute.xlu0 %1432
      %1434 = vrot.lane.b32.xlu0 %v856, 16
      %v1435 = vpop.permute.xlu0 %1434
      %1436 = vrot.lane.b32.xlu0 %v857, 16
      %v1437 = vpop.permute.xlu0 %1436
      %1438 = vrot.lane.b32.xlu0 %v858, 16
      %v1439 = vpop.permute.xlu0 %1438
      %1440 = vrot.lane.b32.xlu0 %v859, 16
      %v1441 = vpop.permute.xlu0 %1440
      %1442 = vrot.lane.b32.xlu0 %v860, 16
      %v1443 = vpop.permute.xlu0 %1442
      %1444 = vrot.lane.b32.xlu0 %v861, 16
      %v1445 = vpop.permute.xlu0 %1444
      %1446 = vrot.lane.b32.xlu0 %v862, 16
      %v1447 = vpop.permute.xlu0 %1446
      %1448 = vrot.lane.b32.xlu0 %v863, 16
      %v1449 = vpop.permute.xlu0 %1448
      %1450 = vrot.lane.b32.xlu0 %v864, 16
      %v1451 = vpop.permute.xlu0 %1450
      %1452 = vrot.lane.b32.xlu0 %v865, 16
      %v1453 = vpop.permute.xlu0 %1452
      %1454 = vrot.lane.b32.xlu0 %v866, 16
      %v1455 = vpop.permute.xlu0 %1454
      %1456 = vrot.lane.b32.xlu0 %v867, 16
      %v1457 = vpop.permute.xlu0 %1456
      %1458 = vrot.lane.b32.xlu0 %v868, 16
      %v1459 = vpop.permute.xlu0 %1458
      %1460 = vrot.lane.b32.xlu0 %v869, 16
      %v1461 = vpop.permute.xlu0 %1460
      %1462 = vrot.lane.b32.xlu0 %v870, 16
      %v1463 = vpop.permute.xlu0 %1462
      %1464 = vrot.lane.b32.xlu0 %v871, 16
      %v1465 = vpop.permute.xlu0 %1464
      %1466 = vrot.lane.b32.xlu0 %v872, 16
      %v1467 = vpop.permute.xlu0 %1466
      %1468 = vrot.lane.b32.xlu0 %v873, 16
      %v1469 = vpop.permute.xlu0 %1468
      %1470 = vrot.lane.b32.xlu0 %v874, 16
      %v1471 = vpop.permute.xlu0 %1470
      %1472 = vrot.lane.b32.xlu0 %v875, 16
      %v1473 = vpop.permute.xlu0 %1472
      %1474 = vrot.lane.b32.xlu0 %v876, 16
      %v1475 = vpop.permute.xlu0 %1474
      %1476 = vrot.lane.b32.xlu0 %v877, 16
      %v1477 = vpop.permute.xlu0 %1476
      %1478 = vrot.lane.b32.xlu0 %v878, 16
      %v1479 = vpop.permute.xlu0 %1478
      %1480 = vrot.lane.b32.xlu0 %v879, 16
      %v1481 = vpop.permute.xlu0 %1480
      %1482 = vrot.lane.b32.xlu0 %v880, 16
      %v1483 = vpop.permute.xlu0 %1482
      %1484 = vrot.lane.b32.xlu0 %v881, 16
      %v1485 = vpop.permute.xlu0 %1484
      %1486 = vrot.lane.b32.xlu0 %v882, 16
      %v1487 = vpop.permute.xlu0 %1486
      %1488 = vrot.lane.b32.xlu0 %v883, 16
      %v1489 = vpop.permute.xlu0 %1488
      %1490 = vrot.lane.b32.xlu0 %v884, 16
      %v1491 = vpop.permute.xlu0 %1490
      %1492 = vrot.lane.b32.xlu0 %v885, 16
      %v1493 = vpop.permute.xlu0 %1492
      %1494 = vrot.lane.b32.xlu0 %v886, 16
      %v1495 = vpop.permute.xlu0 %1494
      %1560 = vrot.lane.b32.xlu0 %v887, 20
      %v1561 = vpop.permute.xlu0 %1560
      %1562 = vrot.lane.b32.xlu0 %v888, 20
      %v1563 = vpop.permute.xlu0 %1562
      %1564 = vrot.lane.b32.xlu0 %v889, 20
      %v1565 = vpop.permute.xlu0 %1564
      %1566 = vrot.lane.b32.xlu0 %v890, 20
      %v1567 = vpop.permute.xlu0 %1566
      %1568 = vrot.lane.b32.xlu0 %v891, 20
      %v1569 = vpop.permute.xlu0 %1568
      %1570 = vrot.lane.b32.xlu0 %v892, 20
      %v1571 = vpop.permute.xlu0 %1570
      %1572 = vrot.lane.b32.xlu0 %v893, 20
      %v1573 = vpop.permute.xlu0 %1572
      %1574 = vrot.lane.b32.xlu0 %v894, 20
      %v1575 = vpop.permute.xlu0 %1574
      %1576 = vrot.lane.b32.xlu0 %v895, 20
      %v1577 = vpop.permute.xlu0 %1576
      %1578 = vrot.lane.b32.xlu0 %v896, 20
      %v1579 = vpop.permute.xlu0 %1578
      %1580 = vrot.lane.b32.xlu0 %v897, 20
      %v1581 = vpop.permute.xlu0 %1580
      %1582 = vrot.lane.b32.xlu0 %v898, 20
      %v1583 = vpop.permute.xlu0 %1582
      %1584 = vrot.lane.b32.xlu0 %v899, 20
      %v1585 = vpop.permute.xlu0 %1584
      %1586 = vrot.lane.b32.xlu0 %v900, 20
      %v1587 = vpop.permute.xlu0 %1586
      %1588 = vrot.lane.b32.xlu0 %v901, 20
      %v1589 = vpop.permute.xlu0 %1588
      %1590 = vrot.lane.b32.xlu0 %v902, 20
      %v1591 = vpop.permute.xlu0 %1590
      %1592 = vrot.lane.b32.xlu0 %v903, 20
      %v1593 = vpop.permute.xlu0 %1592
      %1594 = vrot.lane.b32.xlu0 %v904, 20
      %v1595 = vpop.permute.xlu0 %1594
      %1596 = vrot.lane.b32.xlu0 %v905, 20
      %v1597 = vpop.permute.xlu0 %1596
      %1598 = vrot.lane.b32.xlu0 %v906, 20
      %v1599 = vpop.permute.xlu0 %1598
      %1600 = vrot.lane.b32.xlu0 %v907, 20
      %v1601 = vpop.permute.xlu0 %1600
      %1602 = vrot.lane.b32.xlu0 %v908, 20
      %v1603 = vpop.permute.xlu0 %1602
      %1604 = vrot.lane.b32.xlu0 %v909, 20
      %v1605 = vpop.permute.xlu0 %1604
      %1606 = vrot.lane.b32.xlu0 %v910, 20
      %v1607 = vpop.permute.xlu0 %1606
      %1608 = vrot.lane.b32.xlu0 %v911, 20
      %v1609 = vpop.permute.xlu0 %1608
      %1610 = vrot.lane.b32.xlu0 %v912, 20
      %v1611 = vpop.permute.xlu0 %1610
      %1612 = vrot.lane.b32.xlu0 %v913, 20
      %v1613 = vpop.permute.xlu0 %1612
      %1614 = vrot.lane.b32.xlu0 %v914, 20
      %v1615 = vpop.permute.xlu0 %1614
      %1616 = vrot.lane.b32.xlu0 %v915, 20
      %v1617 = vpop.permute.xlu0 %1616
      %1618 = vrot.lane.b32.xlu0 %v916, 20
      %v1619 = vpop.permute.xlu0 %1618
      %1620 = vrot.lane.b32.xlu0 %v917, 20
      %v1621 = vpop.permute.xlu0 %1620
      %1622 = vrot.lane.b32.xlu0 %v918, 20
      %v1623 = vpop.permute.xlu0 %1622
      %1688 = vrot.lane.b32.xlu0 %v920, 24
      %v1689 = vpop.permute.xlu0 %1688
      %1690 = vrot.lane.b32.xlu0 %v921, 24
      %v1691 = vpop.permute.xlu0 %1690
      %1692 = vrot.lane.b32.xlu0 %v922, 24
      %v1693 = vpop.permute.xlu0 %1692
      %1694 = vrot.lane.b32.xlu0 %v923, 24
      %v1695 = vpop.permute.xlu0 %1694
      %1696 = vrot.lane.b32.xlu0 %v924, 24
      %v1697 = vpop.permute.xlu0 %1696
      %1698 = vrot.lane.b32.xlu0 %v925, 24
      %v1699 = vpop.permute.xlu0 %1698
      %1700 = vrot.lane.b32.xlu0 %v926, 24
      %v1701 = vpop.permute.xlu0 %1700
      %1702 = vrot.lane.b32.xlu0 %v927, 24
      %v1703 = vpop.permute.xlu0 %1702
      %1704 = vrot.lane.b32.xlu0 %v928, 24
      %v1705 = vpop.permute.xlu0 %1704
      %1706 = vrot.lane.b32.xlu0 %v929, 24
      %v1707 = vpop.permute.xlu0 %1706
      %1708 = vrot.lane.b32.xlu0 %v930, 24
      %v1709 = vpop.permute.xlu0 %1708
      %1710 = vrot.lane.b32.xlu0 %v931, 24
      %v1711 = vpop.permute.xlu0 %1710
      %1712 = vrot.lane.b32.xlu0 %v932, 24
      %v1713 = vpop.permute.xlu0 %1712
      %1714 = vrot.lane.b32.xlu0 %v933, 24
      %v1715 = vpop.permute.xlu0 %1714
      %1716 = vrot.lane.b32.xlu0 %v934, 24
      %v1717 = vpop.permute.xlu0 %1716
      %1718 = vrot.lane.b32.xlu0 %v935, 24
      %v1719 = vpop.permute.xlu0 %1718
      %1720 = vrot.lane.b32.xlu0 %v936, 24
      %v1721 = vpop.permute.xlu0 %1720
      %1722 = vrot.lane.b32.xlu0 %v937, 24
      %v1723 = vpop.permute.xlu0 %1722
      %1724 = vrot.lane.b32.xlu0 %v938, 24
      %v1725 = vpop.permute.xlu0 %1724
      %1726 = vrot.lane.b32.xlu0 %v939, 24
      %v1727 = vpop.permute.xlu0 %1726
      %1728 = vrot.lane.b32.xlu0 %v940, 24
      %v1729 = vpop.permute.xlu0 %1728
      %1730 = vrot.lane.b32.xlu0 %v941, 24
      %v1731 = vpop.permute.xlu0 %1730
      %1732 = vrot.lane.b32.xlu0 %v942, 24
      %v1733 = vpop.permute.xlu0 %1732
      %1734 = vrot.lane.b32.xlu0 %v943, 24
      %v1735 = vpop.permute.xlu0 %1734
      %1736 = vrot.lane.b32.xlu0 %v944, 24
      %v1737 = vpop.permute.xlu0 %1736
      %1738 = vrot.lane.b32.xlu0 %v945, 24
      %v1739 = vpop.permute.xlu0 %1738
      %1740 = vrot.lane.b32.xlu0 %v946, 24
      %v1741 = vpop.permute.xlu0 %1740
      %1742 = vrot.lane.b32.xlu0 %v947, 24
      %v1743 = vpop.permute.xlu0 %1742
      %1744 = vrot.lane.b32.xlu0 %v948, 24
      %v1745 = vpop.permute.xlu0 %1744
      %1746 = vrot.lane.b32.xlu0 %v949, 24
      %v1747 = vpop.permute.xlu0 %1746
      %1748 = vrot.lane.b32.xlu0 %v950, 24
      %v1749 = vpop.permute.xlu0 %1748
      %1750 = vrot.lane.b32.xlu0 %v951, 24
      %v1751 = vpop.permute.xlu0 %1750
      %1816 = vrot.lane.b32.xlu0 %v952, 28
      %v1817 = vpop.permute.xlu0 %1816
      %1818 = vrot.lane.b32.xlu0 %v953, 28
      %v1819 = vpop.permute.xlu0 %1818
      %1820 = vrot.lane.b32.xlu0 %v954, 28
      %v1821 = vpop.permute.xlu0 %1820
      %1822 = vrot.lane.b32.xlu0 %v955, 28
      %v1823 = vpop.permute.xlu0 %1822
      %1824 = vrot.lane.b32.xlu0 %v956, 28
      %v1825 = vpop.permute.xlu0 %1824
      %1826 = vrot.lane.b32.xlu0 %v957, 28
      %v1827 = vpop.permute.xlu0 %1826
      %1828 = vrot.lane.b32.xlu0 %v958, 28
      %v1829 = vpop.permute.xlu0 %1828
      %1830 = vrot.lane.b32.xlu0 %v959, 28
      %v1831 = vpop.permute.xlu0 %1830
      %1832 = vrot.lane.b32.xlu0 %v960, 28
      %v1833 = vpop.permute.xlu0 %1832
      %1834 = vrot.lane.b32.xlu0 %v961, 28
      %v1835 = vpop.permute.xlu0 %1834
      %1836 = vrot.lane.b32.xlu0 %v962, 28
      %v1837 = vpop.permute.xlu0 %1836
      %1838 = vrot.lane.b32.xlu0 %v963, 28
      %v1839 = vpop.permute.xlu0 %1838
      %1840 = vrot.lane.b32.xlu0 %v964, 28
      %v1841 = vpop.permute.xlu0 %1840
      %1842 = vrot.lane.b32.xlu0 %v965, 28
      %v1843 = vpop.permute.xlu0 %1842
      %1844 = vrot.lane.b32.xlu0 %v966, 28
      %v1845 = vpop.permute.xlu0 %1844
      %1846 = vrot.lane.b32.xlu0 %v967, 28
      %v1847 = vpop.permute.xlu0 %1846
      %1848 = vrot.lane.b32.xlu0 %v968, 28
      %v1849 = vpop.permute.xlu0 %1848
      %1850 = vrot.lane.b32.xlu0 %v969, 28
      %v1851 = vpop.permute.xlu0 %1850
      %1852 = vrot.lane.b32.xlu0 %v970, 28
      %v1853 = vpop.permute.xlu0 %1852
      %1854 = vrot.lane.b32.xlu0 %v971, 28
      %v1855 = vpop.permute.xlu0 %1854
      %1856 = vrot.lane.b32.xlu0 %v972, 28
      %v1857 = vpop.permute.xlu0 %1856
      %1858 = vrot.lane.b32.xlu0 %v973, 28
      %v1859 = vpop.permute.xlu0 %1858
      %1860 = vrot.lane.b32.xlu0 %v974, 28
      %v1861 = vpop.permute.xlu0 %1860
      %1862 = vrot.lane.b32.xlu0 %v975, 28
      %v1863 = vpop.permute.xlu0 %1862
      %1864 = vrot.lane.b32.xlu0 %v976, 28
      %v1865 = vpop.permute.xlu0 %1864
      %1866 = vrot.lane.b32.xlu0 %v977, 28
      %v1867 = vpop.permute.xlu0 %1866
      %1868 = vrot.lane.b32.xlu0 %v978, 28
      %v1869 = vpop.permute.xlu0 %1868
      %1870 = vrot.lane.b32.xlu0 %v979, 28
      %v1871 = vpop.permute.xlu0 %1870
      %1872 = vrot.lane.b32.xlu0 %v980, 28
      %v1873 = vpop.permute.xlu0 %1872
      %1874 = vrot.lane.b32.xlu0 %v981, 28
      %v1875 = vpop.permute.xlu0 %1874
      %1876 = vrot.lane.b32.xlu0 %v982, 28
      %v1877 = vpop.permute.xlu0 %1876
      %1878 = vrot.lane.b32.xlu0 %v983, 28
      %v1879 = vpop.permute.xlu0 %1878
      %1944 = vrot.lane.b32.xlu0 %v984, 32
      %v1945 = vpop.permute.xlu0 %1944
      %1946 = vrot.lane.b32.xlu0 %v985, 32
      %v1947 = vpop.permute.xlu0 %1946
      %1948 = vrot.lane.b32.xlu0 %v986, 32
      %v1949 = vpop.permute.xlu0 %1948
      %1950 = vrot.lane.b32.xlu0 %v987, 32
      %v1951 = vpop.permute.xlu0 %1950
      %1952 = vrot.lane.b32.xlu0 %v988, 32
      %v1953 = vpop.permute.xlu0 %1952
      %1954 = vrot.lane.b32.xlu0 %v989, 32
      %v1955 = vpop.permute.xlu0 %1954
      %1956 = vrot.lane.b32.xlu0 %v990, 32
      %v1957 = vpop.permute.xlu0 %1956
      %1958 = vrot.lane.b32.xlu0 %v991, 32
      %v1959 = vpop.permute.xlu0 %1958
      %1960 = vrot.lane.b32.xlu0 %v992, 32
      %v1961 = vpop.permute.xlu0 %1960
      %1962 = vrot.lane.b32.xlu0 %v993, 32
      %v1963 = vpop.permute.xlu0 %1962
      %1964 = vrot.lane.b32.xlu0 %v994, 32
      %v1965 = vpop.permute.xlu0 %1964
      %1966 = vrot.lane.b32.xlu0 %v995, 32
      %v1967 = vpop.permute.xlu0 %1966
      %1968 = vrot.lane.b32.xlu0 %v996, 32
      %v1969 = vpop.permute.xlu0 %1968
      %1970 = vrot.lane.b32.xlu0 %v997, 32
      %v1971 = vpop.permute.xlu0 %1970
      %1972 = vrot.lane.b32.xlu0 %v998, 32
      %v1973 = vpop.permute.xlu0 %1972
      %1974 = vrot.lane.b32.xlu0 %v999, 32
      %v1975 = vpop.permute.xlu0 %1974
      %1976 = vrot.lane.b32.xlu0 %v1000, 32
      %v1977 = vpop.permute.xlu0 %1976
      %1978 = vrot.lane.b32.xlu0 %v1001, 32
      %v1979 = vpop.permute.xlu0 %1978
      %1980 = vrot.lane.b32.xlu0 %v1002, 32
      %v1981 = vpop.permute.xlu0 %1980
      %1982 = vrot.lane.b32.xlu0 %v1003, 32
      %v1983 = vpop.permute.xlu0 %1982
      %1984 = vrot.lane.b32.xlu0 %v1004, 32
      %v1985 = vpop.permute.xlu0 %1984
      %1986 = vrot.lane.b32.xlu0 %v1005, 32
      %v1987 = vpop.permute.xlu0 %1986
      %1988 = vrot.lane.b32.xlu0 %v1006, 32
      %v1989 = vpop.permute.xlu0 %1988
      %1990 = vrot.lane.b32.xlu0 %v1007, 32
      %v1991 = vpop.permute.xlu0 %1990
      %1992 = vrot.lane.b32.xlu0 %v1008, 32
      %v1993 = vpop.permute.xlu0 %1992
      %1994 = vrot.lane.b32.xlu0 %v1009, 32
      %v1995 = vpop.permute.xlu0 %1994
      %1996 = vrot.lane.b32.xlu0 %v1010, 32
      %v1997 = vpop.permute.xlu0 %1996
      %1998 = vrot.lane.b32.xlu0 %v1011, 32
      %v1999 = vpop.permute.xlu0 %1998
      %2000 = vrot.lane.b32.xlu0 %v1012, 32
      %v2001 = vpop.permute.xlu0 %2000
      %2002 = vrot.lane.b32.xlu0 %v1013, 32
      %v2003 = vpop.permute.xlu0 %2002
      %2004 = vrot.lane.b32.xlu0 %v1014, 32
      %v2005 = vpop.permute.xlu0 %2004
      %2006 = vrot.lane.b32.xlu0 %v1015, 32
      %v2007 = vpop.permute.xlu0 %2006
      %v2040 = vsel %vm519, %v727, %v1049
      %v2041 = vsel %vm519, %v728, %v1051
      %v2042 = vsel %vm519, %v729, %v1053
      %v2043 = vsel %vm519, %v730, %v1055
      %v2044 = vsel %vm519, %v731, %v1057
      %v2045 = vsel %vm519, %v732, %v1059
      %v2046 = vsel %vm519, %v733, %v1061
      %v2047 = vsel %vm519, %v734, %v1063
      %v2048 = vsel %vm519, %v735, %v1065
      %v2049 = vsel %vm519, %v736, %v1067
      %v2050 = vsel %vm519, %v737, %v1069
      %v2051 = vsel %vm519, %v738, %v1071
      %v2052 = vsel %vm519, %v739, %v1073
      %v2053 = vsel %vm519, %v740, %v1075
      %v2054 = vsel %vm519, %v741, %v1077
      %v2055 = vsel %vm519, %v742, %v1079
      %v2056 = vsel %vm519, %v743, %v1081
      %v2057 = vsel %vm519, %v744, %v1083
      %v2058 = vsel %vm519, %v745, %v1085
      %v2059 = vsel %vm519, %v746, %v1087
      %v2060 = vsel %vm519, %v747, %v1089
      %v2061 = vsel %vm519, %v748, %v1091
      %v2062 = vsel %vm519, %v749, %v1093
      %v2063 = vsel %vm519, %v750, %v1095
      %v2064 = vsel %vm519, %v751, %v1097
      %v2065 = vsel %vm519, %v752, %v1099
      %v2066 = vsel %vm519, %v753, %v1101
      %v2067 = vsel %vm519, %v754, %v1103
      %v2068 = vsel %vm519, %v755, %v1105
      %v2069 = vsel %vm519, %v756, %v1107
      %v2070 = vsel %vm519, %v757, %v1109
      %v2071 = vsel %vm519, %v758, %v1111
      %vm2072 = vcmask 64512
      %v2073 = vsel %vm2072, %v2040, %v1177
      %v2074 = vsel %vm2072, %v2041, %v1179
      %v2075 = vsel %vm2072, %v2042, %v1181
      %v2076 = vsel %vm2072, %v2043, %v1183
      %v2077 = vsel %vm2072, %v2044, %v1185
      %v2078 = vsel %vm2072, %v2045, %v1187
      %v2079 = vsel %vm2072, %v2046, %v1189
      %v2080 = vsel %vm2072, %v2047, %v1191
      %v2081 = vsel %vm2072, %v2048, %v1193
      %v2082 = vsel %vm2072, %v2049, %v1195
      %v2083 = vsel %vm2072, %v2050, %v1197
      %v2084 = vsel %vm2072, %v2051, %v1199
      %v2085 = vsel %vm2072, %v2052, %v1201
      %v2086 = vsel %vm2072, %v2053, %v1203
      %v2087 = vsel %vm2072, %v2054, %v1205
      %v2088 = vsel %vm2072, %v2055, %v1207
      %v2089 = vsel %vm2072, %v2056, %v1209
      %v2090 = vsel %vm2072, %v2057, %v1211
      %v2091 = vsel %vm2072, %v2058, %v1213
      %v2092 = vsel %vm2072, %v2059, %v1215
      %v2093 = vsel %vm2072, %v2060, %v1217
      %v2094 = vsel %vm2072, %v2061, %v1219
      %v2095 = vsel %vm2072, %v2062, %v1221
      %v2096 = vsel %vm2072, %v2063, %v1223
      %v2097 = vsel %vm2072, %v2064, %v1225
      %v2098 = vsel %vm2072, %v2065, %v1227
      %v2099 = vsel %vm2072, %v2066, %v1229
      %v2100 = vsel %vm2072, %v2067, %v1231
      %v2101 = vsel %vm2072, %v2068, %v1233
      %v2102 = vsel %vm2072, %v2069, %v1235
      %v2103 = vsel %vm2072, %v2070, %v1237
      %v2104 = vsel %vm2072, %v2071, %v1239
      %vm2105 = vcmask 97280
      %v2106 = vsel %vm2105, %v2073, %v1305
      %v2107 = vsel %vm2105, %v2074, %v1307
      %v2108 = vsel %vm2105, %v2075, %v1309
      %v2109 = vsel %vm2105, %v2076, %v1311
      %v2110 = vsel %vm2105, %v2077, %v1313
      %v2111 = vsel %vm2105, %v2078, %v1315
      %v2112 = vsel %vm2105, %v2079, %v1317
      %v2113 = vsel %vm2105, %v2080, %v1319
      %v2114 = vsel %vm2105, %v2081, %v1321
      %v2115 = vsel %vm2105, %v2082, %v1323
      %v2116 = vsel %vm2105, %v2083, %v1325
      %v2117 = vsel %vm2105, %v2084, %v1327
      %v2118 = vsel %vm2105, %v2085, %v1329
      %v2119 = vsel %vm2105, %v2086, %v1331
      %v2120 = vsel %vm2105, %v2087, %v1333
      %v2121 = vsel %vm2105, %v2088, %v1335
      %v2122 = vsel %vm2105, %v2089, %v1337
      %v2123 = vsel %vm2105, %v2090, %v1339
      %v2124 = vsel %vm2105, %v2091, %v1341
      %v2125 = vsel %vm2105, %v2092, %v1343
      %v2126 = vsel %vm2105, %v2093, %v1345
      %v2127 = vsel %vm2105, %v2094, %v1347
      %v2128 = vsel %vm2105, %v2095, %v1349
      %v2129 = vsel %vm2105, %v2096, %v1351
      %v2130 = vsel %vm2105, %v2097, %v1353
      %v2131 = vsel %vm2105, %v2098, %v1355
      %v2132 = vsel %vm2105, %v2099, %v1357
      %v2133 = vsel %vm2105, %v2100, %v1359
      %v2134 = vsel %vm2105, %v2101, %v1361
      %v2135 = vsel %vm2105, %v2102, %v1363
      %v2136 = vsel %vm2105, %v2103, %v1365
      %v2137 = vsel %vm2105, %v2104, %v1367
      %v2138 = vsel %vm441, %v2106, %v1433
      %v2139 = vsel %vm441, %v2107, %v1435
      %v2140 = vsel %vm441, %v2108, %v1437
      %v2141 = vsel %vm441, %v2109, %v1439
      %v2142 = vsel %vm441, %v2110, %v1441
      %v2143 = vsel %vm441, %v2111, %v1443
      %v2144 = vsel %vm441, %v2112, %v1445
      %v2145 = vsel %vm441, %v2113, %v1447
      %v2146 = vsel %vm441, %v2114, %v1449
      %v2147 = vsel %vm441, %v2115, %v1451
      %v2148 = vsel %vm441, %v2116, %v1453
      %v2149 = vsel %vm441, %v2117, %v1455
      %v2150 = vsel %vm441, %v2118, %v1457
      %v2151 = vsel %vm441, %v2119, %v1459
      %v2152 = vsel %vm441, %v2120, %v1461
      %v2153 = vsel %vm441, %v2121, %v1463
      %v2154 = vsel %vm441, %v2122, %v1465
      %v2155 = vsel %vm441, %v2123, %v1467
      %v2156 = vsel %vm441, %v2124, %v1469
      %v2157 = vsel %vm441, %v2125, %v1471
      %v2158 = vsel %vm441, %v2126, %v1473
      %v2159 = vsel %vm441, %v2127, %v1475
      %v2160 = vsel %vm441, %v2128, %v1477
      %v2161 = vsel %vm441, %v2129, %v1479
      %v2162 = vsel %vm441, %v2130, %v1481
      %v2163 = vsel %vm441, %v2131, %v1483
      %v2164 = vsel %vm441, %v2132, %v1485
      %v2165 = vsel %vm441, %v2133, %v1487
      %v2166 = vsel %vm441, %v2134, %v1489
      %v2167 = vsel %vm441, %v2135, %v1491
      %v2168 = vsel %vm441, %v2136, %v1493
      %v2169 = vsel %vm441, %v2137, %v1495
      %vm2170 = vcmask 162816
      %v2171 = vsel %vm2170, %v2138, %v1561
      %v2172 = vsel %vm2170, %v2139, %v1563
      %v2173 = vsel %vm2170, %v2140, %v1565
      %v2174 = vsel %vm2170, %v2141, %v1567
      %v2175 = vsel %vm2170, %v2142, %v1569
      %v2176 = vsel %vm2170, %v2143, %v1571
      %v2177 = vsel %vm2170, %v2144, %v1573
      %v2178 = vsel %vm2170, %v2145, %v1575
      %v2179 = vsel %vm2170, %v2146, %v1577
      %v2180 = vsel %vm2170, %v2147, %v1579
      %v2181 = vsel %vm2170, %v2148, %v1581
      %v2182 = vsel %vm2170, %v2149, %v1583
      %v2183 = vsel %vm2170, %v2150, %v1585
      %v2184 = vsel %vm2170, %v2151, %v1587
      %v2185 = vsel %vm2170, %v2152, %v1589
      %v2186 = vsel %vm2170, %v2153, %v1591
      %v2187 = vsel %vm2170, %v2154, %v1593
      %v2188 = vsel %vm2170, %v2155, %v1595
      %v2189 = vsel %vm2170, %v2156, %v1597
      %v2190 = vsel %vm2170, %v2157, %v1599
      %v2191 = vsel %vm2170, %v2158, %v1601
      %v2192 = vsel %vm2170, %v2159, %v1603
      %v2193 = vsel %vm2170, %v2160, %v1605
      %v2194 = vsel %vm2170, %v2161, %v1607
      %v2195 = vsel %vm2170, %v2162, %v1609
      %v2196 = vsel %vm2170, %v2163, %v1611
      %v2197 = vsel %vm2170, %v2164, %v1613
      %v2198 = vsel %vm2170, %v2165, %v1615
      %v2199 = vsel %vm2170, %v2166, %v1617
      %v2200 = vsel %vm2170, %v2167, %v1619
      %v2201 = vsel %vm2170, %v2168, %v1621
      %v2202 = vsel %vm2170, %v2169, %v1623
      %vm2203 = vcmask 195584
      %v2204 = vsel %vm2203, %v2171, %v1689
      %v2205 = vsel %vm2203, %v2172, %v1691
      %v2206 = vsel %vm2203, %v2173, %v1693
      %v2207 = vsel %vm2203, %v2174, %v1695
      %v2208 = vsel %vm2203, %v2175, %v1697
      %v2209 = vsel %vm2203, %v2176, %v1699
      %v2210 = vsel %vm2203, %v2177, %v1701
      %v2211 = vsel %vm2203, %v2178, %v1703
      %v2212 = vsel %vm2203, %v2179, %v1705
      %v2213 = vsel %vm2203, %v2180, %v1707
      %v2214 = vsel %vm2203, %v2181, %v1709
      %v2215 = vsel %vm2203, %v2182, %v1711
      %v2216 = vsel %vm2203, %v2183, %v1713
      %v2217 = vsel %vm2203, %v2184, %v1715
      %v2218 = vsel %vm2203, %v2185, %v1717
      %v2219 = vsel %vm2203, %v2186, %v1719
      %v2220 = vsel %vm2203, %v2187, %v1721
      %v2221 = vsel %vm2203, %v2188, %v1723
      %v2222 = vsel %vm2203, %v2189, %v1725
      %v2223 = vsel %vm2203, %v2190, %v1727
      %v2224 = vsel %vm2203, %v2191, %v1729
      %v2225 = vsel %vm2203, %v2192, %v1731
      %v2226 = vsel %vm2203, %v2193, %v1733
      %v2227 = vsel %vm2203, %v2194, %v1735
      %v2228 = vsel %vm2203, %v2195, %v1737
      %v2229 = vsel %vm2203, %v2196, %v1739
      %v2230 = vsel %vm2203, %v2197, %v1741
      %v2231 = vsel %vm2203, %v2198, %v1743
      %v2232 = vsel %vm2203, %v2199, %v1745
      %v2233 = vsel %vm2203, %v2200, %v1747
      %v2234 = vsel %vm2203, %v2201, %v1749
      %v2235 = vsel %vm2203, %v2202, %v1751
      %vm2236 = vcmask 228352
      %v2237 = vsel %vm2236, %v2204, %v1817
      %v2238 = vsel %vm2236, %v2205, %v1819
      %v2239 = vsel %vm2236, %v2206, %v1821
      %v2240 = vsel %vm2236, %v2207, %v1823
      %v2241 = vsel %vm2236, %v2208, %v1825
      %v2242 = vsel %vm2236, %v2209, %v1827
      %v2243 = vsel %vm2236, %v2210, %v1829
      %v2244 = vsel %vm2236, %v2211, %v1831
      %v2245 = vsel %vm2236, %v2212, %v1833
      %v2246 = vsel %vm2236, %v2213, %v1835
      %v2247 = vsel %vm2236, %v2214, %v1837
      %v2248 = vsel %vm2236, %v2215, %v1839
      %v2249 = vsel %vm2236, %v2216, %v1841
      %v2250 = vsel %vm2236, %v2217, %v1843
      %v2251 = vsel %vm2236, %v2218, %v1845
      %v2252 = vsel %vm2236, %v2219, %v1847
      %v2253 = vsel %vm2236, %v2220, %v1849
      %v2254 = vsel %vm2236, %v2221, %v1851
      %v2255 = vsel %vm2236, %v2222, %v1853
      %v2256 = vsel %vm2236, %v2223, %v1855
      %v2257 = vsel %vm2236, %v2224, %v1857
      %v2258 = vsel %vm2236, %v2225, %v1859
      %v2259 = vsel %vm2236, %v2226, %v1861
      %v2260 = vsel %vm2236, %v2227, %v1863
      %v2261 = vsel %vm2236, %v2228, %v1865
      %v2262 = vsel %vm2236, %v2229, %v1867
      %v2263 = vsel %vm2236, %v2230, %v1869
      %v2264 = vsel %vm2236, %v2231, %v1871
      %v2265 = vsel %vm2236, %v2232, %v1873
      %v2266 = vsel %vm2236, %v2233, %v1875
      %v2267 = vsel %vm2236, %v2234, %v1877
      %v2268 = vsel %vm2236, %v2235, %v1879
      %vm2269 = vcmask 261120
      %v2270 = vsel %vm2269, %v2237, %v1945
      %v2271 = vsel %vm2269, %v2238, %v1947
      %v2272 = vsel %vm2269, %v2239, %v1949
      %v2273 = vsel %vm2269, %v2240, %v1951
      %v2274 = vsel %vm2269, %v2241, %v1953
      %v2275 = vsel %vm2269, %v2242, %v1955
      %v2276 = vsel %vm2269, %v2243, %v1957
      %v2277 = vsel %vm2269, %v2244, %v1959
      %v2278 = vsel %vm2269, %v2245, %v1961
      %v2279 = vsel %vm2269, %v2246, %v1963
      %v2280 = vsel %vm2269, %v2247, %v1965
      %v2281 = vsel %vm2269, %v2248, %v1967
      %v2282 = vsel %vm2269, %v2249, %v1969
      %v2283 = vsel %vm2269, %v2250, %v1971
      %v2284 = vsel %vm2269, %v2251, %v1973
      %v2285 = vsel %vm2269, %v2252, %v1975
      %v2286 = vsel %vm2269, %v2253, %v1977
      %v2287 = vsel %vm2269, %v2254, %v1979
      %v2288 = vsel %vm2269, %v2255, %v1981
      %v2289 = vsel %vm2269, %v2256, %v1983
      %v2290 = vsel %vm2269, %v2257, %v1985
      %v2291 = vsel %vm2269, %v2258, %v1987
      %v2292 = vsel %vm2269, %v2259, %v1989
      %v2293 = vsel %vm2269, %v2260, %v1991
      %v2294 = vsel %vm2269, %v2261, %v1993
      %v2295 = vsel %vm2269, %v2262, %v1995
      %v2296 = vsel %vm2269, %v2263, %v1997
      %v2297 = vsel %vm2269, %v2264, %v1999
      %v2298 = vsel %vm2269, %v2265, %v2001
      %v2299 = vsel %vm2269, %v2266, %v2003
      %v2300 = vsel %vm2269, %v2267, %v2005
      %v2301 = vsel %vm2269, %v2268, %v2007
      %v2302 = vld [vmem:[%s3] sm:$0xff]
      %v2303 = vld [vmem:[%s3 + $0x8] sm:$0xff]
      %v2304 = vld [vmem:[%s3 + $0x10] sm:$0xff]
      %v2305 = vld [vmem:[%s3 + $0x18] sm:$0xff]
      %v2306 = vld [vmem:[%s3 + $0x20] sm:$0xf]
      %v2307 = vld [vmem:[%s4] sm:$0x1]
      %v2309 = vlaneseq
      %v2310 = vshrl.u32 %v2309, 7
      %v2311 = vsub.s32 0, %v2310
      %v2312 = vrot.slane %v2307, %v2311
      %vm2314 = vcmask 293888
      %v2316 = vsel %vm2314, %v2270, 0
      %v2319 = vsel %vm2314, %v2271, 0
      %v2322 = vsel %vm2314, %v2272, 0
      %v2325 = vsel %vm2314, %v2273, 0
      %v2328 = vsel %vm2314, %v2274, 0
      %v2331 = vsel %vm2314, %v2275, 0
      %v2334 = vsel %vm2314, %v2276, 0
      %v2337 = vsel %vm2314, %v2277, 0
      %v2340 = vsel %vm2314, %v2278, 0
      %v2343 = vsel %vm2314, %v2279, 0
      %v2346 = vsel %vm2314, %v2280, 0
      %v2349 = vsel %vm2314, %v2281, 0
      %v2352 = vsel %vm2314, %v2282, 0
      %v2355 = vsel %vm2314, %v2283, 0
      %v2358 = vsel %vm2314, %v2284, 0
      %v2361 = vsel %vm2314, %v2285, 0
      %v2364 = vsel %vm2314, %v2286, 0
      %v2367 = vsel %vm2314, %v2287, 0
      %v2370 = vsel %vm2314, %v2288, 0
      %v2373 = vsel %vm2314, %v2289, 0
      %v2376 = vsel %vm2314, %v2290, 0
      %v2379 = vsel %vm2314, %v2291, 0
      %v2382 = vsel %vm2314, %v2292, 0
      %v2385 = vsel %vm2314, %v2293, 0
      %v2388 = vsel %vm2314, %v2294, 0
      %v2391 = vsel %vm2314, %v2295, 0
      %v2394 = vsel %vm2314, %v2296, 0
      %v2397 = vsel %vm2314, %v2297, 0
      %v2400 = vsel %vm2314, %v2298, 0
      %v2403 = vsel %vm2314, %v2299, 0
      %v2406 = vsel %vm2314, %v2300, 0
      %v2409 = vsel %vm2314, %v2301, 0
      %vm2411 = vcmask 1043456
      %v2413 = vsel %vm2411, %v2306, 0
      %2415 = vmatprep.subr.mxu0 0.0
      %2416 = vmatpush1.msra.mxu0 %v2302
      %2417 = vmatprep.subr.mxu0 0.0
      %2418 = vmatpush1.msra.mxu0 %v2303
      %2419 = vmatprep.subr.mxu0 0.0
      %2420 = vmatpush1.msra.mxu0 %v2304
      %2421 = vmatprep.subr.mxu0 0.0
      %2422 = vmatpush1.msra.mxu0 %v2305
      %2423 = vmatprep.subr.mxu0 0.0
      %2424 = vmatpush1.msra.mxu0 %v2413
      %2425 = vmatprep.subr.mxu0 0.0
      %2426 = vmatpush1.msra.mxu0 0.0
      %2427 = vmatprep.subr.mxu0 0.0
      %2428 = vmatpush1.msra.mxu0 0.0
      %2429 = vmatprep.subr.mxu0 0.0
      %2430 = vmatpush1.msra.mxu0 0.0
      %2431 = vmatprep.subr.mxu0 0.0
      %2432 = vmatpush1.msra.mxu0 0.0
      %2433 = vmatprep.subr.mxu0 0.0
      %2434 = vmatpush1.msra.mxu0 0.0
      %2435 = vmatprep.subr.mxu0 0.0
      %2436 = vmatpush1.msra.mxu0 0.0
      %2437 = vmatprep.subr.mxu0 0.0
      %2438 = vmatpush1.msra.mxu0 0.0
      %2439 = vmatprep.subr.mxu0 0.0
      %2440 = vmatpush1.msra.mxu0 0.0
      %2441 = vmatprep.subr.mxu0 0.0
      %2442 = vmatpush1.msra.mxu0 0.0
      %2443 = vmatprep.subr.mxu0 0.0
      %2444 = vmatpush1.msra.mxu0 0.0
      %2445 = vmatprep.subr.mxu0 0.0
      %2446 = vmatpush1.msra.mxu0 0.0
      %2447 = vmatprep.subr.mxu0 0.0
      %2448 = vmatpush1.msra.mxu0 0.0
      %2449 = vmatprep.subr.mxu0 0.0
      %2450 = vmatpush1.msra.mxu0 0.0
      %2451 = vmatprep.subr.mxu0 0.0
      %2452 = vmatpush1.msra.mxu0 0.0
      %2453 = vmatprep.subr.mxu0 0.0
      %2454 = vmatpush1.msra.mxu0 0.0
      %2455 = vmatprep.subr.mxu0 0.0
      %2456 = vmatpush1.msra.mxu0 0.0
      %2457 = vmatprep.subr.mxu0 0.0
      %2458 = vmatpush1.msra.mxu0 0.0
      %2459 = vmatprep.subr.mxu0 0.0
      %2460 = vmatpush1.msra.mxu0 0.0
      %2461 = vmatprep.subr.mxu0 0.0
      %2462 = vmatpush1.msra.mxu0 0.0
      %2463 = vmatprep.subr.mxu0 0.0
      %2464 = vmatpush1.msra.mxu0 0.0
      %2465 = vmatprep.subr.mxu0 0.0
      %2466 = vmatpush1.msra.mxu0 0.0
      %2467 = vmatprep.subr.mxu0 0.0
      %2468 = vmatpush1.msra.mxu0 0.0
      %2469 = vmatprep.subr.mxu0 0.0
      %2470 = vmatpush1.msra.mxu0 0.0
      %2471 = vmatprep.subr.mxu0 0.0
      %2472 = vmatpush1.msra.mxu0 0.0
      %2473 = vmatprep.subr.mxu0 0.0
      %2474 = vmatpush1.msra.mxu0 0.0
      %2475 = vmatprep.subr.mxu0 0.0
      %2476 = vmatpush1.msra.mxu0 0.0
      %2477 = vmatprep.subr.mxu0 0.0
      %2478 = vmatpush1.msra.mxu0 0.0
      %2479 = vmatprep.mubr.f32.mxu0 0.0
      %2480 = vmatmul.mubr.f32.gmra.mrb[0].mxu0 %v2316
      %v2481 = vpop.f32.mrb[0].mxu0
      %v2482 = vadd.f32 %v2312, %v2481
      %v2483 = vpop.f32.mrb[0].mxu0
      %2484 = vmatprep.mubr.f32.mxu0 0.0
      %2485 = vmatmul.mubr.f32.gmra.mrb[0].mxu0 %v2319
      %v2486 = vpop.f32.mrb[0].mxu0
      %v2487 = vadd.f32 %v2312, %v2486
      %v2488 = vpop.f32.mrb[0].mxu0
      %2489 = vmatprep.mubr.f32.mxu0 0.0
      %2490 = vmatmul.mubr.f32.gmra.mrb[0].mxu0 %v2322
      %v2491 = vpop.f32.mrb[0].mxu0
      %v2492 = vadd.f32 %v2312, %v2491
      %v2493 = vpop.f32.mrb[0].mxu0
      %2494 = vmatprep.mubr.f32.mxu0 0.0
      %2495 = vmatmul.mubr.f32.gmra.mrb[0].mxu0 %v2325
      %v2496 = vpop.f32.mrb[0].mxu0
      %v2497 = vadd.f32 %v2312, %v2496
      %v2498 = vpop.f32.mrb[0].mxu0
      %2499 = vmatprep.mubr.f32.mxu0 0.0
      %2500 = vmatmul.mubr.f32.gmra.mrb[0].mxu0 %v2328
      %v2501 = vpop.f32.mrb[0].mxu0
      %v2502 = vadd.f32 %v2312, %v2501
      %v2503 = vpop.f32.mrb[0].mxu0
      %2504 = vmatprep.mubr.f32.mxu0 0.0
      %2505 = vmatmul.mubr.f32.gmra.mrb[0].mxu0 %v2331
      %v2506 = vpop.f32.mrb[0].mxu0
      %v2507 = vadd.f32 %v2312, %v2506
      %v2508 = vpop.f32.mrb[0].mxu0
      %2509 = vmatprep.mubr.f32.mxu0 0.0
      %2510 = vmatmul.mubr.f32.gmra.mrb[0].mxu0 %v2334
      %v2511 = vpop.f32.mrb[0].mxu0
      %v2512 = vadd.f32 %v2312, %v2511
      %v2513 = vpop.f32.mrb[0].mxu0
      %2514 = vmatprep.mubr.f32.mxu0 0.0
      %2515 = vmatmul.mubr.f32.gmra.mrb[0].mxu0 %v2337
      %v2516 = vpop.f32.mrb[0].mxu0
      %v2517 = vadd.f32 %v2312, %v2516
      %v2518 = vpop.f32.mrb[0].mxu0
      %2519 = vmatprep.mubr.f32.mxu0 0.0
      %2520 = vmatmul.mubr.f32.gmra.mrb[0].mxu0 %v2340
      %v2521 = vpop.f32.mrb[0].mxu0
      %v2522 = vadd.f32 %v2312, %v2521
      %v2523 = vpop.f32.mrb[0].mxu0
      %2524 = vmatprep.mubr.f32.mxu0 0.0
      %2525 = vmatmul.mubr.f32.gmra.mrb[0].mxu0 %v2343
      %v2526 = vpop.f32.mrb[0].mxu0
      %v2527 = vadd.f32 %v2312, %v2526
      %v2528 = vpop.f32.mrb[0].mxu0
      %2529 = vmatprep.mubr.f32.mxu0 0.0
      %2530 = vmatmul.mubr.f32.gmra.mrb[0].mxu0 %v2346
      %v2531 = vpop.f32.mrb[0].mxu0
      %v2532 = vadd.f32 %v2312, %v2531
      %v2533 = vpop.f32.mrb[0].mxu0
      %2534 = vmatprep.mubr.f32.mxu0 0.0
      %2535 = vmatmul.mubr.f32.gmra.mrb[0].mxu0 %v2349
      %v2536 = vpop.f32.mrb[0].mxu0
      %v2537 = vadd.f32 %v2312, %v2536
      %v2538 = vpop.f32.mrb[0].mxu0
      %2539 = vmatprep.mubr.f32.mxu0 0.0
      %2540 = vmatmul.mubr.f32.gmra.mrb[0].mxu0 %v2352
      %v2541 = vpop.f32.mrb[0].mxu0
      %v2542 = vadd.f32 %v2312, %v2541
      %v2543 = vpop.f32.mrb[0].mxu0
      %2544 = vmatprep.mubr.f32.mxu0 0.0
      %2545 = vmatmul.mubr.f32.gmra.mrb[0].mxu0 %v2355
      %v2546 = vpop.f32.mrb[0].mxu0
      %v2547 = vadd.f32 %v2312, %v2546
      %v2548 = vpop.f32.mrb[0].mxu0
      %2549 = vmatprep.mubr.f32.mxu0 0.0
      %2550 = vmatmul.mubr.f32.gmra.mrb[0].mxu0 %v2358
      %v2551 = vpop.f32.mrb[0].mxu0
      %v2552 = vadd.f32 %v2312, %v2551
      %v2553 = vpop.f32.mrb[0].mxu0
      %2554 = vmatprep.mubr.f32.mxu0 0.0
      %2555 = vmatmul.mubr.f32.gmra.mrb[0].mxu0 %v2361
      %v2556 = vpop.f32.mrb[0].mxu0
      %v2557 = vadd.f32 %v2312, %v2556
      %v2558 = vpop.f32.mrb[0].mxu0
      %2559 = vmatprep.mubr.f32.mxu0 0.0
      %2560 = vmatmul.mubr.f32.gmra.mrb[0].mxu0 %v2364
      %v2561 = vpop.f32.mrb[0].mxu0
      %v2562 = vadd.f32 %v2312, %v2561
      %v2563 = vpop.f32.mrb[0].mxu0
      %2564 = vmatprep.mubr.f32.mxu0 0.0
      %2565 = vmatmul.mubr.f32.gmra.mrb[0].mxu0 %v2367
      %v2566 = vpop.f32.mrb[0].mxu0
      %v2567 = vadd.f32 %v2312, %v2566
      %v2568 = vpop.f32.mrb[0].mxu0
      %2569 = vmatprep.mubr.f32.mxu0 0.0
      %2570 = vmatmul.mubr.f32.gmra.mrb[0].mxu0 %v2370
      %v2571 = vpop.f32.mrb[0].mxu0
      %v2572 = vadd.f32 %v2312, %v2571
      %v2573 = vpop.f32.mrb[0].mxu0
      %2574 = vmatprep.mubr.f32.mxu0 0.0
      %2575 = vmatmul.mubr.f32.gmra.mrb[0].mxu0 %v2373
      %v2576 = vpop.f32.mrb[0].mxu0
      %v2577 = vadd.f32 %v2312, %v2576
      %v2578 = vpop.f32.mrb[0].mxu0
      %2579 = vmatprep.mubr.f32.mxu0 0.0
      %2580 = vmatmul.mubr.f32.gmra.mrb[0].mxu0 %v2376
      %v2581 = vpop.f32.mrb[0].mxu0
      %v2582 = vadd.f32 %v2312, %v2581
      %v2583 = vpop.f32.mrb[0].mxu0
      %2584 = vmatprep.mubr.f32.mxu0 0.0
      %2585 = vmatmul.mubr.f32.gmra.mrb[0].mxu0 %v2379
      %v2586 = vpop.f32.mrb[0].mxu0
      %v2587 = vadd.f32 %v2312, %v2586
      %v2588 = vpop.f32.mrb[0].mxu0
      %2589 = vmatprep.mubr.f32.mxu0 0.0
      %2590 = vmatmul.mubr.f32.gmra.mrb[0].mxu0 %v2382
      %v2591 = vpop.f32.mrb[0].mxu0
      %v2592 = vadd.f32 %v2312, %v2591
      %v2593 = vpop.f32.mrb[0].mxu0
      %2594 = vmatprep.mubr.f32.mxu0 0.0
      %2595 = vmatmul.mubr.f32.gmra.mrb[0].mxu0 %v2385
      %v2596 = vpop.f32.mrb[0].mxu0
      %v2597 = vadd.f32 %v2312, %v2596
      %v2598 = vpop.f32.mrb[0].mxu0
      %2599 = vmatprep.mubr.f32.mxu0 0.0
      %2600 = vmatmul.mubr.f32.gmra.mrb[0].mxu0 %v2388
      %v2601 = vpop.f32.mrb[0].mxu0
      %v2602 = vadd.f32 %v2312, %v2601
      %v2603 = vpop.f32.mrb[0].mxu0
      %2604 = vmatprep.mubr.f32.mxu0 0.0
      %2605 = vmatmul.mubr.f32.gmra.mrb[0].mxu0 %v2391
      %v2606 = vpop.f32.mrb[0].mxu0
      %v2607 = vadd.f32 %v2312, %v2606
      %v2608 = vpop.f32.mrb[0].mxu0
      %2609 = vmatprep.mubr.f32.mxu0 0.0
      %2610 = vmatmul.mubr.f32.gmra.mrb[0].mxu0 %v2394
      %v2611 = vpop.f32.mrb[0].mxu0
      %v2612 = vadd.f32 %v2312, %v2611
      %v2613 = vpop.f32.mrb[0].mxu0
      %2614 = vmatprep.mubr.f32.mxu0 0.0
      %2615 = vmatmul.mubr.f32.gmra.mrb[0].mxu0 %v2397
      %v2616 = vpop.f32.mrb[0].mxu0
      %v2617 = vadd.f32 %v2312, %v2616
      %v2618 = vpop.f32.mrb[0].mxu0
      %2619 = vmatprep.mubr.f32.mxu0 0.0
      %2620 = vmatmul.mubr.f32.gmra.mrb[0].mxu0 %v2400
      %v2621 = vpop.f32.mrb[0].mxu0
      %v2622 = vadd.f32 %v2312, %v2621
      %v2623 = vpop.f32.mrb[0].mxu0
      %2624 = vmatprep.mubr.f32.mxu0 0.0
      %2625 = vmatmul.mubr.f32.gmra.mrb[0].mxu0 %v2403
      %v2626 = vpop.f32.mrb[0].mxu0
      %v2627 = vadd.f32 %v2312, %v2626
      %v2628 = vpop.f32.mrb[0].mxu0
      %2629 = vmatprep.mubr.f32.mxu0 0.0
      %2630 = vmatmul.mubr.f32.gmra.mrb[0].mxu0 %v2406
      %v2631 = vpop.f32.mrb[0].mxu0
      %v2632 = vadd.f32 %v2312, %v2631
      %v2633 = vpop.f32.mrb[0].mxu0
      %2634 = vmatprep.mubr.f32.mxu0 0.0
      %2635 = vmatmul.mubr.f32.gmra.mrb[0].mxu0 %v2409
      %v2636 = vpop.f32.mrb[0].mxu0
      %v2637 = vadd.f32 %v2312, %v2636
      %v2638 = vpop.f32.mrb[0].mxu0
      %2639 = vdwg.mxu0
      %2672 = vrot.lane.b32.xlu0 %v2482, 4
      %v2673 = vpop.permute.xlu0 %2672
      %2674 = vrot.lane.b32.xlu0 %v2487, 4
      %v2675 = vpop.permute.xlu0 %2674
      %2676 = vrot.lane.b32.xlu0 %v2492, 4
      %v2677 = vpop.permute.xlu0 %2676
      %2678 = vrot.lane.b32.xlu0 %v2497, 4
      %v2679 = vpop.permute.xlu0 %2678
      %2680 = vrot.lane.b32.xlu0 %v2502, 4
      %v2681 = vpop.permute.xlu0 %2680
      %2682 = vrot.lane.b32.xlu0 %v2507, 4
      %v2683 = vpop.permute.xlu0 %2682
      %2684 = vrot.lane.b32.xlu0 %v2512, 4
      %v2685 = vpop.permute.xlu0 %2684
      %2686 = vrot.lane.b32.xlu0 %v2517, 4
      %v2687 = vpop.permute.xlu0 %2686
      %2688 = vrot.lane.b32.xlu0 %v2522, 4
      %v2689 = vpop.permute.xlu0 %2688
      %2690 = vrot.lane.b32.xlu0 %v2527, 4
      %v2691 = vpop.permute.xlu0 %2690
      %2692 = vrot.lane.b32.xlu0 %v2532, 4
      %v2693 = vpop.permute.xlu0 %2692
      %2694 = vrot.lane.b32.xlu0 %v2537, 4
      %v2695 = vpop.permute.xlu0 %2694
      %2696 = vrot.lane.b32.xlu0 %v2542, 4
      %v2697 = vpop.permute.xlu0 %2696
      %2698 = vrot.lane.b32.xlu0 %v2547, 4
      %v2699 = vpop.permute.xlu0 %2698
      %2700 = vrot.lane.b32.xlu0 %v2552, 4
      %v2701 = vpop.permute.xlu0 %2700
      %2702 = vrot.lane.b32.xlu0 %v2557, 4
      %v2703 = vpop.permute.xlu0 %2702
      %2704 = vrot.lane.b32.xlu0 %v2562, 4
      %v2705 = vpop.permute.xlu0 %2704
      %2706 = vrot.lane.b32.xlu0 %v2567, 4
      %v2707 = vpop.permute.xlu0 %2706
      %2708 = vrot.lane.b32.xlu0 %v2572, 4
      %v2709 = vpop.permute.xlu0 %2708
      %2710 = vrot.lane.b32.xlu0 %v2577, 4
      %v2711 = vpop.permute.xlu0 %2710
      %2712 = vrot.lane.b32.xlu0 %v2582, 4
      %v2713 = vpop.permute.xlu0 %2712
      %2714 = vrot.lane.b32.xlu0 %v2587, 4
      %v2715 = vpop.permute.xlu0 %2714
      %2716 = vrot.lane.b32.xlu0 %v2592, 4
      %v2717 = vpop.permute.xlu0 %2716
      %2718 = vrot.lane.b32.xlu0 %v2597, 4
      %v2719 = vpop.permute.xlu0 %2718
      %2720 = vrot.lane.b32.xlu0 %v2602, 4
      %v2721 = vpop.permute.xlu0 %2720
      %2722 = vrot.lane.b32.xlu0 %v2607, 4
      %v2723 = vpop.permute.xlu0 %2722
      %2724 = vrot.lane.b32.xlu0 %v2612, 4
      %v2725 = vpop.permute.xlu0 %2724
      %2726 = vrot.lane.b32.xlu0 %v2617, 4
      %v2727 = vpop.permute.xlu0 %2726
      %2728 = vrot.lane.b32.xlu0 %v2622, 4
      %v2729 = vpop.permute.xlu0 %2728
      %2730 = vrot.lane.b32.xlu0 %v2627, 4
      %v2731 = vpop.permute.xlu0 %2730
      %2732 = vrot.lane.b32.xlu0 %v2632, 4
      %v2733 = vpop.permute.xlu0 %2732
      %2734 = vrot.lane.b32.xlu0 %v2637, 4
      %v2735 = vpop.permute.xlu0 %2734
      %vm2768 = vcmask 64544
      %2769 = vst.msk [vmem:[%s440] sm:$0xff] %vm2768, %v2673
      %2770 = vst.msk [vmem:[%s440 + $0x8] sm:$0xff] %vm2768, %v2675
      %2771 = vst.msk [vmem:[%s440 + $0x10] sm:$0xff] %vm2768, %v2677
      %2772 = vst.msk [vmem:[%s440 + $0x18] sm:$0xff] %vm2768, %v2679
      %2773 = vst.msk [vmem:[%s440 + $0x20] sm:$0xff] %vm2768, %v2681
      %2774 = vst.msk [vmem:[%s440 + $0x28] sm:$0xff] %vm2768, %v2683
      %2775 = vst.msk [vmem:[%s440 + $0x30] sm:$0xff] %vm2768, %v2685
      %2776 = vst.msk [vmem:[%s440 + $0x38] sm:$0xff] %vm2768, %v2687
      %2777 = vst.msk [vmem:[%s440 + $0x40] sm:$0xff] %vm2768, %v2689
      %2778 = vst.msk [vmem:[%s440 + $0x48] sm:$0xff] %vm2768, %v2691
      %2779 = vst.msk [vmem:[%s440 + $0x50] sm:$0xff] %vm2768, %v2693
      %2780 = vst.msk [vmem:[%s440 + $0x58] sm:$0xff] %vm2768, %v2695
      %2781 = vst.msk [vmem:[%s440 + $0x60] sm:$0xff] %vm2768, %v2697
      %2782 = vst.msk [vmem:[%s440 + $0x68] sm:$0xff] %vm2768, %v2699
      %2783 = vst.msk [vmem:[%s440 + $0x70] sm:$0xff] %vm2768, %v2701
      %2784 = vst.msk [vmem:[%s440 + $0x78] sm:$0xff] %vm2768, %v2703
      %2785 = vst.msk [vmem:[%s440 + $0x80] sm:$0xff] %vm2768, %v2705
      %2786 = vst.msk [vmem:[%s440 + $0x88] sm:$0xff] %vm2768, %v2707
      %2787 = vst.msk [vmem:[%s440 + $0x90] sm:$0xff] %vm2768, %v2709
      %2788 = vst.msk [vmem:[%s440 + $0x98] sm:$0xff] %vm2768, %v2711
      %2789 = vst.msk [vmem:[%s440 + $0xa0] sm:$0xff] %vm2768, %v2713
      %2790 = vst.msk [vmem:[%s440 + $0xa8] sm:$0xff] %vm2768, %v2715
      %2791 = vst.msk [vmem:[%s440 + $0xb0] sm:$0xff] %vm2768, %v2717
      %2792 = vst.msk [vmem:[%s440 + $0xb8] sm:$0xff] %vm2768, %v2719
      %2793 = vst.msk [vmem:[%s440 + $0xc0] sm:$0xff] %vm2768, %v2721
      %2794 = vst.msk [vmem:[%s440 + $0xc8] sm:$0xff] %vm2768, %v2723
      %2795 = vst.msk [vmem:[%s440 + $0xd0] sm:$0xff] %vm2768, %v2725
      %2796 = vst.msk [vmem:[%s440 + $0xd8] sm:$0xff] %vm2768, %v2727
      %2797 = vst.msk [vmem:[%s440 + $0xe0] sm:$0xff] %vm2768, %v2729
      %2798 = vst.msk [vmem:[%s440 + $0xe8] sm:$0xff] %vm2768, %v2731
      %2799 = vst.msk [vmem:[%s440 + $0xf0] sm:$0xff] %vm2768, %v2733
      %2800 = vst.msk [vmem:[%s440 + $0xf8] sm:$0xff] %vm2768, %v2735
      %v2801 = vld [vmem:[%s440] sm:$0xff]
      %v2802 = vld [vmem:[%s440 + $0x8] sm:$0xff]
      %v2803 = vld [vmem:[%s440 + $0x10] sm:$0xff]
      %v2804 = vld [vmem:[%s440 + $0x18] sm:$0xff]
      %v2805 = vld [vmem:[%s440 + $0x20] sm:$0xff]
      %v2806 = vld [vmem:[%s440 + $0x28] sm:$0xff]
      %v2807 = vld [vmem:[%s440 + $0x30] sm:$0xff]
      %v2808 = vld [vmem:[%s440 + $0x38] sm:$0xff]
      %v2809 = vld [vmem:[%s440 + $0x40] sm:$0xff]
      %v2810 = vld [vmem:[%s440 + $0x48] sm:$0xff]
      %v2811 = vld [vmem:[%s440 + $0x50] sm:$0xff]
      %v2812 = vld [vmem:[%s440 + $0x58] sm:$0xff]
      %v2813 = vld [vmem:[%s440 + $0x60] sm:$0xff]
      %v2814 = vld [vmem:[%s440 + $0x68] sm:$0xff]
      %v2815 = vld [vmem:[%s440 + $0x70] sm:$0xff]
      %v2816 = vld [vmem:[%s440 + $0x78] sm:$0xff]
      %v2817 = vld [vmem:[%s440 + $0x80] sm:$0xff]
      %v2818 = vld [vmem:[%s440 + $0x88] sm:$0xff]
      %v2819 = vld [vmem:[%s440 + $0x90] sm:$0xff]
      %v2820 = vld [vmem:[%s440 + $0x98] sm:$0xff]
      %v2821 = vld [vmem:[%s440 + $0xa0] sm:$0xff]
      %v2822 = vld [vmem:[%s440 + $0xa8] sm:$0xff]
      %v2823 = vld [vmem:[%s440 + $0xb0] sm:$0xff]
      %v2824 = vld [vmem:[%s440 + $0xb8] sm:$0xff]
      %v2825 = vld [vmem:[%s440 + $0xc0] sm:$0xff]
      %v2826 = vld [vmem:[%s440 + $0xc8] sm:$0xff]
      %v2827 = vld [vmem:[%s440 + $0xd0] sm:$0xff]
      %v2828 = vld [vmem:[%s440 + $0xd8] sm:$0xff]
      %v2829 = vld [vmem:[%s440 + $0xe0] sm:$0xff]
      %v2830 = vld [vmem:[%s440 + $0xe8] sm:$0xff]
      %v2831 = vld [vmem:[%s440 + $0xf0] sm:$0xff]
      %v2832 = vld [vmem:[%s440 + $0xf8] sm:$0xff]
      %v2833 = vld [vmem:[%s5] sm:$0x1]
      %v2835 = vlaneseq
      %v2836 = vshrl.u32 %v2835, 7
      %v2837 = vsub.s32 0, %v2836
      %v2838 = vrot.slane %v2833, %v2837
      %v2840 = vmul.f32 %v2801, %v2838
      %v2841 = vmul.f32 %v2802, %v2838
      %v2842 = vmul.f32 %v2803, %v2838
      %v2843 = vmul.f32 %v2804, %v2838
      %v2844 = vmul.f32 %v2805, %v2838
      %v2845 = vmul.f32 %v2806, %v2838
      %v2846 = vmul.f32 %v2807, %v2838
      %v2847 = vmul.f32 %v2808, %v2838
      %v2848 = vmul.f32 %v2809, %v2838
      %v2849 = vmul.f32 %v2810, %v2838
      %v2850 = vmul.f32 %v2811, %v2838
      %v2851 = vmul.f32 %v2812, %v2838
      %v2852 = vmul.f32 %v2813, %v2838
      %v2853 = vmul.f32 %v2814, %v2838
      %v2854 = vmul.f32 %v2815, %v2838
      %v2855 = vmul.f32 %v2816, %v2838
      %v2856 = vmul.f32 %v2817, %v2838
      %v2857 = vmul.f32 %v2818, %v2838
      %v2858 = vmul.f32 %v2819, %v2838
      %v2859 = vmul.f32 %v2820, %v2838
      %v2860 = vmul.f32 %v2821, %v2838
      %v2861 = vmul.f32 %v2822, %v2838
      %v2862 = vmul.f32 %v2823, %v2838
      %v2863 = vmul.f32 %v2824, %v2838
      %v2864 = vmul.f32 %v2825, %v2838
      %v2865 = vmul.f32 %v2826, %v2838
      %v2866 = vmul.f32 %v2827, %v2838
      %v2867 = vmul.f32 %v2828, %v2838
      %v2868 = vmul.f32 %v2829, %v2838
      %v2869 = vmul.f32 %v2830, %v2838
      %v2870 = vmul.f32 %v2831, %v2838
      %v2871 = vmul.f32 %v2832, %v2838
      %v2872 = vld [vmem:[%s6] sm:$0x1]
      %v2874 = vlaneseq
      %v2875 = vshrl.u32 %v2874, 7
      %v2876 = vsub.s32 0, %v2875
      %v2877 = vrot.slane %v2872, %v2876
      %v2879 = vadd.f32 %v2840, %v2877
      %v2880 = vadd.f32 %v2841, %v2877
      %v2881 = vadd.f32 %v2842, %v2877
      %v2882 = vadd.f32 %v2843, %v2877
      %v2883 = vadd.f32 %v2844, %v2877
      %v2884 = vadd.f32 %v2845, %v2877
      %v2885 = vadd.f32 %v2846, %v2877
      %v2886 = vadd.f32 %v2847, %v2877
      %v2887 = vadd.f32 %v2848, %v2877
      %v2888 = vadd.f32 %v2849, %v2877
      %v2889 = vadd.f32 %v2850, %v2877
      %v2890 = vadd.f32 %v2851, %v2877
      %v2891 = vadd.f32 %v2852, %v2877
      %v2892 = vadd.f32 %v2853, %v2877
      %v2893 = vadd.f32 %v2854, %v2877
      %v2894 = vadd.f32 %v2855, %v2877
      %v2895 = vadd.f32 %v2856, %v2877
      %v2896 = vadd.f32 %v2857, %v2877
      %v2897 = vadd.f32 %v2858, %v2877
      %v2898 = vadd.f32 %v2859, %v2877
      %v2899 = vadd.f32 %v2860, %v2877
      %v2900 = vadd.f32 %v2861, %v2877
      %v2901 = vadd.f32 %v2862, %v2877
      %v2902 = vadd.f32 %v2863, %v2877
      %v2903 = vadd.f32 %v2864, %v2877
      %v2904 = vadd.f32 %v2865, %v2877
      %v2905 = vadd.f32 %v2866, %v2877
      %v2906 = vadd.f32 %v2867, %v2877
      %v2907 = vadd.f32 %v2868, %v2877
      %v2908 = vadd.f32 %v2869, %v2877
      %v2909 = vadd.f32 %v2870, %v2877
      %v2910 = vadd.f32 %v2871, %v2877
      %v2911 = vmax.f32 %v2879, 0.0
      %v2912 = vmax.f32 %v2880, 0.0
      %v2913 = vmax.f32 %v2881, 0.0
      %v2914 = vmax.f32 %v2882, 0.0
      %v2915 = vmax.f32 %v2883, 0.0
      %v2916 = vmax.f32 %v2884, 0.0
      %v2917 = vmax.f32 %v2885, 0.0
      %v2918 = vmax.f32 %v2886, 0.0
      %v2919 = vmax.f32 %v2887, 0.0
      %v2920 = vmax.f32 %v2888, 0.0
      %v2921 = vmax.f32 %v2889, 0.0
      %v2922 = vmax.f32 %v2890, 0.0
      %v2923 = vmax.f32 %v2891, 0.0
      %v2924 = vmax.f32 %v2892, 0.0
      %v2925 = vmax.f32 %v2893, 0.0
      %v2926 = vmax.f32 %v2894, 0.0
      %v2927 = vmax.f32 %v2895, 0.0
      %v2928 = vmax.f32 %v2896, 0.0
      %v2929 = vmax.f32 %v2897, 0.0
      %v2930 = vmax.f32 %v2898, 0.0
      %v2931 = vmax.f32 %v2899, 0.0
      %v2932 = vmax.f32 %v2900, 0.0
      %v2933 = vmax.f32 %v2901, 0.0
      %v2934 = vmax.f32 %v2902, 0.0
      %v2935 = vmax.f32 %v2903, 0.0
      %v2936 = vmax.f32 %v2904, 0.0
      %v2937 = vmax.f32 %v2905, 0.0
      %v2938 = vmax.f32 %v2906, 0.0
      %v2939 = vmax.f32 %v2907, 0.0
      %v2940 = vmax.f32 %v2908, 0.0
      %v2941 = vmax.f32 %v2909, 0.0
      %v2942 = vmax.f32 %v2910, 0.0
      %2943 = vst.msk [vmem:[%s694 + $0x1] sm:$0xff] %vm2072, %v2911
      %2944 = vst.msk [vmem:[%s694 + $0x9] sm:$0xff] %vm2072, %v2912
      %2945 = vst.msk [vmem:[%s694 + $0x19] sm:$0xff] %vm2072, %v2913
      %2946 = vst.msk [vmem:[%s694 + $0x21] sm:$0xff] %vm2072, %v2914
      %2947 = vst.msk [vmem:[%s694 + $0x31] sm:$0xff] %vm2072, %v2915
      %2948 = vst.msk [vmem:[%s694 + $0x39] sm:$0xff] %vm2072, %v2916
      %2949 = vst.msk [vmem:[%s694 + $0x49] sm:$0xff] %vm2072, %v2917
      %2950 = vst.msk [vmem:[%s694 + $0x51] sm:$0xff] %vm2072, %v2918
      %2951 = vst.msk [vmem:[%s694 + $0x61] sm:$0xff] %vm2072, %v2919
      %2952 = vst.msk [vmem:[%s694 + $0x69] sm:$0xff] %vm2072, %v2920
      %2953 = vst.msk [vmem:[%s694 + $0x79] sm:$0xff] %vm2072, %v2921
      %2954 = vst.msk [vmem:[%s694 + $0x81] sm:$0xff] %vm2072, %v2922
      %2955 = vst.msk [vmem:[%s694 + $0x91] sm:$0xff] %vm2072, %v2923
      %2956 = vst.msk [vmem:[%s694 + $0x99] sm:$0xff] %vm2072, %v2924
      %2957 = vst.msk [vmem:[%s694 + $0xa9] sm:$0xff] %vm2072, %v2925
      %2958 = vst.msk [vmem:[%s694 + $0xb1] sm:$0xff] %vm2072, %v2926
      %2959 = vst.msk [vmem:[%s694 + $0xc1] sm:$0xff] %vm2072, %v2927
      %2960 = vst.msk [vmem:[%s694 + $0xc9] sm:$0xff] %vm2072, %v2928
      %2961 = vst.msk [vmem:[%s694 + $0xd9] sm:$0xff] %vm2072, %v2929
      %2962 = vst.msk [vmem:[%s694 + $0xe1] sm:$0xff] %vm2072, %v2930
      %2963 = vst.msk [vmem:[%s694 + $0xf1] sm:$0xff] %vm2072, %v2931
      %2964 = vst.msk [vmem:[%s694 + $0xf9] sm:$0xff] %vm2072, %v2932
      %2965 = vst.msk [vmem:[%s694 + $0x109] sm:$0xff] %vm2072, %v2933
      %2966 = vst.msk [vmem:[%s694 + $0x111] sm:$0xff] %vm2072, %v2934
      %2967 = vst.msk [vmem:[%s694 + $0x121] sm:$0xff] %vm2072, %v2935
      %2968 = vst.msk [vmem:[%s694 + $0x129] sm:$0xff] %vm2072, %v2936
      %2969 = vst.msk [vmem:[%s694 + $0x139] sm:$0xff] %vm2072, %v2937
      %2970 = vst.msk [vmem:[%s694 + $0x141] sm:$0xff] %vm2072, %v2938
      %2971 = vst.msk [vmem:[%s694 + $0x151] sm:$0xff] %vm2072, %v2939
      %2972 = vst.msk [vmem:[%s694 + $0x159] sm:$0xff] %vm2072, %v2940
      %2973 = vst.msk [vmem:[%s694 + $0x169] sm:$0xff] %vm2072, %v2941
      %2974 = vst.msk [vmem:[%s694 + $0x171] sm:$0xff] %vm2072, %v2942
      %v2975 = vld [vmem:[#allocation2] sm:$0xff]
      %v2976 = vld [vmem:[#allocation2 + $0x8] sm:$0xff]
      %v2977 = vld [vmem:[#allocation2 + $0x18] sm:$0xff]
      %v2978 = vld [vmem:[#allocation2 + $0x20] sm:$0xff]
      %v2979 = vld [vmem:[#allocation2 + $0x30] sm:$0xff]
      %v2980 = vld [vmem:[#allocation2 + $0x38] sm:$0xff]
      %v2981 = vld [vmem:[#allocation2 + $0x48] sm:$0xff]
      %v2982 = vld [vmem:[#allocation2 + $0x50] sm:$0xff]
      %v2983 = vld [vmem:[#allocation2 + $0x60] sm:$0xff]
      %v2984 = vld [vmem:[#allocation2 + $0x68] sm:$0xff]
      %v2985 = vld [vmem:[#allocation2 + $0x78] sm:$0xff]
      %v2986 = vld [vmem:[#allocation2 + $0x80] sm:$0xff]
      %v2987 = vld [vmem:[#allocation2 + $0x90] sm:$0xff]
      %v2988 = vld [vmem:[#allocation2 + $0x98] sm:$0xff]
      %v2989 = vld [vmem:[#allocation2 + $0xa8] sm:$0xff]
      %v2990 = vld [vmem:[#allocation2 + $0xb0] sm:$0xff]
      %v2991 = vld [vmem:[#allocation2 + $0xc0] sm:$0xff]
      %v2992 = vld [vmem:[#allocation2 + $0xc8] sm:$0xff]
      %v2993 = vld [vmem:[#allocation2 + $0xd8] sm:$0xff]
      %v2994 = vld [vmem:[#allocation2 + $0xe0] sm:$0xff]
      %v2995 = vld [vmem:[#allocation2 + $0xf0] sm:$0xff]
      %v2996 = vld [vmem:[#allocation2 + $0xf8] sm:$0xff]
      %v2997 = vld [vmem:[#allocation2 + $0x108] sm:$0xff]
      %v2998 = vld [vmem:[#allocation2 + $0x110] sm:$0xff]
      %v2999 = vld [vmem:[#allocation2 + $0x120] sm:$0xff]
      %v3000 = vld [vmem:[#allocation2 + $0x128] sm:$0xff]
      %v3001 = vld [vmem:[#allocation2 + $0x138] sm:$0xff]
      %v3002 = vld [vmem:[#allocation2 + $0x140] sm:$0xff]
      %v3003 = vld [vmem:[#allocation2 + $0x150] sm:$0xff]
      %v3004 = vld [vmem:[#allocation2 + $0x158] sm:$0xff]
      %v3005 = vld [vmem:[#allocation2 + $0x168] sm:$0xff]
      %v3006 = vld [vmem:[#allocation2 + $0x170] sm:$0xff]
      %v3007 = vld [vmem:[#allocation2 + $0x1] sm:$0xff]
      %v3008 = vld [vmem:[#allocation2 + $0x9] sm:$0xff]
      %v3009 = vld [vmem:[#allocation2 + $0x19] sm:$0xff]
      %v3010 = vld [vmem:[#allocation2 + $0x21] sm:$0xff]
      %v3011 = vld [vmem:[#allocation2 + $0x31] sm:$0xff]
      %v3012 = vld [vmem:[#allocation2 + $0x39] sm:$0xff]
      %v3013 = vld [vmem:[#allocation2 + $0x49] sm:$0xff]
      %v3014 = vld [vmem:[#allocation2 + $0x51] sm:$0xff]
      %v3015 = vld [vmem:[#allocation2 + $0x61] sm:$0xff]
      %v3016 = vld [vmem:[#allocation2 + $0x69] sm:$0xff]
      %v3017 = vld [vmem:[#allocation2 + $0x79] sm:$0xff]
      %v3018 = vld [vmem:[#allocation2 + $0x81] sm:$0xff]
      %v3019 = vld [vmem:[#allocation2 + $0x91] sm:$0xff]
      %v3020 = vld [vmem:[#allocation2 + $0x99] sm:$0xff]
      %v3021 = vld [vmem:[#allocation2 + $0xa9] sm:$0xff]
      %v3022 = vld [vmem:[#allocation2 + $0xb1] sm:$0xff]
      %v3023 = vld [vmem:[#allocation2 + $0xc1] sm:$0xff]
      %v3024 = vld [vmem:[#allocation2 + $0xc9] sm:$0xff]
      %v3025 = vld [vmem:[#allocation2 + $0xd9] sm:$0xff]
      %v3026 = vld [vmem:[#allocation2 + $0xe1] sm:$0xff]
      %v3027 = vld [vmem:[#allocation2 + $0xf1] sm:$0xff]
      %v3028 = vld [vmem:[#allocation2 + $0xf9] sm:$0xff]
      %v3029 = vld [vmem:[#allocation2 + $0x109] sm:$0xff]
      %v3030 = vld [vmem:[#allocation2 + $0x111] sm:$0xff]
      %v3031 = vld [vmem:[#allocation2 + $0x121] sm:$0xff]
      %v3032 = vld [vmem:[#allocation2 + $0x129] sm:$0xff]
      %v3033 = vld [vmem:[#allocation2 + $0x139] sm:$0xff]
      %v3034 = vld [vmem:[#allocation2 + $0x141] sm:$0xff]
      %v3035 = vld [vmem:[#allocation2 + $0x151] sm:$0xff]
      %v3036 = vld [vmem:[#allocation2 + $0x159] sm:$0xff]
      %v3037 = vld [vmem:[#allocation2 + $0x169] sm:$0xff]
      %v3038 = vld [vmem:[#allocation2 + $0x171] sm:$0xff]
      %v3039 = vld [vmem:[#allocation2 + $0x2] sm:$0xff]
      %v3040 = vld [vmem:[#allocation2 + $0xa] sm:$0xff]
      %v3041 = vld [vmem:[#allocation2 + $0x1a] sm:$0xff]
      %v3042 = vld [vmem:[#allocation2 + $0x22] sm:$0xff]
      %v3043 = vld [vmem:[#allocation2 + $0x32] sm:$0xff]
      %v3044 = vld [vmem:[#allocation2 + $0x3a] sm:$0xff]
      %v3045 = vld [vmem:[#allocation2 + $0x4a] sm:$0xff]
      %v3046 = vld [vmem:[#allocation2 + $0x52] sm:$0xff]
      %v3047 = vld [vmem:[#allocation2 + $0x62] sm:$0xff]
      %v3048 = vld [vmem:[#allocation2 + $0x6a] sm:$0xff]
      %v3049 = vld [vmem:[#allocation2 + $0x7a] sm:$0xff]
      %v3050 = vld [vmem:[#allocation2 + $0x82] sm:$0xff]
      %v3051 = vld [vmem:[#allocation2 + $0x92] sm:$0xff]
      %v3052 = vld [vmem:[#allocation2 + $0x9a] sm:$0xff]
      %v3053 = vld [vmem:[#allocation2 + $0xaa] sm:$0xff]
      %v3054 = vld [vmem:[#allocation2 + $0xb2] sm:$0xff]
      %v3055 = vld [vmem:[#allocation2 + $0xc2] sm:$0xff]
      %v3056 = vld [vmem:[#allocation2 + $0xca] sm:$0xff]
      %v3057 = vld [vmem:[#allocation2 + $0xda] sm:$0xff]
      %v3058 = vld [vmem:[#allocation2 + $0xe2] sm:$0xff]
      %v3059 = vld [vmem:[#allocation2 + $0xf2] sm:$0xff]
      %v3060 = vld [vmem:[#allocation2 + $0xfa] sm:$0xff]
      %v3061 = vld [vmem:[#allocation2 + $0x10a] sm:$0xff]
      %v3062 = vld [vmem:[#allocation2 + $0x112] sm:$0xff]
      %v3063 = vld [vmem:[#allocation2 + $0x122] sm:$0xff]
      %v3064 = vld [vmem:[#allocation2 + $0x12a] sm:$0xff]
      %v3065 = vld [vmem:[#allocation2 + $0x13a] sm:$0xff]
      %v3066 = vld [vmem:[#allocation2 + $0x142] sm:$0xff]
      %v3067 = vld [vmem:[#allocation2 + $0x152] sm:$0xff]
      %v3068 = vld [vmem:[#allocation2 + $0x15a] sm:$0xff]
      %v3069 = vld [vmem:[#allocation2 + $0x16a] sm:$0xff]
      %v3070 = vld [vmem:[#allocation2 + $0x172] sm:$0xff]
      %v3071 = vld [vmem:[%s694] sm:$0xff]
      %v3072 = vld [vmem:[%s694 + $0x8] sm:$0xff]
      %v3073 = vld [vmem:[%s694 + $0x18] sm:$0xff]
      %v3074 = vld [vmem:[%s694 + $0x20] sm:$0xff]
      %v3075 = vld [vmem:[%s694 + $0x30] sm:$0xff]
      %v3076 = vld [vmem:[%s694 + $0x38] sm:$0xff]
      %v3077 = vld [vmem:[%s694 + $0x48] sm:$0xff]
      %v3078 = vld [vmem:[%s694 + $0x50] sm:$0xff]
      %v3079 = vld [vmem:[%s694 + $0x60] sm:$0xff]
      %v3080 = vld [vmem:[%s694 + $0x68] sm:$0xff]
      %v3081 = vld [vmem:[%s694 + $0x78] sm:$0xff]
      %v3082 = vld [vmem:[%s694 + $0x80] sm:$0xff]
      %v3083 = vld [vmem:[%s694 + $0x90] sm:$0xff]
      %v3084 = vld [vmem:[%s694 + $0x98] sm:$0xff]
      %v3085 = vld [vmem:[%s694 + $0xa8] sm:$0xff]
      %v3086 = vld [vmem:[%s694 + $0xb0] sm:$0xff]
      %v3087 = vld [vmem:[%s694 + $0xc0] sm:$0xff]
      %v3088 = vld [vmem:[%s694 + $0xc8] sm:$0xff]
      %v3089 = vld [vmem:[%s694 + $0xd8] sm:$0xff]
      %v3090 = vld [vmem:[%s694 + $0xe0] sm:$0xff]
      %v3091 = vld [vmem:[%s694 + $0xf0] sm:$0xff]
      %v3092 = vld [vmem:[%s694 + $0xf8] sm:$0xff]
      %v3093 = vld [vmem:[%s694 + $0x108] sm:$0xff]
      %v3094 = vld [vmem:[%s694 + $0x110] sm:$0xff]
      %v3095 = vld [vmem:[%s694 + $0x120] sm:$0xff]
      %v3096 = vld [vmem:[%s694 + $0x128] sm:$0xff]
      %v3097 = vld [vmem:[%s694 + $0x138] sm:$0xff]
      %v3098 = vld [vmem:[%s694 + $0x140] sm:$0xff]
      %v3099 = vld [vmem:[%s694 + $0x150] sm:$0xff]
      %v3100 = vld [vmem:[%s694 + $0x158] sm:$0xff]
      %v3101 = vld [vmem:[%s694 + $0x168] sm:$0xff]
      %v3102 = vld [vmem:[%s694 + $0x170] sm:$0xff]
      %v3103 = vld [vmem:[%s694 + $0x1] sm:$0xff]
      %v3104 = vld [vmem:[%s694 + $0x9] sm:$0xff]
      %v3105 = vld [vmem:[%s694 + $0x19] sm:$0xff]
      %v3106 = vld [vmem:[%s694 + $0x21] sm:$0xff]
      %v3107 = vld [vmem:[%s694 + $0x31] sm:$0xff]
      %v3108 = vld [vmem:[%s694 + $0x39] sm:$0xff]
      %v3109 = vld [vmem:[%s694 + $0x49] sm:$0xff]
      %v3110 = vld [vmem:[%s694 + $0x51] sm:$0xff]
      %v3111 = vld [vmem:[%s694 + $0x61] sm:$0xff]
      %v3112 = vld [vmem:[%s694 + $0x69] sm:$0xff]
      %v3113 = vld [vmem:[%s694 + $0x79] sm:$0xff]
      %v3114 = vld [vmem:[%s694 + $0x81] sm:$0xff]
      %v3115 = vld [vmem:[%s694 + $0x91] sm:$0xff]
      %v3116 = vld [vmem:[%s694 + $0x99] sm:$0xff]
      %v3117 = vld [vmem:[%s694 + $0xa9] sm:$0xff]
      %v3118 = vld [vmem:[%s694 + $0xb1] sm:$0xff]
      %v3119 = vld [vmem:[%s694 + $0xc1] sm:$0xff]
      %v3120 = vld [vmem:[%s694 + $0xc9] sm:$0xff]
      %v3121 = vld [vmem:[%s694 + $0xd9] sm:$0xff]
      %v3122 = vld [vmem:[%s694 + $0xe1] sm:$0xff]
      %v3123 = vld [vmem:[%s694 + $0xf1] sm:$0xff]
      %v3124 = vld [vmem:[%s694 + $0xf9] sm:$0xff]
      %v3125 = vld [vmem:[%s694 + $0x109] sm:$0xff]
      %v3126 = vld [vmem:[%s694 + $0x111] sm:$0xff]
      %v3127 = vld [vmem:[%s694 + $0x121] sm:$0xff]
      %v3128 = vld [vmem:[%s694 + $0x129] sm:$0xff]
      %v3129 = vld [vmem:[%s694 + $0x139] sm:$0xff]
      %v3130 = vld [vmem:[%s694 + $0x141] sm:$0xff]
      %v3131 = vld [vmem:[%s694 + $0x151] sm:$0xff]
      %v3132 = vld [vmem:[%s694 + $0x159] sm:$0xff]
      %v3133 = vld [vmem:[%s694 + $0x169] sm:$0xff]
      %v3134 = vld [vmem:[%s694 + $0x171] sm:$0xff]
      %v3135 = vld [vmem:[%s694 + $0x2] sm:$0xff]
      %v3136 = vld [vmem:[%s694 + $0xa] sm:$0xff]
      %v3137 = vld [vmem:[%s694 + $0x1a] sm:$0xff]
      %v3138 = vld [vmem:[%s694 + $0x22] sm:$0xff]
      %v3139 = vld [vmem:[%s694 + $0x32] sm:$0xff]
      %v3140 = vld [vmem:[%s694 + $0x3a] sm:$0xff]
      %v3141 = vld [vmem:[%s694 + $0x4a] sm:$0xff]
      %v3142 = vld [vmem:[%s694 + $0x52] sm:$0xff]
      %v3143 = vld [vmem:[%s694 + $0x62] sm:$0xff]
      %v3144 = vld [vmem:[%s694 + $0x6a] sm:$0xff]
      %v3145 = vld [vmem:[%s694 + $0x7a] sm:$0xff]
      %v3146 = vld [vmem:[%s694 + $0x82] sm:$0xff]
      %v3147 = vld [vmem:[%s694 + $0x92] sm:$0xff]
      %v3148 = vld [vmem:[%s694 + $0x9a] sm:$0xff]
      %v3149 = vld [vmem:[%s694 + $0xaa] sm:$0xff]
      %v3150 = vld [vmem:[%s694 + $0xb2] sm:$0xff]
      %v3151 = vld [vmem:[%s694 + $0xc2] sm:$0xff]
      %v3152 = vld [vmem:[%s694 + $0xca] sm:$0xff]
      %v3153 = vld [vmem:[%s694 + $0xda] sm:$0xff]
      %v3154 = vld [vmem:[%s694 + $0xe2] sm:$0xff]
      %v3155 = vld [vmem:[%s694 + $0xf2] sm:$0xff]
      %v3156 = vld [vmem:[%s694 + $0xfa] sm:$0xff]
      %v3157 = vld [vmem:[%s694 + $0x10a] sm:$0xff]
      %v3158 = vld [vmem:[%s694 + $0x112] sm:$0xff]
      %v3159 = vld [vmem:[%s694 + $0x122] sm:$0xff]
      %v3160 = vld [vmem:[%s694 + $0x12a] sm:$0xff]
      %v3161 = vld [vmem:[%s694 + $0x13a] sm:$0xff]
      %v3162 = vld [vmem:[%s694 + $0x142] sm:$0xff]
      %v3163 = vld [vmem:[%s694 + $0x152] sm:$0xff]
      %v3164 = vld [vmem:[%s694 + $0x15a] sm:$0xff]
      %v3165 = vld [vmem:[%s694 + $0x16a] sm:$0xff]
      %v3166 = vld [vmem:[%s694 + $0x172] sm:$0xff]
      %v3167 = vld [vmem:[%s919] sm:$0xff]
      %v3168 = vld [vmem:[%s919 + $0x8] sm:$0xff]
      %v3169 = vld [vmem:[%s919 + $0x18] sm:$0xff]
      %v3170 = vld [vmem:[%s919 + $0x20] sm:$0xff]
      %v3171 = vld [vmem:[%s919 + $0x30] sm:$0xff]
      %v3172 = vld [vmem:[%s919 + $0x38] sm:$0xff]
      %v3173 = vld [vmem:[%s919 + $0x48] sm:$0xff]
      %v3174 = vld [vmem:[%s919 + $0x50] sm:$0xff]
      %v3175 = vld [vmem:[%s919 + $0x60] sm:$0xff]
      %v3176 = vld [vmem:[%s919 + $0x68] sm:$0xff]
      %v3177 = vld [vmem:[%s919 + $0x78] sm:$0xff]
      %v3178 = vld [vmem:[%s919 + $0x80] sm:$0xff]
      %v3179 = vld [vmem:[%s919 + $0x90] sm:$0xff]
      %v3180 = vld [vmem:[%s919 + $0x98] sm:$0xff]
      %v3181 = vld [vmem:[%s919 + $0xa8] sm:$0xff]
      %v3182 = vld [vmem:[%s919 + $0xb0] sm:$0xff]
      %v3183 = vld [vmem:[%s919 + $0xc0] sm:$0xff]
      %v3184 = vld [vmem:[%s919 + $0xc8] sm:$0xff]
      %v3185 = vld [vmem:[%s919 + $0xd8] sm:$0xff]
      %v3186 = vld [vmem:[%s919 + $0xe0] sm:$0xff]
      %v3187 = vld [vmem:[%s919 + $0xf0] sm:$0xff]
      %v3188 = vld [vmem:[%s919 + $0xf8] sm:$0xff]
      %v3189 = vld [vmem:[%s919 + $0x108] sm:$0xff]
      %v3190 = vld [vmem:[%s919 + $0x110] sm:$0xff]
      %v3191 = vld [vmem:[%s919 + $0x120] sm:$0xff]
      %v3192 = vld [vmem:[%s919 + $0x128] sm:$0xff]
      %v3193 = vld [vmem:[%s919 + $0x138] sm:$0xff]
      %v3194 = vld [vmem:[%s919 + $0x140] sm:$0xff]
      %v3195 = vld [vmem:[%s919 + $0x150] sm:$0xff]
      %v3196 = vld [vmem:[%s919 + $0x158] sm:$0xff]
      %v3197 = vld [vmem:[%s919 + $0x168] sm:$0xff]
      %v3198 = vld [vmem:[%s919 + $0x170] sm:$0xff]
      %v3199 = vld [vmem:[%s919 + $0x1] sm:$0xff]
      %v3200 = vld [vmem:[%s919 + $0x9] sm:$0xff]
      %v3201 = vld [vmem:[%s919 + $0x19] sm:$0xff]
      %v3202 = vld [vmem:[%s919 + $0x21] sm:$0xff]
      %v3203 = vld [vmem:[%s919 + $0x31] sm:$0xff]
      %v3204 = vld [vmem:[%s919 + $0x39] sm:$0xff]
      %v3205 = vld [vmem:[%s919 + $0x49] sm:$0xff]
      %v3206 = vld [vmem:[%s919 + $0x51] sm:$0xff]
      %v3207 = vld [vmem:[%s919 + $0x61] sm:$0xff]
      %v3208 = vld [vmem:[%s919 + $0x69] sm:$0xff]
      %v3209 = vld [vmem:[%s919 + $0x79] sm:$0xff]
      %v3210 = vld [vmem:[%s919 + $0x81] sm:$0xff]
      %v3211 = vld [vmem:[%s919 + $0x91] sm:$0xff]
      %v3212 = vld [vmem:[%s919 + $0x99] sm:$0xff]
      %v3213 = vld [vmem:[%s919 + $0xa9] sm:$0xff]
      %v3214 = vld [vmem:[%s919 + $0xb1] sm:$0xff]
      %v3215 = vld [vmem:[%s919 + $0xc1] sm:$0xff]
      %v3216 = vld [vmem:[%s919 + $0xc9] sm:$0xff]
      %v3217 = vld [vmem:[%s919 + $0xd9] sm:$0xff]
      %v3218 = vld [vmem:[%s919 + $0xe1] sm:$0xff]
      %v3219 = vld [vmem:[%s919 + $0xf1] sm:$0xff]
      %v3220 = vld [vmem:[%s919 + $0xf9] sm:$0xff]
      %v3221 = vld [vmem:[%s919 + $0x109] sm:$0xff]
      %v3222 = vld [vmem:[%s919 + $0x111] sm:$0xff]
      %v3223 = vld [vmem:[%s919 + $0x121] sm:$0xff]
      %v3224 = vld [vmem:[%s919 + $0x129] sm:$0xff]
      %v3225 = vld [vmem:[%s919 + $0x139] sm:$0xff]
      %v3226 = vld [vmem:[%s919 + $0x141] sm:$0xff]
      %v3227 = vld [vmem:[%s919 + $0x151] sm:$0xff]
      %v3228 = vld [vmem:[%s919 + $0x159] sm:$0xff]
      %v3229 = vld [vmem:[%s919 + $0x169] sm:$0xff]
      %v3230 = vld [vmem:[%s919 + $0x171] sm:$0xff]
      %v3231 = vld [vmem:[%s919 + $0x2] sm:$0xff]
      %v3232 = vld [vmem:[%s919 + $0xa] sm:$0xff]
      %v3233 = vld [vmem:[%s919 + $0x1a] sm:$0xff]
      %v3234 = vld [vmem:[%s919 + $0x22] sm:$0xff]
      %v3235 = vld [vmem:[%s919 + $0x32] sm:$0xff]
      %v3236 = vld [vmem:[%s919 + $0x3a] sm:$0xff]
      %v3237 = vld [vmem:[%s919 + $0x4a] sm:$0xff]
      %v3238 = vld [vmem:[%s919 + $0x52] sm:$0xff]
      %v3239 = vld [vmem:[%s919 + $0x62] sm:$0xff]
      %v3240 = vld [vmem:[%s919 + $0x6a] sm:$0xff]
      %v3241 = vld [vmem:[%s919 + $0x7a] sm:$0xff]
      %v3242 = vld [vmem:[%s919 + $0x82] sm:$0xff]
      %v3243 = vld [vmem:[%s919 + $0x92] sm:$0xff]
      %v3244 = vld [vmem:[%s919 + $0x9a] sm:$0xff]
      %v3245 = vld [vmem:[%s919 + $0xaa] sm:$0xff]
      %v3246 = vld [vmem:[%s919 + $0xb2] sm:$0xff]
      %v3247 = vld [vmem:[%s919 + $0xc2] sm:$0xff]
      %v3248 = vld [vmem:[%s919 + $0xca] sm:$0xff]
      %v3249 = vld [vmem:[%s919 + $0xda] sm:$0xff]
      %v3250 = vld [vmem:[%s919 + $0xe2] sm:$0xff]
      %v3251 = vld [vmem:[%s919 + $0xf2] sm:$0xff]
      %v3252 = vld [vmem:[%s919 + $0xfa] sm:$0xff]
      %v3253 = vld [vmem:[%s919 + $0x10a] sm:$0xff]
      %v3254 = vld [vmem:[%s919 + $0x112] sm:$0xff]
      %v3255 = vld [vmem:[%s919 + $0x122] sm:$0xff]
      %v3256 = vld [vmem:[%s919 + $0x12a] sm:$0xff]
      %v3257 = vld [vmem:[%s919 + $0x13a] sm:$0xff]
      %v3258 = vld [vmem:[%s919 + $0x142] sm:$0xff]
      %v3259 = vld [vmem:[%s919 + $0x152] sm:$0xff]
      %v3260 = vld [vmem:[%s919 + $0x15a] sm:$0xff]
      %v3261 = vld [vmem:[%s919 + $0x16a] sm:$0xff]
      %v3262 = vld [vmem:[%s919 + $0x172] sm:$0xff]
      %3295 = vrot.lane.b32.xlu0 %v3007, 8
      %v3296 = vpop.permute.xlu0 %3295
      %3297 = vrot.lane.b32.xlu0 %v3008, 8
      %v3298 = vpop.permute.xlu0 %3297
      %3299 = vrot.lane.b32.xlu0 %v3009, 8
      %v3300 = vpop.permute.xlu0 %3299
      %3301 = vrot.lane.b32.xlu0 %v3010, 8
      %v3302 = vpop.permute.xlu0 %3301
      %3303 = vrot.lane.b32.xlu0 %v3011, 8
      %v3304 = vpop.permute.xlu0 %3303
      %3305 = vrot.lane.b32.xlu0 %v3012, 8
      %v3306 = vpop.permute.xlu0 %3305
      %3307 = vrot.lane.b32.xlu0 %v3013, 8
      %v3308 = vpop.permute.xlu0 %3307
      %3309 = vrot.lane.b32.xlu0 %v3014, 8
      %v3310 = vpop.permute.xlu0 %3309
      %3311 = vrot.lane.b32.xlu0 %v3015, 8
      %v3312 = vpop.permute.xlu0 %3311
      %3313 = vrot.lane.b32.xlu0 %v3016, 8
      %v3314 = vpop.permute.xlu0 %3313
      %3315 = vrot.lane.b32.xlu0 %v3017, 8
      %v3316 = vpop.permute.xlu0 %3315
      %3317 = vrot.lane.b32.xlu0 %v3018, 8
      %v3318 = vpop.permute.xlu0 %3317
      %3319 = vrot.lane.b32.xlu0 %v3019, 8
      %v3320 = vpop.permute.xlu0 %3319
      %3321 = vrot.lane.b32.xlu0 %v3020, 8
      %v3322 = vpop.permute.xlu0 %3321
      %3323 = vrot.lane.b32.xlu0 %v3021, 8
      %v3324 = vpop.permute.xlu0 %3323
      %3325 = vrot.lane.b32.xlu0 %v3022, 8
      %v3326 = vpop.permute.xlu0 %3325
      %3327 = vrot.lane.b32.xlu0 %v3023, 8
      %v3328 = vpop.permute.xlu0 %3327
      %3329 = vrot.lane.b32.xlu0 %v3024, 8
      %v3330 = vpop.permute.xlu0 %3329
      %3331 = vrot.lane.b32.xlu0 %v3025, 8
      %v3332 = vpop.permute.xlu0 %3331
      %3333 = vrot.lane.b32.xlu0 %v3026, 8
      %v3334 = vpop.permute.xlu0 %3333
      %3335 = vrot.lane.b32.xlu0 %v3027, 8
      %v3336 = vpop.permute.xlu0 %3335
      %3337 = vrot.lane.b32.xlu0 %v3028, 8
      %v3338 = vpop.permute.xlu0 %3337
      %3339 = vrot.lane.b32.xlu0 %v3029, 8
      %v3340 = vpop.permute.xlu0 %3339
      %3341 = vrot.lane.b32.xlu0 %v3030, 8
      %v3342 = vpop.permute.xlu0 %3341
      %3343 = vrot.lane.b32.xlu0 %v3031, 8
      %v3344 = vpop.permute.xlu0 %3343
      %3345 = vrot.lane.b32.xlu0 %v3032, 8
      %v3346 = vpop.permute.xlu0 %3345
      %3347 = vrot.lane.b32.xlu0 %v3033, 8
      %v3348 = vpop.permute.xlu0 %3347
      %3349 = vrot.lane.b32.xlu0 %v3034, 8
      %v3350 = vpop.permute.xlu0 %3349
      %3351 = vrot.lane.b32.xlu0 %v3035, 8
      %v3352 = vpop.permute.xlu0 %3351
      %3353 = vrot.lane.b32.xlu0 %v3036, 8
      %v3354 = vpop.permute.xlu0 %3353
      %3355 = vrot.lane.b32.xlu0 %v3037, 8
      %v3356 = vpop.permute.xlu0 %3355
      %3357 = vrot.lane.b32.xlu0 %v3038, 8
      %v3358 = vpop.permute.xlu0 %3357
      %3423 = vrot.lane.b32.xlu0 %v3039, 16
      %v3424 = vpop.permute.xlu0 %3423
      %3425 = vrot.lane.b32.xlu0 %v3040, 16
      %v3426 = vpop.permute.xlu0 %3425
      %3427 = vrot.lane.b32.xlu0 %v3041, 16
      %v3428 = vpop.permute.xlu0 %3427
      %3429 = vrot.lane.b32.xlu0 %v3042, 16
      %v3430 = vpop.permute.xlu0 %3429
      %3431 = vrot.lane.b32.xlu0 %v3043, 16
      %v3432 = vpop.permute.xlu0 %3431
      %3433 = vrot.lane.b32.xlu0 %v3044, 16
      %v3434 = vpop.permute.xlu0 %3433
      %3435 = vrot.lane.b32.xlu0 %v3045, 16
      %v3436 = vpop.permute.xlu0 %3435
      %3437 = vrot.lane.b32.xlu0 %v3046, 16
      %v3438 = vpop.permute.xlu0 %3437
      %3439 = vrot.lane.b32.xlu0 %v3047, 16
      %v3440 = vpop.permute.xlu0 %3439
      %3441 = vrot.lane.b32.xlu0 %v3048, 16
      %v3442 = vpop.permute.xlu0 %3441
      %3443 = vrot.lane.b32.xlu0 %v3049, 16
      %v3444 = vpop.permute.xlu0 %3443
      %3445 = vrot.lane.b32.xlu0 %v3050, 16
      %v3446 = vpop.permute.xlu0 %3445
      %3447 = vrot.lane.b32.xlu0 %v3051, 16
      %v3448 = vpop.permute.xlu0 %3447
      %3449 = vrot.lane.b32.xlu0 %v3052, 16
      %v3450 = vpop.permute.xlu0 %3449
      %3451 = vrot.lane.b32.xlu0 %v3053, 16
      %v3452 = vpop.permute.xlu0 %3451
      %3453 = vrot.lane.b32.xlu0 %v3054, 16
      %v3454 = vpop.permute.xlu0 %3453
      %3455 = vrot.lane.b32.xlu0 %v3055, 16
      %v3456 = vpop.permute.xlu0 %3455
      %3457 = vrot.lane.b32.xlu0 %v3056, 16
      %v3458 = vpop.permute.xlu0 %3457
      %3459 = vrot.lane.b32.xlu0 %v3057, 16
      %v3460 = vpop.permute.xlu0 %3459
      %3461 = vrot.lane.b32.xlu0 %v3058, 16
      %v3462 = vpop.permute.xlu0 %3461
      %3463 = vrot.lane.b32.xlu0 %v3059, 16
      %v3464 = vpop.permute.xlu0 %3463
      %3465 = vrot.lane.b32.xlu0 %v3060, 16
      %v3466 = vpop.permute.xlu0 %3465
      %3467 = vrot.lane.b32.xlu0 %v3061, 16
      %v3468 = vpop.permute.xlu0 %3467
      %3469 = vrot.lane.b32.xlu0 %v3062, 16
      %v3470 = vpop.permute.xlu0 %3469
      %3471 = vrot.lane.b32.xlu0 %v3063, 16
      %v3472 = vpop.permute.xlu0 %3471
      %3473 = vrot.lane.b32.xlu0 %v3064, 16
      %v3474 = vpop.permute.xlu0 %3473
      %3475 = vrot.lane.b32.xlu0 %v3065, 16
      %v3476 = vpop.permute.xlu0 %3475
      %3477 = vrot.lane.b32.xlu0 %v3066, 16
      %v3478 = vpop.permute.xlu0 %3477
      %3479 = vrot.lane.b32.xlu0 %v3067, 16
      %v3480 = vpop.permute.xlu0 %3479
      %3481 = vrot.lane.b32.xlu0 %v3068, 16
      %v3482 = vpop.permute.xlu0 %3481
      %3483 = vrot.lane.b32.xlu0 %v3069, 16
      %v3484 = vpop.permute.xlu0 %3483
      %3485 = vrot.lane.b32.xlu0 %v3070, 16
      %v3486 = vpop.permute.xlu0 %3485
      %3551 = vrot.lane.b32.xlu0 %v3071, 24
      %v3552 = vpop.permute.xlu0 %3551
      %3553 = vrot.lane.b32.xlu0 %v3072, 24
      %v3554 = vpop.permute.xlu0 %3553
      %3555 = vrot.lane.b32.xlu0 %v3073, 24
      %v3556 = vpop.permute.xlu0 %3555
      %3557 = vrot.lane.b32.xlu0 %v3074, 24
      %v3558 = vpop.permute.xlu0 %3557
      %3559 = vrot.lane.b32.xlu0 %v3075, 24
      %v3560 = vpop.permute.xlu0 %3559
      %3561 = vrot.lane.b32.xlu0 %v3076, 24
      %v3562 = vpop.permute.xlu0 %3561
      %3563 = vrot.lane.b32.xlu0 %v3077, 24
      %v3564 = vpop.permute.xlu0 %3563
      %3565 = vrot.lane.b32.xlu0 %v3078, 24
      %v3566 = vpop.permute.xlu0 %3565
      %3567 = vrot.lane.b32.xlu0 %v3079, 24
      %v3568 = vpop.permute.xlu0 %3567
      %3569 = vrot.lane.b32.xlu0 %v3080, 24
      %v3570 = vpop.permute.xlu0 %3569
      %3571 = vrot.lane.b32.xlu0 %v3081, 24
      %v3572 = vpop.permute.xlu0 %3571
      %3573 = vrot.lane.b32.xlu0 %v3082, 24
      %v3574 = vpop.permute.xlu0 %3573
      %3575 = vrot.lane.b32.xlu0 %v3083, 24
      %v3576 = vpop.permute.xlu0 %3575
      %3577 = vrot.lane.b32.xlu0 %v3084, 24
      %v3578 = vpop.permute.xlu0 %3577
      %3579 = vrot.lane.b32.xlu0 %v3085, 24
      %v3580 = vpop.permute.xlu0 %3579
      %3581 = vrot.lane.b32.xlu0 %v3086, 24
      %v3582 = vpop.permute.xlu0 %3581
      %3583 = vrot.lane.b32.xlu0 %v3087, 24
      %v3584 = vpop.permute.xlu0 %3583
      %3585 = vrot.lane.b32.xlu0 %v3088, 24
      %v3586 = vpop.permute.xlu0 %3585
      %3587 = vrot.lane.b32.xlu0 %v3089, 24
      %v3588 = vpop.permute.xlu0 %3587
      %3589 = vrot.lane.b32.xlu0 %v3090, 24
      %v3590 = vpop.permute.xlu0 %3589
      %3591 = vrot.lane.b32.xlu0 %v3091, 24
      %v3592 = vpop.permute.xlu0 %3591
      %3593 = vrot.lane.b32.xlu0 %v3092, 24
      %v3594 = vpop.permute.xlu0 %3593
      %3595 = vrot.lane.b32.xlu0 %v3093, 24
      %v3596 = vpop.permute.xlu0 %3595
      %3597 = vrot.lane.b32.xlu0 %v3094, 24
      %v3598 = vpop.permute.xlu0 %3597
      %3599 = vrot.lane.b32.xlu0 %v3095, 24
      %v3600 = vpop.permute.xlu0 %3599
      %3601 = vrot.lane.b32.xlu0 %v3096, 24
      %v3602 = vpop.permute.xlu0 %3601
      %3603 = vrot.lane.b32.xlu0 %v3097, 24
      %v3604 = vpop.permute.xlu0 %3603
      %3605 = vrot.lane.b32.xlu0 %v3098, 24
      %v3606 = vpop.permute.xlu0 %3605
      %3607 = vrot.lane.b32.xlu0 %v3099, 24
      %v3608 = vpop.permute.xlu0 %3607
      %3609 = vrot.lane.b32.xlu0 %v3100, 24
      %v3610 = vpop.permute.xlu0 %3609
      %3611 = vrot.lane.b32.xlu0 %v3101, 24
      %v3612 = vpop.permute.xlu0 %3611
      %3613 = vrot.lane.b32.xlu0 %v3102, 24
      %v3614 = vpop.permute.xlu0 %3613
      %3679 = vrot.lane.b32.xlu0 %v3103, 32
      %v3680 = vpop.permute.xlu0 %3679
      %3681 = vrot.lane.b32.xlu0 %v3104, 32
      %v3682 = vpop.permute.xlu0 %3681
      %3683 = vrot.lane.b32.xlu0 %v3105, 32
      %v3684 = vpop.permute.xlu0 %3683
      %3685 = vrot.lane.b32.xlu0 %v3106, 32
      %v3686 = vpop.permute.xlu0 %3685
      %3687 = vrot.lane.b32.xlu0 %v3107, 32
      %v3688 = vpop.permute.xlu0 %3687
      %3689 = vrot.lane.b32.xlu0 %v3108, 32
      %v3690 = vpop.permute.xlu0 %3689
      %3691 = vrot.lane.b32.xlu0 %v3109, 32
      %v3692 = vpop.permute.xlu0 %3691
      %3693 = vrot.lane.b32.xlu0 %v3110, 32
      %v3694 = vpop.permute.xlu0 %3693
      %3695 = vrot.lane.b32.xlu0 %v3111, 32
      %v3696 = vpop.permute.xlu0 %3695
      %3697 = vrot.lane.b32.xlu0 %v3112, 32
      %v3698 = vpop.permute.xlu0 %3697
      %3699 = vrot.lane.b32.xlu0 %v3113, 32
      %v3700 = vpop.permute.xlu0 %3699
      %3701 = vrot.lane.b32.xlu0 %v3114, 32
      %v3702 = vpop.permute.xlu0 %3701
      %3703 = vrot.lane.b32.xlu0 %v3115, 32
      %v3704 = vpop.permute.xlu0 %3703
      %3705 = vrot.lane.b32.xlu0 %v3116, 32
      %v3706 = vpop.permute.xlu0 %3705
      %3707 = vrot.lane.b32.xlu0 %v3117, 32
      %v3708 = vpop.permute.xlu0 %3707
      %3709 = vrot.lane.b32.xlu0 %v3118, 32
      %v3710 = vpop.permute.xlu0 %3709
      %3711 = vrot.lane.b32.xlu0 %v3119, 32
      %v3712 = vpop.permute.xlu0 %3711
      %3713 = vrot.lane.b32.xlu0 %v3120, 32
      %v3714 = vpop.permute.xlu0 %3713
      %3715 = vrot.lane.b32.xlu0 %v3121, 32
      %v3716 = vpop.permute.xlu0 %3715
      %3717 = vrot.lane.b32.xlu0 %v3122, 32
      %v3718 = vpop.permute.xlu0 %3717
      %3719 = vrot.lane.b32.xlu0 %v3123, 32
      %v3720 = vpop.permute.xlu0 %3719
      %3721 = vrot.lane.b32.xlu0 %v3124, 32
      %v3722 = vpop.permute.xlu0 %3721
      %3723 = vrot.lane.b32.xlu0 %v3125, 32
      %v3724 = vpop.permute.xlu0 %3723
      %3725 = vrot.lane.b32.xlu0 %v3126, 32
      %v3726 = vpop.permute.xlu0 %3725
      %3727 = vrot.lane.b32.xlu0 %v3127, 32
      %v3728 = vpop.permute.xlu0 %3727
      %3729 = vrot.lane.b32.xlu0 %v3128, 32
      %v3730 = vpop.permute.xlu0 %3729
      %3731 = vrot.lane.b32.xlu0 %v3129, 32
      %v3732 = vpop.permute.xlu0 %3731
      %3733 = vrot.lane.b32.xlu0 %v3130, 32
      %v3734 = vpop.permute.xlu0 %3733
      %3735 = vrot.lane.b32.xlu0 %v3131, 32
      %v3736 = vpop.permute.xlu0 %3735
      %3737 = vrot.lane.b32.xlu0 %v3132, 32
      %v3738 = vpop.permute.xlu0 %3737
      %3739 = vrot.lane.b32.xlu0 %v3133, 32
      %v3740 = vpop.permute.xlu0 %3739
      %3741 = vrot.lane.b32.xlu0 %v3134, 32
      %v3742 = vpop.permute.xlu0 %3741
      %3807 = vrot.lane.b32.xlu0 %v3135, 40
      %v3808 = vpop.permute.xlu0 %3807
      %3809 = vrot.lane.b32.xlu0 %v3136, 40
      %v3810 = vpop.permute.xlu0 %3809
      %3811 = vrot.lane.b32.xlu0 %v3137, 40
      %v3812 = vpop.permute.xlu0 %3811
      %3813 = vrot.lane.b32.xlu0 %v3138, 40
      %v3814 = vpop.permute.xlu0 %3813
      %3815 = vrot.lane.b32.xlu0 %v3139, 40
      %v3816 = vpop.permute.xlu0 %3815
      %3817 = vrot.lane.b32.xlu0 %v3140, 40
      %v3818 = vpop.permute.xlu0 %3817
      %3819 = vrot.lane.b32.xlu0 %v3141, 40
      %v3820 = vpop.permute.xlu0 %3819
      %3821 = vrot.lane.b32.xlu0 %v3142, 40
      %v3822 = vpop.permute.xlu0 %3821
      %3823 = vrot.lane.b32.xlu0 %v3143, 40
      %v3824 = vpop.permute.xlu0 %3823
      %3825 = vrot.lane.b32.xlu0 %v3144, 40
      %v3826 = vpop.permute.xlu0 %3825
      %3827 = vrot.lane.b32.xlu0 %v3145, 40
      %v3828 = vpop.permute.xlu0 %3827
      %3829 = vrot.lane.b32.xlu0 %v3146, 40
      %v3830 = vpop.permute.xlu0 %3829
      %3831 = vrot.lane.b32.xlu0 %v3147, 40
      %v3832 = vpop.permute.xlu0 %3831
      %3833 = vrot.lane.b32.xlu0 %v3148, 40
      %v3834 = vpop.permute.xlu0 %3833
      %3835 = vrot.lane.b32.xlu0 %v3149, 40
      %v3836 = vpop.permute.xlu0 %3835
      %3837 = vrot.lane.b32.xlu0 %v3150, 40
      %v3838 = vpop.permute.xlu0 %3837
      %3839 = vrot.lane.b32.xlu0 %v3151, 40
      %v3840 = vpop.permute.xlu0 %3839
      %3841 = vrot.lane.b32.xlu0 %v3152, 40
      %v3842 = vpop.permute.xlu0 %3841
      %3843 = vrot.lane.b32.xlu0 %v3153, 40
      %v3844 = vpop.permute.xlu0 %3843
      %3845 = vrot.lane.b32.xlu0 %v3154, 40
      %v3846 = vpop.permute.xlu0 %3845
      %3847 = vrot.lane.b32.xlu0 %v3155, 40
      %v3848 = vpop.permute.xlu0 %3847
      %3849 = vrot.lane.b32.xlu0 %v3156, 40
      %v3850 = vpop.permute.xlu0 %3849
      %3851 = vrot.lane.b32.xlu0 %v3157, 40
      %v3852 = vpop.permute.xlu0 %3851
      %3853 = vrot.lane.b32.xlu0 %v3158, 40
      %v3854 = vpop.permute.xlu0 %3853
      %3855 = vrot.lane.b32.xlu0 %v3159, 40
      %v3856 = vpop.permute.xlu0 %3855
      %3857 = vrot.lane.b32.xlu0 %v3160, 40
      %v3858 = vpop.permute.xlu0 %3857
      %3859 = vrot.lane.b32.xlu0 %v3161, 40
      %v3860 = vpop.permute.xlu0 %3859
      %3861 = vrot.lane.b32.xlu0 %v3162, 40
      %v3862 = vpop.permute.xlu0 %3861
      %3863 = vrot.lane.b32.xlu0 %v3163, 40
      %v3864 = vpop.permute.xlu0 %3863
      %3865 = vrot.lane.b32.xlu0 %v3164, 40
      %v3866 = vpop.permute.xlu0 %3865
      %3867 = vrot.lane.b32.xlu0 %v3165, 40
      %v3868 = vpop.permute.xlu0 %3867
      %3869 = vrot.lane.b32.xlu0 %v3166, 40
      %v3870 = vpop.permute.xlu0 %3869
      %3935 = vrot.lane.b32.xlu0 %v3167, 48
      %v3936 = vpop.permute.xlu0 %3935
      %3937 = vrot.lane.b32.xlu0 %v3168, 48
      %v3938 = vpop.permute.xlu0 %3937
      %3939 = vrot.lane.b32.xlu0 %v3169, 48
      %v3940 = vpop.permute.xlu0 %3939
      %3941 = vrot.lane.b32.xlu0 %v3170, 48
      %v3942 = vpop.permute.xlu0 %3941
      %3943 = vrot.lane.b32.xlu0 %v3171, 48
      %v3944 = vpop.permute.xlu0 %3943
      %3945 = vrot.lane.b32.xlu0 %v3172, 48
      %v3946 = vpop.permute.xlu0 %3945
      %3947 = vrot.lane.b32.xlu0 %v3173, 48
      %v3948 = vpop.permute.xlu0 %3947
      %3949 = vrot.lane.b32.xlu0 %v3174, 48
      %v3950 = vpop.permute.xlu0 %3949
      %3951 = vrot.lane.b32.xlu0 %v3175, 48
      %v3952 = vpop.permute.xlu0 %3951
      %3953 = vrot.lane.b32.xlu0 %v3176, 48
      %v3954 = vpop.permute.xlu0 %3953
      %3955 = vrot.lane.b32.xlu0 %v3177, 48
      %v3956 = vpop.permute.xlu0 %3955
      %3957 = vrot.lane.b32.xlu0 %v3178, 48
      %v3958 = vpop.permute.xlu0 %3957
      %3959 = vrot.lane.b32.xlu0 %v3179, 48
      %v3960 = vpop.permute.xlu0 %3959
      %3961 = vrot.lane.b32.xlu0 %v3180, 48
      %v3962 = vpop.permute.xlu0 %3961
      %3963 = vrot.lane.b32.xlu0 %v3181, 48
      %v3964 = vpop.permute.xlu0 %3963
      %3965 = vrot.lane.b32.xlu0 %v3182, 48
      %v3966 = vpop.permute.xlu0 %3965
      %3967 = vrot.lane.b32.xlu0 %v3183, 48
      %v3968 = vpop.permute.xlu0 %3967
      %3969 = vrot.lane.b32.xlu0 %v3184, 48
      %v3970 = vpop.permute.xlu0 %3969
      %3971 = vrot.lane.b32.xlu0 %v3185, 48
      %v3972 = vpop.permute.xlu0 %3971
      %3973 = vrot.lane.b32.xlu0 %v3186, 48
      %v3974 = vpop.permute.xlu0 %3973
      %3975 = vrot.lane.b32.xlu0 %v3187, 48
      %v3976 = vpop.permute.xlu0 %3975
      %3977 = vrot.lane.b32.xlu0 %v3188, 48
      %v3978 = vpop.permute.xlu0 %3977
      %3979 = vrot.lane.b32.xlu0 %v3189, 48
      %v3980 = vpop.permute.xlu0 %3979
      %3981 = vrot.lane.b32.xlu0 %v3190, 48
      %v3982 = vpop.permute.xlu0 %3981
      %3983 = vrot.lane.b32.xlu0 %v3191, 48
      %v3984 = vpop.permute.xlu0 %3983
      %3985 = vrot.lane.b32.xlu0 %v3192, 48
      %v3986 = vpop.permute.xlu0 %3985
      %3987 = vrot.lane.b32.xlu0 %v3193, 48
      %v3988 = vpop.permute.xlu0 %3987
      %3989 = vrot.lane.b32.xlu0 %v3194, 48
      %v3990 = vpop.permute.xlu0 %3989
      %3991 = vrot.lane.b32.xlu0 %v3195, 48
      %v3992 = vpop.permute.xlu0 %3991
      %3993 = vrot.lane.b32.xlu0 %v3196, 48
      %v3994 = vpop.permute.xlu0 %3993
      %3995 = vrot.lane.b32.xlu0 %v3197, 48
      %v3996 = vpop.permute.xlu0 %3995
      %3997 = vrot.lane.b32.xlu0 %v3198, 48
      %v3998 = vpop.permute.xlu0 %3997
      %4063 = vrot.lane.b32.xlu0 %v3199, 56
      %v4064 = vpop.permute.xlu0 %4063
      %4065 = vrot.lane.b32.xlu0 %v3200, 56
      %v4066 = vpop.permute.xlu0 %4065
      %4067 = vrot.lane.b32.xlu0 %v3201, 56
      %v4068 = vpop.permute.xlu0 %4067
      %4069 = vrot.lane.b32.xlu0 %v3202, 56
      %v4070 = vpop.permute.xlu0 %4069
      %4071 = vrot.lane.b32.xlu0 %v3203, 56
      %v4072 = vpop.permute.xlu0 %4071
      %4073 = vrot.lane.b32.xlu0 %v3204, 56
      %v4074 = vpop.permute.xlu0 %4073
      %4075 = vrot.lane.b32.xlu0 %v3205, 56
      %v4076 = vpop.permute.xlu0 %4075
      %4077 = vrot.lane.b32.xlu0 %v3206, 56
      %v4078 = vpop.permute.xlu0 %4077
      %4079 = vrot.lane.b32.xlu0 %v3207, 56
      %v4080 = vpop.permute.xlu0 %4079
      %4081 = vrot.lane.b32.xlu0 %v3208, 56
      %v4082 = vpop.permute.xlu0 %4081
      %4083 = vrot.lane.b32.xlu0 %v3209, 56
      %v4084 = vpop.permute.xlu0 %4083
      %4085 = vrot.lane.b32.xlu0 %v3210, 56
      %v4086 = vpop.permute.xlu0 %4085
      %4087 = vrot.lane.b32.xlu0 %v3211, 56
      %v4088 = vpop.permute.xlu0 %4087
      %4089 = vrot.lane.b32.xlu0 %v3212, 56
      %v4090 = vpop.permute.xlu0 %4089
      %4091 = vrot.lane.b32.xlu0 %v3213, 56
      %v4092 = vpop.permute.xlu0 %4091
      %4093 = vrot.lane.b32.xlu0 %v3214, 56
      %v4094 = vpop.permute.xlu0 %4093
      %4095 = vrot.lane.b32.xlu0 %v3215, 56
      %v4096 = vpop.permute.xlu0 %4095
      %4097 = vrot.lane.b32.xlu0 %v3216, 56
      %v4098 = vpop.permute.xlu0 %4097
      %4099 = vrot.lane.b32.xlu0 %v3217, 56
      %v4100 = vpop.permute.xlu0 %4099
      %4101 = vrot.lane.b32.xlu0 %v3218, 56
      %v4102 = vpop.permute.xlu0 %4101
      %4103 = vrot.lane.b32.xlu0 %v3219, 56
      %v4104 = vpop.permute.xlu0 %4103
      %4105 = vrot.lane.b32.xlu0 %v3220, 56
      %v4106 = vpop.permute.xlu0 %4105
      %4107 = vrot.lane.b32.xlu0 %v3221, 56
      %v4108 = vpop.permute.xlu0 %4107
      %4109 = vrot.lane.b32.xlu0 %v3222, 56
      %v4110 = vpop.permute.xlu0 %4109
      %4111 = vrot.lane.b32.xlu0 %v3223, 56
      %v4112 = vpop.permute.xlu0 %4111
      %4113 = vrot.lane.b32.xlu0 %v3224, 56
      %v4114 = vpop.permute.xlu0 %4113
      %4115 = vrot.lane.b32.xlu0 %v3225, 56
      %v4116 = vpop.permute.xlu0 %4115
      %4117 = vrot.lane.b32.xlu0 %v3226, 56
      %v4118 = vpop.permute.xlu0 %4117
      %4119 = vrot.lane.b32.xlu0 %v3227, 56
      %v4120 = vpop.permute.xlu0 %4119
      %4121 = vrot.lane.b32.xlu0 %v3228, 56
      %v4122 = vpop.permute.xlu0 %4121
      %4123 = vrot.lane.b32.xlu0 %v3229, 56
      %v4124 = vpop.permute.xlu0 %4123
      %4125 = vrot.lane.b32.xlu0 %v3230, 56
      %v4126 = vpop.permute.xlu0 %4125
      %4191 = vrot.lane.b32.xlu0 %v3231, 64
      %v4192 = vpop.permute.xlu0 %4191
      %4193 = vrot.lane.b32.xlu0 %v3232, 64
      %v4194 = vpop.permute.xlu0 %4193
      %4195 = vrot.lane.b32.xlu0 %v3233, 64
      %v4196 = vpop.permute.xlu0 %4195
      %4197 = vrot.lane.b32.xlu0 %v3234, 64
      %v4198 = vpop.permute.xlu0 %4197
      %4199 = vrot.lane.b32.xlu0 %v3235, 64
      %v4200 = vpop.permute.xlu0 %4199
      %4201 = vrot.lane.b32.xlu0 %v3236, 64
      %v4202 = vpop.permute.xlu0 %4201
      %4203 = vrot.lane.b32.xlu0 %v3237, 64
      %v4204 = vpop.permute.xlu0 %4203
      %4205 = vrot.lane.b32.xlu0 %v3238, 64
      %v4206 = vpop.permute.xlu0 %4205
      %4207 = vrot.lane.b32.xlu0 %v3239, 64
      %v4208 = vpop.permute.xlu0 %4207
      %4209 = vrot.lane.b32.xlu0 %v3240, 64
      %v4210 = vpop.permute.xlu0 %4209
      %4211 = vrot.lane.b32.xlu0 %v3241, 64
      %v4212 = vpop.permute.xlu0 %4211
      %4213 = vrot.lane.b32.xlu0 %v3242, 64
      %v4214 = vpop.permute.xlu0 %4213
      %4215 = vrot.lane.b32.xlu0 %v3243, 64
      %v4216 = vpop.permute.xlu0 %4215
      %4217 = vrot.lane.b32.xlu0 %v3244, 64
      %v4218 = vpop.permute.xlu0 %4217
      %4219 = vrot.lane.b32.xlu0 %v3245, 64
      %v4220 = vpop.permute.xlu0 %4219
      %4221 = vrot.lane.b32.xlu0 %v3246, 64
      %v4222 = vpop.permute.xlu0 %4221
      %4223 = vrot.lane.b32.xlu0 %v3247, 64
      %v4224 = vpop.permute.xlu0 %4223
      %4225 = vrot.lane.b32.xlu0 %v3248, 64
      %v4226 = vpop.permute.xlu0 %4225
      %4227 = vrot.lane.b32.xlu0 %v3249, 64
      %v4228 = vpop.permute.xlu0 %4227
      %4229 = vrot.lane.b32.xlu0 %v3250, 64
      %v4230 = vpop.permute.xlu0 %4229
      %4231 = vrot.lane.b32.xlu0 %v3251, 64
      %v4232 = vpop.permute.xlu0 %4231
      %4233 = vrot.lane.b32.xlu0 %v3252, 64
      %v4234 = vpop.permute.xlu0 %4233
      %4235 = vrot.lane.b32.xlu0 %v3253, 64
      %v4236 = vpop.permute.xlu0 %4235
      %4237 = vrot.lane.b32.xlu0 %v3254, 64
      %v4238 = vpop.permute.xlu0 %4237
      %4239 = vrot.lane.b32.xlu0 %v3255, 64
      %v4240 = vpop.permute.xlu0 %4239
      %4241 = vrot.lane.b32.xlu0 %v3256, 64
      %v4242 = vpop.permute.xlu0 %4241
      %4243 = vrot.lane.b32.xlu0 %v3257, 64
      %v4244 = vpop.permute.xlu0 %4243
      %4245 = vrot.lane.b32.xlu0 %v3258, 64
      %v4246 = vpop.permute.xlu0 %4245
      %4247 = vrot.lane.b32.xlu0 %v3259, 64
      %v4248 = vpop.permute.xlu0 %4247
      %4249 = vrot.lane.b32.xlu0 %v3260, 64
      %v4250 = vpop.permute.xlu0 %4249
      %4251 = vrot.lane.b32.xlu0 %v3261, 64
      %v4252 = vpop.permute.xlu0 %4251
      %4253 = vrot.lane.b32.xlu0 %v3262, 64
      %v4254 = vpop.permute.xlu0 %4253
      %v4287 = vsel %vm2072, %v2975, %v3296
      %v4288 = vsel %vm2072, %v2976, %v3298
      %v4289 = vsel %vm2072, %v2977, %v3300
      %v4290 = vsel %vm2072, %v2978, %v3302
      %v4291 = vsel %vm2072, %v2979, %v3304
      %v4292 = vsel %vm2072, %v2980, %v3306
      %v4293 = vsel %vm2072, %v2981, %v3308
      %v4294 = vsel %vm2072, %v2982, %v3310
      %v4295 = vsel %vm2072, %v2983, %v3312
      %v4296 = vsel %vm2072, %v2984, %v3314
      %v4297 = vsel %vm2072, %v2985, %v3316
      %v4298 = vsel %vm2072, %v2986, %v3318
      %v4299 = vsel %vm2072, %v2987, %v3320
      %v4300 = vsel %vm2072, %v2988, %v3322
      %v4301 = vsel %vm2072, %v2989, %v3324
      %v4302 = vsel %vm2072, %v2990, %v3326
      %v4303 = vsel %vm2072, %v2991, %v3328
      %v4304 = vsel %vm2072, %v2992, %v3330
      %v4305 = vsel %vm2072, %v2993, %v3332
      %v4306 = vsel %vm2072, %v2994, %v3334
      %v4307 = vsel %vm2072, %v2995, %v3336
      %v4308 = vsel %vm2072, %v2996, %v3338
      %v4309 = vsel %vm2072, %v2997, %v3340
      %v4310 = vsel %vm2072, %v2998, %v3342
      %v4311 = vsel %vm2072, %v2999, %v3344
      %v4312 = vsel %vm2072, %v3000, %v3346
      %v4313 = vsel %vm2072, %v3001, %v3348
      %v4314 = vsel %vm2072, %v3002, %v3350
      %v4315 = vsel %vm2072, %v3003, %v3352
      %v4316 = vsel %vm2072, %v3004, %v3354
      %v4317 = vsel %vm2072, %v3005, %v3356
      %v4318 = vsel %vm2072, %v3006, %v3358
      %v4319 = vsel %vm441, %v4287, %v3424
      %v4320 = vsel %vm441, %v4288, %v3426
      %v4321 = vsel %vm441, %v4289, %v3428
      %v4322 = vsel %vm441, %v4290, %v3430
      %v4323 = vsel %vm441, %v4291, %v3432
      %v4324 = vsel %vm441, %v4292, %v3434
      %v4325 = vsel %vm441, %v4293, %v3436
      %v4326 = vsel %vm441, %v4294, %v3438
      %v4327 = vsel %vm441, %v4295, %v3440
      %v4328 = vsel %vm441, %v4296, %v3442
      %v4329 = vsel %vm441, %v4297, %v3444
      %v4330 = vsel %vm441, %v4298, %v3446
      %v4331 = vsel %vm441, %v4299, %v3448
      %v4332 = vsel %vm441, %v4300, %v3450
      %v4333 = vsel %vm441, %v4301, %v3452
      %v4334 = vsel %vm441, %v4302, %v3454
      %v4335 = vsel %vm441, %v4303, %v3456
      %v4336 = vsel %vm441, %v4304, %v3458
      %v4337 = vsel %vm441, %v4305, %v3460
      %v4338 = vsel %vm441, %v4306, %v3462
      %v4339 = vsel %vm441, %v4307, %v3464
      %v4340 = vsel %vm441, %v4308, %v3466
      %v4341 = vsel %vm441, %v4309, %v3468
      %v4342 = vsel %vm441, %v4310, %v3470
      %v4343 = vsel %vm441, %v4311, %v3472
      %v4344 = vsel %vm441, %v4312, %v3474
      %v4345 = vsel %vm441, %v4313, %v3476
      %v4346 = vsel %vm441, %v4314, %v3478
      %v4347 = vsel %vm441, %v4315, %v3480
      %v4348 = vsel %vm441, %v4316, %v3482
      %v4349 = vsel %vm441, %v4317, %v3484
      %v4350 = vsel %vm441, %v4318, %v3486
      %v4351 = vsel %vm2203, %v4319, %v3552
      %v4352 = vsel %vm2203, %v4320, %v3554
      %v4353 = vsel %vm2203, %v4321, %v3556
      %v4354 = vsel %vm2203, %v4322, %v3558
      %v4355 = vsel %vm2203, %v4323, %v3560
      %v4356 = vsel %vm2203, %v4324, %v3562
      %v4357 = vsel %vm2203, %v4325, %v3564
      %v4358 = vsel %vm2203, %v4326, %v3566
      %v4359 = vsel %vm2203, %v4327, %v3568
      %v4360 = vsel %vm2203, %v4328, %v3570
      %v4361 = vsel %vm2203, %v4329, %v3572
      %v4362 = vsel %vm2203, %v4330, %v3574
      %v4363 = vsel %vm2203, %v4331, %v3576
      %v4364 = vsel %vm2203, %v4332, %v3578
      %v4365 = vsel %vm2203, %v4333, %v3580
      %v4366 = vsel %vm2203, %v4334, %v3582
      %v4367 = vsel %vm2203, %v4335, %v3584
      %v4368 = vsel %vm2203, %v4336, %v3586
      %v4369 = vsel %vm2203, %v4337, %v3588
      %v4370 = vsel %vm2203, %v4338, %v3590
      %v4371 = vsel %vm2203, %v4339, %v3592
      %v4372 = vsel %vm2203, %v4340, %v3594
      %v4373 = vsel %vm2203, %v4341, %v3596
      %v4374 = vsel %vm2203, %v4342, %v3598
      %v4375 = vsel %vm2203, %v4343, %v3600
      %v4376 = vsel %vm2203, %v4344, %v3602
      %v4377 = vsel %vm2203, %v4345, %v3604
      %v4378 = vsel %vm2203, %v4346, %v3606
      %v4379 = vsel %vm2203, %v4347, %v3608
      %v4380 = vsel %vm2203, %v4348, %v3610
      %v4381 = vsel %vm2203, %v4349, %v3612
      %v4382 = vsel %vm2203, %v4350, %v3614
      %v4383 = vsel %vm2269, %v4351, %v3680
      %v4384 = vsel %vm2269, %v4352, %v3682
      %v4385 = vsel %vm2269, %v4353, %v3684
      %v4386 = vsel %vm2269, %v4354, %v3686
      %v4387 = vsel %vm2269, %v4355, %v3688
      %v4388 = vsel %vm2269, %v4356, %v3690
      %v4389 = vsel %vm2269, %v4357, %v3692
      %v4390 = vsel %vm2269, %v4358, %v3694
      %v4391 = vsel %vm2269, %v4359, %v3696
      %v4392 = vsel %vm2269, %v4360, %v3698
      %v4393 = vsel %vm2269, %v4361, %v3700
      %v4394 = vsel %vm2269, %v4362, %v3702
      %v4395 = vsel %vm2269, %v4363, %v3704
      %v4396 = vsel %vm2269, %v4364, %v3706
      %v4397 = vsel %vm2269, %v4365, %v3708
      %v4398 = vsel %vm2269, %v4366, %v3710
      %v4399 = vsel %vm2269, %v4367, %v3712
      %v4400 = vsel %vm2269, %v4368, %v3714
      %v4401 = vsel %vm2269, %v4369, %v3716
      %v4402 = vsel %vm2269, %v4370, %v3718
      %v4403 = vsel %vm2269, %v4371, %v3720
      %v4404 = vsel %vm2269, %v4372, %v3722
      %v4405 = vsel %vm2269, %v4373, %v3724
      %v4406 = vsel %vm2269, %v4374, %v3726
      %v4407 = vsel %vm2269, %v4375, %v3728
      %v4408 = vsel %vm2269, %v4376, %v3730
      %v4409 = vsel %vm2269, %v4377, %v3732
      %v4410 = vsel %vm2269, %v4378, %v3734
      %v4411 = vsel %vm2269, %v4379, %v3736
      %v4412 = vsel %vm2269, %v4380, %v3738
      %v4413 = vsel %vm2269, %v4381, %v3740
      %v4414 = vsel %vm2269, %v4382, %v3742
      %vm4415 = vcmask 326656
      %v4416 = vsel %vm4415, %v4383, %v3808
      %v4417 = vsel %vm4415, %v4384, %v3810
      %v4418 = vsel %vm4415, %v4385, %v3812
      %v4419 = vsel %vm4415, %v4386, %v3814
      %v4420 = vsel %vm4415, %v4387, %v3816
      %v4421 = vsel %vm4415, %v4388, %v3818
      %v4422 = vsel %vm4415, %v4389, %v3820
      %v4423 = vsel %vm4415, %v4390, %v3822
      %v4424 = vsel %vm4415, %v4391, %v3824
      %v4425 = vsel %vm4415, %v4392, %v3826
      %v4426 = vsel %vm4415, %v4393, %v3828
      %v4427 = vsel %vm4415, %v4394, %v3830
      %v4428 = vsel %vm4415, %v4395, %v3832
      %v4429 = vsel %vm4415, %v4396, %v3834
      %v4430 = vsel %vm4415, %v4397, %v3836
      %v4431 = vsel %vm4415, %v4398, %v3838
      %v4432 = vsel %vm4415, %v4399, %v3840
      %v4433 = vsel %vm4415, %v4400, %v3842
      %v4434 = vsel %vm4415, %v4401, %v3844
      %v4435 = vsel %vm4415, %v4402, %v3846
      %v4436 = vsel %vm4415, %v4403, %v3848
      %v4437 = vsel %vm4415, %v4404, %v3850
      %v4438 = vsel %vm4415, %v4405, %v3852
      %v4439 = vsel %vm4415, %v4406, %v3854
      %v4440 = vsel %vm4415, %v4407, %v3856
      %v4441 = vsel %vm4415, %v4408, %v3858
      %v4442 = vsel %vm4415, %v4409, %v3860
      %v4443 = vsel %vm4415, %v4410, %v3862
      %v4444 = vsel %vm4415, %v4411, %v3864
      %v4445 = vsel %vm4415, %v4412, %v3866
      %v4446 = vsel %vm4415, %v4413, %v3868
      %v4447 = vsel %vm4415, %v4414, %v3870
      %vm4448 = vcmask 392192
      %v4449 = vsel %vm4448, %v4416, %v3936
      %v4450 = vsel %vm4448, %v4417, %v3938
      %v4451 = vsel %vm4448, %v4418, %v3940
      %v4452 = vsel %vm4448, %v4419, %v3942
      %v4453 = vsel %vm4448, %v4420, %v3944
      %v4454 = vsel %vm4448, %v4421, %v3946
      %v4455 = vsel %vm4448, %v4422, %v3948
      %v4456 = vsel %vm4448, %v4423, %v3950
      %v4457 = vsel %vm4448, %v4424, %v3952
      %v4458 = vsel %vm4448, %v4425, %v3954
      %v4459 = vsel %vm4448, %v4426, %v3956
      %v4460 = vsel %vm4448, %v4427, %v3958
      %v4461 = vsel %vm4448, %v4428, %v3960
      %v4462 = vsel %vm4448, %v4429, %v3962
      %v4463 = vsel %vm4448, %v4430, %v3964
      %v4464 = vsel %vm4448, %v4431, %v3966
      %v4465 = vsel %vm4448, %v4432, %v3968
      %v4466 = vsel %vm4448, %v4433, %v3970
      %v4467 = vsel %vm4448, %v4434, %v3972
      %v4468 = vsel %vm4448, %v4435, %v3974
      %v4469 = vsel %vm4448, %v4436, %v3976
      %v4470 = vsel %vm4448, %v4437, %v3978
      %v4471 = vsel %vm4448, %v4438, %v3980
      %v4472 = vsel %vm4448, %v4439, %v3982
      %v4473 = vsel %vm4448, %v4440, %v3984
      %v4474 = vsel %vm4448, %v4441, %v3986
      %v4475 = vsel %vm4448, %v4442, %v3988
      %v4476 = vsel %vm4448, %v4443, %v3990
      %v4477 = vsel %vm4448, %v4444, %v3992
      %v4478 = vsel %vm4448, %v4445, %v3994
      %v4479 = vsel %vm4448, %v4446, %v3996
      %v4480 = vsel %vm4448, %v4447, %v3998
      %vm4481 = vcmask 457728
      %v4482 = vsel %vm4481, %v4449, %v4064
      %v4483 = vsel %vm4481, %v4450, %v4066
      %v4484 = vsel %vm4481, %v4451, %v4068
      %v4485 = vsel %vm4481, %v4452, %v4070
      %v4486 = vsel %vm4481, %v4453, %v4072
      %v4487 = vsel %vm4481, %v4454, %v4074
      %v4488 = vsel %vm4481, %v4455, %v4076
      %v4489 = vsel %vm4481, %v4456, %v4078
      %v4490 = vsel %vm4481, %v4457, %v4080
      %v4491 = vsel %vm4481, %v4458, %v4082
      %v4492 = vsel %vm4481, %v4459, %v4084
      %v4493 = vsel %vm4481, %v4460, %v4086
      %v4494 = vsel %vm4481, %v4461, %v4088
      %v4495 = vsel %vm4481, %v4462, %v4090
      %v4496 = vsel %vm4481, %v4463, %v4092
      %v4497 = vsel %vm4481, %v4464, %v4094
      %v4498 = vsel %vm4481, %v4465, %v4096
      %v4499 = vsel %vm4481, %v4466, %v4098
      %v4500 = vsel %vm4481, %v4467, %v4100
      %v4501 = vsel %vm4481, %v4468, %v4102
      %v4502 = vsel %vm4481, %v4469, %v4104
      %v4503 = vsel %vm4481, %v4470, %v4106
      %v4504 = vsel %vm4481, %v4471, %v4108
      %v4505 = vsel %vm4481, %v4472, %v4110
      %v4506 = vsel %vm4481, %v4473, %v4112
      %v4507 = vsel %vm4481, %v4474, %v4114
      %v4508 = vsel %vm4481, %v4475, %v4116
      %v4509 = vsel %vm4481, %v4476, %v4118
      %v4510 = vsel %vm4481, %v4477, %v4120
      %v4511 = vsel %vm4481, %v4478, %v4122
      %v4512 = vsel %vm4481, %v4479, %v4124
      %v4513 = vsel %vm4481, %v4480, %v4126
      %vm4514 = vcmask 523264
      %v4515 = vsel %vm4514, %v4482, %v4192
      %v4516 = vsel %vm4514, %v4483, %v4194
      %v4517 = vsel %vm4514, %v4484, %v4196
      %v4518 = vsel %vm4514, %v4485, %v4198
      %v4519 = vsel %vm4514, %v4486, %v4200
      %v4520 = vsel %vm4514, %v4487, %v4202
      %v4521 = vsel %vm4514, %v4488, %v4204
      %v4522 = vsel %vm4514, %v4489, %v4206
      %v4523 = vsel %vm4514, %v4490, %v4208
      %v4524 = vsel %vm4514, %v4491, %v4210
      %v4525 = vsel %vm4514, %v4492, %v4212
      %v4526 = vsel %vm4514, %v4493, %v4214
      %v4527 = vsel %vm4514, %v4494, %v4216
      %v4528 = vsel %vm4514, %v4495, %v4218
      %v4529 = vsel %vm4514, %v4496, %v4220
      %v4530 = vsel %vm4514, %v4497, %v4222
      %v4531 = vsel %vm4514, %v4498, %v4224
      %v4532 = vsel %vm4514, %v4499, %v4226
      %v4533 = vsel %vm4514, %v4500, %v4228
      %v4534 = vsel %vm4514, %v4501, %v4230
      %v4535 = vsel %vm4514, %v4502, %v4232
      %v4536 = vsel %vm4514, %v4503, %v4234
      %v4537 = vsel %vm4514, %v4504, %v4236
      %v4538 = vsel %vm4514, %v4505, %v4238
      %v4539 = vsel %vm4514, %v4506, %v4240
      %v4540 = vsel %vm4514, %v4507, %v4242
      %v4541 = vsel %vm4514, %v4508, %v4244
      %v4542 = vsel %vm4514, %v4509, %v4246
      %v4543 = vsel %vm4514, %v4510, %v4248
      %v4544 = vsel %vm4514, %v4511, %v4250
      %v4545 = vsel %vm4514, %v4512, %v4252
      %v4546 = vsel %vm4514, %v4513, %v4254
      %v4547 = vld [vmem:[%s7] sm:$0xff]
      %v4548 = vld [vmem:[%s7 + $0x8] sm:$0xff]
      %v4549 = vld [vmem:[%s7 + $0x10] sm:$0xff]
      %v4550 = vld [vmem:[%s7 + $0x18] sm:$0xff]
      %v4551 = vld [vmem:[%s7 + $0x20] sm:$0xff]
      %v4552 = vld [vmem:[%s7 + $0x28] sm:$0xff]
      %v4553 = vld [vmem:[%s7 + $0x30] sm:$0xff]
      %v4554 = vld [vmem:[%s7 + $0x38] sm:$0xff]
      %v4555 = vld [vmem:[%s7 + $0x40] sm:$0xff]
      %v4556 = vld [vmem:[%s8] sm:$0x1]
      %v4558 = vlaneseq
      %v4559 = vshrl.u32 %v4558, 7
      %v4560 = vsub.s32 0, %v4559
      %v4561 = vrot.slane %v4556, %v4560
      %vm4563 = vcmask 588800
      %v4565 = vsel %vm4563, %v4515, 0
      %v4568 = vsel %vm4563, %v4516, 0
      %v4571 = vsel %vm4563, %v4517, 0
      %v4574 = vsel %vm4563, %v4518, 0
      %v4577 = vsel %vm4563, %v4519, 0
      %v4580 = vsel %vm4563, %v4520, 0
      %v4583 = vsel %vm4563, %v4521, 0
      %v4586 = vsel %vm4563, %v4522, 0
      %v4589 = vsel %vm4563, %v4523, 0
      %v4592 = vsel %vm4563, %v4524, 0
      %v4595 = vsel %vm4563, %v4525, 0
      %v4598 = vsel %vm4563, %v4526, 0
      %v4601 = vsel %vm4563, %v4527, 0
      %v4604 = vsel %vm4563, %v4528, 0
      %v4607 = vsel %vm4563, %v4529, 0
      %v4610 = vsel %vm4563, %v4530, 0
      %v4613 = vsel %vm4563, %v4531, 0
      %v4616 = vsel %vm4563, %v4532, 0
      %v4619 = vsel %vm4563, %v4533, 0
      %v4622 = vsel %vm4563, %v4534, 0
      %v4625 = vsel %vm4563, %v4535, 0
      %v4628 = vsel %vm4563, %v4536, 0
      %v4631 = vsel %vm4563, %v4537, 0
      %v4634 = vsel %vm4563, %v4538, 0
      %v4637 = vsel %vm4563, %v4539, 0
      %v4640 = vsel %vm4563, %v4540, 0
      %v4643 = vsel %vm4563, %v4541, 0
      %v4646 = vsel %vm4563, %v4542, 0
      %v4649 = vsel %vm4563, %v4543, 0
      %v4652 = vsel %vm4563, %v4544, 0
      %v4655 = vsel %vm4563, %v4545, 0
      %v4658 = vsel %vm4563, %v4546, 0
      %4660 = vmatprep.subr.mxu0 0.0
      %4661 = vmatpush1.msra.mxu0 %v4547
      %4662 = vmatprep.subr.mxu0 0.0
      %4663 = vmatpush1.msra.mxu0 %v4548
      %4664 = vmatprep.subr.mxu0 0.0
      %4665 = vmatpush1.msra.mxu0 %v4549
      %4666 = vmatprep.subr.mxu0 0.0
      %4667 = vmatpush1.msra.mxu0 %v4550
      %4668 = vmatprep.subr.mxu0 0.0
      %4669 = vmatpush1.msra.mxu0 %v4551
      %4670 = vmatprep.subr.mxu0 0.0
      %4671 = vmatpush1.msra.mxu0 %v4552
      %4672 = vmatprep.subr.mxu0 0.0
      %4673 = vmatpush1.msra.mxu0 %v4553
      %4674 = vmatprep.subr.mxu0 0.0
      %4675 = vmatpush1.msra.mxu0 %v4554
      %4676 = vmatprep.subr.mxu0 0.0
      %4677 = vmatpush1.msra.mxu0 %v4555
      %4678 = vmatprep.subr.mxu0 0.0
      %4679 = vmatpush1.msra.mxu0 0.0
      %4680 = vmatprep.subr.mxu0 0.0
      %4681 = vmatpush1.msra.mxu0 0.0
      %4682 = vmatprep.subr.mxu0 0.0
      %4683 = vmatpush1.msra.mxu0 0.0
      %4684 = vmatprep.subr.mxu0 0.0
      %4685 = vmatpush1.msra.mxu0 0.0
      %4686 = vmatprep.subr.mxu0 0.0
      %4687 = vmatpush1.msra.mxu0 0.0
      %4688 = vmatprep.subr.mxu0 0.0
      %4689 = vmatpush1.msra.mxu0 0.0
      %4690 = vmatprep.subr.mxu0 0.0
      %4691 = vmatpush1.msra.mxu0 0.0
      %4692 = vmatprep.subr.mxu0 0.0
      %4693 = vmatpush1.msra.mxu0 0.0
      %4694 = vmatprep.subr.mxu0 0.0
      %4695 = vmatpush1.msra.mxu0 0.0
      %4696 = vmatprep.subr.mxu0 0.0
      %4697 = vmatpush1.msra.mxu0 0.0
      %4698 = vmatprep.subr.mxu0 0.0
      %4699 = vmatpush1.msra.mxu0 0.0
      %4700 = vmatprep.subr.mxu0 0.0
      %4701 = vmatpush1.msra.mxu0 0.0
      %4702 = vmatprep.subr.mxu0 0.0
      %4703 = vmatpush1.msra.mxu0 0.0
      %4704 = vmatprep.subr.mxu0 0.0
      %4705 = vmatpush1.msra.mxu0 0.0
      %4706 = vmatprep.subr.mxu0 0.0
      %4707 = vmatpush1.msra.mxu0 0.0
      %4708 = vmatprep.subr.mxu0 0.0
      %4709 = vmatpush1.msra.mxu0 0.0
      %4710 = vmatprep.subr.mxu0 0.0
      %4711 = vmatpush1.msra.mxu0 0.0
      %4712 = vmatprep.subr.mxu0 0.0
      %4713 = vmatpush1.msra.mxu0 0.0
      %4714 = vmatprep.subr.mxu0 0.0
      %4715 = vmatpush1.msra.mxu0 0.0
      %4716 = vmatprep.subr.mxu0 0.0
      %4717 = vmatpush1.msra.mxu0 0.0
      %4718 = vmatprep.subr.mxu0 0.0
      %4719 = vmatpush1.msra.mxu0 0.0
      %4720 = vmatprep.subr.mxu0 0.0
      %4721 = vmatpush1.msra.mxu0 0.0
      %4722 = vmatprep.subr.mxu0 0.0
      %4723 = vmatpush1.msra.mxu0 0.0
      %4724 = vmatprep.mubr.f32.mxu0 0.0
      %4725 = vmatmul.mubr.f32.gmra.mrb[0].mxu0 %v4565
      %v4726 = vpop.f32.mrb[0].mxu0
      %v4727 = vadd.f32 %v4561, %v4726
      %v4728 = vpop.f32.mrb[0].mxu0
      %4729 = vmatprep.mubr.f32.mxu0 0.0
      %4730 = vmatmul.mubr.f32.gmra.mrb[0].mxu0 %v4568
      %v4731 = vpop.f32.mrb[0].mxu0
      %v4732 = vadd.f32 %v4561, %v4731
      %v4733 = vpop.f32.mrb[0].mxu0
      %4734 = vmatprep.mubr.f32.mxu0 0.0
      %4735 = vmatmul.mubr.f32.gmra.mrb[0].mxu0 %v4571
      %v4736 = vpop.f32.mrb[0].mxu0
      %v4737 = vadd.f32 %v4561, %v4736
      %v4738 = vpop.f32.mrb[0].mxu0
      %4739 = vmatprep.mubr.f32.mxu0 0.0
      %4740 = vmatmul.mubr.f32.gmra.mrb[0].mxu0 %v4574
      %v4741 = vpop.f32.mrb[0].mxu0
      %v4742 = vadd.f32 %v4561, %v4741
      %v4743 = vpop.f32.mrb[0].mxu0
      %4744 = vmatprep.mubr.f32.mxu0 0.0
      %4745 = vmatmul.mubr.f32.gmra.mrb[0].mxu0 %v4577
      %v4746 = vpop.f32.mrb[0].mxu0
      %v4747 = vadd.f32 %v4561, %v4746
      %v4748 = vpop.f32.mrb[0].mxu0
      %4749 = vmatprep.mubr.f32.mxu0 0.0
      %4750 = vmatmul.mubr.f32.gmra.mrb[0].mxu0 %v4580
      %v4751 = vpop.f32.mrb[0].mxu0
      %v4752 = vadd.f32 %v4561, %v4751
      %v4753 = vpop.f32.mrb[0].mxu0
      %4754 = vmatprep.mubr.f32.mxu0 0.0
      %4755 = vmatmul.mubr.f32.gmra.mrb[0].mxu0 %v4583
      %v4756 = vpop.f32.mrb[0].mxu0
      %v4757 = vadd.f32 %v4561, %v4756
      %v4758 = vpop.f32.mrb[0].mxu0
      %4759 = vmatprep.mubr.f32.mxu0 0.0
      %4760 = vmatmul.mubr.f32.gmra.mrb[0].mxu0 %v4586
      %v4761 = vpop.f32.mrb[0].mxu0
      %v4762 = vadd.f32 %v4561, %v4761
      %v4763 = vpop.f32.mrb[0].mxu0
      %4764 = vmatprep.mubr.f32.mxu0 0.0
      %4765 = vmatmul.mubr.f32.gmra.mrb[0].mxu0 %v4589
      %v4766 = vpop.f32.mrb[0].mxu0
      %v4767 = vadd.f32 %v4561, %v4766
      %v4768 = vpop.f32.mrb[0].mxu0
      %4769 = vmatprep.mubr.f32.mxu0 0.0
      %4770 = vmatmul.mubr.f32.gmra.mrb[0].mxu0 %v4592
      %v4771 = vpop.f32.mrb[0].mxu0
      %v4772 = vadd.f32 %v4561, %v4771
      %v4773 = vpop.f32.mrb[0].mxu0
      %4774 = vmatprep.mubr.f32.mxu0 0.0
      %4775 = vmatmul.mubr.f32.gmra.mrb[0].mxu0 %v4595
      %v4776 = vpop.f32.mrb[0].mxu0
      %v4777 = vadd.f32 %v4561, %v4776
      %v4778 = vpop.f32.mrb[0].mxu0
      %4779 = vmatprep.mubr.f32.mxu0 0.0
      %4780 = vmatmul.mubr.f32.gmra.mrb[0].mxu0 %v4598
      %v4781 = vpop.f32.mrb[0].mxu0
      %v4782 = vadd.f32 %v4561, %v4781
      %v4783 = vpop.f32.mrb[0].mxu0
      %4784 = vmatprep.mubr.f32.mxu0 0.0
      %4785 = vmatmul.mubr.f32.gmra.mrb[0].mxu0 %v4601
      %v4786 = vpop.f32.mrb[0].mxu0
      %v4787 = vadd.f32 %v4561, %v4786
      %v4788 = vpop.f32.mrb[0].mxu0
      %4789 = vmatprep.mubr.f32.mxu0 0.0
      %4790 = vmatmul.mubr.f32.gmra.mrb[0].mxu0 %v4604
      %v4791 = vpop.f32.mrb[0].mxu0
      %v4792 = vadd.f32 %v4561, %v4791
      %v4793 = vpop.f32.mrb[0].mxu0
      %4794 = vmatprep.mubr.f32.mxu0 0.0
      %4795 = vmatmul.mubr.f32.gmra.mrb[0].mxu0 %v4607
      %v4796 = vpop.f32.mrb[0].mxu0
      %v4797 = vadd.f32 %v4561, %v4796
      %v4798 = vpop.f32.mrb[0].mxu0
      %4799 = vmatprep.mubr.f32.mxu0 0.0
      %4800 = vmatmul.mubr.f32.gmra.mrb[0].mxu0 %v4610
      %v4801 = vpop.f32.mrb[0].mxu0
      %v4802 = vadd.f32 %v4561, %v4801
      %v4803 = vpop.f32.mrb[0].mxu0
      %4804 = vmatprep.mubr.f32.mxu0 0.0
      %4805 = vmatmul.mubr.f32.gmra.mrb[0].mxu0 %v4613
      %v4806 = vpop.f32.mrb[0].mxu0
      %v4807 = vadd.f32 %v4561, %v4806
      %v4808 = vpop.f32.mrb[0].mxu0
      %4809 = vmatprep.mubr.f32.mxu0 0.0
      %4810 = vmatmul.mubr.f32.gmra.mrb[0].mxu0 %v4616
      %v4811 = vpop.f32.mrb[0].mxu0
      %v4812 = vadd.f32 %v4561, %v4811
      %v4813 = vpop.f32.mrb[0].mxu0
      %4814 = vmatprep.mubr.f32.mxu0 0.0
      %4815 = vmatmul.mubr.f32.gmra.mrb[0].mxu0 %v4619
      %v4816 = vpop.f32.mrb[0].mxu0
      %v4817 = vadd.f32 %v4561, %v4816
      %v4818 = vpop.f32.mrb[0].mxu0
      %4819 = vmatprep.mubr.f32.mxu0 0.0
      %4820 = vmatmul.mubr.f32.gmra.mrb[0].mxu0 %v4622
      %v4821 = vpop.f32.mrb[0].mxu0
      %v4822 = vadd.f32 %v4561, %v4821
      %v4823 = vpop.f32.mrb[0].mxu0
      %4824 = vmatprep.mubr.f32.mxu0 0.0
      %4825 = vmatmul.mubr.f32.gmra.mrb[0].mxu0 %v4625
      %v4826 = vpop.f32.mrb[0].mxu0
      %v4827 = vadd.f32 %v4561, %v4826
      %v4828 = vpop.f32.mrb[0].mxu0
      %4829 = vmatprep.mubr.f32.mxu0 0.0
      %4830 = vmatmul.mubr.f32.gmra.mrb[0].mxu0 %v4628
      %v4831 = vpop.f32.mrb[0].mxu0
      %v4832 = vadd.f32 %v4561, %v4831
      %v4833 = vpop.f32.mrb[0].mxu0
      %4834 = vmatprep.mubr.f32.mxu0 0.0
      %4835 = vmatmul.mubr.f32.gmra.mrb[0].mxu0 %v4631
      %v4836 = vpop.f32.mrb[0].mxu0
      %v4837 = vadd.f32 %v4561, %v4836
      %v4838 = vpop.f32.mrb[0].mxu0
      %4839 = vmatprep.mubr.f32.mxu0 0.0
      %4840 = vmatmul.mubr.f32.gmra.mrb[0].mxu0 %v4634
      %v4841 = vpop.f32.mrb[0].mxu0
      %v4842 = vadd.f32 %v4561, %v4841
      %v4843 = vpop.f32.mrb[0].mxu0
      %4844 = vmatprep.mubr.f32.mxu0 0.0
      %4845 = vmatmul.mubr.f32.gmra.mrb[0].mxu0 %v4637
      %v4846 = vpop.f32.mrb[0].mxu0
      %v4847 = vadd.f32 %v4561, %v4846
      %v4848 = vpop.f32.mrb[0].mxu0
      %4849 = vmatprep.mubr.f32.mxu0 0.0
      %4850 = vmatmul.mubr.f32.gmra.mrb[0].mxu0 %v4640
      %v4851 = vpop.f32.mrb[0].mxu0
      %v4852 = vadd.f32 %v4561, %v4851
      %v4853 = vpop.f32.mrb[0].mxu0
      %4854 = vmatprep.mubr.f32.mxu0 0.0
      %4855 = vmatmul.mubr.f32.gmra.mrb[0].mxu0 %v4643
      %v4856 = vpop.f32.mrb[0].mxu0
      %v4857 = vadd.f32 %v4561, %v4856
      %v4858 = vpop.f32.mrb[0].mxu0
      %4859 = vmatprep.mubr.f32.mxu0 0.0
      %4860 = vmatmul.mubr.f32.gmra.mrb[0].mxu0 %v4646
      %v4861 = vpop.f32.mrb[0].mxu0
      %v4862 = vadd.f32 %v4561, %v4861
      %v4863 = vpop.f32.mrb[0].mxu0
      %4864 = vmatprep.mubr.f32.mxu0 0.0
      %4865 = vmatmul.mubr.f32.gmra.mrb[0].mxu0 %v4649
      %v4866 = vpop.f32.mrb[0].mxu0
      %v4867 = vadd.f32 %v4561, %v4866
      %v4868 = vpop.f32.mrb[0].mxu0
      %4869 = vmatprep.mubr.f32.mxu0 0.0
      %4870 = vmatmul.mubr.f32.gmra.mrb[0].mxu0 %v4652
      %v4871 = vpop.f32.mrb[0].mxu0
      %v4872 = vadd.f32 %v4561, %v4871
      %v4873 = vpop.f32.mrb[0].mxu0
      %4874 = vmatprep.mubr.f32.mxu0 0.0
      %4875 = vmatmul.mubr.f32.gmra.mrb[0].mxu0 %v4655
      %v4876 = vpop.f32.mrb[0].mxu0
      %v4877 = vadd.f32 %v4561, %v4876
      %v4878 = vpop.f32.mrb[0].mxu0
      %4879 = vmatprep.mubr.f32.mxu0 0.0
      %4880 = vmatmul.mubr.f32.gmra.mrb[0].mxu0 %v4658
      %v4881 = vpop.f32.mrb[0].mxu0
      %v4882 = vadd.f32 %v4561, %v4881
      %v4883 = vpop.f32.mrb[0].mxu0
      %4884 = vdwg.mxu0
      %4917 = vrot.lane.b32.xlu0 %v4727, 8
      %v4918 = vpop.permute.xlu0 %4917
      %4919 = vrot.lane.b32.xlu0 %v4732, 8
      %v4920 = vpop.permute.xlu0 %4919
      %4921 = vrot.lane.b32.xlu0 %v4737, 8
      %v4922 = vpop.permute.xlu0 %4921
      %4923 = vrot.lane.b32.xlu0 %v4742, 8
      %v4924 = vpop.permute.xlu0 %4923
      %4925 = vrot.lane.b32.xlu0 %v4747, 8
      %v4926 = vpop.permute.xlu0 %4925
      %4927 = vrot.lane.b32.xlu0 %v4752, 8
      %v4928 = vpop.permute.xlu0 %4927
      %4929 = vrot.lane.b32.xlu0 %v4757, 8
      %v4930 = vpop.permute.xlu0 %4929
      %4931 = vrot.lane.b32.xlu0 %v4762, 8
      %v4932 = vpop.permute.xlu0 %4931
      %4933 = vrot.lane.b32.xlu0 %v4767, 8
      %v4934 = vpop.permute.xlu0 %4933
      %4935 = vrot.lane.b32.xlu0 %v4772, 8
      %v4936 = vpop.permute.xlu0 %4935
      %4937 = vrot.lane.b32.xlu0 %v4777, 8
      %v4938 = vpop.permute.xlu0 %4937
      %4939 = vrot.lane.b32.xlu0 %v4782, 8
      %v4940 = vpop.permute.xlu0 %4939
      %4941 = vrot.lane.b32.xlu0 %v4787, 8
      %v4942 = vpop.permute.xlu0 %4941
      %4943 = vrot.lane.b32.xlu0 %v4792, 8
      %v4944 = vpop.permute.xlu0 %4943
      %4945 = vrot.lane.b32.xlu0 %v4797, 8
      %v4946 = vpop.permute.xlu0 %4945
      %4947 = vrot.lane.b32.xlu0 %v4802, 8
      %v4948 = vpop.permute.xlu0 %4947
      %4949 = vrot.lane.b32.xlu0 %v4807, 8
      %v4950 = vpop.permute.xlu0 %4949
      %4951 = vrot.lane.b32.xlu0 %v4812, 8
      %v4952 = vpop.permute.xlu0 %4951
      %4953 = vrot.lane.b32.xlu0 %v4817, 8
      %v4954 = vpop.permute.xlu0 %4953
      %4955 = vrot.lane.b32.xlu0 %v4822, 8
      %v4956 = vpop.permute.xlu0 %4955
      %4957 = vrot.lane.b32.xlu0 %v4827, 8
      %v4958 = vpop.permute.xlu0 %4957
      %4959 = vrot.lane.b32.xlu0 %v4832, 8
      %v4960 = vpop.permute.xlu0 %4959
      %4961 = vrot.lane.b32.xlu0 %v4837, 8
      %v4962 = vpop.permute.xlu0 %4961
      %4963 = vrot.lane.b32.xlu0 %v4842, 8
      %v4964 = vpop.permute.xlu0 %4963
      %4965 = vrot.lane.b32.xlu0 %v4847, 8
      %v4966 = vpop.permute.xlu0 %4965
      %4967 = vrot.lane.b32.xlu0 %v4852, 8
      %v4968 = vpop.permute.xlu0 %4967
      %4969 = vrot.lane.b32.xlu0 %v4857, 8
      %v4970 = vpop.permute.xlu0 %4969
      %4971 = vrot.lane.b32.xlu0 %v4862, 8
      %v4972 = vpop.permute.xlu0 %4971
      %4973 = vrot.lane.b32.xlu0 %v4867, 8
      %v4974 = vpop.permute.xlu0 %4973
      %4975 = vrot.lane.b32.xlu0 %v4872, 8
      %v4976 = vpop.permute.xlu0 %4975
      %4977 = vrot.lane.b32.xlu0 %v4877, 8
      %v4978 = vpop.permute.xlu0 %4977
      %4979 = vrot.lane.b32.xlu0 %v4882, 8
      %v4980 = vpop.permute.xlu0 %4979
      %vm5013 = vcmask 97344
      %5014 = vst.msk [vmem:[%s440] sm:$0xff] %vm5013, %v4918
      %5015 = vst.msk [vmem:[%s440 + $0x8] sm:$0xff] %vm5013, %v4920
      %5016 = vst.msk [vmem:[%s440 + $0x10] sm:$0xff] %vm5013, %v4922
      %5017 = vst.msk [vmem:[%s440 + $0x18] sm:$0xff] %vm5013, %v4924
      %5018 = vst.msk [vmem:[%s440 + $0x20] sm:$0xff] %vm5013, %v4926
      %5019 = vst.msk [vmem:[%s440 + $0x28] sm:$0xff] %vm5013, %v4928
      %5020 = vst.msk [vmem:[%s440 + $0x30] sm:$0xff] %vm5013, %v4930
      %5021 = vst.msk [vmem:[%s440 + $0x38] sm:$0xff] %vm5013, %v4932
      %5022 = vst.msk [vmem:[%s440 + $0x40] sm:$0xff] %vm5013, %v4934
      %5023 = vst.msk [vmem:[%s440 + $0x48] sm:$0xff] %vm5013, %v4936
      %5024 = vst.msk [vmem:[%s440 + $0x50] sm:$0xff] %vm5013, %v4938
      %5025 = vst.msk [vmem:[%s440 + $0x58] sm:$0xff] %vm5013, %v4940
      %5026 = vst.msk [vmem:[%s440 + $0x60] sm:$0xff] %vm5013, %v4942
      %5027 = vst.msk [vmem:[%s440 + $0x68] sm:$0xff] %vm5013, %v4944
      %5028 = vst.msk [vmem:[%s440 + $0x70] sm:$0xff] %vm5013, %v4946
      %5029 = vst.msk [vmem:[%s440 + $0x78] sm:$0xff] %vm5013, %v4948
      %5030 = vst.msk [vmem:[%s440 + $0x80] sm:$0xff] %vm5013, %v4950
      %5031 = vst.msk [vmem:[%s440 + $0x88] sm:$0xff] %vm5013, %v4952
      %5032 = vst.msk [vmem:[%s440 + $0x90] sm:$0xff] %vm5013, %v4954
      %5033 = vst.msk [vmem:[%s440 + $0x98] sm:$0xff] %vm5013, %v4956
      %5034 = vst.msk [vmem:[%s440 + $0xa0] sm:$0xff] %vm5013, %v4958
      %5035 = vst.msk [vmem:[%s440 + $0xa8] sm:$0xff] %vm5013, %v4960
      %5036 = vst.msk [vmem:[%s440 + $0xb0] sm:$0xff] %vm5013, %v4962
      %5037 = vst.msk [vmem:[%s440 + $0xb8] sm:$0xff] %vm5013, %v4964
      %5038 = vst.msk [vmem:[%s440 + $0xc0] sm:$0xff] %vm5013, %v4966
      %5039 = vst.msk [vmem:[%s440 + $0xc8] sm:$0xff] %vm5013, %v4968
      %5040 = vst.msk [vmem:[%s440 + $0xd0] sm:$0xff] %vm5013, %v4970
      %5041 = vst.msk [vmem:[%s440 + $0xd8] sm:$0xff] %vm5013, %v4972
      %5042 = vst.msk [vmem:[%s440 + $0xe0] sm:$0xff] %vm5013, %v4974
      %5043 = vst.msk [vmem:[%s440 + $0xe8] sm:$0xff] %vm5013, %v4976
      %5044 = vst.msk [vmem:[%s440 + $0xf0] sm:$0xff] %vm5013, %v4978
      %5045 = vst.msk [vmem:[%s440 + $0xf8] sm:$0xff] %vm5013, %v4980
      %v5046 = vld [vmem:[%s440] sm:$0xff]
      %v5047 = vld [vmem:[%s440 + $0x8] sm:$0xff]
      %v5048 = vld [vmem:[%s440 + $0x10] sm:$0xff]
      %v5049 = vld [vmem:[%s440 + $0x18] sm:$0xff]
      %v5050 = vld [vmem:[%s440 + $0x20] sm:$0xff]
      %v5051 = vld [vmem:[%s440 + $0x28] sm:$0xff]
      %v5052 = vld [vmem:[%s440 + $0x30] sm:$0xff]
      %v5053 = vld [vmem:[%s440 + $0x38] sm:$0xff]
      %v5054 = vld [vmem:[%s440 + $0x40] sm:$0xff]
      %v5055 = vld [vmem:[%s440 + $0x48] sm:$0xff]
      %v5056 = vld [vmem:[%s440 + $0x50] sm:$0xff]
      %v5057 = vld [vmem:[%s440 + $0x58] sm:$0xff]
      %v5058 = vld [vmem:[%s440 + $0x60] sm:$0xff]
      %v5059 = vld [vmem:[%s440 + $0x68] sm:$0xff]
      %v5060 = vld [vmem:[%s440 + $0x70] sm:$0xff]
      %v5061 = vld [vmem:[%s440 + $0x78] sm:$0xff]
      %v5062 = vld [vmem:[%s440 + $0x80] sm:$0xff]
      %v5063 = vld [vmem:[%s440 + $0x88] sm:$0xff]
      %v5064 = vld [vmem:[%s440 + $0x90] sm:$0xff]
      %v5065 = vld [vmem:[%s440 + $0x98] sm:$0xff]
      %v5066 = vld [vmem:[%s440 + $0xa0] sm:$0xff]
      %v5067 = vld [vmem:[%s440 + $0xa8] sm:$0xff]
      %v5068 = vld [vmem:[%s440 + $0xb0] sm:$0xff]
      %v5069 = vld [vmem:[%s440 + $0xb8] sm:$0xff]
      %v5070 = vld [vmem:[%s440 + $0xc0] sm:$0xff]
      %v5071 = vld [vmem:[%s440 + $0xc8] sm:$0xff]
      %v5072 = vld [vmem:[%s440 + $0xd0] sm:$0xff]
      %v5073 = vld [vmem:[%s440 + $0xd8] sm:$0xff]
      %v5074 = vld [vmem:[%s440 + $0xe0] sm:$0xff]
      %v5075 = vld [vmem:[%s440 + $0xe8] sm:$0xff]
      %v5076 = vld [vmem:[%s440 + $0xf0] sm:$0xff]
      %v5077 = vld [vmem:[%s440 + $0xf8] sm:$0xff]
      %v5078 = vld [vmem:[%s9] sm:$0x1]
      %v5080 = vlaneseq
      %v5081 = vshrl.u32 %v5080, 7
      %v5082 = vsub.s32 0, %v5081
      %v5083 = vrot.slane %v5078, %v5082
      %v5085 = vmul.f32 %v5046, %v5083
      %v5086 = vmul.f32 %v5047, %v5083
      %v5087 = vmul.f32 %v5048, %v5083
      %v5088 = vmul.f32 %v5049, %v5083
      %v5089 = vmul.f32 %v5050, %v5083
      %v5090 = vmul.f32 %v5051, %v5083
      %v5091 = vmul.f32 %v5052, %v5083
      %v5092 = vmul.f32 %v5053, %v5083
      %v5093 = vmul.f32 %v5054, %v5083
      %v5094 = vmul.f32 %v5055, %v5083
      %v5095 = vmul.f32 %v5056, %v5083
      %v5096 = vmul.f32 %v5057, %v5083
      %v5097 = vmul.f32 %v5058, %v5083
      %v5098 = vmul.f32 %v5059, %v5083
      %v5099 = vmul.f32 %v5060, %v5083
      %v5100 = vmul.f32 %v5061, %v5083
      %v5101 = vmul.f32 %v5062, %v5083
      %v5102 = vmul.f32 %v5063, %v5083
      %v5103 = vmul.f32 %v5064, %v5083
      %v5104 = vmul.f32 %v5065, %v5083
      %v5105 = vmul.f32 %v5066, %v5083
      %v5106 = vmul.f32 %v5067, %v5083
      %v5107 = vmul.f32 %v5068, %v5083
      %v5108 = vmul.f32 %v5069, %v5083
      %v5109 = vmul.f32 %v5070, %v5083
      %v5110 = vmul.f32 %v5071, %v5083
      %v5111 = vmul.f32 %v5072, %v5083
      %v5112 = vmul.f32 %v5073, %v5083
      %v5113 = vmul.f32 %v5074, %v5083
      %v5114 = vmul.f32 %v5075, %v5083
      %v5115 = vmul.f32 %v5076, %v5083
      %v5116 = vmul.f32 %v5077, %v5083
      %v5117 = vld [vmem:[%s10] sm:$0x1]
      %v5119 = vlaneseq
      %v5120 = vshrl.u32 %v5119, 7
      %v5121 = vsub.s32 0, %v5120
      %v5122 = vrot.slane %v5117, %v5121
      %v5124 = vadd.f32 %v5085, %v5122
      %v5125 = vadd.f32 %v5086, %v5122
      %v5126 = vadd.f32 %v5087, %v5122
      %v5127 = vadd.f32 %v5088, %v5122
      %v5128 = vadd.f32 %v5089, %v5122
      %v5129 = vadd.f32 %v5090, %v5122
      %v5130 = vadd.f32 %v5091, %v5122
      %v5131 = vadd.f32 %v5092, %v5122
      %v5132 = vadd.f32 %v5093, %v5122
      %v5133 = vadd.f32 %v5094, %v5122
      %v5134 = vadd.f32 %v5095, %v5122
      %v5135 = vadd.f32 %v5096, %v5122
      %v5136 = vadd.f32 %v5097, %v5122
      %v5137 = vadd.f32 %v5098, %v5122
      %v5138 = vadd.f32 %v5099, %v5122
      %v5139 = vadd.f32 %v5100, %v5122
      %v5140 = vadd.f32 %v5101, %v5122
      %v5141 = vadd.f32 %v5102, %v5122
      %v5142 = vadd.f32 %v5103, %v5122
      %v5143 = vadd.f32 %v5104, %v5122
      %v5144 = vadd.f32 %v5105, %v5122
      %v5145 = vadd.f32 %v5106, %v5122
      %v5146 = vadd.f32 %v5107, %v5122
      %v5147 = vadd.f32 %v5108, %v5122
      %v5148 = vadd.f32 %v5109, %v5122
      %v5149 = vadd.f32 %v5110, %v5122
      %v5150 = vadd.f32 %v5111, %v5122
      %v5151 = vadd.f32 %v5112, %v5122
      %v5152 = vadd.f32 %v5113, %v5122
      %v5153 = vadd.f32 %v5114, %v5122
      %v5154 = vadd.f32 %v5115, %v5122
      %v5155 = vadd.f32 %v5116, %v5122
      %v5156 = vmax.f32 %v5124, 0.0
      %v5157 = vmax.f32 %v5125, 0.0
      %v5158 = vmax.f32 %v5126, 0.0
      %v5159 = vmax.f32 %v5127, 0.0
      %v5160 = vmax.f32 %v5128, 0.0
      %v5161 = vmax.f32 %v5129, 0.0
      %v5162 = vmax.f32 %v5130, 0.0
      %v5163 = vmax.f32 %v5131, 0.0
      %v5164 = vmax.f32 %v5132, 0.0
      %v5165 = vmax.f32 %v5133, 0.0
      %v5166 = vmax.f32 %v5134, 0.0
      %v5167 = vmax.f32 %v5135, 0.0
      %v5168 = vmax.f32 %v5136, 0.0
      %v5169 = vmax.f32 %v5137, 0.0
      %v5170 = vmax.f32 %v5138, 0.0
      %v5171 = vmax.f32 %v5139, 0.0
      %v5172 = vmax.f32 %v5140, 0.0
      %v5173 = vmax.f32 %v5141, 0.0
      %v5174 = vmax.f32 %v5142, 0.0
      %v5175 = vmax.f32 %v5143, 0.0
      %v5176 = vmax.f32 %v5144, 0.0
      %v5177 = vmax.f32 %v5145, 0.0
      %v5178 = vmax.f32 %v5146, 0.0
      %v5179 = vmax.f32 %v5147, 0.0
      %v5180 = vmax.f32 %v5148, 0.0
      %v5181 = vmax.f32 %v5149, 0.0
      %v5182 = vmax.f32 %v5150, 0.0
      %v5183 = vmax.f32 %v5151, 0.0
      %v5184 = vmax.f32 %v5152, 0.0
      %v5185 = vmax.f32 %v5153, 0.0
      %v5186 = vmax.f32 %v5154, 0.0
      %v5187 = vmax.f32 %v5155, 0.0
      %5188 = vst.msk [vmem:[%s694 + $0x1] sm:$0xff] %vm2105, %v5156
      %5189 = vst.msk [vmem:[%s694 + $0x9] sm:$0xff] %vm2105, %v5157
      %5190 = vst.msk [vmem:[%s694 + $0x19] sm:$0xff] %vm2105, %v5158
      %5191 = vst.msk [vmem:[%s694 + $0x21] sm:$0xff] %vm2105, %v5159
      %5192 = vst.msk [vmem:[%s694 + $0x31] sm:$0xff] %vm2105, %v5160
      %5193 = vst.msk [vmem:[%s694 + $0x39] sm:$0xff] %vm2105, %v5161
      %5194 = vst.msk [vmem:[%s694 + $0x49] sm:$0xff] %vm2105, %v5162
      %5195 = vst.msk [vmem:[%s694 + $0x51] sm:$0xff] %vm2105, %v5163
      %5196 = vst.msk [vmem:[%s694 + $0x61] sm:$0xff] %vm2105, %v5164
      %5197 = vst.msk [vmem:[%s694 + $0x69] sm:$0xff] %vm2105, %v5165
      %5198 = vst.msk [vmem:[%s694 + $0x79] sm:$0xff] %vm2105, %v5166
      %5199 = vst.msk [vmem:[%s694 + $0x81] sm:$0xff] %vm2105, %v5167
      %5200 = vst.msk [vmem:[%s694 + $0x91] sm:$0xff] %vm2105, %v5168
      %5201 = vst.msk [vmem:[%s694 + $0x99] sm:$0xff] %vm2105, %v5169
      %5202 = vst.msk [vmem:[%s694 + $0xa9] sm:$0xff] %vm2105, %v5170
      %5203 = vst.msk [vmem:[%s694 + $0xb1] sm:$0xff] %vm2105, %v5171
      %5204 = vst.msk [vmem:[%s694 + $0xc1] sm:$0xff] %vm2105, %v5172
      %5205 = vst.msk [vmem:[%s694 + $0xc9] sm:$0xff] %vm2105, %v5173
      %5206 = vst.msk [vmem:[%s694 + $0xd9] sm:$0xff] %vm2105, %v5174
      %5207 = vst.msk [vmem:[%s694 + $0xe1] sm:$0xff] %vm2105, %v5175
      %5208 = vst.msk [vmem:[%s694 + $0xf1] sm:$0xff] %vm2105, %v5176
      %5209 = vst.msk [vmem:[%s694 + $0xf9] sm:$0xff] %vm2105, %v5177
      %5210 = vst.msk [vmem:[%s694 + $0x109] sm:$0xff] %vm2105, %v5178
      %5211 = vst.msk [vmem:[%s694 + $0x111] sm:$0xff] %vm2105, %v5179
      %5212 = vst.msk [vmem:[%s694 + $0x121] sm:$0xff] %vm2105, %v5180
      %5213 = vst.msk [vmem:[%s694 + $0x129] sm:$0xff] %vm2105, %v5181
      %5214 = vst.msk [vmem:[%s694 + $0x139] sm:$0xff] %vm2105, %v5182
      %5215 = vst.msk [vmem:[%s694 + $0x141] sm:$0xff] %vm2105, %v5183
      %5216 = vst.msk [vmem:[%s694 + $0x151] sm:$0xff] %vm2105, %v5184
      %5217 = vst.msk [vmem:[%s694 + $0x159] sm:$0xff] %vm2105, %v5185
      %5218 = vst.msk [vmem:[%s694 + $0x169] sm:$0xff] %vm2105, %v5186
      %5219 = vst.msk [vmem:[%s694 + $0x171] sm:$0xff] %vm2105, %v5187
      %v5220 = vld [vmem:[#allocation2] sm:$0xff]
      %v5221 = vld [vmem:[#allocation2 + $0x8] sm:$0xff]
      %v5222 = vld [vmem:[#allocation2 + $0x18] sm:$0xff]
      %v5223 = vld [vmem:[#allocation2 + $0x20] sm:$0xff]
      %v5224 = vld [vmem:[#allocation2 + $0x30] sm:$0xff]
      %v5225 = vld [vmem:[#allocation2 + $0x38] sm:$0xff]
      %v5226 = vld [vmem:[#allocation2 + $0x48] sm:$0xff]
      %v5227 = vld [vmem:[#allocation2 + $0x50] sm:$0xff]
      %v5228 = vld [vmem:[#allocation2 + $0x60] sm:$0xff]
      %v5229 = vld [vmem:[#allocation2 + $0x68] sm:$0xff]
      %v5230 = vld [vmem:[#allocation2 + $0x78] sm:$0xff]
      %v5231 = vld [vmem:[#allocation2 + $0x80] sm:$0xff]
      %v5232 = vld [vmem:[#allocation2 + $0x90] sm:$0xff]
      %v5233 = vld [vmem:[#allocation2 + $0x98] sm:$0xff]
      %v5234 = vld [vmem:[#allocation2 + $0xa8] sm:$0xff]
      %v5235 = vld [vmem:[#allocation2 + $0xb0] sm:$0xff]
      %v5236 = vld [vmem:[#allocation2 + $0xc0] sm:$0xff]
      %v5237 = vld [vmem:[#allocation2 + $0xc8] sm:$0xff]
      %v5238 = vld [vmem:[#allocation2 + $0xd8] sm:$0xff]
      %v5239 = vld [vmem:[#allocation2 + $0xe0] sm:$0xff]
      %v5240 = vld [vmem:[#allocation2 + $0xf0] sm:$0xff]
      %v5241 = vld [vmem:[#allocation2 + $0xf8] sm:$0xff]
      %v5242 = vld [vmem:[#allocation2 + $0x108] sm:$0xff]
      %v5243 = vld [vmem:[#allocation2 + $0x110] sm:$0xff]
      %v5244 = vld [vmem:[#allocation2 + $0x120] sm:$0xff]
      %v5245 = vld [vmem:[#allocation2 + $0x128] sm:$0xff]
      %v5246 = vld [vmem:[#allocation2 + $0x138] sm:$0xff]
      %v5247 = vld [vmem:[#allocation2 + $0x140] sm:$0xff]
      %v5248 = vld [vmem:[#allocation2 + $0x150] sm:$0xff]
      %v5249 = vld [vmem:[#allocation2 + $0x158] sm:$0xff]
      %v5250 = vld [vmem:[#allocation2 + $0x168] sm:$0xff]
      %v5251 = vld [vmem:[#allocation2 + $0x170] sm:$0xff]
      %v5252 = vld [vmem:[#allocation2 + $0x1] sm:$0xff]
      %v5253 = vld [vmem:[#allocation2 + $0x9] sm:$0xff]
      %v5254 = vld [vmem:[#allocation2 + $0x19] sm:$0xff]
      %v5255 = vld [vmem:[#allocation2 + $0x21] sm:$0xff]
      %v5256 = vld [vmem:[#allocation2 + $0x31] sm:$0xff]
      %v5257 = vld [vmem:[#allocation2 + $0x39] sm:$0xff]
      %v5258 = vld [vmem:[#allocation2 + $0x49] sm:$0xff]
      %v5259 = vld [vmem:[#allocation2 + $0x51] sm:$0xff]
      %v5260 = vld [vmem:[#allocation2 + $0x61] sm:$0xff]
      %v5261 = vld [vmem:[#allocation2 + $0x69] sm:$0xff]
      %v5262 = vld [vmem:[#allocation2 + $0x79] sm:$0xff]
      %v5263 = vld [vmem:[#allocation2 + $0x81] sm:$0xff]
      %v5264 = vld [vmem:[#allocation2 + $0x91] sm:$0xff]
      %v5265 = vld [vmem:[#allocation2 + $0x99] sm:$0xff]
      %v5266 = vld [vmem:[#allocation2 + $0xa9] sm:$0xff]
      %v5267 = vld [vmem:[#allocation2 + $0xb1] sm:$0xff]
      %v5268 = vld [vmem:[#allocation2 + $0xc1] sm:$0xff]
      %v5269 = vld [vmem:[#allocation2 + $0xc9] sm:$0xff]
      %v5270 = vld [vmem:[#allocation2 + $0xd9] sm:$0xff]
      %v5271 = vld [vmem:[#allocation2 + $0xe1] sm:$0xff]
      %v5272 = vld [vmem:[#allocation2 + $0xf1] sm:$0xff]
      %v5273 = vld [vmem:[#allocation2 + $0xf9] sm:$0xff]
      %v5274 = vld [vmem:[#allocation2 + $0x109] sm:$0xff]
      %v5275 = vld [vmem:[#allocation2 + $0x111] sm:$0xff]
      %v5276 = vld [vmem:[#allocation2 + $0x121] sm:$0xff]
      %v5277 = vld [vmem:[#allocation2 + $0x129] sm:$0xff]
      %v5278 = vld [vmem:[#allocation2 + $0x139] sm:$0xff]
      %v5279 = vld [vmem:[#allocation2 + $0x141] sm:$0xff]
      %v5280 = vld [vmem:[#allocation2 + $0x151] sm:$0xff]
      %v5281 = vld [vmem:[#allocation2 + $0x159] sm:$0xff]
      %v5282 = vld [vmem:[#allocation2 + $0x169] sm:$0xff]
      %v5283 = vld [vmem:[#allocation2 + $0x171] sm:$0xff]
      %v5284 = vld [vmem:[#allocation2 + $0x2] sm:$0xff]
      %v5285 = vld [vmem:[#allocation2 + $0xa] sm:$0xff]
      %v5286 = vld [vmem:[#allocation2 + $0x1a] sm:$0xff]
      %v5287 = vld [vmem:[#allocation2 + $0x22] sm:$0xff]
      %v5288 = vld [vmem:[#allocation2 + $0x32] sm:$0xff]
      %v5289 = vld [vmem:[#allocation2 + $0x3a] sm:$0xff]
      %v5290 = vld [vmem:[#allocation2 + $0x4a] sm:$0xff]
      %v5291 = vld [vmem:[#allocation2 + $0x52] sm:$0xff]
      %v5292 = vld [vmem:[#allocation2 + $0x62] sm:$0xff]
      %v5293 = vld [vmem:[#allocation2 + $0x6a] sm:$0xff]
      %v5294 = vld [vmem:[#allocation2 + $0x7a] sm:$0xff]
      %v5295 = vld [vmem:[#allocation2 + $0x82] sm:$0xff]
      %v5296 = vld [vmem:[#allocation2 + $0x92] sm:$0xff]
      %v5297 = vld [vmem:[#allocation2 + $0x9a] sm:$0xff]
      %v5298 = vld [vmem:[#allocation2 + $0xaa] sm:$0xff]
      %v5299 = vld [vmem:[#allocation2 + $0xb2] sm:$0xff]
      %v5300 = vld [vmem:[#allocation2 + $0xc2] sm:$0xff]
      %v5301 = vld [vmem:[#allocation2 + $0xca] sm:$0xff]
      %v5302 = vld [vmem:[#allocation2 + $0xda] sm:$0xff]
      %v5303 = vld [vmem:[#allocation2 + $0xe2] sm:$0xff]
      %v5304 = vld [vmem:[#allocation2 + $0xf2] sm:$0xff]
      %v5305 = vld [vmem:[#allocation2 + $0xfa] sm:$0xff]
      %v5306 = vld [vmem:[#allocation2 + $0x10a] sm:$0xff]
      %v5307 = vld [vmem:[#allocation2 + $0x112] sm:$0xff]
      %v5308 = vld [vmem:[#allocation2 + $0x122] sm:$0xff]
      %v5309 = vld [vmem:[#allocation2 + $0x12a] sm:$0xff]
      %v5310 = vld [vmem:[#allocation2 + $0x13a] sm:$0xff]
      %v5311 = vld [vmem:[#allocation2 + $0x142] sm:$0xff]
      %v5312 = vld [vmem:[#allocation2 + $0x152] sm:$0xff]
      %v5313 = vld [vmem:[#allocation2 + $0x15a] sm:$0xff]
      %v5314 = vld [vmem:[#allocation2 + $0x16a] sm:$0xff]
      %v5315 = vld [vmem:[#allocation2 + $0x172] sm:$0xff]
      %v5316 = vld [vmem:[%s694] sm:$0xff]
      %v5317 = vld [vmem:[%s694 + $0x8] sm:$0xff]
      %v5318 = vld [vmem:[%s694 + $0x18] sm:$0xff]
      %v5319 = vld [vmem:[%s694 + $0x20] sm:$0xff]
      %v5320 = vld [vmem:[%s694 + $0x30] sm:$0xff]
      %v5321 = vld [vmem:[%s694 + $0x38] sm:$0xff]
      %v5322 = vld [vmem:[%s694 + $0x48] sm:$0xff]
      %v5323 = vld [vmem:[%s694 + $0x50] sm:$0xff]
      %v5324 = vld [vmem:[%s694 + $0x60] sm:$0xff]
      %v5325 = vld [vmem:[%s694 + $0x68] sm:$0xff]
      %v5326 = vld [vmem:[%s694 + $0x78] sm:$0xff]
      %v5327 = vld [vmem:[%s694 + $0x80] sm:$0xff]
      %v5328 = vld [vmem:[%s694 + $0x90] sm:$0xff]
      %v5329 = vld [vmem:[%s694 + $0x98] sm:$0xff]
      %v5330 = vld [vmem:[%s694 + $0xa8] sm:$0xff]
      %v5331 = vld [vmem:[%s694 + $0xb0] sm:$0xff]
      %v5332 = vld [vmem:[%s694 + $0xc0] sm:$0xff]
      %v5333 = vld [vmem:[%s694 + $0xc8] sm:$0xff]
      %v5334 = vld [vmem:[%s694 + $0xd8] sm:$0xff]
      %v5335 = vld [vmem:[%s694 + $0xe0] sm:$0xff]
      %v5336 = vld [vmem:[%s694 + $0xf0] sm:$0xff]
      %v5337 = vld [vmem:[%s694 + $0xf8] sm:$0xff]
      %v5338 = vld [vmem:[%s694 + $0x108] sm:$0xff]
      %v5339 = vld [vmem:[%s694 + $0x110] sm:$0xff]
      %v5340 = vld [vmem:[%s694 + $0x120] sm:$0xff]
      %v5341 = vld [vmem:[%s694 + $0x128] sm:$0xff]
      %v5342 = vld [vmem:[%s694 + $0x138] sm:$0xff]
      %v5343 = vld [vmem:[%s694 + $0x140] sm:$0xff]
      %v5344 = vld [vmem:[%s694 + $0x150] sm:$0xff]
      %v5345 = vld [vmem:[%s694 + $0x158] sm:$0xff]
      %v5346 = vld [vmem:[%s694 + $0x168] sm:$0xff]
      %v5347 = vld [vmem:[%s694 + $0x170] sm:$0xff]
      %v5348 = vld [vmem:[%s694 + $0x1] sm:$0xff]
      %v5349 = vld [vmem:[%s694 + $0x9] sm:$0xff]
      %v5350 = vld [vmem:[%s694 + $0x19] sm:$0xff]
      %v5351 = vld [vmem:[%s694 + $0x21] sm:$0xff]
      %v5352 = vld [vmem:[%s694 + $0x31] sm:$0xff]
      %v5353 = vld [vmem:[%s694 + $0x39] sm:$0xff]
      %v5354 = vld [vmem:[%s694 + $0x49] sm:$0xff]
      %v5355 = vld [vmem:[%s694 + $0x51] sm:$0xff]
      %v5356 = vld [vmem:[%s694 + $0x61] sm:$0xff]
      %v5357 = vld [vmem:[%s694 + $0x69] sm:$0xff]
      %v5358 = vld [vmem:[%s694 + $0x79] sm:$0xff]
      %v5359 = vld [vmem:[%s694 + $0x81] sm:$0xff]
      %v5360 = vld [vmem:[%s694 + $0x91] sm:$0xff]
      %v5361 = vld [vmem:[%s694 + $0x99] sm:$0xff]
      %v5362 = vld [vmem:[%s694 + $0xa9] sm:$0xff]
      %v5363 = vld [vmem:[%s694 + $0xb1] sm:$0xff]
      %v5364 = vld [vmem:[%s694 + $0xc1] sm:$0xff]
      %v5365 = vld [vmem:[%s694 + $0xc9] sm:$0xff]
      %v5366 = vld [vmem:[%s694 + $0xd9] sm:$0xff]
      %v5367 = vld [vmem:[%s694 + $0xe1] sm:$0xff]
      %v5368 = vld [vmem:[%s694 + $0xf1] sm:$0xff]
      %v5369 = vld [vmem:[%s694 + $0xf9] sm:$0xff]
      %v5370 = vld [vmem:[%s694 + $0x109] sm:$0xff]
      %v5371 = vld [vmem:[%s694 + $0x111] sm:$0xff]
      %v5372 = vld [vmem:[%s694 + $0x121] sm:$0xff]
      %v5373 = vld [vmem:[%s694 + $0x129] sm:$0xff]
      %v5374 = vld [vmem:[%s694 + $0x139] sm:$0xff]
      %v5375 = vld [vmem:[%s694 + $0x141] sm:$0xff]
      %v5376 = vld [vmem:[%s694 + $0x151] sm:$0xff]
      %v5377 = vld [vmem:[%s694 + $0x159] sm:$0xff]
      %v5378 = vld [vmem:[%s694 + $0x169] sm:$0xff]
      %v5379 = vld [vmem:[%s694 + $0x171] sm:$0xff]
      %v5380 = vld [vmem:[%s694 + $0x2] sm:$0xff]
      %v5381 = vld [vmem:[%s694 + $0xa] sm:$0xff]
      %v5382 = vld [vmem:[%s694 + $0x1a] sm:$0xff]
      %v5383 = vld [vmem:[%s694 + $0x22] sm:$0xff]
      %v5384 = vld [vmem:[%s694 + $0x32] sm:$0xff]
      %v5385 = vld [vmem:[%s694 + $0x3a] sm:$0xff]
      %v5386 = vld [vmem:[%s694 + $0x4a] sm:$0xff]
      %v5387 = vld [vmem:[%s694 + $0x52] sm:$0xff]
      %v5388 = vld [vmem:[%s694 + $0x62] sm:$0xff]
      %v5389 = vld [vmem:[%s694 + $0x6a] sm:$0xff]
      %v5390 = vld [vmem:[%s694 + $0x7a] sm:$0xff]
      %v5391 = vld [vmem:[%s694 + $0x82] sm:$0xff]
      %v5392 = vld [vmem:[%s694 + $0x92] sm:$0xff]
      %v5393 = vld [vmem:[%s694 + $0x9a] sm:$0xff]
      %v5394 = vld [vmem:[%s694 + $0xaa] sm:$0xff]
      %v5395 = vld [vmem:[%s694 + $0xb2] sm:$0xff]
      %v5396 = vld [vmem:[%s694 + $0xc2] sm:$0xff]
      %v5397 = vld [vmem:[%s694 + $0xca] sm:$0xff]
      %v5398 = vld [vmem:[%s694 + $0xda] sm:$0xff]
      %v5399 = vld [vmem:[%s694 + $0xe2] sm:$0xff]
      %v5400 = vld [vmem:[%s694 + $0xf2] sm:$0xff]
      %v5401 = vld [vmem:[%s694 + $0xfa] sm:$0xff]
      %v5402 = vld [vmem:[%s694 + $0x10a] sm:$0xff]
      %v5403 = vld [vmem:[%s694 + $0x112] sm:$0xff]
      %v5404 = vld [vmem:[%s694 + $0x122] sm:$0xff]
      %v5405 = vld [vmem:[%s694 + $0x12a] sm:$0xff]
      %v5406 = vld [vmem:[%s694 + $0x13a] sm:$0xff]
      %v5407 = vld [vmem:[%s694 + $0x142] sm:$0xff]
      %v5408 = vld [vmem:[%s694 + $0x152] sm:$0xff]
      %v5409 = vld [vmem:[%s694 + $0x15a] sm:$0xff]
      %v5410 = vld [vmem:[%s694 + $0x16a] sm:$0xff]
      %v5411 = vld [vmem:[%s694 + $0x172] sm:$0xff]
      %v5412 = vld [vmem:[%s919] sm:$0xff]
      %v5413 = vld [vmem:[%s919 + $0x8] sm:$0xff]
      %v5414 = vld [vmem:[%s919 + $0x18] sm:$0xff]
      %v5415 = vld [vmem:[%s919 + $0x20] sm:$0xff]
      %v5416 = vld [vmem:[%s919 + $0x30] sm:$0xff]
      %v5417 = vld [vmem:[%s919 + $0x38] sm:$0xff]
      %v5418 = vld [vmem:[%s919 + $0x48] sm:$0xff]
      %v5419 = vld [vmem:[%s919 + $0x50] sm:$0xff]
      %v5420 = vld [vmem:[%s919 + $0x60] sm:$0xff]
      %v5421 = vld [vmem:[%s919 + $0x68] sm:$0xff]
      %v5422 = vld [vmem:[%s919 + $0x78] sm:$0xff]
      %v5423 = vld [vmem:[%s919 + $0x80] sm:$0xff]
      %v5424 = vld [vmem:[%s919 + $0x90] sm:$0xff]
      %v5425 = vld [vmem:[%s919 + $0x98] sm:$0xff]
      %v5426 = vld [vmem:[%s919 + $0xa8] sm:$0xff]
      %v5427 = vld [vmem:[%s919 + $0xb0] sm:$0xff]
      %v5428 = vld [vmem:[%s919 + $0xc0] sm:$0xff]
      %v5429 = vld [vmem:[%s919 + $0xc8] sm:$0xff]
      %v5430 = vld [vmem:[%s919 + $0xd8] sm:$0xff]
      %v5431 = vld [vmem:[%s919 + $0xe0] sm:$0xff]
      %v5432 = vld [vmem:[%s919 + $0xf0] sm:$0xff]
      %v5433 = vld [vmem:[%s919 + $0xf8] sm:$0xff]
      %v5434 = vld [vmem:[%s919 + $0x108] sm:$0xff]
      %v5435 = vld [vmem:[%s919 + $0x110] sm:$0xff]
      %v5436 = vld [vmem:[%s919 + $0x120] sm:$0xff]
      %v5437 = vld [vmem:[%s919 + $0x128] sm:$0xff]
      %v5438 = vld [vmem:[%s919 + $0x138] sm:$0xff]
      %v5439 = vld [vmem:[%s919 + $0x140] sm:$0xff]
      %v5440 = vld [vmem:[%s919 + $0x150] sm:$0xff]
      %v5441 = vld [vmem:[%s919 + $0x158] sm:$0xff]
      %v5442 = vld [vmem:[%s919 + $0x168] sm:$0xff]
      %v5443 = vld [vmem:[%s919 + $0x170] sm:$0xff]
      %v5444 = vld [vmem:[%s919 + $0x1] sm:$0xff]
      %v5445 = vld [vmem:[%s919 + $0x9] sm:$0xff]
      %v5446 = vld [vmem:[%s919 + $0x19] sm:$0xff]
      %v5447 = vld [vmem:[%s919 + $0x21] sm:$0xff]
      %v5448 = vld [vmem:[%s919 + $0x31] sm:$0xff]
      %v5449 = vld [vmem:[%s919 + $0x39] sm:$0xff]
      %v5450 = vld [vmem:[%s919 + $0x49] sm:$0xff]
      %v5451 = vld [vmem:[%s919 + $0x51] sm:$0xff]
      %v5452 = vld [vmem:[%s919 + $0x61] sm:$0xff]
      %v5453 = vld [vmem:[%s919 + $0x69] sm:$0xff]
      %v5454 = vld [vmem:[%s919 + $0x79] sm:$0xff]
      %v5455 = vld [vmem:[%s919 + $0x81] sm:$0xff]
      %v5456 = vld [vmem:[%s919 + $0x91] sm:$0xff]
      %v5457 = vld [vmem:[%s919 + $0x99] sm:$0xff]
      %v5458 = vld [vmem:[%s919 + $0xa9] sm:$0xff]
      %v5459 = vld [vmem:[%s919 + $0xb1] sm:$0xff]
      %v5460 = vld [vmem:[%s919 + $0xc1] sm:$0xff]
      %v5461 = vld [vmem:[%s919 + $0xc9] sm:$0xff]
      %v5462 = vld [vmem:[%s919 + $0xd9] sm:$0xff]
      %v5463 = vld [vmem:[%s919 + $0xe1] sm:$0xff]
      %v5464 = vld [vmem:[%s919 + $0xf1] sm:$0xff]
      %v5465 = vld [vmem:[%s919 + $0xf9] sm:$0xff]
      %v5466 = vld [vmem:[%s919 + $0x109] sm:$0xff]
      %v5467 = vld [vmem:[%s919 + $0x111] sm:$0xff]
      %v5468 = vld [vmem:[%s919 + $0x121] sm:$0xff]
      %v5469 = vld [vmem:[%s919 + $0x129] sm:$0xff]
      %v5470 = vld [vmem:[%s919 + $0x139] sm:$0xff]
      %v5471 = vld [vmem:[%s919 + $0x141] sm:$0xff]
      %v5472 = vld [vmem:[%s919 + $0x151] sm:$0xff]
      %v5473 = vld [vmem:[%s919 + $0x159] sm:$0xff]
      %v5474 = vld [vmem:[%s919 + $0x169] sm:$0xff]
      %v5475 = vld [vmem:[%s919 + $0x171] sm:$0xff]
      %v5476 = vld [vmem:[%s919 + $0x2] sm:$0xff]
      %v5477 = vld [vmem:[%s919 + $0xa] sm:$0xff]
      %v5478 = vld [vmem:[%s919 + $0x1a] sm:$0xff]
      %v5479 = vld [vmem:[%s919 + $0x22] sm:$0xff]
      %v5480 = vld [vmem:[%s919 + $0x32] sm:$0xff]
      %v5481 = vld [vmem:[%s919 + $0x3a] sm:$0xff]
      %v5482 = vld [vmem:[%s919 + $0x4a] sm:$0xff]
      %v5483 = vld [vmem:[%s919 + $0x52] sm:$0xff]
      %v5484 = vld [vmem:[%s919 + $0x62] sm:$0xff]
      %v5485 = vld [vmem:[%s919 + $0x6a] sm:$0xff]
      %v5486 = vld [vmem:[%s919 + $0x7a] sm:$0xff]
      %v5487 = vld [vmem:[%s919 + $0x82] sm:$0xff]
      %v5488 = vld [vmem:[%s919 + $0x92] sm:$0xff]
      %v5489 = vld [vmem:[%s919 + $0x9a] sm:$0xff]
      %v5490 = vld [vmem:[%s919 + $0xaa] sm:$0xff]
      %v5491 = vld [vmem:[%s919 + $0xb2] sm:$0xff]
      %v5492 = vld [vmem:[%s919 + $0xc2] sm:$0xff]
      %v5493 = vld [vmem:[%s919 + $0xca] sm:$0xff]
      %v5494 = vld [vmem:[%s919 + $0xda] sm:$0xff]
      %v5495 = vld [vmem:[%s919 + $0xe2] sm:$0xff]
      %v5496 = vld [vmem:[%s919 + $0xf2] sm:$0xff]
      %v5497 = vld [vmem:[%s919 + $0xfa] sm:$0xff]
      %v5498 = vld [vmem:[%s919 + $0x10a] sm:$0xff]
      %v5499 = vld [vmem:[%s919 + $0x112] sm:$0xff]
      %v5500 = vld [vmem:[%s919 + $0x122] sm:$0xff]
      %v5501 = vld [vmem:[%s919 + $0x12a] sm:$0xff]
      %v5502 = vld [vmem:[%s919 + $0x13a] sm:$0xff]
      %v5503 = vld [vmem:[%s919 + $0x142] sm:$0xff]
      %v5504 = vld [vmem:[%s919 + $0x152] sm:$0xff]
      %v5505 = vld [vmem:[%s919 + $0x15a] sm:$0xff]
      %v5506 = vld [vmem:[%s919 + $0x16a] sm:$0xff]
      %v5507 = vld [vmem:[%s919 + $0x172] sm:$0xff]
      %5540 = vrot.lane.b32.xlu0 %v5252, 12
      %v5541 = vpop.permute.xlu0 %5540
      %5542 = vrot.lane.b32.xlu0 %v5253, 12
      %v5543 = vpop.permute.xlu0 %5542
      %5544 = vrot.lane.b32.xlu0 %v5254, 12
      %v5545 = vpop.permute.xlu0 %5544
      %5546 = vrot.lane.b32.xlu0 %v5255, 12
      %v5547 = vpop.permute.xlu0 %5546
      %5548 = vrot.lane.b32.xlu0 %v5256, 12
      %v5549 = vpop.permute.xlu0 %5548
      %5550 = vrot.lane.b32.xlu0 %v5257, 12
      %v5551 = vpop.permute.xlu0 %5550
      %5552 = vrot.lane.b32.xlu0 %v5258, 12
      %v5553 = vpop.permute.xlu0 %5552
      %5554 = vrot.lane.b32.xlu0 %v5259, 12
      %v5555 = vpop.permute.xlu0 %5554
      %5556 = vrot.lane.b32.xlu0 %v5260, 12
      %v5557 = vpop.permute.xlu0 %5556
      %5558 = vrot.lane.b32.xlu0 %v5261, 12
      %v5559 = vpop.permute.xlu0 %5558
      %5560 = vrot.lane.b32.xlu0 %v5262, 12
      %v5561 = vpop.permute.xlu0 %5560
      %5562 = vrot.lane.b32.xlu0 %v5263, 12
      %v5563 = vpop.permute.xlu0 %5562
      %5564 = vrot.lane.b32.xlu0 %v5264, 12
      %v5565 = vpop.permute.xlu0 %5564
      %5566 = vrot.lane.b32.xlu0 %v5265, 12
      %v5567 = vpop.permute.xlu0 %5566
      %5568 = vrot.lane.b32.xlu0 %v5266, 12
      %v5569 = vpop.permute.xlu0 %5568
      %5570 = vrot.lane.b32.xlu0 %v5267, 12
      %v5571 = vpop.permute.xlu0 %5570
      %5572 = vrot.lane.b32.xlu0 %v5268, 12
      %v5573 = vpop.permute.xlu0 %5572
      %5574 = vrot.lane.b32.xlu0 %v5269, 12
      %v5575 = vpop.permute.xlu0 %5574
      %5576 = vrot.lane.b32.xlu0 %v5270, 12
      %v5577 = vpop.permute.xlu0 %5576
      %5578 = vrot.lane.b32.xlu0 %v5271, 12
      %v5579 = vpop.permute.xlu0 %5578
      %5580 = vrot.lane.b32.xlu0 %v5272, 12
      %v5581 = vpop.permute.xlu0 %5580
      %5582 = vrot.lane.b32.xlu0 %v5273, 12
      %v5583 = vpop.permute.xlu0 %5582
      %5584 = vrot.lane.b32.xlu0 %v5274, 12
      %v5585 = vpop.permute.xlu0 %5584
      %5586 = vrot.lane.b32.xlu0 %v5275, 12
      %v5587 = vpop.permute.xlu0 %5586
      %5588 = vrot.lane.b32.xlu0 %v5276, 12
      %v5589 = vpop.permute.xlu0 %5588
      %5590 = vrot.lane.b32.xlu0 %v5277, 12
      %v5591 = vpop.permute.xlu0 %5590
      %5592 = vrot.lane.b32.xlu0 %v5278, 12
      %v5593 = vpop.permute.xlu0 %5592
      %5594 = vrot.lane.b32.xlu0 %v5279, 12
      %v5595 = vpop.permute.xlu0 %5594
      %5596 = vrot.lane.b32.xlu0 %v5280, 12
      %v5597 = vpop.permute.xlu0 %5596
      %5598 = vrot.lane.b32.xlu0 %v5281, 12
      %v5599 = vpop.permute.xlu0 %5598
      %5600 = vrot.lane.b32.xlu0 %v5282, 12
      %v5601 = vpop.permute.xlu0 %5600
      %5602 = vrot.lane.b32.xlu0 %v5283, 12
      %v5603 = vpop.permute.xlu0 %5602
      %5668 = vrot.lane.b32.xlu0 %v5284, 24
      %v5669 = vpop.permute.xlu0 %5668
      %5670 = vrot.lane.b32.xlu0 %v5285, 24
      %v5671 = vpop.permute.xlu0 %5670
      %5672 = vrot.lane.b32.xlu0 %v5286, 24
      %v5673 = vpop.permute.xlu0 %5672
      %5674 = vrot.lane.b32.xlu0 %v5287, 24
      %v5675 = vpop.permute.xlu0 %5674
      %5676 = vrot.lane.b32.xlu0 %v5288, 24
      %v5677 = vpop.permute.xlu0 %5676
      %5678 = vrot.lane.b32.xlu0 %v5289, 24
      %v5679 = vpop.permute.xlu0 %5678
      %5680 = vrot.lane.b32.xlu0 %v5290, 24
      %v5681 = vpop.permute.xlu0 %5680
      %5682 = vrot.lane.b32.xlu0 %v5291, 24
      %v5683 = vpop.permute.xlu0 %5682
      %5684 = vrot.lane.b32.xlu0 %v5292, 24
      %v5685 = vpop.permute.xlu0 %5684
      %5686 = vrot.lane.b32.xlu0 %v5293, 24
      %v5687 = vpop.permute.xlu0 %5686
      %5688 = vrot.lane.b32.xlu0 %v5294, 24
      %v5689 = vpop.permute.xlu0 %5688
      %5690 = vrot.lane.b32.xlu0 %v5295, 24
      %v5691 = vpop.permute.xlu0 %5690
      %5692 = vrot.lane.b32.xlu0 %v5296, 24
      %v5693 = vpop.permute.xlu0 %5692
      %5694 = vrot.lane.b32.xlu0 %v5297, 24
      %v5695 = vpop.permute.xlu0 %5694
      %5696 = vrot.lane.b32.xlu0 %v5298, 24
      %v5697 = vpop.permute.xlu0 %5696
      %5698 = vrot.lane.b32.xlu0 %v5299, 24
      %v5699 = vpop.permute.xlu0 %5698
      %5700 = vrot.lane.b32.xlu0 %v5300, 24
      %v5701 = vpop.permute.xlu0 %5700
      %5702 = vrot.lane.b32.xlu0 %v5301, 24
      %v5703 = vpop.permute.xlu0 %5702
      %5704 = vrot.lane.b32.xlu0 %v5302, 24
      %v5705 = vpop.permute.xlu0 %5704
      %5706 = vrot.lane.b32.xlu0 %v5303, 24
      %v5707 = vpop.permute.xlu0 %5706
      %5708 = vrot.lane.b32.xlu0 %v5304, 24
      %v5709 = vpop.permute.xlu0 %5708
      %5710 = vrot.lane.b32.xlu0 %v5305, 24
      %v5711 = vpop.permute.xlu0 %5710
      %5712 = vrot.lane.b32.xlu0 %v5306, 24
      %v5713 = vpop.permute.xlu0 %5712
      %5714 = vrot.lane.b32.xlu0 %v5307, 24
      %v5715 = vpop.permute.xlu0 %5714
      %5716 = vrot.lane.b32.xlu0 %v5308, 24
      %v5717 = vpop.permute.xlu0 %5716
      %5718 = vrot.lane.b32.xlu0 %v5309, 24
      %v5719 = vpop.permute.xlu0 %5718
      %5720 = vrot.lane.b32.xlu0 %v5310, 24
      %v5721 = vpop.permute.xlu0 %5720
      %5722 = vrot.lane.b32.xlu0 %v5311, 24
      %v5723 = vpop.permute.xlu0 %5722
      %5724 = vrot.lane.b32.xlu0 %v5312, 24
      %v5725 = vpop.permute.xlu0 %5724
      %5726 = vrot.lane.b32.xlu0 %v5313, 24
      %v5727 = vpop.permute.xlu0 %5726
      %5728 = vrot.lane.b32.xlu0 %v5314, 24
      %v5729 = vpop.permute.xlu0 %5728
      %5730 = vrot.lane.b32.xlu0 %v5315, 24
      %v5731 = vpop.permute.xlu0 %5730
      %5796 = vrot.lane.b32.xlu0 %v5316, 36
      %v5797 = vpop.permute.xlu0 %5796
      %5798 = vrot.lane.b32.xlu0 %v5317, 36
      %v5799 = vpop.permute.xlu0 %5798
      %5800 = vrot.lane.b32.xlu0 %v5318, 36
      %v5801 = vpop.permute.xlu0 %5800
      %5802 = vrot.lane.b32.xlu0 %v5319, 36
      %v5803 = vpop.permute.xlu0 %5802
      %5804 = vrot.lane.b32.xlu0 %v5320, 36
      %v5805 = vpop.permute.xlu0 %5804
      %5806 = vrot.lane.b32.xlu0 %v5321, 36
      %v5807 = vpop.permute.xlu0 %5806
      %5808 = vrot.lane.b32.xlu0 %v5322, 36
      %v5809 = vpop.permute.xlu0 %5808
      %5810 = vrot.lane.b32.xlu0 %v5323, 36
      %v5811 = vpop.permute.xlu0 %5810
      %5812 = vrot.lane.b32.xlu0 %v5324, 36
      %v5813 = vpop.permute.xlu0 %5812
      %5814 = vrot.lane.b32.xlu0 %v5325, 36
      %v5815 = vpop.permute.xlu0 %5814
      %5816 = vrot.lane.b32.xlu0 %v5326, 36
      %v5817 = vpop.permute.xlu0 %5816
      %5818 = vrot.lane.b32.xlu0 %v5327, 36
      %v5819 = vpop.permute.xlu0 %5818
      %5820 = vrot.lane.b32.xlu0 %v5328, 36
      %v5821 = vpop.permute.xlu0 %5820
      %5822 = vrot.lane.b32.xlu0 %v5329, 36
      %v5823 = vpop.permute.xlu0 %5822
      %5824 = vrot.lane.b32.xlu0 %v5330, 36
      %v5825 = vpop.permute.xlu0 %5824
      %5826 = vrot.lane.b32.xlu0 %v5331, 36
      %v5827 = vpop.permute.xlu0 %5826
      %5828 = vrot.lane.b32.xlu0 %v5332, 36
      %v5829 = vpop.permute.xlu0 %5828
      %5830 = vrot.lane.b32.xlu0 %v5333, 36
      %v5831 = vpop.permute.xlu0 %5830
      %5832 = vrot.lane.b32.xlu0 %v5334, 36
      %v5833 = vpop.permute.xlu0 %5832
      %5834 = vrot.lane.b32.xlu0 %v5335, 36
      %v5835 = vpop.permute.xlu0 %5834
      %5836 = vrot.lane.b32.xlu0 %v5336, 36
      %v5837 = vpop.permute.xlu0 %5836
      %5838 = vrot.lane.b32.xlu0 %v5337, 36
      %v5839 = vpop.permute.xlu0 %5838
      %5840 = vrot.lane.b32.xlu0 %v5338, 36
      %v5841 = vpop.permute.xlu0 %5840
      %5842 = vrot.lane.b32.xlu0 %v5339, 36
      %v5843 = vpop.permute.xlu0 %5842
      %5844 = vrot.lane.b32.xlu0 %v5340, 36
      %v5845 = vpop.permute.xlu0 %5844
      %5846 = vrot.lane.b32.xlu0 %v5341, 36
      %v5847 = vpop.permute.xlu0 %5846
      %5848 = vrot.lane.b32.xlu0 %v5342, 36
      %v5849 = vpop.permute.xlu0 %5848
      %5850 = vrot.lane.b32.xlu0 %v5343, 36
      %v5851 = vpop.permute.xlu0 %5850
      %5852 = vrot.lane.b32.xlu0 %v5344, 36
      %v5853 = vpop.permute.xlu0 %5852
      %5854 = vrot.lane.b32.xlu0 %v5345, 36
      %v5855 = vpop.permute.xlu0 %5854
      %5856 = vrot.lane.b32.xlu0 %v5346, 36
      %v5857 = vpop.permute.xlu0 %5856
      %5858 = vrot.lane.b32.xlu0 %v5347, 36
      %v5859 = vpop.permute.xlu0 %5858
      %5924 = vrot.lane.b32.xlu0 %v5348, 48
      %v5925 = vpop.permute.xlu0 %5924
      %5926 = vrot.lane.b32.xlu0 %v5349, 48
      %v5927 = vpop.permute.xlu0 %5926
      %5928 = vrot.lane.b32.xlu0 %v5350, 48
      %v5929 = vpop.permute.xlu0 %5928
      %5930 = vrot.lane.b32.xlu0 %v5351, 48
      %v5931 = vpop.permute.xlu0 %5930
      %5932 = vrot.lane.b32.xlu0 %v5352, 48
      %v5933 = vpop.permute.xlu0 %5932
      %5934 = vrot.lane.b32.xlu0 %v5353, 48
      %v5935 = vpop.permute.xlu0 %5934
      %5936 = vrot.lane.b32.xlu0 %v5354, 48
      %v5937 = vpop.permute.xlu0 %5936
      %5938 = vrot.lane.b32.xlu0 %v5355, 48
      %v5939 = vpop.permute.xlu0 %5938
      %5940 = vrot.lane.b32.xlu0 %v5356, 48
      %v5941 = vpop.permute.xlu0 %5940
      %5942 = vrot.lane.b32.xlu0 %v5357, 48
      %v5943 = vpop.permute.xlu0 %5942
      %5944 = vrot.lane.b32.xlu0 %v5358, 48
      %v5945 = vpop.permute.xlu0 %5944
      %5946 = vrot.lane.b32.xlu0 %v5359, 48
      %v5947 = vpop.permute.xlu0 %5946
      %5948 = vrot.lane.b32.xlu0 %v5360, 48
      %v5949 = vpop.permute.xlu0 %5948
      %5950 = vrot.lane.b32.xlu0 %v5361, 48
      %v5951 = vpop.permute.xlu0 %5950
      %5952 = vrot.lane.b32.xlu0 %v5362, 48
      %v5953 = vpop.permute.xlu0 %5952
      %5954 = vrot.lane.b32.xlu0 %v5363, 48
      %v5955 = vpop.permute.xlu0 %5954
      %5956 = vrot.lane.b32.xlu0 %v5364, 48
      %v5957 = vpop.permute.xlu0 %5956
      %5958 = vrot.lane.b32.xlu0 %v5365, 48
      %v5959 = vpop.permute.xlu0 %5958
      %5960 = vrot.lane.b32.xlu0 %v5366, 48
      %v5961 = vpop.permute.xlu0 %5960
      %5962 = vrot.lane.b32.xlu0 %v5367, 48
      %v5963 = vpop.permute.xlu0 %5962
      %5964 = vrot.lane.b32.xlu0 %v5368, 48
      %v5965 = vpop.permute.xlu0 %5964
      %5966 = vrot.lane.b32.xlu0 %v5369, 48
      %v5967 = vpop.permute.xlu0 %5966
      %5968 = vrot.lane.b32.xlu0 %v5370, 48
      %v5969 = vpop.permute.xlu0 %5968
      %5970 = vrot.lane.b32.xlu0 %v5371, 48
      %v5971 = vpop.permute.xlu0 %5970
      %5972 = vrot.lane.b32.xlu0 %v5372, 48
      %v5973 = vpop.permute.xlu0 %5972
      %5974 = vrot.lane.b32.xlu0 %v5373, 48
      %v5975 = vpop.permute.xlu0 %5974
      %5976 = vrot.lane.b32.xlu0 %v5374, 48
      %v5977 = vpop.permute.xlu0 %5976
      %5978 = vrot.lane.b32.xlu0 %v5375, 48
      %v5979 = vpop.permute.xlu0 %5978
      %5980 = vrot.lane.b32.xlu0 %v5376, 48
      %v5981 = vpop.permute.xlu0 %5980
      %5982 = vrot.lane.b32.xlu0 %v5377, 48
      %v5983 = vpop.permute.xlu0 %5982
      %5984 = vrot.lane.b32.xlu0 %v5378, 48
      %v5985 = vpop.permute.xlu0 %5984
      %5986 = vrot.lane.b32.xlu0 %v5379, 48
      %v5987 = vpop.permute.xlu0 %5986
      %6052 = vrot.lane.b32.xlu0 %v5380, 60
      %v6053 = vpop.permute.xlu0 %6052
      %6054 = vrot.lane.b32.xlu0 %v5381, 60
      %v6055 = vpop.permute.xlu0 %6054
      %6056 = vrot.lane.b32.xlu0 %v5382, 60
      %v6057 = vpop.permute.xlu0 %6056
      %6058 = vrot.lane.b32.xlu0 %v5383, 60
      %v6059 = vpop.permute.xlu0 %6058
      %6060 = vrot.lane.b32.xlu0 %v5384, 60
      %v6061 = vpop.permute.xlu0 %6060
      %6062 = vrot.lane.b32.xlu0 %v5385, 60
      %v6063 = vpop.permute.xlu0 %6062
      %6064 = vrot.lane.b32.xlu0 %v5386, 60
      %v6065 = vpop.permute.xlu0 %6064
      %6066 = vrot.lane.b32.xlu0 %v5387, 60
      %v6067 = vpop.permute.xlu0 %6066
      %6068 = vrot.lane.b32.xlu0 %v5388, 60
      %v6069 = vpop.permute.xlu0 %6068
      %6070 = vrot.lane.b32.xlu0 %v5389, 60
      %v6071 = vpop.permute.xlu0 %6070
      %6072 = vrot.lane.b32.xlu0 %v5390, 60
      %v6073 = vpop.permute.xlu0 %6072
      %6074 = vrot.lane.b32.xlu0 %v5391, 60
      %v6075 = vpop.permute.xlu0 %6074
      %6076 = vrot.lane.b32.xlu0 %v5392, 60
      %v6077 = vpop.permute.xlu0 %6076
      %6078 = vrot.lane.b32.xlu0 %v5393, 60
      %v6079 = vpop.permute.xlu0 %6078
      %6080 = vrot.lane.b32.xlu0 %v5394, 60
      %v6081 = vpop.permute.xlu0 %6080
      %6082 = vrot.lane.b32.xlu0 %v5395, 60
      %v6083 = vpop.permute.xlu0 %6082
      %6084 = vrot.lane.b32.xlu0 %v5396, 60
      %v6085 = vpop.permute.xlu0 %6084
      %6086 = vrot.lane.b32.xlu0 %v5397, 60
      %v6087 = vpop.permute.xlu0 %6086
      %6088 = vrot.lane.b32.xlu0 %v5398, 60
      %v6089 = vpop.permute.xlu0 %6088
      %6090 = vrot.lane.b32.xlu0 %v5399, 60
      %v6091 = vpop.permute.xlu0 %6090
      %6092 = vrot.lane.b32.xlu0 %v5400, 60
      %v6093 = vpop.permute.xlu0 %6092
      %6094 = vrot.lane.b32.xlu0 %v5401, 60
      %v6095 = vpop.permute.xlu0 %6094
      %6096 = vrot.lane.b32.xlu0 %v5402, 60
      %v6097 = vpop.permute.xlu0 %6096
      %6098 = vrot.lane.b32.xlu0 %v5403, 60
      %v6099 = vpop.permute.xlu0 %6098
      %6100 = vrot.lane.b32.xlu0 %v5404, 60
      %v6101 = vpop.permute.xlu0 %6100
      %6102 = vrot.lane.b32.xlu0 %v5405, 60
      %v6103 = vpop.permute.xlu0 %6102
      %6104 = vrot.lane.b32.xlu0 %v5406, 60
      %v6105 = vpop.permute.xlu0 %6104
      %6106 = vrot.lane.b32.xlu0 %v5407, 60
      %v6107 = vpop.permute.xlu0 %6106
      %6108 = vrot.lane.b32.xlu0 %v5408, 60
      %v6109 = vpop.permute.xlu0 %6108
      %6110 = vrot.lane.b32.xlu0 %v5409, 60
      %v6111 = vpop.permute.xlu0 %6110
      %6112 = vrot.lane.b32.xlu0 %v5410, 60
      %v6113 = vpop.permute.xlu0 %6112
      %6114 = vrot.lane.b32.xlu0 %v5411, 60
      %v6115 = vpop.permute.xlu0 %6114
      %6180 = vrot.lane.b32.xlu0 %v5412, 72
      %v6181 = vpop.permute.xlu0 %6180
      %6182 = vrot.lane.b32.xlu0 %v5413, 72
      %v6183 = vpop.permute.xlu0 %6182
      %6184 = vrot.lane.b32.xlu0 %v5414, 72
      %v6185 = vpop.permute.xlu0 %6184
      %6186 = vrot.lane.b32.xlu0 %v5415, 72
      %v6187 = vpop.permute.xlu0 %6186
      %6188 = vrot.lane.b32.xlu0 %v5416, 72
      %v6189 = vpop.permute.xlu0 %6188
      %6190 = vrot.lane.b32.xlu0 %v5417, 72
      %v6191 = vpop.permute.xlu0 %6190
      %6192 = vrot.lane.b32.xlu0 %v5418, 72
      %v6193 = vpop.permute.xlu0 %6192
      %6194 = vrot.lane.b32.xlu0 %v5419, 72
      %v6195 = vpop.permute.xlu0 %6194
      %6196 = vrot.lane.b32.xlu0 %v5420, 72
      %v6197 = vpop.permute.xlu0 %6196
      %6198 = vrot.lane.b32.xlu0 %v5421, 72
      %v6199 = vpop.permute.xlu0 %6198
      %6200 = vrot.lane.b32.xlu0 %v5422, 72
      %v6201 = vpop.permute.xlu0 %6200
      %6202 = vrot.lane.b32.xlu0 %v5423, 72
      %v6203 = vpop.permute.xlu0 %6202
      %6204 = vrot.lane.b32.xlu0 %v5424, 72
      %v6205 = vpop.permute.xlu0 %6204
      %6206 = vrot.lane.b32.xlu0 %v5425, 72
      %v6207 = vpop.permute.xlu0 %6206
      %6208 = vrot.lane.b32.xlu0 %v5426, 72
      %v6209 = vpop.permute.xlu0 %6208
      %6210 = vrot.lane.b32.xlu0 %v5427, 72
      %v6211 = vpop.permute.xlu0 %6210
      %6212 = vrot.lane.b32.xlu0 %v5428, 72
      %v6213 = vpop.permute.xlu0 %6212
      %6214 = vrot.lane.b32.xlu0 %v5429, 72
      %v6215 = vpop.permute.xlu0 %6214
      %6216 = vrot.lane.b32.xlu0 %v5430, 72
      %v6217 = vpop.permute.xlu0 %6216
      %6218 = vrot.lane.b32.xlu0 %v5431, 72
      %v6219 = vpop.permute.xlu0 %6218
      %6220 = vrot.lane.b32.xlu0 %v5432, 72
      %v6221 = vpop.permute.xlu0 %6220
      %6222 = vrot.lane.b32.xlu0 %v5433, 72
      %v6223 = vpop.permute.xlu0 %6222
      %6224 = vrot.lane.b32.xlu0 %v5434, 72
      %v6225 = vpop.permute.xlu0 %6224
      %6226 = vrot.lane.b32.xlu0 %v5435, 72
      %v6227 = vpop.permute.xlu0 %6226
      %6228 = vrot.lane.b32.xlu0 %v5436, 72
      %v6229 = vpop.permute.xlu0 %6228
      %6230 = vrot.lane.b32.xlu0 %v5437, 72
      %v6231 = vpop.permute.xlu0 %6230
      %6232 = vrot.lane.b32.xlu0 %v5438, 72
      %v6233 = vpop.permute.xlu0 %6232
      %6234 = vrot.lane.b32.xlu0 %v5439, 72
      %v6235 = vpop.permute.xlu0 %6234
      %6236 = vrot.lane.b32.xlu0 %v5440, 72
      %v6237 = vpop.permute.xlu0 %6236
      %6238 = vrot.lane.b32.xlu0 %v5441, 72
      %v6239 = vpop.permute.xlu0 %6238
      %6240 = vrot.lane.b32.xlu0 %v5442, 72
      %v6241 = vpop.permute.xlu0 %6240
      %6242 = vrot.lane.b32.xlu0 %v5443, 72
      %v6243 = vpop.permute.xlu0 %6242
      %6308 = vrot.lane.b32.xlu0 %v5444, 84
      %v6309 = vpop.permute.xlu0 %6308
      %6310 = vrot.lane.b32.xlu0 %v5445, 84
      %v6311 = vpop.permute.xlu0 %6310
      %6312 = vrot.lane.b32.xlu0 %v5446, 84
      %v6313 = vpop.permute.xlu0 %6312
      %6314 = vrot.lane.b32.xlu0 %v5447, 84
      %v6315 = vpop.permute.xlu0 %6314
      %6316 = vrot.lane.b32.xlu0 %v5448, 84
      %v6317 = vpop.permute.xlu0 %6316
      %6318 = vrot.lane.b32.xlu0 %v5449, 84
      %v6319 = vpop.permute.xlu0 %6318
      %6320 = vrot.lane.b32.xlu0 %v5450, 84
      %v6321 = vpop.permute.xlu0 %6320
      %6322 = vrot.lane.b32.xlu0 %v5451, 84
      %v6323 = vpop.permute.xlu0 %6322
      %6324 = vrot.lane.b32.xlu0 %v5452, 84
      %v6325 = vpop.permute.xlu0 %6324
      %6326 = vrot.lane.b32.xlu0 %v5453, 84
      %v6327 = vpop.permute.xlu0 %6326
      %6328 = vrot.lane.b32.xlu0 %v5454, 84
      %v6329 = vpop.permute.xlu0 %6328
      %6330 = vrot.lane.b32.xlu0 %v5455, 84
      %v6331 = vpop.permute.xlu0 %6330
      %6332 = vrot.lane.b32.xlu0 %v5456, 84
      %v6333 = vpop.permute.xlu0 %6332
      %6334 = vrot.lane.b32.xlu0 %v5457, 84
      %v6335 = vpop.permute.xlu0 %6334
      %6336 = vrot.lane.b32.xlu0 %v5458, 84
      %v6337 = vpop.permute.xlu0 %6336
      %6338 = vrot.lane.b32.xlu0 %v5459, 84
      %v6339 = vpop.permute.xlu0 %6338
      %6340 = vrot.lane.b32.xlu0 %v5460, 84
      %v6341 = vpop.permute.xlu0 %6340
      %6342 = vrot.lane.b32.xlu0 %v5461, 84
      %v6343 = vpop.permute.xlu0 %6342
      %6344 = vrot.lane.b32.xlu0 %v5462, 84
      %v6345 = vpop.permute.xlu0 %6344
      %6346 = vrot.lane.b32.xlu0 %v5463, 84
      %v6347 = vpop.permute.xlu0 %6346
      %6348 = vrot.lane.b32.xlu0 %v5464, 84
      %v6349 = vpop.permute.xlu0 %6348
      %6350 = vrot.lane.b32.xlu0 %v5465, 84
      %v6351 = vpop.permute.xlu0 %6350
      %6352 = vrot.lane.b32.xlu0 %v5466, 84
      %v6353 = vpop.permute.xlu0 %6352
      %6354 = vrot.lane.b32.xlu0 %v5467, 84
      %v6355 = vpop.permute.xlu0 %6354
      %6356 = vrot.lane.b32.xlu0 %v5468, 84
      %v6357 = vpop.permute.xlu0 %6356
      %6358 = vrot.lane.b32.xlu0 %v5469, 84
      %v6359 = vpop.permute.xlu0 %6358
      %6360 = vrot.lane.b32.xlu0 %v5470, 84
      %v6361 = vpop.permute.xlu0 %6360
      %6362 = vrot.lane.b32.xlu0 %v5471, 84
      %v6363 = vpop.permute.xlu0 %6362
      %6364 = vrot.lane.b32.xlu0 %v5472, 84
      %v6365 = vpop.permute.xlu0 %6364
      %6366 = vrot.lane.b32.xlu0 %v5473, 84
      %v6367 = vpop.permute.xlu0 %6366
      %6368 = vrot.lane.b32.xlu0 %v5474, 84
      %v6369 = vpop.permute.xlu0 %6368
      %6370 = vrot.lane.b32.xlu0 %v5475, 84
      %v6371 = vpop.permute.xlu0 %6370
      %6436 = vrot.lane.b32.xlu0 %v5476, 96
      %v6437 = vpop.permute.xlu0 %6436
      %6438 = vrot.lane.b32.xlu0 %v5477, 96
      %v6439 = vpop.permute.xlu0 %6438
      %6440 = vrot.lane.b32.xlu0 %v5478, 96
      %v6441 = vpop.permute.xlu0 %6440
      %6442 = vrot.lane.b32.xlu0 %v5479, 96
      %v6443 = vpop.permute.xlu0 %6442
      %6444 = vrot.lane.b32.xlu0 %v5480, 96
      %v6445 = vpop.permute.xlu0 %6444
      %6446 = vrot.lane.b32.xlu0 %v5481, 96
      %v6447 = vpop.permute.xlu0 %6446
      %6448 = vrot.lane.b32.xlu0 %v5482, 96
      %v6449 = vpop.permute.xlu0 %6448
      %6450 = vrot.lane.b32.xlu0 %v5483, 96
      %v6451 = vpop.permute.xlu0 %6450
      %6452 = vrot.lane.b32.xlu0 %v5484, 96
      %v6453 = vpop.permute.xlu0 %6452
      %6454 = vrot.lane.b32.xlu0 %v5485, 96
      %v6455 = vpop.permute.xlu0 %6454
      %6456 = vrot.lane.b32.xlu0 %v5486, 96
      %v6457 = vpop.permute.xlu0 %6456
      %6458 = vrot.lane.b32.xlu0 %v5487, 96
      %v6459 = vpop.permute.xlu0 %6458
      %6460 = vrot.lane.b32.xlu0 %v5488, 96
      %v6461 = vpop.permute.xlu0 %6460
      %6462 = vrot.lane.b32.xlu0 %v5489, 96
      %v6463 = vpop.permute.xlu0 %6462
      %6464 = vrot.lane.b32.xlu0 %v5490, 96
      %v6465 = vpop.permute.xlu0 %6464
      %6466 = vrot.lane.b32.xlu0 %v5491, 96
      %v6467 = vpop.permute.xlu0 %6466
      %6468 = vrot.lane.b32.xlu0 %v5492, 96
      %v6469 = vpop.permute.xlu0 %6468
      %6470 = vrot.lane.b32.xlu0 %v5493, 96
      %v6471 = vpop.permute.xlu0 %6470
      %6472 = vrot.lane.b32.xlu0 %v5494, 96
      %v6473 = vpop.permute.xlu0 %6472
      %6474 = vrot.lane.b32.xlu0 %v5495, 96
      %v6475 = vpop.permute.xlu0 %6474
      %6476 = vrot.lane.b32.xlu0 %v5496, 96
      %v6477 = vpop.permute.xlu0 %6476
      %6478 = vrot.lane.b32.xlu0 %v5497, 96
      %v6479 = vpop.permute.xlu0 %6478
      %6480 = vrot.lane.b32.xlu0 %v5498, 96
      %v6481 = vpop.permute.xlu0 %6480
      %6482 = vrot.lane.b32.xlu0 %v5499, 96
      %v6483 = vpop.permute.xlu0 %6482
      %6484 = vrot.lane.b32.xlu0 %v5500, 96
      %v6485 = vpop.permute.xlu0 %6484
      %6486 = vrot.lane.b32.xlu0 %v5501, 96
      %v6487 = vpop.permute.xlu0 %6486
      %6488 = vrot.lane.b32.xlu0 %v5502, 96
      %v6489 = vpop.permute.xlu0 %6488
      %6490 = vrot.lane.b32.xlu0 %v5503, 96
      %v6491 = vpop.permute.xlu0 %6490
      %6492 = vrot.lane.b32.xlu0 %v5504, 96
      %v6493 = vpop.permute.xlu0 %6492
      %6494 = vrot.lane.b32.xlu0 %v5505, 96
      %v6495 = vpop.permute.xlu0 %6494
      %6496 = vrot.lane.b32.xlu0 %v5506, 96
      %v6497 = vpop.permute.xlu0 %6496
      %6498 = vrot.lane.b32.xlu0 %v5507, 96
      %v6499 = vpop.permute.xlu0 %6498
      %v6532 = vsel %vm2105, %v5220, %v5541
      %v6533 = vsel %vm2105, %v5221, %v5543
      %v6534 = vsel %vm2105, %v5222, %v5545
      %v6535 = vsel %vm2105, %v5223, %v5547
      %v6536 = vsel %vm2105, %v5224, %v5549
      %v6537 = vsel %vm2105, %v5225, %v5551
      %v6538 = vsel %vm2105, %v5226, %v5553
      %v6539 = vsel %vm2105, %v5227, %v5555
      %v6540 = vsel %vm2105, %v5228, %v5557
      %v6541 = vsel %vm2105, %v5229, %v5559
      %v6542 = vsel %vm2105, %v5230, %v5561
      %v6543 = vsel %vm2105, %v5231, %v5563
      %v6544 = vsel %vm2105, %v5232, %v5565
      %v6545 = vsel %vm2105, %v5233, %v5567
      %v6546 = vsel %vm2105, %v5234, %v5569
      %v6547 = vsel %vm2105, %v5235, %v5571
      %v6548 = vsel %vm2105, %v5236, %v5573
      %v6549 = vsel %vm2105, %v5237, %v5575
      %v6550 = vsel %vm2105, %v5238, %v5577
      %v6551 = vsel %vm2105, %v5239, %v5579
      %v6552 = vsel %vm2105, %v5240, %v5581
      %v6553 = vsel %vm2105, %v5241, %v5583
      %v6554 = vsel %vm2105, %v5242, %v5585
      %v6555 = vsel %vm2105, %v5243, %v5587
      %v6556 = vsel %vm2105, %v5244, %v5589
      %v6557 = vsel %vm2105, %v5245, %v5591
      %v6558 = vsel %vm2105, %v5246, %v5593
      %v6559 = vsel %vm2105, %v5247, %v5595
      %v6560 = vsel %vm2105, %v5248, %v5597
      %v6561 = vsel %vm2105, %v5249, %v5599
      %v6562 = vsel %vm2105, %v5250, %v5601
      %v6563 = vsel %vm2105, %v5251, %v5603
      %v6564 = vsel %vm2203, %v6532, %v5669
      %v6565 = vsel %vm2203, %v6533, %v5671
      %v6566 = vsel %vm2203, %v6534, %v5673
      %v6567 = vsel %vm2203, %v6535, %v5675
      %v6568 = vsel %vm2203, %v6536, %v5677
      %v6569 = vsel %vm2203, %v6537, %v5679
      %v6570 = vsel %vm2203, %v6538, %v5681
      %v6571 = vsel %vm2203, %v6539, %v5683
      %v6572 = vsel %vm2203, %v6540, %v5685
      %v6573 = vsel %vm2203, %v6541, %v5687
      %v6574 = vsel %vm2203, %v6542, %v5689
      %v6575 = vsel %vm2203, %v6543, %v5691
      %v6576 = vsel %vm2203, %v6544, %v5693
      %v6577 = vsel %vm2203, %v6545, %v5695
      %v6578 = vsel %vm2203, %v6546, %v5697
      %v6579 = vsel %vm2203, %v6547, %v5699
      %v6580 = vsel %vm2203, %v6548, %v5701
      %v6581 = vsel %vm2203, %v6549, %v5703
      %v6582 = vsel %vm2203, %v6550, %v5705
      %v6583 = vsel %vm2203, %v6551, %v5707
      %v6584 = vsel %vm2203, %v6552, %v5709
      %v6585 = vsel %vm2203, %v6553, %v5711
      %v6586 = vsel %vm2203, %v6554, %v5713
      %v6587 = vsel %vm2203, %v6555, %v5715
      %v6588 = vsel %vm2203, %v6556, %v5717
      %v6589 = vsel %vm2203, %v6557, %v5719
      %v6590 = vsel %vm2203, %v6558, %v5721
      %v6591 = vsel %vm2203, %v6559, %v5723
      %v6592 = vsel %vm2203, %v6560, %v5725
      %v6593 = vsel %vm2203, %v6561, %v5727
      %v6594 = vsel %vm2203, %v6562, %v5729
      %v6595 = vsel %vm2203, %v6563, %v5731
      %v6596 = vsel %vm2314, %v6564, %v5797
      %v6597 = vsel %vm2314, %v6565, %v5799
      %v6598 = vsel %vm2314, %v6566, %v5801
      %v6599 = vsel %vm2314, %v6567, %v5803
      %v6600 = vsel %vm2314, %v6568, %v5805
      %v6601 = vsel %vm2314, %v6569, %v5807
      %v6602 = vsel %vm2314, %v6570, %v5809
      %v6603 = vsel %vm2314, %v6571, %v5811
      %v6604 = vsel %vm2314, %v6572, %v5813
      %v6605 = vsel %vm2314, %v6573, %v5815
      %v6606 = vsel %vm2314, %v6574, %v5817
      %v6607 = vsel %vm2314, %v6575, %v5819
      %v6608 = vsel %vm2314, %v6576, %v5821
      %v6609 = vsel %vm2314, %v6577, %v5823
      %v6610 = vsel %vm2314, %v6578, %v5825
      %v6611 = vsel %vm2314, %v6579, %v5827
      %v6612 = vsel %vm2314, %v6580, %v5829
      %v6613 = vsel %vm2314, %v6581, %v5831
      %v6614 = vsel %vm2314, %v6582, %v5833
      %v6615 = vsel %vm2314, %v6583, %v5835
      %v6616 = vsel %vm2314, %v6584, %v5837
      %v6617 = vsel %vm2314, %v6585, %v5839
      %v6618 = vsel %vm2314, %v6586, %v5841
      %v6619 = vsel %vm2314, %v6587, %v5843
      %v6620 = vsel %vm2314, %v6588, %v5845
      %v6621 = vsel %vm2314, %v6589, %v5847
      %v6622 = vsel %vm2314, %v6590, %v5849
      %v6623 = vsel %vm2314, %v6591, %v5851
      %v6624 = vsel %vm2314, %v6592, %v5853
      %v6625 = vsel %vm2314, %v6593, %v5855
      %v6626 = vsel %vm2314, %v6594, %v5857
      %v6627 = vsel %vm2314, %v6595, %v5859
      %v6628 = vsel %vm4448, %v6596, %v5925
      %v6629 = vsel %vm4448, %v6597, %v5927
      %v6630 = vsel %vm4448, %v6598, %v5929
      %v6631 = vsel %vm4448, %v6599, %v5931
      %v6632 = vsel %vm4448, %v6600, %v5933
      %v6633 = vsel %vm4448, %v6601, %v5935
      %v6634 = vsel %vm4448, %v6602, %v5937
      %v6635 = vsel %vm4448, %v6603, %v5939
      %v6636 = vsel %vm4448, %v6604, %v5941
      %v6637 = vsel %vm4448, %v6605, %v5943
      %v6638 = vsel %vm4448, %v6606, %v5945
      %v6639 = vsel %vm4448, %v6607, %v5947
      %v6640 = vsel %vm4448, %v6608, %v5949
      %v6641 = vsel %vm4448, %v6609, %v5951
      %v6642 = vsel %vm4448, %v6610, %v5953
      %v6643 = vsel %vm4448, %v6611, %v5955
      %v6644 = vsel %vm4448, %v6612, %v5957
      %v6645 = vsel %vm4448, %v6613, %v5959
      %v6646 = vsel %vm4448, %v6614, %v5961
      %v6647 = vsel %vm4448, %v6615, %v5963
      %v6648 = vsel %vm4448, %v6616, %v5965
      %v6649 = vsel %vm4448, %v6617, %v5967
      %v6650 = vsel %vm4448, %v6618, %v5969
      %v6651 = vsel %vm4448, %v6619, %v5971
      %v6652 = vsel %vm4448, %v6620, %v5973
      %v6653 = vsel %vm4448, %v6621, %v5975
      %v6654 = vsel %vm4448, %v6622, %v5977
      %v6655 = vsel %vm4448, %v6623, %v5979
      %v6656 = vsel %vm4448, %v6624, %v5981
      %v6657 = vsel %vm4448, %v6625, %v5983
      %v6658 = vsel %vm4448, %v6626, %v5985
      %v6659 = vsel %vm4448, %v6627, %v5987
      %vm6660 = vcmask 490496
      %v6661 = vsel %vm6660, %v6628, %v6053
      %v6662 = vsel %vm6660, %v6629, %v6055
      %v6663 = vsel %vm6660, %v6630, %v6057
      %v6664 = vsel %vm6660, %v6631, %v6059
      %v6665 = vsel %vm6660, %v6632, %v6061
      %v6666 = vsel %vm6660, %v6633, %v6063
      %v6667 = vsel %vm6660, %v6634, %v6065
      %v6668 = vsel %vm6660, %v6635, %v6067
      %v6669 = vsel %vm6660, %v6636, %v6069
      %v6670 = vsel %vm6660, %v6637, %v6071
      %v6671 = vsel %vm6660, %v6638, %v6073
      %v6672 = vsel %vm6660, %v6639, %v6075
      %v6673 = vsel %vm6660, %v6640, %v6077
      %v6674 = vsel %vm6660, %v6641, %v6079
      %v6675 = vsel %vm6660, %v6642, %v6081
      %v6676 = vsel %vm6660, %v6643, %v6083
      %v6677 = vsel %vm6660, %v6644, %v6085
      %v6678 = vsel %vm6660, %v6645, %v6087
      %v6679 = vsel %vm6660, %v6646, %v6089
      %v6680 = vsel %vm6660, %v6647, %v6091
      %v6681 = vsel %vm6660, %v6648, %v6093
      %v6682 = vsel %vm6660, %v6649, %v6095
      %v6683 = vsel %vm6660, %v6650, %v6097
      %v6684 = vsel %vm6660, %v6651, %v6099
      %v6685 = vsel %vm6660, %v6652, %v6101
      %v6686 = vsel %vm6660, %v6653, %v6103
      %v6687 = vsel %vm6660, %v6654, %v6105
      %v6688 = vsel %vm6660, %v6655, %v6107
      %v6689 = vsel %vm6660, %v6656, %v6109
      %v6690 = vsel %vm6660, %v6657, %v6111
      %v6691 = vsel %vm6660, %v6658, %v6113
      %v6692 = vsel %vm6660, %v6659, %v6115
      %v6693 = vsel %vm4563, %v6661, %v6181
      %v6694 = vsel %vm4563, %v6662, %v6183
      %v6695 = vsel %vm4563, %v6663, %v6185
      %v6696 = vsel %vm4563, %v6664, %v6187
      %v6697 = vsel %vm4563, %v6665, %v6189
      %v6698 = vsel %vm4563, %v6666, %v6191
      %v6699 = vsel %vm4563, %v6667, %v6193
      %v6700 = vsel %vm4563, %v6668, %v6195
      %v6701 = vsel %vm4563, %v6669, %v6197
      %v6702 = vsel %vm4563, %v6670, %v6199
      %v6703 = vsel %vm4563, %v6671, %v6201
      %v6704 = vsel %vm4563, %v6672, %v6203
      %v6705 = vsel %vm4563, %v6673, %v6205
      %v6706 = vsel %vm4563, %v6674, %v6207
      %v6707 = vsel %vm4563, %v6675, %v6209
      %v6708 = vsel %vm4563, %v6676, %v6211
      %v6709 = vsel %vm4563, %v6677, %v6213
      %v6710 = vsel %vm4563, %v6678, %v6215
      %v6711 = vsel %vm4563, %v6679, %v6217
      %v6712 = vsel %vm4563, %v6680, %v6219
      %v6713 = vsel %vm4563, %v6681, %v6221
      %v6714 = vsel %vm4563, %v6682, %v6223
      %v6715 = vsel %vm4563, %v6683, %v6225
      %v6716 = vsel %vm4563, %v6684, %v6227
      %v6717 = vsel %vm4563, %v6685, %v6229
      %v6718 = vsel %vm4563, %v6686, %v6231
      %v6719 = vsel %vm4563, %v6687, %v6233
      %v6720 = vsel %vm4563, %v6688, %v6235
      %v6721 = vsel %vm4563, %v6689, %v6237
      %v6722 = vsel %vm4563, %v6690, %v6239
      %v6723 = vsel %vm4563, %v6691, %v6241
      %v6724 = vsel %vm4563, %v6692, %v6243
      %vm6725 = vcmask 687104
      %v6726 = vsel %vm6725, %v6693, %v6309
      %v6727 = vsel %vm6725, %v6694, %v6311
      %v6728 = vsel %vm6725, %v6695, %v6313
      %v6729 = vsel %vm6725, %v6696, %v6315
      %v6730 = vsel %vm6725, %v6697, %v6317
      %v6731 = vsel %vm6725, %v6698, %v6319
      %v6732 = vsel %vm6725, %v6699, %v6321
      %v6733 = vsel %vm6725, %v6700, %v6323
      %v6734 = vsel %vm6725, %v6701, %v6325
      %v6735 = vsel %vm6725, %v6702, %v6327
      %v6736 = vsel %vm6725, %v6703, %v6329
      %v6737 = vsel %vm6725, %v6704, %v6331
      %v6738 = vsel %vm6725, %v6705, %v6333
      %v6739 = vsel %vm6725, %v6706, %v6335
      %v6740 = vsel %vm6725, %v6707, %v6337
      %v6741 = vsel %vm6725, %v6708, %v6339
      %v6742 = vsel %vm6725, %v6709, %v6341
      %v6743 = vsel %vm6725, %v6710, %v6343
      %v6744 = vsel %vm6725, %v6711, %v6345
      %v6745 = vsel %vm6725, %v6712, %v6347
      %v6746 = vsel %vm6725, %v6713, %v6349
      %v6747 = vsel %vm6725, %v6714, %v6351
      %v6748 = vsel %vm6725, %v6715, %v6353
      %v6749 = vsel %vm6725, %v6716, %v6355
      %v6750 = vsel %vm6725, %v6717, %v6357
      %v6751 = vsel %vm6725, %v6718, %v6359
      %v6752 = vsel %vm6725, %v6719, %v6361
      %v6753 = vsel %vm6725, %v6720, %v6363
      %v6754 = vsel %vm6725, %v6721, %v6365
      %v6755 = vsel %vm6725, %v6722, %v6367
      %v6756 = vsel %vm6725, %v6723, %v6369
      %v6757 = vsel %vm6725, %v6724, %v6371
      %vm6758 = vcmask 785408
      %v6759 = vsel %vm6758, %v6726, %v6437
      %v6760 = vsel %vm6758, %v6727, %v6439
      %v6761 = vsel %vm6758, %v6728, %v6441
      %v6762 = vsel %vm6758, %v6729, %v6443
      %v6763 = vsel %vm6758, %v6730, %v6445
      %v6764 = vsel %vm6758, %v6731, %v6447
      %v6765 = vsel %vm6758, %v6732, %v6449
      %v6766 = vsel %vm6758, %v6733, %v6451
      %v6767 = vsel %vm6758, %v6734, %v6453
      %v6768 = vsel %vm6758, %v6735, %v6455
      %v6769 = vsel %vm6758, %v6736, %v6457
      %v6770 = vsel %vm6758, %v6737, %v6459
      %v6771 = vsel %vm6758, %v6738, %v6461
      %v6772 = vsel %vm6758, %v6739, %v6463
      %v6773 = vsel %vm6758, %v6740, %v6465
      %v6774 = vsel %vm6758, %v6741, %v6467
      %v6775 = vsel %vm6758, %v6742, %v6469
      %v6776 = vsel %vm6758, %v6743, %v6471
      %v6777 = vsel %vm6758, %v6744, %v6473
      %v6778 = vsel %vm6758, %v6745, %v6475
      %v6779 = vsel %vm6758, %v6746, %v6477
      %v6780 = vsel %vm6758, %v6747, %v6479
      %v6781 = vsel %vm6758, %v6748, %v6481
      %v6782 = vsel %vm6758, %v6749, %v6483
      %v6783 = vsel %vm6758, %v6750, %v6485
      %v6784 = vsel %vm6758, %v6751, %v6487
      %v6785 = vsel %vm6758, %v6752, %v6489
      %v6786 = vsel %vm6758, %v6753, %v6491
      %v6787 = vsel %vm6758, %v6754, %v6493
      %v6788 = vsel %vm6758, %v6755, %v6495
      %v6789 = vsel %vm6758, %v6756, %v6497
      %v6790 = vsel %vm6758, %v6757, %v6499
      %v6791 = vld [vmem:[%s11] sm:$0xff]
      %v6792 = vld [vmem:[%s11 + $0x8] sm:$0xff]
      %v6793 = vld [vmem:[%s11 + $0x10] sm:$0xff]
      %v6794 = vld [vmem:[%s11 + $0x18] sm:$0xff]
      %v6795 = vld [vmem:[%s11 + $0x20] sm:$0xff]
      %v6796 = vld [vmem:[%s11 + $0x28] sm:$0xff]
      %v6797 = vld [vmem:[%s11 + $0x30] sm:$0xff]
      %v6798 = vld [vmem:[%s11 + $0x38] sm:$0xff]
      %v6799 = vld [vmem:[%s11 + $0x40] sm:$0xff]
      %v6800 = vld [vmem:[%s11 + $0x48] sm:$0xff]
      %v6801 = vld [vmem:[%s11 + $0x50] sm:$0xff]
      %v6802 = vld [vmem:[%s11 + $0x58] sm:$0xff]
      %v6803 = vld [vmem:[%s11 + $0x60] sm:$0xff]
      %v6804 = vld [vmem:[%s11 + $0x68] sm:$0xf]
      %v6805 = vld [vmem:[%s12] sm:$0x1]
      %v6807 = vlaneseq
      %v6808 = vshrl.u32 %v6807, 7
      %v6809 = vsub.s32 0, %v6808
      %v6810 = vrot.slane %v6805, %v6809
      %vm6812 = vcmask 883712
      %v6814 = vsel %vm6812, %v6759, 0
      %v6817 = vsel %vm6812, %v6760, 0
      %v6820 = vsel %vm6812, %v6761, 0
      %v6823 = vsel %vm6812, %v6762, 0
      %v6826 = vsel %vm6812, %v6763, 0
      %v6829 = vsel %vm6812, %v6764, 0
      %v6832 = vsel %vm6812, %v6765, 0
      %v6835 = vsel %vm6812, %v6766, 0
      %v6838 = vsel %vm6812, %v6767, 0
      %v6841 = vsel %vm6812, %v6768, 0
      %v6844 = vsel %vm6812, %v6769, 0
      %v6847 = vsel %vm6812, %v6770, 0
      %v6850 = vsel %vm6812, %v6771, 0
      %v6853 = vsel %vm6812, %v6772, 0
      %v6856 = vsel %vm6812, %v6773, 0
      %v6859 = vsel %vm6812, %v6774, 0
      %v6862 = vsel %vm6812, %v6775, 0
      %v6865 = vsel %vm6812, %v6776, 0
      %v6868 = vsel %vm6812, %v6777, 0
      %v6871 = vsel %vm6812, %v6778, 0
      %v6874 = vsel %vm6812, %v6779, 0
      %v6877 = vsel %vm6812, %v6780, 0
      %v6880 = vsel %vm6812, %v6781, 0
      %v6883 = vsel %vm6812, %v6782, 0
      %v6886 = vsel %vm6812, %v6783, 0
      %v6889 = vsel %vm6812, %v6784, 0
      %v6892 = vsel %vm6812, %v6785, 0
      %v6895 = vsel %vm6812, %v6786, 0
      %v6898 = vsel %vm6812, %v6787, 0
      %v6901 = vsel %vm6812, %v6788, 0
      %v6904 = vsel %vm6812, %v6789, 0
      %v6907 = vsel %vm6812, %v6790, 0
      %v6910 = vsel %vm2411, %v6804, 0
      %6912 = vmatprep.subr.mxu0 0.0
      %6913 = vmatpush1.msra.mxu0 %v6791
      %6914 = vmatprep.subr.mxu0 0.0
      %6915 = vmatpush1.msra.mxu0 %v6792
      %6916 = vmatprep.subr.mxu0 0.0
      %6917 = vmatpush1.msra.mxu0 %v6793
      %6918 = vmatprep.subr.mxu0 0.0
      %6919 = vmatpush1.msra.mxu0 %v6794
      %6920 = vmatprep.subr.mxu0 0.0
      %6921 = vmatpush1.msra.mxu0 %v6795
      %6922 = vmatprep.subr.mxu0 0.0
      %6923 = vmatpush1.msra.mxu0 %v6796
      %6924 = vmatprep.subr.mxu0 0.0
      %6925 = vmatpush1.msra.mxu0 %v6797
      %6926 = vmatprep.subr.mxu0 0.0
      %6927 = vmatpush1.msra.mxu0 %v6798
      %6928 = vmatprep.subr.mxu0 0.0
      %6929 = vmatpush1.msra.mxu0 %v6799
      %6930 = vmatprep.subr.mxu0 0.0
      %6931 = vmatpush1.msra.mxu0 %v6800
      %6932 = vmatprep.subr.mxu0 0.0
      %6933 = vmatpush1.msra.mxu0 %v6801
      %6934 = vmatprep.subr.mxu0 0.0
      %6935 = vmatpush1.msra.mxu0 %v6802
      %6936 = vmatprep.subr.mxu0 0.0
      %6937 = vmatpush1.msra.mxu0 %v6803
      %6938 = vmatprep.subr.mxu0 0.0
      %6939 = vmatpush1.msra.mxu0 %v6910
      %6940 = vmatprep.subr.mxu0 0.0
      %6941 = vmatpush1.msra.mxu0 0.0
      %6942 = vmatprep.subr.mxu0 0.0
      %6943 = vmatpush1.msra.mxu0 0.0
      %6944 = vmatprep.subr.mxu0 0.0
      %6945 = vmatpush1.msra.mxu0 0.0
      %6946 = vmatprep.subr.mxu0 0.0
      %6947 = vmatpush1.msra.mxu0 0.0
      %6948 = vmatprep.subr.mxu0 0.0
      %6949 = vmatpush1.msra.mxu0 0.0
      %6950 = vmatprep.subr.mxu0 0.0
      %6951 = vmatpush1.msra.mxu0 0.0
      %6952 = vmatprep.subr.mxu0 0.0
      %6953 = vmatpush1.msra.mxu0 0.0
      %6954 = vmatprep.subr.mxu0 0.0
      %6955 = vmatpush1.msra.mxu0 0.0
      %6956 = vmatprep.subr.mxu0 0.0
      %6957 = vmatpush1.msra.mxu0 0.0
      %6958 = vmatprep.subr.mxu0 0.0
      %6959 = vmatpush1.msra.mxu0 0.0
      %6960 = vmatprep.subr.mxu0 0.0
      %6961 = vmatpush1.msra.mxu0 0.0
      %6962 = vmatprep.subr.mxu0 0.0
      %6963 = vmatpush1.msra.mxu0 0.0
      %6964 = vmatprep.subr.mxu0 0.0
      %6965 = vmatpush1.msra.mxu0 0.0
      %6966 = vmatprep.subr.mxu0 0.0
      %6967 = vmatpush1.msra.mxu0 0.0
      %6968 = vmatprep.subr.mxu0 0.0
      %6969 = vmatpush1.msra.mxu0 0.0
      %6970 = vmatprep.subr.mxu0 0.0
      %6971 = vmatpush1.msra.mxu0 0.0
      %6972 = vmatprep.subr.mxu0 0.0
      %6973 = vmatpush1.msra.mxu0 0.0
      %6974 = vmatprep.subr.mxu0 0.0
      %6975 = vmatpush1.msra.mxu0 0.0
      %6976 = vmatprep.mubr.f32.mxu0 0.0
      %6977 = vmatmul.mubr.f32.gmra.mrb[0].mxu0 %v6814
      %v6978 = vpop.f32.mrb[0].mxu0
      %v6979 = vadd.f32 %v6810, %v6978
      %v6980 = vpop.f32.mrb[0].mxu0
      %6981 = vmatprep.mubr.f32.mxu0 0.0
      %6982 = vmatmul.mubr.f32.gmra.mrb[0].mxu0 %v6817
      %v6983 = vpop.f32.mrb[0].mxu0
      %v6984 = vadd.f32 %v6810, %v6983
      %v6985 = vpop.f32.mrb[0].mxu0
      %6986 = vmatprep.mubr.f32.mxu0 0.0
      %6987 = vmatmul.mubr.f32.gmra.mrb[0].mxu0 %v6820
      %v6988 = vpop.f32.mrb[0].mxu0
      %v6989 = vadd.f32 %v6810, %v6988
      %v6990 = vpop.f32.mrb[0].mxu0
      %6991 = vmatprep.mubr.f32.mxu0 0.0
      %6992 = vmatmul.mubr.f32.gmra.mrb[0].mxu0 %v6823
      %v6993 = vpop.f32.mrb[0].mxu0
      %v6994 = vadd.f32 %v6810, %v6993
      %v6995 = vpop.f32.mrb[0].mxu0
      %6996 = vmatprep.mubr.f32.mxu0 0.0
      %6997 = vmatmul.mubr.f32.gmra.mrb[0].mxu0 %v6826
      %v6998 = vpop.f32.mrb[0].mxu0
      %v6999 = vadd.f32 %v6810, %v6998
      %v7000 = vpop.f32.mrb[0].mxu0
      %7001 = vmatprep.mubr.f32.mxu0 0.0
      %7002 = vmatmul.mubr.f32.gmra.mrb[0].mxu0 %v6829
      %v7003 = vpop.f32.mrb[0].mxu0
      %v7004 = vadd.f32 %v6810, %v7003
      %v7005 = vpop.f32.mrb[0].mxu0
      %7006 = vmatprep.mubr.f32.mxu0 0.0
      %7007 = vmatmul.mubr.f32.gmra.mrb[0].mxu0 %v6832
      %v7008 = vpop.f32.mrb[0].mxu0
      %v7009 = vadd.f32 %v6810, %v7008
      %v7010 = vpop.f32.mrb[0].mxu0
      %7011 = vmatprep.mubr.f32.mxu0 0.0
      %7012 = vmatmul.mubr.f32.gmra.mrb[0].mxu0 %v6835
      %v7013 = vpop.f32.mrb[0].mxu0
      %v7014 = vadd.f32 %v6810, %v7013
      %v7015 = vpop.f32.mrb[0].mxu0
      %7016 = vmatprep.mubr.f32.mxu0 0.0
      %7017 = vmatmul.mubr.f32.gmra.mrb[0].mxu0 %v6838
      %v7018 = vpop.f32.mrb[0].mxu0
      %v7019 = vadd.f32 %v6810, %v7018
      %v7020 = vpop.f32.mrb[0].mxu0
      %7021 = vmatprep.mubr.f32.mxu0 0.0
      %7022 = vmatmul.mubr.f32.gmra.mrb[0].mxu0 %v6841
      %v7023 = vpop.f32.mrb[0].mxu0
      %v7024 = vadd.f32 %v6810, %v7023
      %v7025 = vpop.f32.mrb[0].mxu0
      %7026 = vmatprep.mubr.f32.mxu0 0.0
      %7027 = vmatmul.mubr.f32.gmra.mrb[0].mxu0 %v6844
      %v7028 = vpop.f32.mrb[0].mxu0
      %v7029 = vadd.f32 %v6810, %v7028
      %v7030 = vpop.f32.mrb[0].mxu0
      %7031 = vmatprep.mubr.f32.mxu0 0.0
      %7032 = vmatmul.mubr.f32.gmra.mrb[0].mxu0 %v6847
      %v7033 = vpop.f32.mrb[0].mxu0
      %v7034 = vadd.f32 %v6810, %v7033
      %v7035 = vpop.f32.mrb[0].mxu0
      %7036 = vmatprep.mubr.f32.mxu0 0.0
      %7037 = vmatmul.mubr.f32.gmra.mrb[0].mxu0 %v6850
      %v7038 = vpop.f32.mrb[0].mxu0
      %v7039 = vadd.f32 %v6810, %v7038
      %v7040 = vpop.f32.mrb[0].mxu0
      %7041 = vmatprep.mubr.f32.mxu0 0.0
      %7042 = vmatmul.mubr.f32.gmra.mrb[0].mxu0 %v6853
      %v7043 = vpop.f32.mrb[0].mxu0
      %v7044 = vadd.f32 %v6810, %v7043
      %v7045 = vpop.f32.mrb[0].mxu0
      %7046 = vmatprep.mubr.f32.mxu0 0.0
      %7047 = vmatmul.mubr.f32.gmra.mrb[0].mxu0 %v6856
      %v7048 = vpop.f32.mrb[0].mxu0
      %v7049 = vadd.f32 %v6810, %v7048
      %v7050 = vpop.f32.mrb[0].mxu0
      %7051 = vmatprep.mubr.f32.mxu0 0.0
      %7052 = vmatmul.mubr.f32.gmra.mrb[0].mxu0 %v6859
      %v7053 = vpop.f32.mrb[0].mxu0
      %v7054 = vadd.f32 %v6810, %v7053
      %v7055 = vpop.f32.mrb[0].mxu0
      %7056 = vmatprep.mubr.f32.mxu0 0.0
      %7057 = vmatmul.mubr.f32.gmra.mrb[0].mxu0 %v6862
      %v7058 = vpop.f32.mrb[0].mxu0
      %v7059 = vadd.f32 %v6810, %v7058
      %v7060 = vpop.f32.mrb[0].mxu0
      %7061 = vmatprep.mubr.f32.mxu0 0.0
      %7062 = vmatmul.mubr.f32.gmra.mrb[0].mxu0 %v6865
      %v7063 = vpop.f32.mrb[0].mxu0
      %v7064 = vadd.f32 %v6810, %v7063
      %v7065 = vpop.f32.mrb[0].mxu0
      %7066 = vmatprep.mubr.f32.mxu0 0.0
      %7067 = vmatmul.mubr.f32.gmra.mrb[0].mxu0 %v6868
      %v7068 = vpop.f32.mrb[0].mxu0
      %v7069 = vadd.f32 %v6810, %v7068
      %v7070 = vpop.f32.mrb[0].mxu0
      %7071 = vmatprep.mubr.f32.mxu0 0.0
      %7072 = vmatmul.mubr.f32.gmra.mrb[0].mxu0 %v6871
      %v7073 = vpop.f32.mrb[0].mxu0
      %v7074 = vadd.f32 %v6810, %v7073
      %v7075 = vpop.f32.mrb[0].mxu0
      %7076 = vmatprep.mubr.f32.mxu0 0.0
      %7077 = vmatmul.mubr.f32.gmra.mrb[0].mxu0 %v6874
      %v7078 = vpop.f32.mrb[0].mxu0
      %v7079 = vadd.f32 %v6810, %v7078
      %v7080 = vpop.f32.mrb[0].mxu0
      %7081 = vmatprep.mubr.f32.mxu0 0.0
      %7082 = vmatmul.mubr.f32.gmra.mrb[0].mxu0 %v6877
      %v7083 = vpop.f32.mrb[0].mxu0
      %v7084 = vadd.f32 %v6810, %v7083
      %v7085 = vpop.f32.mrb[0].mxu0
      %7086 = vmatprep.mubr.f32.mxu0 0.0
      %7087 = vmatmul.mubr.f32.gmra.mrb[0].mxu0 %v6880
      %v7088 = vpop.f32.mrb[0].mxu0
      %v7089 = vadd.f32 %v6810, %v7088
      %v7090 = vpop.f32.mrb[0].mxu0
      %7091 = vmatprep.mubr.f32.mxu0 0.0
      %7092 = vmatmul.mubr.f32.gmra.mrb[0].mxu0 %v6883
      %v7093 = vpop.f32.mrb[0].mxu0
      %v7094 = vadd.f32 %v6810, %v7093
      %v7095 = vpop.f32.mrb[0].mxu0
      %7096 = vmatprep.mubr.f32.mxu0 0.0
      %7097 = vmatmul.mubr.f32.gmra.mrb[0].mxu0 %v6886
      %v7098 = vpop.f32.mrb[0].mxu0
      %v7099 = vadd.f32 %v6810, %v7098
      %v7100 = vpop.f32.mrb[0].mxu0
      %7101 = vmatprep.mubr.f32.mxu0 0.0
      %7102 = vmatmul.mubr.f32.gmra.mrb[0].mxu0 %v6889
      %v7103 = vpop.f32.mrb[0].mxu0
      %v7104 = vadd.f32 %v6810, %v7103
      %v7105 = vpop.f32.mrb[0].mxu0
      %7106 = vmatprep.mubr.f32.mxu0 0.0
      %7107 = vmatmul.mubr.f32.gmra.mrb[0].mxu0 %v6892
      %v7108 = vpop.f32.mrb[0].mxu0
      %v7109 = vadd.f32 %v6810, %v7108
      %v7110 = vpop.f32.mrb[0].mxu0
      %7111 = vmatprep.mubr.f32.mxu0 0.0
      %7112 = vmatmul.mubr.f32.gmra.mrb[0].mxu0 %v6895
      %v7113 = vpop.f32.mrb[0].mxu0
      %v7114 = vadd.f32 %v6810, %v7113
      %v7115 = vpop.f32.mrb[0].mxu0
      %7116 = vmatprep.mubr.f32.mxu0 0.0
      %7117 = vmatmul.mubr.f32.gmra.mrb[0].mxu0 %v6898
      %v7118 = vpop.f32.mrb[0].mxu0
      %v7119 = vadd.f32 %v6810, %v7118
      %v7120 = vpop.f32.mrb[0].mxu0
      %7121 = vmatprep.mubr.f32.mxu0 0.0
      %7122 = vmatmul.mubr.f32.gmra.mrb[0].mxu0 %v6901
      %v7123 = vpop.f32.mrb[0].mxu0
      %v7124 = vadd.f32 %v6810, %v7123
      %v7125 = vpop.f32.mrb[0].mxu0
      %7126 = vmatprep.mubr.f32.mxu0 0.0
      %7127 = vmatmul.mubr.f32.gmra.mrb[0].mxu0 %v6904
      %v7128 = vpop.f32.mrb[0].mxu0
      %v7129 = vadd.f32 %v6810, %v7128
      %v7130 = vpop.f32.mrb[0].mxu0
      %7131 = vmatprep.mubr.f32.mxu0 0.0
      %7132 = vmatmul.mubr.f32.gmra.mrb[0].mxu0 %v6907
      %v7133 = vpop.f32.mrb[0].mxu0
      %v7134 = vadd.f32 %v6810, %v7133
      %v7135 = vpop.f32.mrb[0].mxu0
      %7136 = vdwg.mxu0
      %7169 = vrot.lane.b32.xlu0 %v6979, 12
      %v7170 = vpop.permute.xlu0 %7169
      %7171 = vrot.lane.b32.xlu0 %v6984, 12
      %v7172 = vpop.permute.xlu0 %7171
      %7173 = vrot.lane.b32.xlu0 %v6989, 12
      %v7174 = vpop.permute.xlu0 %7173
      %7175 = vrot.lane.b32.xlu0 %v6994, 12
      %v7176 = vpop.permute.xlu0 %7175
      %7177 = vrot.lane.b32.xlu0 %v6999, 12
      %v7178 = vpop.permute.xlu0 %7177
      %7179 = vrot.lane.b32.xlu0 %v7004, 12
      %v7180 = vpop.permute.xlu0 %7179
      %7181 = vrot.lane.b32.xlu0 %v7009, 12
      %v7182 = vpop.permute.xlu0 %7181
      %7183 = vrot.lane.b32.xlu0 %v7014, 12
      %v7184 = vpop.permute.xlu0 %7183
      %7185 = vrot.lane.b32.xlu0 %v7019, 12
      %v7186 = vpop.permute.xlu0 %7185
      %7187 = vrot.lane.b32.xlu0 %v7024, 12
      %v7188 = vpop.permute.xlu0 %7187
      %7189 = vrot.lane.b32.xlu0 %v7029, 12
      %v7190 = vpop.permute.xlu0 %7189
      %7191 = vrot.lane.b32.xlu0 %v7034, 12
      %v7192 = vpop.permute.xlu0 %7191
      %7193 = vrot.lane.b32.xlu0 %v7039, 12
      %v7194 = vpop.permute.xlu0 %7193
      %7195 = vrot.lane.b32.xlu0 %v7044, 12
      %v7196 = vpop.permute.xlu0 %7195
      %7197 = vrot.lane.b32.xlu0 %v7049, 12
      %v7198 = vpop.permute.xlu0 %7197
      %7199 = vrot.lane.b32.xlu0 %v7054, 12
      %v7200 = vpop.permute.xlu0 %7199
      %7201 = vrot.lane.b32.xlu0 %v7059, 12
      %v7202 = vpop.permute.xlu0 %7201
      %7203 = vrot.lane.b32.xlu0 %v7064, 12
      %v7204 = vpop.permute.xlu0 %7203
      %7205 = vrot.lane.b32.xlu0 %v7069, 12
      %v7206 = vpop.permute.xlu0 %7205
      %7207 = vrot.lane.b32.xlu0 %v7074, 12
      %v7208 = vpop.permute.xlu0 %7207
      %7209 = vrot.lane.b32.xlu0 %v7079, 12
      %v7210 = vpop.permute.xlu0 %7209
      %7211 = vrot.lane.b32.xlu0 %v7084, 12
      %v7212 = vpop.permute.xlu0 %7211
      %7213 = vrot.lane.b32.xlu0 %v7089, 12
      %v7214 = vpop.permute.xlu0 %7213
      %7215 = vrot.lane.b32.xlu0 %v7094, 12
      %v7216 = vpop.permute.xlu0 %7215
      %7217 = vrot.lane.b32.xlu0 %v7099, 12
      %v7218 = vpop.permute.xlu0 %7217
      %7219 = vrot.lane.b32.xlu0 %v7104, 12
      %v7220 = vpop.permute.xlu0 %7219
      %7221 = vrot.lane.b32.xlu0 %v7109, 12
      %v7222 = vpop.permute.xlu0 %7221
      %7223 = vrot.lane.b32.xlu0 %v7114, 12
      %v7224 = vpop.permute.xlu0 %7223
      %7225 = vrot.lane.b32.xlu0 %v7119, 12
      %v7226 = vpop.permute.xlu0 %7225
      %7227 = vrot.lane.b32.xlu0 %v7124, 12
      %v7228 = vpop.permute.xlu0 %7227
      %7229 = vrot.lane.b32.xlu0 %v7129, 12
      %v7230 = vpop.permute.xlu0 %7229
      %7231 = vrot.lane.b32.xlu0 %v7134, 12
      %v7232 = vpop.permute.xlu0 %7231
      %vm7265 = vcmask 130144
      %7266 = vst.msk [vmem:[%s440] sm:$0xff] %vm7265, %v7170
      %7267 = vst.msk [vmem:[%s440 + $0x8] sm:$0xff] %vm7265, %v7172
      %7268 = vst.msk [vmem:[%s440 + $0x10] sm:$0xff] %vm7265, %v7174
      %7269 = vst.msk [vmem:[%s440 + $0x18] sm:$0xff] %vm7265, %v7176
      %7270 = vst.msk [vmem:[%s440 + $0x20] sm:$0xff] %vm7265, %v7178
      %7271 = vst.msk [vmem:[%s440 + $0x28] sm:$0xff] %vm7265, %v7180
      %7272 = vst.msk [vmem:[%s440 + $0x30] sm:$0xff] %vm7265, %v7182
      %7273 = vst.msk [vmem:[%s440 + $0x38] sm:$0xff] %vm7265, %v7184
      %7274 = vst.msk [vmem:[%s440 + $0x40] sm:$0xff] %vm7265, %v7186
      %7275 = vst.msk [vmem:[%s440 + $0x48] sm:$0xff] %vm7265, %v7188
      %7276 = vst.msk [vmem:[%s440 + $0x50] sm:$0xff] %vm7265, %v7190
      %7277 = vst.msk [vmem:[%s440 + $0x58] sm:$0xff] %vm7265, %v7192
      %7278 = vst.msk [vmem:[%s440 + $0x60] sm:$0xff] %vm7265, %v7194
      %7279 = vst.msk [vmem:[%s440 + $0x68] sm:$0xff] %vm7265, %v7196
      %7280 = vst.msk [vmem:[%s440 + $0x70] sm:$0xff] %vm7265, %v7198
      %7281 = vst.msk [vmem:[%s440 + $0x78] sm:$0xff] %vm7265, %v7200
      %7282 = vst.msk [vmem:[%s440 + $0x80] sm:$0xff] %vm7265, %v7202
      %7283 = vst.msk [vmem:[%s440 + $0x88] sm:$0xff] %vm7265, %v7204
      %7284 = vst.msk [vmem:[%s440 + $0x90] sm:$0xff] %vm7265, %v7206
      %7285 = vst.msk [vmem:[%s440 + $0x98] sm:$0xff] %vm7265, %v7208
      %7286 = vst.msk [vmem:[%s440 + $0xa0] sm:$0xff] %vm7265, %v7210
      %7287 = vst.msk [vmem:[%s440 + $0xa8] sm:$0xff] %vm7265, %v7212
      %7288 = vst.msk [vmem:[%s440 + $0xb0] sm:$0xff] %vm7265, %v7214
      %7289 = vst.msk [vmem:[%s440 + $0xb8] sm:$0xff] %vm7265, %v7216
      %7290 = vst.msk [vmem:[%s440 + $0xc0] sm:$0xff] %vm7265, %v7218
      %7291 = vst.msk [vmem:[%s440 + $0xc8] sm:$0xff] %vm7265, %v7220
      %7292 = vst.msk [vmem:[%s440 + $0xd0] sm:$0xff] %vm7265, %v7222
      %7293 = vst.msk [vmem:[%s440 + $0xd8] sm:$0xff] %vm7265, %v7224
      %7294 = vst.msk [vmem:[%s440 + $0xe0] sm:$0xff] %vm7265, %v7226
      %7295 = vst.msk [vmem:[%s440 + $0xe8] sm:$0xff] %vm7265, %v7228
      %7296 = vst.msk [vmem:[%s440 + $0xf0] sm:$0xff] %vm7265, %v7230
      %7297 = vst.msk [vmem:[%s440 + $0xf8] sm:$0xff] %vm7265, %v7232
      %p7298 = scmp.lt.s32.totalorder %s24, 1
      %s7299 = scalar_select %p7298, %s24, 1
      %s7300 = smul.addr %s7299, 32
      %s7301 = smul.addr %s7300, 8
      %s7302 = scalar_lea.vmem %s13, %s7301
      // Predicated region
      $region73: #{dense_block_forward.1} parent=71 // pred_check
        %p7303 = pneg %p320
      $region74: #{dense_block_forward.1} parent=71 // pred_check_branch
        %7305 = sbr.rel (%p7303) target = $region76
      $region75: #{dense_block_forward.1} parent=71 // pred_region
        _
      $region76: #{dense_block_forward.1} parent=71 // pred_fallthru
        _
    $region72: #{dense_block_forward.1} parent=5 // pred_fallthru
      _
    %p7306 = scmp.le.s32.totalorder 2, %s19
    // Predicated region
    $region77: #{dense_block_forward.1} parent=5 // pred_check
      %p7307 = pneg %p7306
    $region78: #{dense_block_forward.1} parent=5 // pred_check_branch
      %7309 = sbr.rel (%p7307) target = $region80
    $region79: #{dense_block_forward.1} parent=5 // pred_region
      %s7310 = ssub.s32 %s19, 2
      // Predicated region
      $region81: #{dense_block_forward.1} parent=79 // pred_check
        %p7311 = pneg %p326
      $region82: #{dense_block_forward.1} parent=79 // pred_check_branch
        %7313 = sbr.rel (%p7311) target = $region84
      $region83: #{dense_block_forward.1} parent=79 // pred_region
        %p7314 = scmp.lt.s32.totalorder %s25, 1
        %s7315 = scalar_select %p7314, %s25, 1
        %s7316 = smul.addr %s7315, 32
        %s7317 = smul.addr %s7316, 8
        %s7318 = scalar_lea.vmem %s13, %s7317
      $region84: #{dense_block_forward.1} parent=79 // pred_fallthru
        _
    $region80: #{dense_block_forward.1} parent=5 // pred_fallthru
      _
  $region6: #{dense_block_forward.1} parent=0 // loop_footer
    %s23 = sadd.s32 1, %s19
  $region7: #{dense_block_forward.1} parent=0 // loop_footer_branch
    %18 = sbr.rel target = $region3
  $region8: #{dense_block_forward.1} parent=0 // loop_exit
    _

</llo_original>
